<compile_context>
chip_gen: v7x
topology: tpu7x:2x2x1
jax: 0.10.0
libtpu: 0.0.40
codegen_flags: <defaults>
</compile_context>

<pallas_src>
import functools
import math

import jax
import jax.numpy as jnp
from jax import lax
from jax.experimental import pallas as pl
from jax.experimental.pallas import tpu as pltpu


# Scaled-down DINOv2 config with lane-aligned (multiple-of-128) feature dims.
CFG = dict(
    img_size=28, patch_size=14, in_chans=3,
    embed_dim=128, depth=2, num_heads=4, mlp_ratio=4,
    head_hidden=256, head_bottleneck=128, out_dim=128,
)

_LN_EPS = 1e-6


def _round_up(x, m):
    return ((x + m - 1) // m) * m


# ------------------------------ in-kernel math ------------------------------

def _gelu_exact(x):
    # PyTorch nn.GELU() default (erf form).
    return 0.5 * x * (1.0 + lax.erf(x / math.sqrt(2.0)))


def _layernorm(x, g, b, eps=_LN_EPS):
    mu = jnp.mean(x, axis=-1, keepdims=True)
    var = jnp.mean(jnp.square(x - mu), axis=-1, keepdims=True)
    return (x - mu) * lax.rsqrt(var + eps) * g + b


def _mm(a_f32, w_bf16, bias=None):
    # bf16 MXU operands, f32 accumulation; bias add in f32.
    y = jnp.dot(a_f32.astype(jnp.bfloat16), w_bf16,
                preferred_element_type=jnp.float32)
    if bias is not None:
        y = y + bias
    return y


# ------------------------------- fused kernel -------------------------------

def _dinov2_kernel(p_ref, wp_ref, bp_ref, cls_ref, pos_ref,
                   ln1g_ref, ln1b_ref, wqkv_ref, bqkv_ref,
                   wproj_ref, bproj_ref, ls1_ref,
                   ln2g_ref, ln2b_ref, w1_ref, b1_ref, w2_ref, b2_ref, ls2_ref,
                   lnfg_ref, lnfb_ref,
                   hw1_ref, hb1_ref, hw2_ref, hb2_ref, hw3_ref, hb3_ref,
                   hwl_ref,
                   o_ref, xbuf_ref, *, depth, num_heads, scale):
    D = xbuf_ref.shape[-1]
    hd = D // num_heads

    # ---- patch embed + cls token + pos embed (assembled in a VMEM scratch) ----
    tok = _mm(p_ref[0], wp_ref[...], bp_ref[...])                # (n_patches, D)
    pos = pos_ref[...]
    xbuf_ref[:1, :] = cls_ref[...] + pos[:1, :]
    xbuf_ref[1:, :] = tok + pos[1:, :]
    x = xbuf_ref[...]                                            # (N, D) f32

    # ---- transformer blocks (statically unrolled; stacked weights indexed) ----
    for l in range(depth):
        # ---------------- MHSA ----------------
        h = _layernorm(x, ln1g_ref[l], ln1b_ref[l])
        qkv = _mm(h, wqkv_ref[l], bqkv_ref[l])                   # (N, 3D) f32
        q = qkv[:, 0 * D:1 * D] * scale                          # fold 1/sqrt(hd)
        k = qkv[:, 1 * D:2 * D]
        v = qkv[:, 2 * D:3 * D]

        # Per-head attention; each head output is multiplied straight into the
        # matching row-slab of the output projection (no head concat).
        attn_proj = None
        for hi in range(num_heads):
            sl = slice(hi * hd, (hi + 1) * hd)
            qh = q[:, sl].astype(jnp.bfloat16)                   # (N, hd)
            kh = k[:, sl].astype(jnp.bfloat16)
            vh = v[:, sl].astype(jnp.bfloat16)
            s = lax.dot_general(qh, kh, (((1,), (1,)), ((), ())),
                                preferred_element_type=jnp.float32)   # (N, N)
            s = s - jnp.max(s, axis=-1, keepdims=True)
            pexp = jnp.exp(s)
            pexp = pexp * pl.reciprocal(
                jnp.sum(pexp, axis=-1, keepdims=True), approx=True)
            oh = jnp.dot(pexp.astype(jnp.bfloat16), vh,
                         preferred_element_type=jnp.float32)          # (N, hd)
            contrib = jnp.dot(oh.astype(jnp.bfloat16), wproj_ref[l, sl, :],
                              preferred_element_type=jnp.float32)     # (N, D)
            attn_proj = contrib if attn_proj is None else attn_proj + contrib

        x = x + ls1_ref[l] * (attn_proj + bproj_ref[l])

        # ---------------- MLP ----------------
        h2 = _layernorm(x, ln2g_ref[l], ln2b_ref[l])
        m = _gelu_exact(_mm(h2, w1_ref[l], b1_ref[l]))           # (N, hidden)
        x = x + ls2_ref[l] * _mm(m, w2_ref[l], b2_ref[l])

    # ---- final LN -> token mean -> DINOHead ----
    xn = _layernorm(x, lnfg_ref[...], lnfb_ref[...])             # (N, D)
    pooled = jnp.mean(xn, axis=0, keepdims=True)                 # (1, D)
    h = _gelu_exact(_mm(pooled, hw1_ref[...], hb1_ref[...]))
    h = _gelu_exact(_mm(h, hw2_ref[...], hb2_ref[...]))
    h = _mm(h, hw3_ref[...], hb3_ref[...])                       # (1, bottleneck)
    # F.normalize(p=2, dim=-1, eps=1e-12), then weight-normed linear (g == 1).
    n = jnp.sqrt(jnp.sum(h * h, axis=-1, keepdims=True))
    h = h / jnp.maximum(n, 1e-12)
    o_ref[0] = _mm(h, hwl_ref[...])                              # (1, out_dim)


# ------------------------------- thin wrapper -------------------------------

def _const_spec(shape):
    # Whole-array block with a constant index_map -> weights DMA'd once and
    # resident in VMEM across all grid (batch) steps.
    n = len(shape)
    return pl.BlockSpec(shape, lambda b: (0,) * n)


def dinov2_forward(params, x, cfg):
    B, C, H, W = x.shape
    P = cfg["patch_size"]
    nh = cfg["num_heads"]
    depth = cfg["depth"]
    D = cfg["embed_dim"]
    nH, nW = H // P, W // P
    n_patches = nH * nW
    N = n_patches + 1
    k_raw = C * P * P
    k_pad = params["w_patch"].shape[0]
    scale = (D // nh) ** -0.5

    # im2col (NCHW -> (B, n_patches, C*P*P)), zero-padded to a lane multiple.
    # TODO(synk): at production image sizes fuse this gather into the kernel
    # with manual DMA instead of an XLA transpose.
    patches = x.reshape(B, C, nH, P, nW, P).transpose(0, 2, 4, 1, 3, 5)
    patches = patches.reshape(B, n_patches, k_raw)
    patches = jnp.pad(patches, ((0, 0), (0, 0), (0, k_pad - k_raw)))

    blk = params["blocks"]
    hp = params["head"]
    weights = [
        params["w_patch"], params["b_patch"],
        params["cls_token"], params["pos_embed"],
        blk["ln1_g"], blk["ln1_b"], blk["wqkv"], blk["bqkv"],
        blk["wproj"], blk["bproj"], blk["ls1"],
        blk["ln2_g"], blk["ln2_b"], blk["w1"], blk["b1"],
        blk["w2"], blk["b2"], blk["ls2"],
        params["lnf_g"], params["lnf_b"],
        hp["w1"], hp["b1"], hp["w2"], hp["b2"], hp["w3"], hp["b3"],
        hp["w_last"],
    ]
    od = hp["w_last"].shape[1]

    in_specs = [pl.BlockSpec((1, n_patches, k_pad), lambda b: (b, 0, 0))]
    in_specs += [_const_spec(w.shape) for w in weights]

    out = pl.pallas_call(
        functools.partial(_dinov2_kernel, depth=depth, num_heads=nh,
                          scale=scale),
        out_shape=jax.ShapeDtypeStruct((B, 1, od), jnp.float32),
        grid=(B,),
        in_specs=in_specs,
        out_specs=pl.BlockSpec((1, 1, od), lambda b: (b, 0, 0)),
        scratch_shapes=[pltpu.VMEM((N, D), jnp.float32)],
        compiler_params=pltpu.CompilerParams(
            dimension_semantics=("parallel",),   # batch -> megacore / 2 TCs
            vmem_limit_bytes=32 * 1024 * 1024,
        ),
    )(patches, *weights)
    return out.reshape(B, od)


# ------------------------------ model definition -----------------------------

def init_params(key, cfg):
    def nrm(k, shape, sc=0.02):
        return sc * jax.random.normal(k, shape, jnp.float32)

    keys = iter(jax.random.split(key, 64))
    D = cfg["embed_dim"]
    P = cfg["patch_size"]
    C = cfg["in_chans"]
    depth = cfg["depth"]
    num_patches = (cfg["img_size"] // P) ** 2
    hidden = D * cfg["mlp_ratio"]
    k_raw = C * P * P
    k_pad = _round_up(k_raw, 128)

    p = {}
    # Patch-embed Conv2d(C, D, P, stride=P): torch weight (D, C, P, P) ->
    # im2col matmul weight (K, D), zero-padded on K to a lane multiple.
    w_patch_t = nrm(next(keys), (D, C, P, P))
    w_patch = w_patch_t.reshape(D, k_raw).T
    w_patch = jnp.pad(w_patch, ((0, k_pad - k_raw), (0, 0)))
    p["w_patch"] = w_patch.astype(jnp.bfloat16)
    p["b_patch"] = jnp.zeros((1, D), jnp.float32)
    p["cls_token"] = nrm(next(keys), (1, D))
    p["pos_embed"] = nrm(next(keys), (1 + num_patches, D))

    # Transformer block weights stacked on a leading depth axis.
    p["blocks"] = dict(
        ln1_g=jnp.ones((depth, 1, D), jnp.float32),
        ln1_b=jnp.zeros((depth, 1, D), jnp.float32),
        wqkv=nrm(next(keys), (depth, D, 3 * D)).astype(jnp.bfloat16),
        bqkv=jnp.zeros((depth, 1, 3 * D), jnp.float32),
        wproj=nrm(next(keys), (depth, D, D)).astype(jnp.bfloat16),
        bproj=jnp.zeros((depth, 1, D), jnp.float32),
        ls1=jnp.full((depth, 1, D), 1e-5, jnp.float32),
        ln2_g=jnp.ones((depth, 1, D), jnp.float32),
        ln2_b=jnp.zeros((depth, 1, D), jnp.float32),
        w1=nrm(next(keys), (depth, D, hidden)).astype(jnp.bfloat16),
        b1=jnp.zeros((depth, 1, hidden), jnp.float32),
        w2=nrm(next(keys), (depth, hidden, D)).astype(jnp.bfloat16),
        b2=jnp.zeros((depth, 1, D), jnp.float32),
        ls2=jnp.full((depth, 1, D), 1e-5, jnp.float32),
    )
    p["lnf_g"] = jnp.ones((1, D), jnp.float32)
    p["lnf_b"] = jnp.zeros((1, D), jnp.float32)

    # DINOHead (nlayers=3): Linear(D,hd)+GELU, Linear(hd,hd)+GELU, Linear(hd,bn),
    # then L2-normalize and weight-normed Linear(bn, out_dim, bias=False), g=1.
    hd_, bn_, od_ = cfg["head_hidden"], cfg["head_bottleneck"], cfg["out_dim"]
    head = dict(
        w1=nrm(next(keys), (D, hd_)).astype(jnp.bfloat16),
        b1=jnp.zeros((1, hd_), jnp.float32),
        w2=nrm(next(keys), (hd_, hd_)).astype(jnp.bfloat16),
        b2=jnp.zeros((1, hd_), jnp.float32),
        w3=nrm(next(keys), (hd_, bn_)).astype(jnp.bfloat16),
        b3=jnp.zeros((1, bn_), jnp.float32),
    )
    v = nrm(next(keys), (od_, bn_))                # weight_norm direction V
    v_norm = jnp.sqrt(jnp.sum(v * v, axis=1, keepdims=True))
    head["w_last"] = (v / v_norm).T.astype(jnp.bfloat16)   # effective weight (g==1)
    p["head"] = head
    return p


if __name__ == "__main__":
    key = jax.random.PRNGKey(0)
    pkey, xkey = jax.random.split(key)
    params = init_params(pkey, CFG)
    x = jax.random.normal(
        xkey, (2, CFG["in_chans"], CFG["img_size"], CFG["img_size"]),
        jnp.float32)

    fwd = jax.jit(lambda p, xx: dinov2_forward(p, xx, CFG))
    out = jax.block_until_ready(fwd(params, x))
    assert out.shape == (2, CFG["out_dim"]) and out.dtype == jnp.float32
    print("KERNEL_OK")
</pallas_src>

<mosaic_0001>
module attributes {stable_mosaic.version = 11 : i64} {
  func.func @_dinov2_kernel(%arg0: i32, %arg1: memref<1x4x640xf32, #tpu.memory_space<vmem>>, %arg2: memref<640x128xbf16, #tpu.memory_space<vmem>>, %arg3: memref<1x128xf32, #tpu.memory_space<vmem>>, %arg4: memref<1x128xf32, #tpu.memory_space<vmem>>, %arg5: memref<5x128xf32, #tpu.memory_space<vmem>>, %arg6: memref<2x1x128xf32, #tpu.memory_space<vmem>>, %arg7: memref<2x1x128xf32, #tpu.memory_space<vmem>>, %arg8: memref<2x128x384xbf16, #tpu.memory_space<vmem>>, %arg9: memref<2x1x384xf32, #tpu.memory_space<vmem>>, %arg10: memref<2x128x128xbf16, #tpu.memory_space<vmem>>, %arg11: memref<2x1x128xf32, #tpu.memory_space<vmem>>, %arg12: memref<2x1x128xf32, #tpu.memory_space<vmem>>, %arg13: memref<2x1x128xf32, #tpu.memory_space<vmem>>, %arg14: memref<2x1x128xf32, #tpu.memory_space<vmem>>, %arg15: memref<2x128x512xbf16, #tpu.memory_space<vmem>>, %arg16: memref<2x1x512xf32, #tpu.memory_space<vmem>>, %arg17: memref<2x512x128xbf16, #tpu.memory_space<vmem>>, %arg18: memref<2x1x128xf32, #tpu.memory_space<vmem>>, %arg19: memref<2x1x128xf32, #tpu.memory_space<vmem>>, %arg20: memref<1x128xf32, #tpu.memory_space<vmem>>, %arg21: memref<1x128xf32, #tpu.memory_space<vmem>>, %arg22: memref<128x256xbf16, #tpu.memory_space<vmem>>, %arg23: memref<1x256xf32, #tpu.memory_space<vmem>>, %arg24: memref<256x256xbf16, #tpu.memory_space<vmem>>, %arg25: memref<1x256xf32, #tpu.memory_space<vmem>>, %arg26: memref<256x128xbf16, #tpu.memory_space<vmem>>, %arg27: memref<1x128xf32, #tpu.memory_space<vmem>>, %arg28: memref<128x128xbf16, #tpu.memory_space<vmem>>, %arg29: memref<1x1x128xf32, #tpu.memory_space<vmem>>, %arg30: memref<5x128xf32, #tpu.memory_space<vmem>>) attributes {dimension_semantics = [#tpu.dimension_semantics<parallel>], iteration_bounds = array<i64: 2>, scalar_prefetch = 0 : i64, scratch_operands = 1 : i64, tpu.core_type = #tpu.core_type<tc>, window_params = [{transform_indices = @transform_0, window_bounds = array<i64: 1, 4, 640>}, {pipeline_mode = #tpu.pipeline_mode<synchronous>, transform_indices = @transform_1, window_bounds = array<i64: 640, 128>}, {pipeline_mode = #tpu.pipeline_mode<synchronous>, transform_indices = @transform_2, window_bounds = array<i64: 1, 128>}, {pipeline_mode = #tpu.pipeline_mode<synchronous>, transform_indices = @transform_3, window_bounds = array<i64: 1, 128>}, {pipeline_mode = #tpu.pipeline_mode<synchronous>, transform_indices = @transform_4, window_bounds = array<i64: 5, 128>}, {pipeline_mode = #tpu.pipeline_mode<synchronous>, transform_indices = @transform_5, window_bounds = array<i64: 2, 1, 128>}, {pipeline_mode = #tpu.pipeline_mode<synchronous>, transform_indices = @transform_6, window_bounds = array<i64: 2, 1, 128>}, {pipeline_mode = #tpu.pipeline_mode<synchronous>, transform_indices = @transform_7, window_bounds = array<i64: 2, 128, 384>}, {pipeline_mode = #tpu.pipeline_mode<synchronous>, transform_indices = @transform_8, window_bounds = array<i64: 2, 1, 384>}, {pipeline_mode = #tpu.pipeline_mode<synchronous>, transform_indices = @transform_9, window_bounds = array<i64: 2, 128, 128>}, {pipeline_mode = #tpu.pipeline_mode<synchronous>, transform_indices = @transform_10, window_bounds = array<i64: 2, 1, 128>}, {pipeline_mode = #tpu.pipeline_mode<synchronous>, transform_indices = @transform_11, window_bounds = array<i64: 2, 1, 128>}, {pipeline_mode = #tpu.pipeline_mode<synchronous>, transform_indices = @transform_12, window_bounds = array<i64: 2, 1, 128>}, {pipeline_mode = #tpu.pipeline_mode<synchronous>, transform_indices = @transform_13, window_bounds = array<i64: 2, 1, 128>}, {pipeline_mode = #tpu.pipeline_mode<synchronous>, transform_indices = @transform_14, window_bounds = array<i64: 2, 128, 512>}, {pipeline_mode = #tpu.pipeline_mode<synchronous>, transform_indices = @transform_15, window_bounds = array<i64: 2, 1, 512>}, {pipeline_mode = #tpu.pipeline_mode<synchronous>, transform_indices = @transform_16, window_bounds = array<i64: 2, 512, 128>}, {pipeline_mode = #tpu.pipeline_mode<synchronous>, transform_indices = @transform_17, window_bounds = array<i64: 2, 1, 128>}, {pipeline_mode = #tpu.pipeline_mode<synchronous>, transform_indices = @transform_18, window_bounds = array<i64: 2, 1, 128>}, {pipeline_mode = #tpu.pipeline_mode<synchronous>, transform_indices = @transform_19, window_bounds = array<i64: 1, 128>}, {pipeline_mode = #tpu.pipeline_mode<synchronous>, transform_indices = @transform_20, window_bounds = array<i64: 1, 128>}, {pipeline_mode = #tpu.pipeline_mode<synchronous>, transform_indices = @transform_21, window_bounds = array<i64: 128, 256>}, {pipeline_mode = #tpu.pipeline_mode<synchronous>, transform_indices = @transform_22, window_bounds = array<i64: 1, 256>}, {pipeline_mode = #tpu.pipeline_mode<synchronous>, transform_indices = @transform_23, window_bounds = array<i64: 256, 256>}, {pipeline_mode = #tpu.pipeline_mode<synchronous>, transform_indices = @transform_24, window_bounds = array<i64: 1, 256>}, {pipeline_mode = #tpu.pipeline_mode<synchronous>, transform_indices = @transform_25, window_bounds = array<i64: 256, 128>}, {pipeline_mode = #tpu.pipeline_mode<synchronous>, transform_indices = @transform_26, window_bounds = array<i64: 1, 128>}, {pipeline_mode = #tpu.pipeline_mode<synchronous>, transform_indices = @transform_27, window_bounds = array<i64: 128, 128>}, {transform_indices = @transform_28, window_bounds = array<i64: 1, 1, 128>}]} {
    %c0 = arith.constant 0 : index
    %c0_0 = arith.constant 0 : index
    %c0_1 = arith.constant 0 : index
    %0 = vector.load %arg1[%c0, %c0_0, %c0_1] : memref<1x4x640xf32, #tpu.memory_space<vmem>>, vector<1x4x640xf32>
    %1 = vector.shape_cast %0 : vector<1x4x640xf32> to vector<4x640xf32>
    %c0_2 = arith.constant 0 : index
    %c0_3 = arith.constant 0 : index
    %2 = vector.load %arg2[%c0_2, %c0_3] : memref<640x128xbf16, #tpu.memory_space<vmem>>, vector<640x128xbf16>
    %c0_4 = arith.constant 0 : index
    %c0_5 = arith.constant 0 : index
    %3 = vector.load %arg3[%c0_4, %c0_5] : memref<1x128xf32, #tpu.memory_space<vmem>>, vector<1x128xf32>
    %4 = arith.truncf %1 : vector<4x640xf32> to vector<4x640xbf16>
    %cst = arith.constant dense<0.000000e+00> : vector<4x128xf32>
    %5 = tpu.matmul %4, %2, %cst {dimension_numbers = #tpu.dot_dimension_numbers<[1], [0], [0], [1], [0, 0, 1, 1], [], []>} : vector<4x640xbf16>, vector<640x128xbf16>, vector<4x128xf32> -> vector<4x128xf32>
    %6 = vector.broadcast %3 : vector<1x128xf32> to vector<4x128xf32>
    %7 = arith.addf %5, %6 : vector<4x128xf32>
    %c0_6 = arith.constant 0 : index
    %c0_7 = arith.constant 0 : index
    %8 = vector.load %arg5[%c0_6, %c0_7] : memref<5x128xf32, #tpu.memory_space<vmem>>, vector<5x128xf32>
    %c0_8 = arith.constant 0 : index
    %c0_9 = arith.constant 0 : index
    %9 = vector.load %arg4[%c0_8, %c0_9] : memref<1x128xf32, #tpu.memory_space<vmem>>, vector<1x128xf32>
    %10 = vector.extract_strided_slice %8 {offsets = [0, 0], sizes = [1, 128], strides = [1, 1]} : vector<5x128xf32> to vector<1x128xf32>
    %11 = arith.addf %9, %10 : vector<1x128xf32>
    %c0_10 = arith.constant 0 : index
    %c0_11 = arith.constant 0 : index
    %12 = vector.load %arg30[%c0_10, %c0_11] : memref<5x128xf32, #tpu.memory_space<vmem>>, vector<1x128xf32>
    tpu.vector_store %arg30[%c0_10, %c0_11], %11 {strides = array<i32>} : memref<5x128xf32, #tpu.memory_space<vmem>>, vector<1x128xf32>,
    %13 = vector.extract_strided_slice %8 {offsets = [1, 0], sizes = [4, 128], strides = [1, 1]} : vector<5x128xf32> to vector<4x128xf32>
    %14 = arith.addf %7, %13 : vector<4x128xf32>
    %c1 = arith.constant 1 : index
    %c0_12 = arith.constant 0 : index
    %15 = vector.load %arg30[%c1, %c0_12] : memref<5x128xf32, #tpu.memory_space<vmem>>, vector<4x128xf32>
    tpu.vector_store %arg30[%c1, %c0_12], %14 {strides = array<i32>} : memref<5x128xf32, #tpu.memory_space<vmem>>, vector<4x128xf32>,
    %c0_13 = arith.constant 0 : index
    %c0_14 = arith.constant 0 : index
    %16 = vector.load %arg30[%c0_13, %c0_14] : memref<5x128xf32, #tpu.memory_space<vmem>>, vector<5x128xf32>
    %c0_15 = arith.constant 0 : index
    %c0_16 = arith.constant 0 : index
    %c0_17 = arith.constant 0 : index
    %17 = vector.load %arg6[%c0_15, %c0_16, %c0_17] : memref<2x1x128xf32, #tpu.memory_space<vmem>>, vector<1x1x128xf32>
    %18 = vector.shape_cast %17 : vector<1x1x128xf32> to vector<1x128xf32>
    %c0_18 = arith.constant 0 : index
    %c0_19 = arith.constant 0 : index
    %c0_20 = arith.constant 0 : index
    %19 = vector.load %arg7[%c0_18, %c0_19, %c0_20] : memref<2x1x128xf32, #tpu.memory_space<vmem>>, vector<1x1x128xf32>
    %20 = vector.shape_cast %19 : vector<1x1x128xf32> to vector<1x128xf32>
    %cst_21 = arith.constant dense<0.000000e+00> : vector<5xf32>
    %21 = vector.multi_reduction <add>, %16, %cst_21 [1] : vector<5x128xf32> to vector<5xf32>
    %22 = vector.shape_cast %21 : vector<5xf32> to vector<5x1xf32>
    %cst_22 = arith.constant 1.280000e+02 : f32
    %23 = vector.broadcast %cst_22 : f32 to vector<5x1xf32>
    %24 = arith.divf %22, %23 : vector<5x1xf32>
    %25 = vector.broadcast %24 : vector<5x1xf32> to vector<5x128xf32>
    %26 = arith.subf %16, %25 : vector<5x128xf32>
    %27 = arith.mulf %26, %26 : vector<5x128xf32>
    %cst_23 = arith.constant dense<0.000000e+00> : vector<5xf32>
    %28 = vector.multi_reduction <add>, %27, %cst_23 [1] : vector<5x128xf32> to vector<5xf32>
    %29 = vector.shape_cast %28 : vector<5xf32> to vector<5x1xf32>
    %cst_24 = arith.constant 1.280000e+02 : f32
    %30 = vector.broadcast %cst_24 : f32 to vector<5x1xf32>
    %31 = arith.divf %29, %30 : vector<5x1xf32>
    %32 = vector.broadcast %24 : vector<5x1xf32> to vector<5x128xf32>
    %33 = arith.subf %16, %32 : vector<5x128xf32>
    %cst_25 = arith.constant 9.99999997E-7 : f32
    %34 = vector.broadcast %cst_25 : f32 to vector<5x1xf32>
    %35 = arith.addf %31, %34 : vector<5x1xf32>
    %36 = math.rsqrt %35 : vector<5x1xf32>
    %37 = vector.broadcast %36 : vector<5x1xf32> to vector<5x128xf32>
    %38 = arith.mulf %33, %37 : vector<5x128xf32>
    %39 = vector.broadcast %18 : vector<1x128xf32> to vector<5x128xf32>
    %40 = arith.mulf %38, %39 : vector<5x128xf32>
    %41 = vector.broadcast %20 : vector<1x128xf32> to vector<5x128xf32>
    %42 = arith.addf %40, %41 : vector<5x128xf32>
    %c0_26 = arith.constant 0 : index
    %c0_27 = arith.constant 0 : index
    %c0_28 = arith.constant 0 : index
    %43 = vector.load %arg8[%c0_26, %c0_27, %c0_28] : memref<2x128x384xbf16, #tpu.memory_space<vmem>>, vector<1x128x384xbf16>
    %44 = vector.shape_cast %43 : vector<1x128x384xbf16> to vector<128x384xbf16>
    %c0_29 = arith.constant 0 : index
    %c0_30 = arith.constant 0 : index
    %c0_31 = arith.constant 0 : index
    %45 = vector.load %arg9[%c0_29, %c0_30, %c0_31] : memref<2x1x384xf32, #tpu.memory_space<vmem>>, vector<1x1x384xf32>
    %46 = vector.shape_cast %45 : vector<1x1x384xf32> to vector<1x384xf32>
    %47 = arith.truncf %42 : vector<5x128xf32> to vector<5x128xbf16>
    %cst_32 = arith.constant dense<0.000000e+00> : vector<5x384xf32>
    %48 = tpu.matmul %47, %44, %cst_32 {dimension_numbers = #tpu.dot_dimension_numbers<[1], [0], [0], [1], [0, 0, 1, 1], [], []>} : vector<5x128xbf16>, vector<128x384xbf16>, vector<5x384xf32> -> vector<5x384xf32>
    %49 = vector.broadcast %46 : vector<1x384xf32> to vector<5x384xf32>
    %50 = arith.addf %48, %49 : vector<5x384xf32>
    %51 = vector.extract_strided_slice %50 {offsets = [0, 0], sizes = [5, 128], strides = [1, 1]} : vector<5x384xf32> to vector<5x128xf32>
    %cst_33 = arith.constant 0.176776692 : f32
    %52 = vector.broadcast %cst_33 : f32 to vector<5x128xf32>
    %53 = arith.mulf %51, %52 : vector<5x128xf32>
    %54 = vector.extract_strided_slice %50 {offsets = [0, 128], sizes = [5, 128], strides = [1, 1]} : vector<5x384xf32> to vector<5x128xf32>
    %55 = vector.extract_strided_slice %50 {offsets = [0, 256], sizes = [5, 128], strides = [1, 1]} : vector<5x384xf32> to vector<5x128xf32>
    %56 = vector.extract_strided_slice %53 {offsets = [0, 0], sizes = [5, 32], strides = [1, 1]} : vector<5x128xf32> to vector<5x32xf32>
    %57 = arith.truncf %56 : vector<5x32xf32> to vector<5x32xbf16>
    %58 = vector.extract_strided_slice %54 {offsets = [0, 0], sizes = [5, 32], strides = [1, 1]} : vector<5x128xf32> to vector<5x32xf32>
    %59 = arith.truncf %58 : vector<5x32xf32> to vector<5x32xbf16>
    %60 = vector.extract_strided_slice %55 {offsets = [0, 0], sizes = [5, 32], strides = [1, 1]} : vector<5x128xf32> to vector<5x32xf32>
    %61 = arith.truncf %60 : vector<5x32xf32> to vector<5x32xbf16>
    %cst_34 = arith.constant dense<0.000000e+00> : vector<5x5xf32>
    %62 = tpu.matmul %57, %59, %cst_34 {dimension_numbers = #tpu.dot_dimension_numbers<[1], [1], [0], [0], [0, 0, 1, 0], [], []>} : vector<5x32xbf16>, vector<5x32xbf16>, vector<5x5xf32> -> vector<5x5xf32>
    %cst_35 = arith.constant dense<0xFF800000> : vector<5xf32>
    %63 = vector.multi_reduction <maximumf>, %62, %cst_35 [1] : vector<5x5xf32> to vector<5xf32>
    %64 = vector.shape_cast %63 : vector<5xf32> to vector<5x1xf32>
    %65 = vector.broadcast %64 : vector<5x1xf32> to vector<5x5xf32>
    %66 = arith.subf %62, %65 : vector<5x5xf32>
    %67 = math.exp %66 : vector<5x5xf32>
    %cst_36 = arith.constant dense<0.000000e+00> : vector<5xf32>
    %68 = vector.multi_reduction <add>, %67, %cst_36 [1] : vector<5x5xf32> to vector<5xf32>
    %69 = vector.shape_cast %68 : vector<5xf32> to vector<5x1xf32>
    %70 = tpu.reciprocal %69 {approx = true} : vector<5x1xf32> -> vector<5x1xf32>
    %71 = vector.broadcast %70 : vector<5x1xf32> to vector<5x5xf32>
    %72 = arith.mulf %67, %71 : vector<5x5xf32>
    %73 = arith.truncf %72 : vector<5x5xf32> to vector<5x5xbf16>
    %cst_37 = arith.constant dense<0.000000e+00> : vector<5x32xf32>
    %74 = tpu.matmul %73, %61, %cst_37 {dimension_numbers = #tpu.dot_dimension_numbers<[1], [0], [0], [1], [0, 0, 1, 1], [], []>} : vector<5x5xbf16>, vector<5x32xbf16>, vector<5x32xf32> -> vector<5x32xf32>
    %75 = arith.truncf %74 : vector<5x32xf32> to vector<5x32xbf16>
    %c0_38 = arith.constant 0 : index
    %c0_39 = arith.constant 0 : index
    %c0_40 = arith.constant 0 : index
    %76 = vector.load %arg10[%c0_38, %c0_39, %c0_40] : memref<2x128x128xbf16, #tpu.memory_space<vmem>>, vector<1x32x128xbf16>
    %77 = vector.shape_cast %76 : vector<1x32x128xbf16> to vector<32x128xbf16>
    %cst_41 = arith.constant dense<0.000000e+00> : vector<5x128xf32>
    %78 = tpu.matmul %75, %77, %cst_41 {dimension_numbers = #tpu.dot_dimension_numbers<[1], [0], [0], [1], [0, 0, 1, 1], [], []>} : vector<5x32xbf16>, vector<32x128xbf16>, vector<5x128xf32> -> vector<5x128xf32>
    %79 = vector.extract_strided_slice %53 {offsets = [0, 32], sizes = [5, 32], strides = [1, 1]} : vector<5x128xf32> to vector<5x32xf32>
    %80 = arith.truncf %79 : vector<5x32xf32> to vector<5x32xbf16>
    %81 = vector.extract_strided_slice %54 {offsets = [0, 32], sizes = [5, 32], strides = [1, 1]} : vector<5x128xf32> to vector<5x32xf32>
    %82 = arith.truncf %81 : vector<5x32xf32> to vector<5x32xbf16>
    %83 = vector.extract_strided_slice %55 {offsets = [0, 32], sizes = [5, 32], strides = [1, 1]} : vector<5x128xf32> to vector<5x32xf32>
    %84 = arith.truncf %83 : vector<5x32xf32> to vector<5x32xbf16>
    %cst_42 = arith.constant dense<0.000000e+00> : vector<5x5xf32>
    %85 = tpu.matmul %80, %82, %cst_42 {dimension_numbers = #tpu.dot_dimension_numbers<[1], [1], [0], [0], [0, 0, 1, 0], [], []>} : vector<5x32xbf16>, vector<5x32xbf16>, vector<5x5xf32> -> vector<5x5xf32>
    %cst_43 = arith.constant dense<0xFF800000> : vector<5xf32>
    %86 = vector.multi_reduction <maximumf>, %85, %cst_43 [1] : vector<5x5xf32> to vector<5xf32>
    %87 = vector.shape_cast %86 : vector<5xf32> to vector<5x1xf32>
    %88 = vector.broadcast %87 : vector<5x1xf32> to vector<5x5xf32>
    %89 = arith.subf %85, %88 : vector<5x5xf32>
    %90 = math.exp %89 : vector<5x5xf32>
    %cst_44 = arith.constant dense<0.000000e+00> : vector<5xf32>
    %91 = vector.multi_reduction <add>, %90, %cst_44 [1] : vector<5x5xf32> to vector<5xf32>
    %92 = vector.shape_cast %91 : vector<5xf32> to vector<5x1xf32>
    %93 = tpu.reciprocal %92 {approx = true} : vector<5x1xf32> -> vector<5x1xf32>
    %94 = vector.broadcast %93 : vector<5x1xf32> to vector<5x5xf32>
    %95 = arith.mulf %90, %94 : vector<5x5xf32>
    %96 = arith.truncf %95 : vector<5x5xf32> to vector<5x5xbf16>
    %cst_45 = arith.constant dense<0.000000e+00> : vector<5x32xf32>
    %97 = tpu.matmul %96, %84, %cst_45 {dimension_numbers = #tpu.dot_dimension_numbers<[1], [0], [0], [1], [0, 0, 1, 1], [], []>} : vector<5x5xbf16>, vector<5x32xbf16>, vector<5x32xf32> -> vector<5x32xf32>
    %98 = arith.truncf %97 : vector<5x32xf32> to vector<5x32xbf16>
    %c0_46 = arith.constant 0 : index
    %c32 = arith.constant 32 : index
    %c0_47 = arith.constant 0 : index
    %99 = vector.load %arg10[%c0_46, %c32, %c0_47] : memref<2x128x128xbf16, #tpu.memory_space<vmem>>, vector<1x32x128xbf16>
    %100 = vector.shape_cast %99 : vector<1x32x128xbf16> to vector<32x128xbf16>
    %cst_48 = arith.constant dense<0.000000e+00> : vector<5x128xf32>
    %101 = tpu.matmul %98, %100, %cst_48 {dimension_numbers = #tpu.dot_dimension_numbers<[1], [0], [0], [1], [0, 0, 1, 1], [], []>} : vector<5x32xbf16>, vector<32x128xbf16>, vector<5x128xf32> -> vector<5x128xf32>
    %102 = arith.addf %78, %101 : vector<5x128xf32>
    %103 = vector.extract_strided_slice %53 {offsets = [0, 64], sizes = [5, 32], strides = [1, 1]} : vector<5x128xf32> to vector<5x32xf32>
    %104 = arith.truncf %103 : vector<5x32xf32> to vector<5x32xbf16>
    %105 = vector.extract_strided_slice %54 {offsets = [0, 64], sizes = [5, 32], strides = [1, 1]} : vector<5x128xf32> to vector<5x32xf32>
    %106 = arith.truncf %105 : vector<5x32xf32> to vector<5x32xbf16>
    %107 = vector.extract_strided_slice %55 {offsets = [0, 64], sizes = [5, 32], strides = [1, 1]} : vector<5x128xf32> to vector<5x32xf32>
    %108 = arith.truncf %107 : vector<5x32xf32> to vector<5x32xbf16>
    %cst_49 = arith.constant dense<0.000000e+00> : vector<5x5xf32>
    %109 = tpu.matmul %104, %106, %cst_49 {dimension_numbers = #tpu.dot_dimension_numbers<[1], [1], [0], [0], [0, 0, 1, 0], [], []>} : vector<5x32xbf16>, vector<5x32xbf16>, vector<5x5xf32> -> vector<5x5xf32>
    %cst_50 = arith.constant dense<0xFF800000> : vector<5xf32>
    %110 = vector.multi_reduction <maximumf>, %109, %cst_50 [1] : vector<5x5xf32> to vector<5xf32>
    %111 = vector.shape_cast %110 : vector<5xf32> to vector<5x1xf32>
    %112 = vector.broadcast %111 : vector<5x1xf32> to vector<5x5xf32>
    %113 = arith.subf %109, %112 : vector<5x5xf32>
    %114 = math.exp %113 : vector<5x5xf32>
    %cst_51 = arith.constant dense<0.000000e+00> : vector<5xf32>
    %115 = vector.multi_reduction <add>, %114, %cst_51 [1] : vector<5x5xf32> to vector<5xf32>
    %116 = vector.shape_cast %115 : vector<5xf32> to vector<5x1xf32>
    %117 = tpu.reciprocal %116 {approx = true} : vector<5x1xf32> -> vector<5x1xf32>
    %118 = vector.broadcast %117 : vector<5x1xf32> to vector<5x5xf32>
    %119 = arith.mulf %114, %118 : vector<5x5xf32>
    %120 = arith.truncf %119 : vector<5x5xf32> to vector<5x5xbf16>
    %cst_52 = arith.constant dense<0.000000e+00> : vector<5x32xf32>
    %121 = tpu.matmul %120, %108, %cst_52 {dimension_numbers = #tpu.dot_dimension_numbers<[1], [0], [0], [1], [0, 0, 1, 1], [], []>} : vector<5x5xbf16>, vector<5x32xbf16>, vector<5x32xf32> -> vector<5x32xf32>
    %122 = arith.truncf %121 : vector<5x32xf32> to vector<5x32xbf16>
    %c0_53 = arith.constant 0 : index
    %c64 = arith.constant 64 : index
    %c0_54 = arith.constant 0 : index
    %123 = vector.load %arg10[%c0_53, %c64, %c0_54] : memref<2x128x128xbf16, #tpu.memory_space<vmem>>, vector<1x32x128xbf16>
    %124 = vector.shape_cast %123 : vector<1x32x128xbf16> to vector<32x128xbf16>
    %cst_55 = arith.constant dense<0.000000e+00> : vector<5x128xf32>
    %125 = tpu.matmul %122, %124, %cst_55 {dimension_numbers = #tpu.dot_dimension_numbers<[1], [0], [0], [1], [0, 0, 1, 1], [], []>} : vector<5x32xbf16>, vector<32x128xbf16>, vector<5x128xf32> -> vector<5x128xf32>
    %126 = arith.addf %102, %125 : vector<5x128xf32>
    %127 = vector.extract_strided_slice %53 {offsets = [0, 96], sizes = [5, 32], strides = [1, 1]} : vector<5x128xf32> to vector<5x32xf32>
    %128 = arith.truncf %127 : vector<5x32xf32> to vector<5x32xbf16>
    %129 = vector.extract_strided_slice %54 {offsets = [0, 96], sizes = [5, 32], strides = [1, 1]} : vector<5x128xf32> to vector<5x32xf32>
    %130 = arith.truncf %129 : vector<5x32xf32> to vector<5x32xbf16>
    %131 = vector.extract_strided_slice %55 {offsets = [0, 96], sizes = [5, 32], strides = [1, 1]} : vector<5x128xf32> to vector<5x32xf32>
    %132 = arith.truncf %131 : vector<5x32xf32> to vector<5x32xbf16>
    %cst_56 = arith.constant dense<0.000000e+00> : vector<5x5xf32>
    %133 = tpu.matmul %128, %130, %cst_56 {dimension_numbers = #tpu.dot_dimension_numbers<[1], [1], [0], [0], [0, 0, 1, 0], [], []>} : vector<5x32xbf16>, vector<5x32xbf16>, vector<5x5xf32> -> vector<5x5xf32>
    %cst_57 = arith.constant dense<0xFF800000> : vector<5xf32>
    %134 = vector.multi_reduction <maximumf>, %133, %cst_57 [1] : vector<5x5xf32> to vector<5xf32>
    %135 = vector.shape_cast %134 : vector<5xf32> to vector<5x1xf32>
    %136 = vector.broadcast %135 : vector<5x1xf32> to vector<5x5xf32>
    %137 = arith.subf %133, %136 : vector<5x5xf32>
    %138 = math.exp %137 : vector<5x5xf32>
    %cst_58 = arith.constant dense<0.000000e+00> : vector<5xf32>
    %139 = vector.multi_reduction <add>, %138, %cst_58 [1] : vector<5x5xf32> to vector<5xf32>
    %140 = vector.shape_cast %139 : vector<5xf32> to vector<5x1xf32>
    %141 = tpu.reciprocal %140 {approx = true} : vector<5x1xf32> -> vector<5x1xf32>
    %142 = vector.broadcast %141 : vector<5x1xf32> to vector<5x5xf32>
    %143 = arith.mulf %138, %142 : vector<5x5xf32>
    %144 = arith.truncf %143 : vector<5x5xf32> to vector<5x5xbf16>
    %cst_59 = arith.constant dense<0.000000e+00> : vector<5x32xf32>
    %145 = tpu.matmul %144, %132, %cst_59 {dimension_numbers = #tpu.dot_dimension_numbers<[1], [0], [0], [1], [0, 0, 1, 1], [], []>} : vector<5x5xbf16>, vector<5x32xbf16>, vector<5x32xf32> -> vector<5x32xf32>
    %146 = arith.truncf %145 : vector<5x32xf32> to vector<5x32xbf16>
    %c0_60 = arith.constant 0 : index
    %c96 = arith.constant 96 : index
    %c0_61 = arith.constant 0 : index
    %147 = vector.load %arg10[%c0_60, %c96, %c0_61] : memref<2x128x128xbf16, #tpu.memory_space<vmem>>, vector<1x32x128xbf16>
    %148 = vector.shape_cast %147 : vector<1x32x128xbf16> to vector<32x128xbf16>
    %cst_62 = arith.constant dense<0.000000e+00> : vector<5x128xf32>
    %149 = tpu.matmul %146, %148, %cst_62 {dimension_numbers = #tpu.dot_dimension_numbers<[1], [0], [0], [1], [0, 0, 1, 1], [], []>} : vector<5x32xbf16>, vector<32x128xbf16>, vector<5x128xf32> -> vector<5x128xf32>
    %150 = arith.addf %126, %149 : vector<5x128xf32>
    %c0_63 = arith.constant 0 : index
    %c0_64 = arith.constant 0 : index
    %c0_65 = arith.constant 0 : index
    %151 = vector.load %arg12[%c0_63, %c0_64, %c0_65] : memref<2x1x128xf32, #tpu.memory_space<vmem>>, vector<1x1x128xf32>
    %152 = vector.shape_cast %151 : vector<1x1x128xf32> to vector<1x128xf32>
    %c0_66 = arith.constant 0 : index
    %c0_67 = arith.constant 0 : index
    %c0_68 = arith.constant 0 : index
    %153 = vector.load %arg11[%c0_66, %c0_67, %c0_68] : memref<2x1x128xf32, #tpu.memory_space<vmem>>, vector<1x1x128xf32>
    %154 = vector.shape_cast %153 : vector<1x1x128xf32> to vector<1x128xf32>
    %155 = vector.broadcast %154 : vector<1x128xf32> to vector<5x128xf32>
    %156 = arith.addf %150, %155 : vector<5x128xf32>
    %157 = vector.broadcast %152 : vector<1x128xf32> to vector<5x128xf32>
    %158 = arith.mulf %157, %156 : vector<5x128xf32>
    %159 = arith.addf %16, %158 : vector<5x128xf32>
    %c0_69 = arith.constant 0 : index
    %c0_70 = arith.constant 0 : index
    %c0_71 = arith.constant 0 : index
    %160 = vector.load %arg13[%c0_69, %c0_70, %c0_71] : memref<2x1x128xf32, #tpu.memory_space<vmem>>, vector<1x1x128xf32>
    %161 = vector.shape_cast %160 : vector<1x1x128xf32> to vector<1x128xf32>
    %c0_72 = arith.constant 0 : index
    %c0_73 = arith.constant 0 : index
    %c0_74 = arith.constant 0 : index
    %162 = vector.load %arg14[%c0_72, %c0_73, %c0_74] : memref<2x1x128xf32, #tpu.memory_space<vmem>>, vector<1x1x128xf32>
    %163 = vector.shape_cast %162 : vector<1x1x128xf32> to vector<1x128xf32>
    %cst_75 = arith.constant dense<0.000000e+00> : vector<5xf32>
    %164 = vector.multi_reduction <add>, %159, %cst_75 [1] : vector<5x128xf32> to vector<5xf32>
    %165 = vector.shape_cast %164 : vector<5xf32> to vector<5x1xf32>
    %cst_76 = arith.constant 1.280000e+02 : f32
    %166 = vector.broadcast %cst_76 : f32 to vector<5x1xf32>
    %167 = arith.divf %165, %166 : vector<5x1xf32>
    %168 = vector.broadcast %167 : vector<5x1xf32> to vector<5x128xf32>
    %169 = arith.subf %159, %168 : vector<5x128xf32>
    %170 = arith.mulf %169, %169 : vector<5x128xf32>
    %cst_77 = arith.constant dense<0.000000e+00> : vector<5xf32>
    %171 = vector.multi_reduction <add>, %170, %cst_77 [1] : vector<5x128xf32> to vector<5xf32>
    %172 = vector.shape_cast %171 : vector<5xf32> to vector<5x1xf32>
    %cst_78 = arith.constant 1.280000e+02 : f32
    %173 = vector.broadcast %cst_78 : f32 to vector<5x1xf32>
    %174 = arith.divf %172, %173 : vector<5x1xf32>
    %175 = vector.broadcast %167 : vector<5x1xf32> to vector<5x128xf32>
    %176 = arith.subf %159, %175 : vector<5x128xf32>
    %cst_79 = arith.constant 9.99999997E-7 : f32
    %177 = vector.broadcast %cst_79 : f32 to vector<5x1xf32>
    %178 = arith.addf %174, %177 : vector<5x1xf32>
    %179 = math.rsqrt %178 : vector<5x1xf32>
    %180 = vector.broadcast %179 : vector<5x1xf32> to vector<5x128xf32>
    %181 = arith.mulf %176, %180 : vector<5x128xf32>
    %182 = vector.broadcast %161 : vector<1x128xf32> to vector<5x128xf32>
    %183 = arith.mulf %181, %182 : vector<5x128xf32>
    %184 = vector.broadcast %163 : vector<1x128xf32> to vector<5x128xf32>
    %185 = arith.addf %183, %184 : vector<5x128xf32>
    %c0_80 = arith.constant 0 : index
    %c0_81 = arith.constant 0 : index
    %c0_82 = arith.constant 0 : index
    %186 = vector.load %arg15[%c0_80, %c0_81, %c0_82] : memref<2x128x512xbf16, #tpu.memory_space<vmem>>, vector<1x128x512xbf16>
    %187 = vector.shape_cast %186 : vector<1x128x512xbf16> to vector<128x512xbf16>
    %c0_83 = arith.constant 0 : index
    %c0_84 = arith.constant 0 : index
    %c0_85 = arith.constant 0 : index
    %188 = vector.load %arg16[%c0_83, %c0_84, %c0_85] : memref<2x1x512xf32, #tpu.memory_space<vmem>>, vector<1x1x512xf32>
    %189 = vector.shape_cast %188 : vector<1x1x512xf32> to vector<1x512xf32>
    %190 = arith.truncf %185 : vector<5x128xf32> to vector<5x128xbf16>
    %cst_86 = arith.constant dense<0.000000e+00> : vector<5x512xf32>
    %191 = tpu.matmul %190, %187, %cst_86 {dimension_numbers = #tpu.dot_dimension_numbers<[1], [0], [0], [1], [0, 0, 1, 1], [], []>} : vector<5x128xbf16>, vector<128x512xbf16>, vector<5x512xf32> -> vector<5x512xf32>
    %192 = vector.broadcast %189 : vector<1x512xf32> to vector<5x512xf32>
    %193 = arith.addf %191, %192 : vector<5x512xf32>
    %cst_87 = arith.constant 5.000000e-01 : f32
    %194 = vector.broadcast %cst_87 : f32 to vector<5x512xf32>
    %195 = arith.mulf %194, %193 : vector<5x512xf32>
    %cst_88 = arith.constant 1.41421354 : f32
    %196 = vector.broadcast %cst_88 : f32 to vector<5x512xf32>
    %197 = arith.divf %193, %196 : vector<5x512xf32>
    %198 = math.erf %197 : vector<5x512xf32>
    %cst_89 = arith.constant 1.000000e+00 : f32
    %199 = vector.broadcast %cst_89 : f32 to vector<5x512xf32>
    %200 = arith.addf %199, %198 : vector<5x512xf32>
    %201 = arith.mulf %195, %200 : vector<5x512xf32>
    %c0_90 = arith.constant 0 : index
    %c0_91 = arith.constant 0 : index
    %c0_92 = arith.constant 0 : index
    %202 = vector.load %arg19[%c0_90, %c0_91, %c0_92] : memref<2x1x128xf32, #tpu.memory_space<vmem>>, vector<1x1x128xf32>
    %203 = vector.shape_cast %202 : vector<1x1x128xf32> to vector<1x128xf32>
    %c0_93 = arith.constant 0 : index
    %c0_94 = arith.constant 0 : index
    %c0_95 = arith.constant 0 : index
    %204 = vector.load %arg17[%c0_93, %c0_94, %c0_95] : memref<2x512x128xbf16, #tpu.memory_space<vmem>>, vector<1x512x128xbf16>
    %205 = vector.shape_cast %204 : vector<1x512x128xbf16> to vector<512x128xbf16>
    %c0_96 = arith.constant 0 : index
    %c0_97 = arith.constant 0 : index
    %c0_98 = arith.constant 0 : index
    %206 = vector.load %arg18[%c0_96, %c0_97, %c0_98] : memref<2x1x128xf32, #tpu.memory_space<vmem>>, vector<1x1x128xf32>
    %207 = vector.shape_cast %206 : vector<1x1x128xf32> to vector<1x128xf32>
    %208 = arith.truncf %201 : vector<5x512xf32> to vector<5x512xbf16>
    %cst_99 = arith.constant dense<0.000000e+00> : vector<5x128xf32>
    %209 = tpu.matmul %208, %205, %cst_99 {dimension_numbers = #tpu.dot_dimension_numbers<[1], [0], [0], [1], [0, 0, 1, 1], [], []>} : vector<5x512xbf16>, vector<512x128xbf16>, vector<5x128xf32> -> vector<5x128xf32>
    %210 = vector.broadcast %207 : vector<1x128xf32> to vector<5x128xf32>
    %211 = arith.addf %209, %210 : vector<5x128xf32>
    %212 = vector.broadcast %203 : vector<1x128xf32> to vector<5x128xf32>
    %213 = arith.mulf %212, %211 : vector<5x128xf32>
    %214 = arith.addf %159, %213 : vector<5x128xf32>
    %c1_100 = arith.constant 1 : index
    %c0_101 = arith.constant 0 : index
    %c0_102 = arith.constant 0 : index
    %215 = vector.load %arg6[%c1_100, %c0_101, %c0_102] : memref<2x1x128xf32, #tpu.memory_space<vmem>>, vector<1x1x128xf32>
    %216 = vector.shape_cast %215 : vector<1x1x128xf32> to vector<1x128xf32>
    %c1_103 = arith.constant 1 : index
    %c0_104 = arith.constant 0 : index
    %c0_105 = arith.constant 0 : index
    %217 = vector.load %arg7[%c1_103, %c0_104, %c0_105] : memref<2x1x128xf32, #tpu.memory_space<vmem>>, vector<1x1x128xf32>
    %218 = vector.shape_cast %217 : vector<1x1x128xf32> to vector<1x128xf32>
    %cst_106 = arith.constant dense<0.000000e+00> : vector<5xf32>
    %219 = vector.multi_reduction <add>, %214, %cst_106 [1] : vector<5x128xf32> to vector<5xf32>
    %220 = vector.shape_cast %219 : vector<5xf32> to vector<5x1xf32>
    %cst_107 = arith.constant 1.280000e+02 : f32
    %221 = vector.broadcast %cst_107 : f32 to vector<5x1xf32>
    %222 = arith.divf %220, %221 : vector<5x1xf32>
    %223 = vector.broadcast %222 : vector<5x1xf32> to vector<5x128xf32>
    %224 = arith.subf %214, %223 : vector<5x128xf32>
    %225 = arith.mulf %224, %224 : vector<5x128xf32>
    %cst_108 = arith.constant dense<0.000000e+00> : vector<5xf32>
    %226 = vector.multi_reduction <add>, %225, %cst_108 [1] : vector<5x128xf32> to vector<5xf32>
    %227 = vector.shape_cast %226 : vector<5xf32> to vector<5x1xf32>
    %cst_109 = arith.constant 1.280000e+02 : f32
    %228 = vector.broadcast %cst_109 : f32 to vector<5x1xf32>
    %229 = arith.divf %227, %228 : vector<5x1xf32>
    %230 = vector.broadcast %222 : vector<5x1xf32> to vector<5x128xf32>
    %231 = arith.subf %214, %230 : vector<5x128xf32>
    %cst_110 = arith.constant 9.99999997E-7 : f32
    %232 = vector.broadcast %cst_110 : f32 to vector<5x1xf32>
    %233 = arith.addf %229, %232 : vector<5x1xf32>
    %234 = math.rsqrt %233 : vector<5x1xf32>
    %235 = vector.broadcast %234 : vector<5x1xf32> to vector<5x128xf32>
    %236 = arith.mulf %231, %235 : vector<5x128xf32>
    %237 = vector.broadcast %216 : vector<1x128xf32> to vector<5x128xf32>
    %238 = arith.mulf %236, %237 : vector<5x128xf32>
    %239 = vector.broadcast %218 : vector<1x128xf32> to vector<5x128xf32>
    %240 = arith.addf %238, %239 : vector<5x128xf32>
    %c1_111 = arith.constant 1 : index
    %c0_112 = arith.constant 0 : index
    %c0_113 = arith.constant 0 : index
    %241 = vector.load %arg8[%c1_111, %c0_112, %c0_113] : memref<2x128x384xbf16, #tpu.memory_space<vmem>>, vector<1x128x384xbf16>
    %242 = vector.shape_cast %241 : vector<1x128x384xbf16> to vector<128x384xbf16>
    %c1_114 = arith.constant 1 : index
    %c0_115 = arith.constant 0 : index
    %c0_116 = arith.constant 0 : index
    %243 = vector.load %arg9[%c1_114, %c0_115, %c0_116] : memref<2x1x384xf32, #tpu.memory_space<vmem>>, vector<1x1x384xf32>
    %244 = vector.shape_cast %243 : vector<1x1x384xf32> to vector<1x384xf32>
    %245 = arith.truncf %240 : vector<5x128xf32> to vector<5x128xbf16>
    %cst_117 = arith.constant dense<0.000000e+00> : vector<5x384xf32>
    %246 = tpu.matmul %245, %242, %cst_117 {dimension_numbers = #tpu.dot_dimension_numbers<[1], [0], [0], [1], [0, 0, 1, 1], [], []>} : vector<5x128xbf16>, vector<128x384xbf16>, vector<5x384xf32> -> vector<5x384xf32>
    %247 = vector.broadcast %244 : vector<1x384xf32> to vector<5x384xf32>
    %248 = arith.addf %246, %247 : vector<5x384xf32>
    %249 = vector.extract_strided_slice %248 {offsets = [0, 0], sizes = [5, 128], strides = [1, 1]} : vector<5x384xf32> to vector<5x128xf32>
    %cst_118 = arith.constant 0.176776692 : f32
    %250 = vector.broadcast %cst_118 : f32 to vector<5x128xf32>
    %251 = arith.mulf %249, %250 : vector<5x128xf32>
    %252 = vector.extract_strided_slice %248 {offsets = [0, 128], sizes = [5, 128], strides = [1, 1]} : vector<5x384xf32> to vector<5x128xf32>
    %253 = vector.extract_strided_slice %248 {offsets = [0, 256], sizes = [5, 128], strides = [1, 1]} : vector<5x384xf32> to vector<5x128xf32>
    %254 = vector.extract_strided_slice %251 {offsets = [0, 0], sizes = [5, 32], strides = [1, 1]} : vector<5x128xf32> to vector<5x32xf32>
    %255 = arith.truncf %254 : vector<5x32xf32> to vector<5x32xbf16>
    %256 = vector.extract_strided_slice %252 {offsets = [0, 0], sizes = [5, 32], strides = [1, 1]} : vector<5x128xf32> to vector<5x32xf32>
    %257 = arith.truncf %256 : vector<5x32xf32> to vector<5x32xbf16>
    %258 = vector.extract_strided_slice %253 {offsets = [0, 0], sizes = [5, 32], strides = [1, 1]} : vector<5x128xf32> to vector<5x32xf32>
    %259 = arith.truncf %258 : vector<5x32xf32> to vector<5x32xbf16>
    %cst_119 = arith.constant dense<0.000000e+00> : vector<5x5xf32>
    %260 = tpu.matmul %255, %257, %cst_119 {dimension_numbers = #tpu.dot_dimension_numbers<[1], [1], [0], [0], [0, 0, 1, 0], [], []>} : vector<5x32xbf16>, vector<5x32xbf16>, vector<5x5xf32> -> vector<5x5xf32>
    %cst_120 = arith.constant dense<0xFF800000> : vector<5xf32>
    %261 = vector.multi_reduction <maximumf>, %260, %cst_120 [1] : vector<5x5xf32> to vector<5xf32>
    %262 = vector.shape_cast %261 : vector<5xf32> to vector<5x1xf32>
    %263 = vector.broadcast %262 : vector<5x1xf32> to vector<5x5xf32>
    %264 = arith.subf %260, %263 : vector<5x5xf32>
    %265 = math.exp %264 : vector<5x5xf32>
    %cst_121 = arith.constant dense<0.000000e+00> : vector<5xf32>
    %266 = vector.multi_reduction <add>, %265, %cst_121 [1] : vector<5x5xf32> to vector<5xf32>
    %267 = vector.shape_cast %266 : vector<5xf32> to vector<5x1xf32>
    %268 = tpu.reciprocal %267 {approx = true} : vector<5x1xf32> -> vector<5x1xf32>
    %269 = vector.broadcast %268 : vector<5x1xf32> to vector<5x5xf32>
    %270 = arith.mulf %265, %269 : vector<5x5xf32>
    %271 = arith.truncf %270 : vector<5x5xf32> to vector<5x5xbf16>
    %cst_122 = arith.constant dense<0.000000e+00> : vector<5x32xf32>
    %272 = tpu.matmul %271, %259, %cst_122 {dimension_numbers = #tpu.dot_dimension_numbers<[1], [0], [0], [1], [0, 0, 1, 1], [], []>} : vector<5x5xbf16>, vector<5x32xbf16>, vector<5x32xf32> -> vector<5x32xf32>
    %273 = arith.truncf %272 : vector<5x32xf32> to vector<5x32xbf16>
    %c1_123 = arith.constant 1 : index
    %c0_124 = arith.constant 0 : index
    %c0_125 = arith.constant 0 : index
    %274 = vector.load %arg10[%c1_123, %c0_124, %c0_125] : memref<2x128x128xbf16, #tpu.memory_space<vmem>>, vector<1x32x128xbf16>
    %275 = vector.shape_cast %274 : vector<1x32x128xbf16> to vector<32x128xbf16>
    %cst_126 = arith.constant dense<0.000000e+00> : vector<5x128xf32>
    %276 = tpu.matmul %273, %275, %cst_126 {dimension_numbers = #tpu.dot_dimension_numbers<[1], [0], [0], [1], [0, 0, 1, 1], [], []>} : vector<5x32xbf16>, vector<32x128xbf16>, vector<5x128xf32> -> vector<5x128xf32>
    %277 = vector.extract_strided_slice %251 {offsets = [0, 32], sizes = [5, 32], strides = [1, 1]} : vector<5x128xf32> to vector<5x32xf32>
    %278 = arith.truncf %277 : vector<5x32xf32> to vector<5x32xbf16>
    %279 = vector.extract_strided_slice %252 {offsets = [0, 32], sizes = [5, 32], strides = [1, 1]} : vector<5x128xf32> to vector<5x32xf32>
    %280 = arith.truncf %279 : vector<5x32xf32> to vector<5x32xbf16>
    %281 = vector.extract_strided_slice %253 {offsets = [0, 32], sizes = [5, 32], strides = [1, 1]} : vector<5x128xf32> to vector<5x32xf32>
    %282 = arith.truncf %281 : vector<5x32xf32> to vector<5x32xbf16>
    %cst_127 = arith.constant dense<0.000000e+00> : vector<5x5xf32>
    %283 = tpu.matmul %278, %280, %cst_127 {dimension_numbers = #tpu.dot_dimension_numbers<[1], [1], [0], [0], [0, 0, 1, 0], [], []>} : vector<5x32xbf16>, vector<5x32xbf16>, vector<5x5xf32> -> vector<5x5xf32>
    %cst_128 = arith.constant dense<0xFF800000> : vector<5xf32>
    %284 = vector.multi_reduction <maximumf>, %283, %cst_128 [1] : vector<5x5xf32> to vector<5xf32>
    %285 = vector.shape_cast %284 : vector<5xf32> to vector<5x1xf32>
    %286 = vector.broadcast %285 : vector<5x1xf32> to vector<5x5xf32>
    %287 = arith.subf %283, %286 : vector<5x5xf32>
    %288 = math.exp %287 : vector<5x5xf32>
    %cst_129 = arith.constant dense<0.000000e+00> : vector<5xf32>
    %289 = vector.multi_reduction <add>, %288, %cst_129 [1] : vector<5x5xf32> to vector<5xf32>
    %290 = vector.shape_cast %289 : vector<5xf32> to vector<5x1xf32>
    %291 = tpu.reciprocal %290 {approx = true} : vector<5x1xf32> -> vector<5x1xf32>
    %292 = vector.broadcast %291 : vector<5x1xf32> to vector<5x5xf32>
    %293 = arith.mulf %288, %292 : vector<5x5xf32>
    %294 = arith.truncf %293 : vector<5x5xf32> to vector<5x5xbf16>
    %cst_130 = arith.constant dense<0.000000e+00> : vector<5x32xf32>
    %295 = tpu.matmul %294, %282, %cst_130 {dimension_numbers = #tpu.dot_dimension_numbers<[1], [0], [0], [1], [0, 0, 1, 1], [], []>} : vector<5x5xbf16>, vector<5x32xbf16>, vector<5x32xf32> -> vector<5x32xf32>
    %296 = arith.truncf %295 : vector<5x32xf32> to vector<5x32xbf16>
    %c1_131 = arith.constant 1 : index
    %c32_132 = arith.constant 32 : index
    %c0_133 = arith.constant 0 : index
    %297 = vector.load %arg10[%c1_131, %c32_132, %c0_133] : memref<2x128x128xbf16, #tpu.memory_space<vmem>>, vector<1x32x128xbf16>
    %298 = vector.shape_cast %297 : vector<1x32x128xbf16> to vector<32x128xbf16>
    %cst_134 = arith.constant dense<0.000000e+00> : vector<5x128xf32>
    %299 = tpu.matmul %296, %298, %cst_134 {dimension_numbers = #tpu.dot_dimension_numbers<[1], [0], [0], [1], [0, 0, 1, 1], [], []>} : vector<5x32xbf16>, vector<32x128xbf16>, vector<5x128xf32> -> vector<5x128xf32>
    %300 = arith.addf %276, %299 : vector<5x128xf32>
    %301 = vector.extract_strided_slice %251 {offsets = [0, 64], sizes = [5, 32], strides = [1, 1]} : vector<5x128xf32> to vector<5x32xf32>
    %302 = arith.truncf %301 : vector<5x32xf32> to vector<5x32xbf16>
    %303 = vector.extract_strided_slice %252 {offsets = [0, 64], sizes = [5, 32], strides = [1, 1]} : vector<5x128xf32> to vector<5x32xf32>
    %304 = arith.truncf %303 : vector<5x32xf32> to vector<5x32xbf16>
    %305 = vector.extract_strided_slice %253 {offsets = [0, 64], sizes = [5, 32], strides = [1, 1]} : vector<5x128xf32> to vector<5x32xf32>
    %306 = arith.truncf %305 : vector<5x32xf32> to vector<5x32xbf16>
    %cst_135 = arith.constant dense<0.000000e+00> : vector<5x5xf32>
    %307 = tpu.matmul %302, %304, %cst_135 {dimension_numbers = #tpu.dot_dimension_numbers<[1], [1], [0], [0], [0, 0, 1, 0], [], []>} : vector<5x32xbf16>, vector<5x32xbf16>, vector<5x5xf32> -> vector<5x5xf32>
    %cst_136 = arith.constant dense<0xFF800000> : vector<5xf32>
    %308 = vector.multi_reduction <maximumf>, %307, %cst_136 [1] : vector<5x5xf32> to vector<5xf32>
    %309 = vector.shape_cast %308 : vector<5xf32> to vector<5x1xf32>
    %310 = vector.broadcast %309 : vector<5x1xf32> to vector<5x5xf32>
    %311 = arith.subf %307, %310 : vector<5x5xf32>
    %312 = math.exp %311 : vector<5x5xf32>
    %cst_137 = arith.constant dense<0.000000e+00> : vector<5xf32>
    %313 = vector.multi_reduction <add>, %312, %cst_137 [1] : vector<5x5xf32> to vector<5xf32>
    %314 = vector.shape_cast %313 : vector<5xf32> to vector<5x1xf32>
    %315 = tpu.reciprocal %314 {approx = true} : vector<5x1xf32> -> vector<5x1xf32>
    %316 = vector.broadcast %315 : vector<5x1xf32> to vector<5x5xf32>
    %317 = arith.mulf %312, %316 : vector<5x5xf32>
    %318 = arith.truncf %317 : vector<5x5xf32> to vector<5x5xbf16>
    %cst_138 = arith.constant dense<0.000000e+00> : vector<5x32xf32>
    %319 = tpu.matmul %318, %306, %cst_138 {dimension_numbers = #tpu.dot_dimension_numbers<[1], [0], [0], [1], [0, 0, 1, 1], [], []>} : vector<5x5xbf16>, vector<5x32xbf16>, vector<5x32xf32> -> vector<5x32xf32>
    %320 = arith.truncf %319 : vector<5x32xf32> to vector<5x32xbf16>
    %c1_139 = arith.constant 1 : index
    %c64_140 = arith.constant 64 : index
    %c0_141 = arith.constant 0 : index
    %321 = vector.load %arg10[%c1_139, %c64_140, %c0_141] : memref<2x128x128xbf16, #tpu.memory_space<vmem>>, vector<1x32x128xbf16>
    %322 = vector.shape_cast %321 : vector<1x32x128xbf16> to vector<32x128xbf16>
    %cst_142 = arith.constant dense<0.000000e+00> : vector<5x128xf32>
    %323 = tpu.matmul %320, %322, %cst_142 {dimension_numbers = #tpu.dot_dimension_numbers<[1], [0], [0], [1], [0, 0, 1, 1], [], []>} : vector<5x32xbf16>, vector<32x128xbf16>, vector<5x128xf32> -> vector<5x128xf32>
    %324 = arith.addf %300, %323 : vector<5x128xf32>
    %325 = vector.extract_strided_slice %251 {offsets = [0, 96], sizes = [5, 32], strides = [1, 1]} : vector<5x128xf32> to vector<5x32xf32>
    %326 = arith.truncf %325 : vector<5x32xf32> to vector<5x32xbf16>
    %327 = vector.extract_strided_slice %252 {offsets = [0, 96], sizes = [5, 32], strides = [1, 1]} : vector<5x128xf32> to vector<5x32xf32>
    %328 = arith.truncf %327 : vector<5x32xf32> to vector<5x32xbf16>
    %329 = vector.extract_strided_slice %253 {offsets = [0, 96], sizes = [5, 32], strides = [1, 1]} : vector<5x128xf32> to vector<5x32xf32>
    %330 = arith.truncf %329 : vector<5x32xf32> to vector<5x32xbf16>
    %cst_143 = arith.constant dense<0.000000e+00> : vector<5x5xf32>
    %331 = tpu.matmul %326, %328, %cst_143 {dimension_numbers = #tpu.dot_dimension_numbers<[1], [1], [0], [0], [0, 0, 1, 0], [], []>} : vector<5x32xbf16>, vector<5x32xbf16>, vector<5x5xf32> -> vector<5x5xf32>
    %cst_144 = arith.constant dense<0xFF800000> : vector<5xf32>
    %332 = vector.multi_reduction <maximumf>, %331, %cst_144 [1] : vector<5x5xf32> to vector<5xf32>
    %333 = vector.shape_cast %332 : vector<5xf32> to vector<5x1xf32>
    %334 = vector.broadcast %333 : vector<5x1xf32> to vector<5x5xf32>
    %335 = arith.subf %331, %334 : vector<5x5xf32>
    %336 = math.exp %335 : vector<5x5xf32>
    %cst_145 = arith.constant dense<0.000000e+00> : vector<5xf32>
    %337 = vector.multi_reduction <add>, %336, %cst_145 [1] : vector<5x5xf32> to vector<5xf32>
    %338 = vector.shape_cast %337 : vector<5xf32> to vector<5x1xf32>
    %339 = tpu.reciprocal %338 {approx = true} : vector<5x1xf32> -> vector<5x1xf32>
    %340 = vector.broadcast %339 : vector<5x1xf32> to vector<5x5xf32>
    %341 = arith.mulf %336, %340 : vector<5x5xf32>
    %342 = arith.truncf %341 : vector<5x5xf32> to vector<5x5xbf16>
    %cst_146 = arith.constant dense<0.000000e+00> : vector<5x32xf32>
    %343 = tpu.matmul %342, %330, %cst_146 {dimension_numbers = #tpu.dot_dimension_numbers<[1], [0], [0], [1], [0, 0, 1, 1], [], []>} : vector<5x5xbf16>, vector<5x32xbf16>, vector<5x32xf32> -> vector<5x32xf32>
    %344 = arith.truncf %343 : vector<5x32xf32> to vector<5x32xbf16>
    %c1_147 = arith.constant 1 : index
    %c96_148 = arith.constant 96 : index
    %c0_149 = arith.constant 0 : index
    %345 = vector.load %arg10[%c1_147, %c96_148, %c0_149] : memref<2x128x128xbf16, #tpu.memory_space<vmem>>, vector<1x32x128xbf16>
    %346 = vector.shape_cast %345 : vector<1x32x128xbf16> to vector<32x128xbf16>
    %cst_150 = arith.constant dense<0.000000e+00> : vector<5x128xf32>
    %347 = tpu.matmul %344, %346, %cst_150 {dimension_numbers = #tpu.dot_dimension_numbers<[1], [0], [0], [1], [0, 0, 1, 1], [], []>} : vector<5x32xbf16>, vector<32x128xbf16>, vector<5x128xf32> -> vector<5x128xf32>
    %348 = arith.addf %324, %347 : vector<5x128xf32>
    %c1_151 = arith.constant 1 : index
    %c0_152 = arith.constant 0 : index
    %c0_153 = arith.constant 0 : index
    %349 = vector.load %arg12[%c1_151, %c0_152, %c0_153] : memref<2x1x128xf32, #tpu.memory_space<vmem>>, vector<1x1x128xf32>
    %350 = vector.shape_cast %349 : vector<1x1x128xf32> to vector<1x128xf32>
    %c1_154 = arith.constant 1 : index
    %c0_155 = arith.constant 0 : index
    %c0_156 = arith.constant 0 : index
    %351 = vector.load %arg11[%c1_154, %c0_155, %c0_156] : memref<2x1x128xf32, #tpu.memory_space<vmem>>, vector<1x1x128xf32>
    %352 = vector.shape_cast %351 : vector<1x1x128xf32> to vector<1x128xf32>
    %353 = vector.broadcast %352 : vector<1x128xf32> to vector<5x128xf32>
    %354 = arith.addf %348, %353 : vector<5x128xf32>
    %355 = vector.broadcast %350 : vector<1x128xf32> to vector<5x128xf32>
    %356 = arith.mulf %355, %354 : vector<5x128xf32>
    %357 = arith.addf %214, %356 : vector<5x128xf32>
    %c1_157 = arith.constant 1 : index
    %c0_158 = arith.constant 0 : index
    %c0_159 = arith.constant 0 : index
    %358 = vector.load %arg13[%c1_157, %c0_158, %c0_159] : memref<2x1x128xf32, #tpu.memory_space<vmem>>, vector<1x1x128xf32>
    %359 = vector.shape_cast %358 : vector<1x1x128xf32> to vector<1x128xf32>
    %c1_160 = arith.constant 1 : index
    %c0_161 = arith.constant 0 : index
    %c0_162 = arith.constant 0 : index
    %360 = vector.load %arg14[%c1_160, %c0_161, %c0_162] : memref<2x1x128xf32, #tpu.memory_space<vmem>>, vector<1x1x128xf32>
    %361 = vector.shape_cast %360 : vector<1x1x128xf32> to vector<1x128xf32>
    %cst_163 = arith.constant dense<0.000000e+00> : vector<5xf32>
    %362 = vector.multi_reduction <add>, %357, %cst_163 [1] : vector<5x128xf32> to vector<5xf32>
    %363 = vector.shape_cast %362 : vector<5xf32> to vector<5x1xf32>
    %cst_164 = arith.constant 1.280000e+02 : f32
    %364 = vector.broadcast %cst_164 : f32 to vector<5x1xf32>
    %365 = arith.divf %363, %364 : vector<5x1xf32>
    %366 = vector.broadcast %365 : vector<5x1xf32> to vector<5x128xf32>
    %367 = arith.subf %357, %366 : vector<5x128xf32>
    %368 = arith.mulf %367, %367 : vector<5x128xf32>
    %cst_165 = arith.constant dense<0.000000e+00> : vector<5xf32>
    %369 = vector.multi_reduction <add>, %368, %cst_165 [1] : vector<5x128xf32> to vector<5xf32>
    %370 = vector.shape_cast %369 : vector<5xf32> to vector<5x1xf32>
    %cst_166 = arith.constant 1.280000e+02 : f32
    %371 = vector.broadcast %cst_166 : f32 to vector<5x1xf32>
    %372 = arith.divf %370, %371 : vector<5x1xf32>
    %373 = vector.broadcast %365 : vector<5x1xf32> to vector<5x128xf32>
    %374 = arith.subf %357, %373 : vector<5x128xf32>
    %cst_167 = arith.constant 9.99999997E-7 : f32
    %375 = vector.broadcast %cst_167 : f32 to vector<5x1xf32>
    %376 = arith.addf %372, %375 : vector<5x1xf32>
    %377 = math.rsqrt %376 : vector<5x1xf32>
    %378 = vector.broadcast %377 : vector<5x1xf32> to vector<5x128xf32>
    %379 = arith.mulf %374, %378 : vector<5x128xf32>
    %380 = vector.broadcast %359 : vector<1x128xf32> to vector<5x128xf32>
    %381 = arith.mulf %379, %380 : vector<5x128xf32>
    %382 = vector.broadcast %361 : vector<1x128xf32> to vector<5x128xf32>
    %383 = arith.addf %381, %382 : vector<5x128xf32>
    %c1_168 = arith.constant 1 : index
    %c0_169 = arith.constant 0 : index
    %c0_170 = arith.constant 0 : index
    %384 = vector.load %arg15[%c1_168, %c0_169, %c0_170] : memref<2x128x512xbf16, #tpu.memory_space<vmem>>, vector<1x128x512xbf16>
    %385 = vector.shape_cast %384 : vector<1x128x512xbf16> to vector<128x512xbf16>
    %c1_171 = arith.constant 1 : index
    %c0_172 = arith.constant 0 : index
    %c0_173 = arith.constant 0 : index
    %386 = vector.load %arg16[%c1_171, %c0_172, %c0_173] : memref<2x1x512xf32, #tpu.memory_space<vmem>>, vector<1x1x512xf32>
    %387 = vector.shape_cast %386 : vector<1x1x512xf32> to vector<1x512xf32>
    %388 = arith.truncf %383 : vector<5x128xf32> to vector<5x128xbf16>
    %cst_174 = arith.constant dense<0.000000e+00> : vector<5x512xf32>
    %389 = tpu.matmul %388, %385, %cst_174 {dimension_numbers = #tpu.dot_dimension_numbers<[1], [0], [0], [1], [0, 0, 1, 1], [], []>} : vector<5x128xbf16>, vector<128x512xbf16>, vector<5x512xf32> -> vector<5x512xf32>
    %390 = vector.broadcast %387 : vector<1x512xf32> to vector<5x512xf32>
    %391 = arith.addf %389, %390 : vector<5x512xf32>
    %cst_175 = arith.constant 5.000000e-01 : f32
    %392 = vector.broadcast %cst_175 : f32 to vector<5x512xf32>
    %393 = arith.mulf %392, %391 : vector<5x512xf32>
    %cst_176 = arith.constant 1.41421354 : f32
    %394 = vector.broadcast %cst_176 : f32 to vector<5x512xf32>
    %395 = arith.divf %391, %394 : vector<5x512xf32>
    %396 = math.erf %395 : vector<5x512xf32>
    %cst_177 = arith.constant 1.000000e+00 : f32
    %397 = vector.broadcast %cst_177 : f32 to vector<5x512xf32>
    %398 = arith.addf %397, %396 : vector<5x512xf32>
    %399 = arith.mulf %393, %398 : vector<5x512xf32>
    %c1_178 = arith.constant 1 : index
    %c0_179 = arith.constant 0 : index
    %c0_180 = arith.constant 0 : index
    %400 = vector.load %arg19[%c1_178, %c0_179, %c0_180] : memref<2x1x128xf32, #tpu.memory_space<vmem>>, vector<1x1x128xf32>
    %401 = vector.shape_cast %400 : vector<1x1x128xf32> to vector<1x128xf32>
    %c1_181 = arith.constant 1 : index
    %c0_182 = arith.constant 0 : index
    %c0_183 = arith.constant 0 : index
    %402 = vector.load %arg17[%c1_181, %c0_182, %c0_183] : memref<2x512x128xbf16, #tpu.memory_space<vmem>>, vector<1x512x128xbf16>
    %403 = vector.shape_cast %402 : vector<1x512x128xbf16> to vector<512x128xbf16>
    %c1_184 = arith.constant 1 : index
    %c0_185 = arith.constant 0 : index
    %c0_186 = arith.constant 0 : index
    %404 = vector.load %arg18[%c1_184, %c0_185, %c0_186] : memref<2x1x128xf32, #tpu.memory_space<vmem>>, vector<1x1x128xf32>
    %405 = vector.shape_cast %404 : vector<1x1x128xf32> to vector<1x128xf32>
    %406 = arith.truncf %399 : vector<5x512xf32> to vector<5x512xbf16>
    %cst_187 = arith.constant dense<0.000000e+00> : vector<5x128xf32>
    %407 = tpu.matmul %406, %403, %cst_187 {dimension_numbers = #tpu.dot_dimension_numbers<[1], [0], [0], [1], [0, 0, 1, 1], [], []>} : vector<5x512xbf16>, vector<512x128xbf16>, vector<5x128xf32> -> vector<5x128xf32>
    %408 = vector.broadcast %405 : vector<1x128xf32> to vector<5x128xf32>
    %409 = arith.addf %407, %408 : vector<5x128xf32>
    %410 = vector.broadcast %401 : vector<1x128xf32> to vector<5x128xf32>
    %411 = arith.mulf %410, %409 : vector<5x128xf32>
    %412 = arith.addf %357, %411 : vector<5x128xf32>
    %c0_188 = arith.constant 0 : index
    %c0_189 = arith.constant 0 : index
    %413 = vector.load %arg20[%c0_188, %c0_189] : memref<1x128xf32, #tpu.memory_space<vmem>>, vector<1x128xf32>
    %c0_190 = arith.constant 0 : index
    %c0_191 = arith.constant 0 : index
    %414 = vector.load %arg21[%c0_190, %c0_191] : memref<1x128xf32, #tpu.memory_space<vmem>>, vector<1x128xf32>
    %cst_192 = arith.constant dense<0.000000e+00> : vector<5xf32>
    %415 = vector.multi_reduction <add>, %412, %cst_192 [1] : vector<5x128xf32> to vector<5xf32>
    %416 = vector.shape_cast %415 : vector<5xf32> to vector<5x1xf32>
    %cst_193 = arith.constant 1.280000e+02 : f32
    %417 = vector.broadcast %cst_193 : f32 to vector<5x1xf32>
    %418 = arith.divf %416, %417 : vector<5x1xf32>
    %419 = vector.broadcast %418 : vector<5x1xf32> to vector<5x128xf32>
    %420 = arith.subf %412, %419 : vector<5x128xf32>
    %421 = arith.mulf %420, %420 : vector<5x128xf32>
    %cst_194 = arith.constant dense<0.000000e+00> : vector<5xf32>
    %422 = vector.multi_reduction <add>, %421, %cst_194 [1] : vector<5x128xf32> to vector<5xf32>
    %423 = vector.shape_cast %422 : vector<5xf32> to vector<5x1xf32>
    %cst_195 = arith.constant 1.280000e+02 : f32
    %424 = vector.broadcast %cst_195 : f32 to vector<5x1xf32>
    %425 = arith.divf %423, %424 : vector<5x1xf32>
    %426 = vector.broadcast %418 : vector<5x1xf32> to vector<5x128xf32>
    %427 = arith.subf %412, %426 : vector<5x128xf32>
    %cst_196 = arith.constant 9.99999997E-7 : f32
    %428 = vector.broadcast %cst_196 : f32 to vector<5x1xf32>
    %429 = arith.addf %425, %428 : vector<5x1xf32>
    %430 = math.rsqrt %429 : vector<5x1xf32>
    %431 = vector.broadcast %430 : vector<5x1xf32> to vector<5x128xf32>
    %432 = arith.mulf %427, %431 : vector<5x128xf32>
    %433 = vector.broadcast %413 : vector<1x128xf32> to vector<5x128xf32>
    %434 = arith.mulf %432, %433 : vector<5x128xf32>
    %435 = vector.broadcast %414 : vector<1x128xf32> to vector<5x128xf32>
    %436 = arith.addf %434, %435 : vector<5x128xf32>
    %cst_197 = arith.constant dense<0.000000e+00> : vector<128xf32>
    %437 = vector.multi_reduction <add>, %436, %cst_197 [0] : vector<5x128xf32> to vector<128xf32>
    %438 = vector.shape_cast %437 : vector<128xf32> to vector<1x128xf32>
    %cst_198 = arith.constant 5.000000e+00 : f32
    %439 = vector.broadcast %cst_198 : f32 to vector<1x128xf32>
    %440 = arith.divf %438, %439 : vector<1x128xf32>
    %c0_199 = arith.constant 0 : index
    %c0_200 = arith.constant 0 : index
    %441 = vector.load %arg22[%c0_199, %c0_200] : memref<128x256xbf16, #tpu.memory_space<vmem>>, vector<128x256xbf16>
    %c0_201 = arith.constant 0 : index
    %c0_202 = arith.constant 0 : index
    %442 = vector.load %arg23[%c0_201, %c0_202] : memref<1x256xf32, #tpu.memory_space<vmem>>, vector<1x256xf32>
    %443 = arith.truncf %440 : vector<1x128xf32> to vector<1x128xbf16>
    %cst_203 = arith.constant dense<0.000000e+00> : vector<1x256xf32>
    %444 = tpu.matmul %443, %441, %cst_203 {dimension_numbers = #tpu.dot_dimension_numbers<[1], [0], [0], [1], [0, 0, 1, 1], [], []>} : vector<1x128xbf16>, vector<128x256xbf16>, vector<1x256xf32> -> vector<1x256xf32>
    %445 = arith.addf %444, %442 : vector<1x256xf32>
    %cst_204 = arith.constant 5.000000e-01 : f32
    %446 = vector.broadcast %cst_204 : f32 to vector<1x256xf32>
    %447 = arith.mulf %446, %445 : vector<1x256xf32>
    %cst_205 = arith.constant 1.41421354 : f32
    %448 = vector.broadcast %cst_205 : f32 to vector<1x256xf32>
    %449 = arith.divf %445, %448 : vector<1x256xf32>
    %450 = math.erf %449 : vector<1x256xf32>
    %cst_206 = arith.constant 1.000000e+00 : f32
    %451 = vector.broadcast %cst_206 : f32 to vector<1x256xf32>
    %452 = arith.addf %451, %450 : vector<1x256xf32>
    %453 = arith.mulf %447, %452 : vector<1x256xf32>
    %c0_207 = arith.constant 0 : index
    %c0_208 = arith.constant 0 : index
    %454 = vector.load %arg24[%c0_207, %c0_208] : memref<256x256xbf16, #tpu.memory_space<vmem>>, vector<256x256xbf16>
    %c0_209 = arith.constant 0 : index
    %c0_210 = arith.constant 0 : index
    %455 = vector.load %arg25[%c0_209, %c0_210] : memref<1x256xf32, #tpu.memory_space<vmem>>, vector<1x256xf32>
    %456 = arith.truncf %453 : vector<1x256xf32> to vector<1x256xbf16>
    %cst_211 = arith.constant dense<0.000000e+00> : vector<1x256xf32>
    %457 = tpu.matmul %456, %454, %cst_211 {dimension_numbers = #tpu.dot_dimension_numbers<[1], [0], [0], [1], [0, 0, 1, 1], [], []>} : vector<1x256xbf16>, vector<256x256xbf16>, vector<1x256xf32> -> vector<1x256xf32>
    %458 = arith.addf %457, %455 : vector<1x256xf32>
    %cst_212 = arith.constant 5.000000e-01 : f32
    %459 = vector.broadcast %cst_212 : f32 to vector<1x256xf32>
    %460 = arith.mulf %459, %458 : vector<1x256xf32>
    %cst_213 = arith.constant 1.41421354 : f32
    %461 = vector.broadcast %cst_213 : f32 to vector<1x256xf32>
    %462 = arith.divf %458, %461 : vector<1x256xf32>
    %463 = math.erf %462 : vector<1x256xf32>
    %cst_214 = arith.constant 1.000000e+00 : f32
    %464 = vector.broadcast %cst_214 : f32 to vector<1x256xf32>
    %465 = arith.addf %464, %463 : vector<1x256xf32>
    %466 = arith.mulf %460, %465 : vector<1x256xf32>
    %c0_215 = arith.constant 0 : index
    %c0_216 = arith.constant 0 : index
    %467 = vector.load %arg26[%c0_215, %c0_216] : memref<256x128xbf16, #tpu.memory_space<vmem>>, vector<256x128xbf16>
    %c0_217 = arith.constant 0 : index
    %c0_218 = arith.constant 0 : index
    %468 = vector.load %arg27[%c0_217, %c0_218] : memref<1x128xf32, #tpu.memory_space<vmem>>, vector<1x128xf32>
    %469 = arith.truncf %466 : vector<1x256xf32> to vector<1x256xbf16>
    %cst_219 = arith.constant dense<0.000000e+00> : vector<1x128xf32>
    %470 = tpu.matmul %469, %467, %cst_219 {dimension_numbers = #tpu.dot_dimension_numbers<[1], [0], [0], [1], [0, 0, 1, 1], [], []>} : vector<1x256xbf16>, vector<256x128xbf16>, vector<1x128xf32> -> vector<1x128xf32>
    %471 = arith.addf %470, %468 : vector<1x128xf32>
    %472 = arith.mulf %471, %471 : vector<1x128xf32>
    %cst_220 = arith.constant dense<0.000000e+00> : vector<1xf32>
    %473 = vector.multi_reduction <add>, %472, %cst_220 [1] : vector<1x128xf32> to vector<1xf32>
    %474 = vector.shape_cast %473 : vector<1xf32> to vector<1x1xf32>
    %475 = math.sqrt %474 : vector<1x1xf32>
    %cst_221 = arith.constant 9.99999996E-13 : f32
    %476 = vector.broadcast %cst_221 : f32 to vector<1x1xf32>
    %477 = arith.maximumf %475, %476 : vector<1x1xf32>
    %478 = vector.broadcast %477 : vector<1x1xf32> to vector<1x128xf32>
    %479 = arith.divf %471, %478 : vector<1x128xf32>
    %c0_222 = arith.constant 0 : index
    %c0_223 = arith.constant 0 : index
    %480 = vector.load %arg28[%c0_222, %c0_223] : memref<128x128xbf16, #tpu.memory_space<vmem>>, vector<128x128xbf16>
    %481 = arith.truncf %479 : vector<1x128xf32> to vector<1x128xbf16>
    %cst_224 = arith.constant dense<0.000000e+00> : vector<1x128xf32>
    %482 = tpu.matmul %481, %480, %cst_224 {dimension_numbers = #tpu.dot_dimension_numbers<[1], [0], [0], [1], [0, 0, 1, 1], [], []>} : vector<1x128xbf16>, vector<128x128xbf16>, vector<1x128xf32> -> vector<1x128xf32>
    %c0_225 = arith.constant 0 : index
    %c0_226 = arith.constant 0 : index
    %c0_227 = arith.constant 0 : index
    %483 = vector.load %arg29[%c0_225, %c0_226, %c0_227] : memref<1x1x128xf32, #tpu.memory_space<vmem>>, vector<1x1x128xf32>
    %484 = vector.shape_cast %483 : vector<1x1x128xf32> to vector<1x128xf32>
    %485 = vector.shape_cast %482 : vector<1x128xf32> to vector<1x1x128xf32>
    tpu.vector_store %arg29[%c0_225, %c0_226, %c0_227], %485 {strides = array<i32>} : memref<1x1x128xf32, #tpu.memory_space<vmem>>, vector<1x1x128xf32>,
    return
  }
  func.func @transform_0(%arg0: i32) -> (i32, i32, i32) {
    %c0_i32 = arith.constant 0 : i32
    %c0_i32_0 = arith.constant 0 : i32
    %c0_i32_1 = arith.constant 0 : i32
    return %arg0, %c0_i32, %c0_i32_0 : i32, i32, i32
  }
  func.func @transform_1(%arg0: i32) -> (i32, i32) {
    %c0_i32 = arith.constant 0 : i32
    %c0_i32_0 = arith.constant 0 : i32
    %c0_i32_1 = arith.constant 0 : i32
    return %c0_i32, %c0_i32_0 : i32, i32
  }
  func.func @transform_2(%arg0: i32) -> (i32, i32) {
    %c0_i32 = arith.constant 0 : i32
    %c0_i32_0 = arith.constant 0 : i32
    %c0_i32_1 = arith.constant 0 : i32
    return %c0_i32, %c0_i32_0 : i32, i32
  }
  func.func @transform_3(%arg0: i32) -> (i32, i32) {
    %c0_i32 = arith.constant 0 : i32
    %c0_i32_0 = arith.constant 0 : i32
    %c0_i32_1 = arith.constant 0 : i32
    return %c0_i32, %c0_i32_0 : i32, i32
  }
  func.func @transform_4(%arg0: i32) -> (i32, i32) {
    %c0_i32 = arith.constant 0 : i32
    %c0_i32_0 = arith.constant 0 : i32
    %c0_i32_1 = arith.constant 0 : i32
    return %c0_i32, %c0_i32_0 : i32, i32
  }
  func.func @transform_5(%arg0: i32) -> (i32, i32, i32) {
    %c0_i32 = arith.constant 0 : i32
    %c0_i32_0 = arith.constant 0 : i32
    %c0_i32_1 = arith.constant 0 : i32
    %c0_i32_2 = arith.constant 0 : i32
    return %c0_i32, %c0_i32_0, %c0_i32_1 : i32, i32, i32
  }
  func.func @transform_6(%arg0: i32) -> (i32, i32, i32) {
    %c0_i32 = arith.constant 0 : i32
    %c0_i32_0 = arith.constant 0 : i32
    %c0_i32_1 = arith.constant 0 : i32
    %c0_i32_2 = arith.constant 0 : i32
    return %c0_i32, %c0_i32_0, %c0_i32_1 : i32, i32, i32
  }
  func.func @transform_7(%arg0: i32) -> (i32, i32, i32) {
    %c0_i32 = arith.constant 0 : i32
    %c0_i32_0 = arith.constant 0 : i32
    %c0_i32_1 = arith.constant 0 : i32
    %c0_i32_2 = arith.constant 0 : i32
    return %c0_i32, %c0_i32_0, %c0_i32_1 : i32, i32, i32
  }
  func.func @transform_8(%arg0: i32) -> (i32, i32, i32) {
    %c0_i32 = arith.constant 0 : i32
    %c0_i32_0 = arith.constant 0 : i32
    %c0_i32_1 = arith.constant 0 : i32
    %c0_i32_2 = arith.constant 0 : i32
    return %c0_i32, %c0_i32_0, %c0_i32_1 : i32, i32, i32
  }
  func.func @transform_9(%arg0: i32) -> (i32, i32, i32) {
    %c0_i32 = arith.constant 0 : i32
    %c0_i32_0 = arith.constant 0 : i32
    %c0_i32_1 = arith.constant 0 : i32
    %c0_i32_2 = arith.constant 0 : i32
    return %c0_i32, %c0_i32_0, %c0_i32_1 : i32, i32, i32
  }
  func.func @transform_10(%arg0: i32) -> (i32, i32, i32) {
    %c0_i32 = arith.constant 0 : i32
    %c0_i32_0 = arith.constant 0 : i32
    %c0_i32_1 = arith.constant 0 : i32
    %c0_i32_2 = arith.constant 0 : i32
    return %c0_i32, %c0_i32_0, %c0_i32_1 : i32, i32, i32
  }
  func.func @transform_11(%arg0: i32) -> (i32, i32, i32) {
    %c0_i32 = arith.constant 0 : i32
    %c0_i32_0 = arith.constant 0 : i32
    %c0_i32_1 = arith.constant 0 : i32
    %c0_i32_2 = arith.constant 0 : i32
    return %c0_i32, %c0_i32_0, %c0_i32_1 : i32, i32, i32
  }
  func.func @transform_12(%arg0: i32) -> (i32, i32, i32) {
    %c0_i32 = arith.constant 0 : i32
    %c0_i32_0 = arith.constant 0 : i32
    %c0_i32_1 = arith.constant 0 : i32
    %c0_i32_2 = arith.constant 0 : i32
    return %c0_i32, %c0_i32_0, %c0_i32_1 : i32, i32, i32
  }
  func.func @transform_13(%arg0: i32) -> (i32, i32, i32) {
    %c0_i32 = arith.constant 0 : i32
    %c0_i32_0 = arith.constant 0 : i32
    %c0_i32_1 = arith.constant 0 : i32
    %c0_i32_2 = arith.constant 0 : i32
    return %c0_i32, %c0_i32_0, %c0_i32_1 : i32, i32, i32
  }
  func.func @transform_14(%arg0: i32) -> (i32, i32, i32) {
    %c0_i32 = arith.constant 0 : i32
    %c0_i32_0 = arith.constant 0 : i32
    %c0_i32_1 = arith.constant 0 : i32
    %c0_i32_2 = arith.constant 0 : i32
    return %c0_i32, %c0_i32_0, %c0_i32_1 : i32, i32, i32
  }
  func.func @transform_15(%arg0: i32) -> (i32, i32, i32) {
    %c0_i32 = arith.constant 0 : i32
    %c0_i32_0 = arith.constant 0 : i32
    %c0_i32_1 = arith.constant 0 : i32
    %c0_i32_2 = arith.constant 0 : i32
    return %c0_i32, %c0_i32_0, %c0_i32_1 : i32, i32, i32
  }
  func.func @transform_16(%arg0: i32) -> (i32, i32, i32) {
    %c0_i32 = arith.constant 0 : i32
    %c0_i32_0 = arith.constant 0 : i32
    %c0_i32_1 = arith.constant 0 : i32
    %c0_i32_2 = arith.constant 0 : i32
    return %c0_i32, %c0_i32_0, %c0_i32_1 : i32, i32, i32
  }
  func.func @transform_17(%arg0: i32) -> (i32, i32, i32) {
    %c0_i32 = arith.constant 0 : i32
    %c0_i32_0 = arith.constant 0 : i32
    %c0_i32_1 = arith.constant 0 : i32
    %c0_i32_2 = arith.constant 0 : i32
    return %c0_i32, %c0_i32_0, %c0_i32_1 : i32, i32, i32
  }
  func.func @transform_18(%arg0: i32) -> (i32, i32, i32) {
    %c0_i32 = arith.constant 0 : i32
    %c0_i32_0 = arith.constant 0 : i32
    %c0_i32_1 = arith.constant 0 : i32
    %c0_i32_2 = arith.constant 0 : i32
    return %c0_i32, %c0_i32_0, %c0_i32_1 : i32, i32, i32
  }
  func.func @transform_19(%arg0: i32) -> (i32, i32) {
    %c0_i32 = arith.constant 0 : i32
    %c0_i32_0 = arith.constant 0 : i32
    %c0_i32_1 = arith.constant 0 : i32
    return %c0_i32, %c0_i32_0 : i32, i32
  }
  func.func @transform_20(%arg0: i32) -> (i32, i32) {
    %c0_i32 = arith.constant 0 : i32
    %c0_i32_0 = arith.constant 0 : i32
    %c0_i32_1 = arith.constant 0 : i32
    return %c0_i32, %c0_i32_0 : i32, i32
  }
  func.func @transform_21(%arg0: i32) -> (i32, i32) {
    %c0_i32 = arith.constant 0 : i32
    %c0_i32_0 = arith.constant 0 : i32
    %c0_i32_1 = arith.constant 0 : i32
    return %c0_i32, %c0_i32_0 : i32, i32
  }
  func.func @transform_22(%arg0: i32) -> (i32, i32) {
    %c0_i32 = arith.constant 0 : i32
    %c0_i32_0 = arith.constant 0 : i32
    %c0_i32_1 = arith.constant 0 : i32
    return %c0_i32, %c0_i32_0 : i32, i32
  }
  func.func @transform_23(%arg0: i32) -> (i32, i32) {
    %c0_i32 = arith.constant 0 : i32
    %c0_i32_0 = arith.constant 0 : i32
    %c0_i32_1 = arith.constant 0 : i32
    return %c0_i32, %c0_i32_0 : i32, i32
  }
  func.func @transform_24(%arg0: i32) -> (i32, i32) {
    %c0_i32 = arith.constant 0 : i32
    %c0_i32_0 = arith.constant 0 : i32
    %c0_i32_1 = arith.constant 0 : i32
    return %c0_i32, %c0_i32_0 : i32, i32
  }
  func.func @transform_25(%arg0: i32) -> (i32, i32) {
    %c0_i32 = arith.constant 0 : i32
    %c0_i32_0 = arith.constant 0 : i32
    %c0_i32_1 = arith.constant 0 : i32
    return %c0_i32, %c0_i32_0 : i32, i32
  }
  func.func @transform_26(%arg0: i32) -> (i32, i32) {
    %c0_i32 = arith.constant 0 : i32
    %c0_i32_0 = arith.constant 0 : i32
    %c0_i32_1 = arith.constant 0 : i32
    return %c0_i32, %c0_i32_0 : i32, i32
  }
  func.func @transform_27(%arg0: i32) -> (i32, i32) {
    %c0_i32 = arith.constant 0 : i32
    %c0_i32_0 = arith.constant 0 : i32
    %c0_i32_1 = arith.constant 0 : i32
    return %c0_i32, %c0_i32_0 : i32, i32
  }
  func.func @transform_28(%arg0: i32) -> (i32, i32, i32) {
    %c0_i32 = arith.constant 0 : i32
    %c0_i32_0 = arith.constant 0 : i32
    %c0_i32_1 = arith.constant 0 : i32
    return %arg0, %c0_i32, %c0_i32_0 : i32, i32, i32
  }
}

</mosaic_0001>

<llo_original>
// kernel: _lambda_.1
$region0: #{_lambda_.1}
  #allocation0 [shape = 'u32[]', space=smem, size = 0x4, offset = 0x4, fixed_abs, tag = 'smem constant byte address 0x4 - core index']
  #allocation1 [shape = 'u32[144,128]{1,0:T(1,128)}', space=vmem, size = 0x12000, scoped, tag = 'internal scratch']
  #allocation2 [shape = 'f32[5,128]{1,0:T(8,128)}', space=vmem, size = 0x1000, scoped, tag = 'scratch operand']
  %s0 = inlined_call_operand.vmem [shape: f32[2,4,640], index: 0, kind: input, shape index: {}]
  %s1 = inlined_call_operand.vmem [shape: bf16[640,128], index: 1, kind: input, shape index: {}]
  %s2 = inlined_call_operand.hbm [shape: f32[1,128], index: 2, kind: input, shape index: {}]
  %s3 = inlined_call_operand.hbm [shape: f32[1,128], index: 3, kind: input, shape index: {}]
  %s4 = inlined_call_operand.vmem [shape: f32[5,128], index: 4, kind: input, shape index: {}]
  %s5 = inlined_call_operand.vmem [shape: f32[2,1,128], index: 5, kind: input, shape index: {}]
  %s6 = inlined_call_operand.vmem [shape: f32[2,1,128], index: 6, kind: input, shape index: {}]
  %s7 = inlined_call_operand.vmem [shape: bf16[2,128,384], index: 7, kind: input, shape index: {}]
  %s8 = inlined_call_operand.hbm [shape: f32[2,1,384], index: 8, kind: input, shape index: {}]
  %s9 = inlined_call_operand.hbm [shape: bf16[2,128,128], index: 9, kind: input, shape index: {}]
  %s10 = inlined_call_operand.hbm [shape: f32[2,1,128], index: 10, kind: input, shape index: {}]
  %s11 = inlined_call_operand.hbm [shape: f32[2,1,128], index: 11, kind: input, shape index: {}]
  %s12 = inlined_call_operand.hbm [shape: f32[2,1,128], index: 12, kind: input, shape index: {}]
  %s13 = inlined_call_operand.hbm [shape: f32[2,1,128], index: 13, kind: input, shape index: {}]
  %s14 = inlined_call_operand.vmem [shape: bf16[2,128,512], index: 14, kind: input, shape index: {}]
  %s15 = inlined_call_operand.hbm [shape: f32[2,1,512], index: 15, kind: input, shape index: {}]
  %s16 = inlined_call_operand.vmem [shape: bf16[2,512,128], index: 16, kind: input, shape index: {}]
  %s17 = inlined_call_operand.hbm [shape: f32[2,1,128], index: 17, kind: input, shape index: {}]
  %s18 = inlined_call_operand.hbm [shape: f32[2,1,128], index: 18, kind: input, shape index: {}]
  %s19 = inlined_call_operand.hbm [shape: f32[1,128], index: 19, kind: input, shape index: {}]
  %s20 = inlined_call_operand.hbm [shape: f32[1,128], index: 20, kind: input, shape index: {}]
  %s21 = inlined_call_operand.hbm [shape: bf16[128,256], index: 21, kind: input, shape index: {}]
  %s22 = inlined_call_operand.hbm [shape: f32[1,256], index: 22, kind: input, shape index: {}]
  %s23 = inlined_call_operand.hbm [shape: bf16[256,256], index: 23, kind: input, shape index: {}]
  %s24 = inlined_call_operand.hbm [shape: f32[1,256], index: 24, kind: input, shape index: {}]
  %s25 = inlined_call_operand.hbm [shape: bf16[256,128], index: 25, kind: input, shape index: {}]
  %s26 = inlined_call_operand.hbm [shape: f32[1,128], index: 26, kind: input, shape index: {}]
  %s27 = inlined_call_operand.vmem [shape: bf16[128,128], index: 27, kind: input, shape index: {}]
  %s28 = inlined_call_operand.hbm [shape: f32[2,1,128], index: 28, kind: output, shape index: {}]
  %s29 = sld [smem:[#allocation0]]
  $region221: #{_lambda_.1} parent=0
    _
  %s31 = ssub.s32 1, %s29
  %s32 = scalar_select 0, %s31, %s29
  $region1: #{_lambda_.1} parent=0
    #allocation3 [shape = 'u8[512]{0}', space=vmem, size = 0x400, scoped, tag = 'input window, operand 2, single buffered']
    #allocation4 [shape = 's32[2]{0}', space=sflag, size = 0x8, scoped, tag = 'scoped memory for _lambda_.1']
    #allocation5 [shape = 's32[2]{0}', space=sflag, size = 0x8, scoped, tag = 'scoped memory for _lambda_.1']
    #allocation6 [shape = 'u8[512]{0}', space=vmem, size = 0x400, scoped, tag = 'input window, operand 3, single buffered']
    #allocation7 [shape = 's32[1]{0}', space=sflag, size = 0x4, scoped, tag = 'scoped memory for _lambda_.1']
    #allocation8 [shape = 'u8[3072]{0}', space=vmem, size = 0xc00, scoped, tag = 'input window, operand 8, single buffered']
    #allocation9 [shape = 'u8[65536]{0}', space=vmem, size = 0x10000, scoped, tag = 'input window, operand 9, single buffered']
    #allocation10 [shape = 's32[1]{0}', space=sflag, size = 0x4, scoped, tag = 'scoped memory for _lambda_.1']
    #allocation11 [shape = 'u8[1024]{0}', space=vmem, size = 0x400, scoped, tag = 'input window, operand 10, single buffered']
    #allocation12 [shape = 'u8[1024]{0}', space=vmem, size = 0x400, scoped, tag = 'input window, operand 11, single buffered']
    #allocation13 [shape = 's32[1]{0}', space=sflag, size = 0x4, scoped, tag = 'scoped memory for _lambda_.1']
    #allocation14 [shape = 'u8[1024]{0}', space=vmem, size = 0x400, scoped, tag = 'input window, operand 12, single buffered']
    #allocation15 [shape = 'u8[1024]{0}', space=vmem, size = 0x400, scoped, tag = 'input window, operand 13, single buffered']
    #allocation16 [shape = 's32[1]{0}', space=sflag, size = 0x4, scoped, tag = 'scoped memory for _lambda_.1']
    #allocation17 [shape = 'u8[4096]{0}', space=vmem, size = 0x1000, scoped, tag = 'input window, operand 15, single buffered']
    #allocation18 [shape = 'u8[1024]{0}', space=vmem, size = 0x400, scoped, tag = 'input window, operand 17, single buffered']
    #allocation19 [shape = 's32[1]{0}', space=sflag, size = 0x4, scoped, tag = 'scoped memory for _lambda_.1']
    #allocation20 [shape = 'u8[1024]{0}', space=vmem, size = 0x400, scoped, tag = 'input window, operand 18, single buffered']
    #allocation21 [shape = 'u8[512]{0}', space=vmem, size = 0x400, scoped, tag = 'input window, operand 19, single buffered']
    #allocation22 [shape = 's32[1]{0}', space=sflag, size = 0x4, scoped, tag = 'scoped memory for _lambda_.1']
    #allocation23 [shape = 'u8[512]{0}', space=vmem, size = 0x400, scoped, tag = 'input window, operand 20, single buffered']
    #allocation24 [shape = 'u8[65536]{0}', space=vmem, size = 0x10000, scoped, tag = 'input window, operand 21, single buffered']
    #allocation25 [shape = 's32[1]{0}', space=sflag, size = 0x4, scoped, tag = 'scoped memory for _lambda_.1']
    #allocation26 [shape = 'u8[1024]{0}', space=vmem, size = 0x400, scoped, tag = 'input window, operand 22, single buffered']
    #allocation27 [shape = 'u8[131072]{0}', space=vmem, size = 0x20000, scoped, tag = 'input window, operand 23, single buffered']
    #allocation28 [shape = 's32[1]{0}', space=sflag, size = 0x4, scoped, tag = 'scoped memory for _lambda_.1']
    #allocation29 [shape = 'u8[1024]{0}', space=vmem, size = 0x400, scoped, tag = 'input window, operand 24, single buffered']
    #allocation30 [shape = 'u8[65536]{0}', space=vmem, size = 0x10000, scoped, tag = 'input window, operand 25, single buffered']
    #allocation31 [shape = 's32[1]{0}', space=sflag, size = 0x4, scoped, tag = 'scoped memory for _lambda_.1']
    #allocation32 [shape = 'u8[512]{0}', space=vmem, size = 0x400, scoped, tag = 'input window, operand 26, single buffered']
    #allocation33 [shape = 'u8[1024]{0}', space=vmem, size = 0x400, scoped, tag = 'output window, operand 0']
    %33 = vsyncpa [#allocation4], 0
    %34 = vsyncpa [#allocation7], 0
    %35 = vsyncpa [#allocation10], 0
    %36 = vsyncpa [#allocation13], 0
    %37 = vsyncpa [#allocation16], 0
    %38 = vsyncpa [#allocation19], 0
    %39 = vsyncpa [#allocation22], 0
    %40 = vsyncpa [#allocation25], 0
    %41 = vsyncpa [#allocation28], 0
    %42 = vsyncpa [#allocation31], 0
    %43 = vsyncpa [#allocation5], 0
    %s44 = scalar_lea.sflag [#allocation5], 1
    %45 = vsyncpa %s44, 0
    loop: start=0, step=1, limit=4
    $region2: #{_lambda_.1} parent=1 // loop_pre_header
      _
    $region3: #{_lambda_.1} parent=1 // loop_header
      %s47 = sphi 0, %s51
      %p48 = scmp.ge.s32.totalorder %s47, 4
      %s57 = sphi 0, %s59
      %s60 = sphi 0, %s57
      %s61 = sphi 0, %s60
      %s77 = sphi 0, %s61
      %s81 = sphi 0, %s81
      %s83 = sphi 0, %s81
      %s84 = sphi 0, %s83
      %s98 = sphi 0, %s84
      %s102 = sphi 0, %s102
      %s104 = sphi 0, %s102
      %s105 = sphi 0, %s104
      %s119 = sphi 0, %s105
      %s123 = sphi 0, %s123
      %s125 = sphi 0, %s123
      %s126 = sphi 0, %s125
      %s140 = sphi 0, %s126
      %s144 = sphi 0, %s144
      %s146 = sphi 0, %s144
      %s147 = sphi 0, %s146
      %s161 = sphi 0, %s147
      %s165 = sphi 0, %s165
      %s167 = sphi 0, %s165
      %s168 = sphi 0, %s167
      %s182 = sphi 0, %s168
      %s186 = sphi 0, %s186
      %s188 = sphi 0, %s186
      %s189 = sphi 0, %s188
      %s203 = sphi 0, %s189
      %s207 = sphi 0, %s207
      %s209 = sphi 0, %s207
      %s210 = sphi 0, %s209
      %s224 = sphi 0, %s210
      %s228 = sphi 0, %s228
      %s230 = sphi 0, %s228
      %s231 = sphi 0, %s230
      %s245 = sphi 0, %s231
      %s249 = sphi 0, %s249
      %s251 = sphi 0, %s249
      %s252 = sphi 0, %s251
      %s266 = sphi 0, %s252
      %s270 = sphi 0, %s270
      %s272 = sphi 0, %s270
      %s273 = sphi 0, %s272
      %s287 = sphi 0, %s273
      %s291 = sphi 0, %s291
      %s293 = sphi 0, %s291
      %s294 = sphi 0, %s293
      %s308 = sphi 0, %s294
      %s312 = sphi 0, %s312
      %s314 = sphi 0, %s312
      %s315 = sphi 0, %s314
      %s329 = sphi 0, %s315
      %s333 = sphi 0, %s333
      %s335 = sphi 0, %s333
      %s336 = sphi 0, %s335
      %s350 = sphi 0, %s336
      %s354 = sphi 0, %s354
      %s356 = sphi 0, %s354
      %s357 = sphi 0, %s356
      %s371 = sphi 0, %s357
      %s375 = sphi 0, %s375
      %s377 = sphi 0, %s375
      %s378 = sphi 0, %s377
      %s392 = sphi 0, %s378
      %s396 = sphi 0, %s396
      %s398 = sphi 0, %s396
      %s399 = sphi 0, %s398
      %s413 = sphi 0, %s399
      %s417 = sphi 0, %s417
      %s419 = sphi 0, %s417
      %s420 = sphi 0, %s419
      %s434 = sphi 0, %s420
      %s438 = sphi 0, %s438
      %s440 = sphi 0, %s438
      %s441 = sphi 0, %s440
      %s455 = sphi 0, %s441
      %s459 = sphi 0, %s459
      %s461 = sphi 0, %s459
      %s462 = sphi 0, %s461
      %s476 = sphi 0, %s462
      %s480 = sphi 0, %s480
      %s482 = sphi 0, %s480
      %s483 = sphi 0, %s482
      %s497 = sphi 0, %s483
      %s501 = sphi 0, %s501
      %s503 = sphi 0, %s501
      %s504 = sphi 0, %s503
      %s518 = sphi 0, %s504
      %s522 = sphi 0, %s522
      %s524 = sphi 0, %s522
      %s525 = sphi 0, %s524
      %s539 = sphi 0, %s525
      %s543 = sphi 0, %s543
      %s545 = sphi 0, %s543
      %s546 = sphi 0, %s545
      %s560 = sphi 0, %s546
      %s564 = sphi 0, %s564
      %s566 = sphi 0, %s564
      %s567 = sphi 0, %s566
      %s581 = sphi 0, %s567
      %s585 = sphi 0, %s585
      %s587 = sphi 0, %s585
      %s588 = sphi 0, %s587
      %s602 = sphi 0, %s588
      %s606 = sphi 0, %s606
      %s608 = sphi 0, %s606
      %s609 = sphi 0, %s608
      %s623 = sphi 0, %s609
      %s627 = sphi 0, %s627
      %s629 = sphi 0, %s627
      %s630 = sphi 0, %s629
      %s644 = sphi 0, %s630
      %s650 = sphi 0, %s652
      %s653 = sphi 0, %s650
      %s654 = sphi 0, %s653
      %s670 = sphi 0, %s654
    $region4: #{_lambda_.1} parent=1 // loop_header_branch
      %50 = sbr.rel (%p48) target = $region8
    $region5: #{_lambda_.1} parent=1 // loop_body
      %s52 = ssub.s32 %s47, 1
      %s53 = ssub.s32 %s47, 2
      %s54 = sadd.s32 %s47, 1
      %s55 = ssub.s32 %s47, %s54
      %p56 = scmp.eq.s32.totalorder %s55, 0
      %s58 = sadd.s32 %s57, 1
      %s59 = scalar_select %p56, %s57, %s58
      %p62 = pneg %p56
      %p63 = scmp.eq.s32.totalorder %s47, 1
      %p64 = por %p62, %p63
      %p65 = scmp.ne.s32.totalorder %s57, %s60
      %p66 = scmp.eq.s32.totalorder %s47, 0
      %p67 = por %p65, %p66
      %p68 = scmp.ne.s32.totalorder %s57, %s60
      %p69 = scmp.eq.s32.totalorder %s52, 1
      %p70 = por %p68, %p69
      %p71 = scmp.ne.s32.totalorder %s60, %s61
      %p72 = scmp.eq.s32.totalorder %s52, 0
      %p73 = por %p71, %p72
      %p74 = scmp.ne.s32.totalorder %s60, %s61
      %p75 = scmp.eq.s32.totalorder %s53, 1
      %p76 = por %p74, %p75
      %p78 = scmp.ne.s32.totalorder %s61, %s77
      %p79 = scmp.eq.s32.totalorder %s53, 0
      %p80 = por %p78, %p79
      %s82 = sadd.s32 %s81, 1
      %p85 = scmp.eq.s32.totalorder %s47, 1
      %p86 = scmp.ne.s32.totalorder %s81, %s83
      %p87 = scmp.eq.s32.totalorder %s47, 0
      %p88 = por %p86, %p87
      %p89 = scmp.ne.s32.totalorder %s81, %s83
      %p90 = scmp.eq.s32.totalorder %s52, 1
      %p91 = por %p89, %p90
      %p92 = scmp.ne.s32.totalorder %s83, %s84
      %p93 = scmp.eq.s32.totalorder %s52, 0
      %p94 = por %p92, %p93
      %p95 = scmp.ne.s32.totalorder %s83, %s84
      %p96 = scmp.eq.s32.totalorder %s53, 1
      %p97 = por %p95, %p96
      %p99 = scmp.ne.s32.totalorder %s84, %s98
      %p100 = scmp.eq.s32.totalorder %s53, 0
      %p101 = por %p99, %p100
      %s103 = sadd.s32 %s102, 1
      %p106 = scmp.eq.s32.totalorder %s47, 1
      %p107 = scmp.ne.s32.totalorder %s102, %s104
      %p108 = scmp.eq.s32.totalorder %s47, 0
      %p109 = por %p107, %p108
      %p110 = scmp.ne.s32.totalorder %s102, %s104
      %p111 = scmp.eq.s32.totalorder %s52, 1
      %p112 = por %p110, %p111
      %p113 = scmp.ne.s32.totalorder %s104, %s105
      %p114 = scmp.eq.s32.totalorder %s52, 0
      %p115 = por %p113, %p114
      %p116 = scmp.ne.s32.totalorder %s104, %s105
      %p117 = scmp.eq.s32.totalorder %s53, 1
      %p118 = por %p116, %p117
      %p120 = scmp.ne.s32.totalorder %s105, %s119
      %p121 = scmp.eq.s32.totalorder %s53, 0
      %p122 = por %p120, %p121
      %s124 = sadd.s32 %s123, 1
      %p127 = scmp.eq.s32.totalorder %s47, 1
      %p128 = scmp.ne.s32.totalorder %s123, %s125
      %p129 = scmp.eq.s32.totalorder %s47, 0
      %p130 = por %p128, %p129
      %p131 = scmp.ne.s32.totalorder %s123, %s125
      %p132 = scmp.eq.s32.totalorder %s52, 1
      %p133 = por %p131, %p132
      %p134 = scmp.ne.s32.totalorder %s125, %s126
      %p135 = scmp.eq.s32.totalorder %s52, 0
      %p136 = por %p134, %p135
      %p137 = scmp.ne.s32.totalorder %s125, %s126
      %p138 = scmp.eq.s32.totalorder %s53, 1
      %p139 = por %p137, %p138
      %p141 = scmp.ne.s32.totalorder %s126, %s140
      %p142 = scmp.eq.s32.totalorder %s53, 0
      %p143 = por %p141, %p142
      %s145 = sadd.s32 %s144, 1
      %p148 = scmp.eq.s32.totalorder %s47, 1
      %p149 = scmp.ne.s32.totalorder %s144, %s146
      %p150 = scmp.eq.s32.totalorder %s47, 0
      %p151 = por %p149, %p150
      %p152 = scmp.ne.s32.totalorder %s144, %s146
      %p153 = scmp.eq.s32.totalorder %s52, 1
      %p154 = por %p152, %p153
      %p155 = scmp.ne.s32.totalorder %s146, %s147
      %p156 = scmp.eq.s32.totalorder %s52, 0
      %p157 = por %p155, %p156
      %p158 = scmp.ne.s32.totalorder %s146, %s147
      %p159 = scmp.eq.s32.totalorder %s53, 1
      %p160 = por %p158, %p159
      %p162 = scmp.ne.s32.totalorder %s147, %s161
      %p163 = scmp.eq.s32.totalorder %s53, 0
      %p164 = por %p162, %p163
      %s166 = sadd.s32 %s165, 1
      %p169 = scmp.eq.s32.totalorder %s47, 1
      %p170 = scmp.ne.s32.totalorder %s165, %s167
      %p171 = scmp.eq.s32.totalorder %s47, 0
      %p172 = por %p170, %p171
      %p173 = scmp.ne.s32.totalorder %s165, %s167
      %p174 = scmp.eq.s32.totalorder %s52, 1
      %p175 = por %p173, %p174
      %p176 = scmp.ne.s32.totalorder %s167, %s168
      %p177 = scmp.eq.s32.totalorder %s52, 0
      %p178 = por %p176, %p177
      %p179 = scmp.ne.s32.totalorder %s167, %s168
      %p180 = scmp.eq.s32.totalorder %s53, 1
      %p181 = por %p179, %p180
      %p183 = scmp.ne.s32.totalorder %s168, %s182
      %p184 = scmp.eq.s32.totalorder %s53, 0
      %p185 = por %p183, %p184
      %s187 = sadd.s32 %s186, 1
      %p190 = scmp.eq.s32.totalorder %s47, 1
      %p191 = scmp.ne.s32.totalorder %s186, %s188
      %p192 = scmp.eq.s32.totalorder %s47, 0
      %p193 = por %p191, %p192
      %p194 = scmp.ne.s32.totalorder %s186, %s188
      %p195 = scmp.eq.s32.totalorder %s52, 1
      %p196 = por %p194, %p195
      %p197 = scmp.ne.s32.totalorder %s188, %s189
      %p198 = scmp.eq.s32.totalorder %s52, 0
      %p199 = por %p197, %p198
      %p200 = scmp.ne.s32.totalorder %s188, %s189
      %p201 = scmp.eq.s32.totalorder %s53, 1
      %p202 = por %p200, %p201
      %p204 = scmp.ne.s32.totalorder %s189, %s203
      %p205 = scmp.eq.s32.totalorder %s53, 0
      %p206 = por %p204, %p205
      %s208 = sadd.s32 %s207, 1
      %p211 = scmp.eq.s32.totalorder %s47, 1
      %p212 = scmp.ne.s32.totalorder %s207, %s209
      %p213 = scmp.eq.s32.totalorder %s47, 0
      %p214 = por %p212, %p213
      %p215 = scmp.ne.s32.totalorder %s207, %s209
      %p216 = scmp.eq.s32.totalorder %s52, 1
      %p217 = por %p215, %p216
      %p218 = scmp.ne.s32.totalorder %s209, %s210
      %p219 = scmp.eq.s32.totalorder %s52, 0
      %p220 = por %p218, %p219
      %p221 = scmp.ne.s32.totalorder %s209, %s210
      %p222 = scmp.eq.s32.totalorder %s53, 1
      %p223 = por %p221, %p222
      %p225 = scmp.ne.s32.totalorder %s210, %s224
      %p226 = scmp.eq.s32.totalorder %s53, 0
      %p227 = por %p225, %p226
      %s229 = sadd.s32 %s228, 1
      %p232 = scmp.eq.s32.totalorder %s47, 1
      %p233 = scmp.ne.s32.totalorder %s228, %s230
      %p234 = scmp.eq.s32.totalorder %s47, 0
      %p235 = por %p233, %p234
      %p236 = scmp.ne.s32.totalorder %s228, %s230
      %p237 = scmp.eq.s32.totalorder %s52, 1
      %p238 = por %p236, %p237
      %p239 = scmp.ne.s32.totalorder %s230, %s231
      %p240 = scmp.eq.s32.totalorder %s52, 0
      %p241 = por %p239, %p240
      %p242 = scmp.ne.s32.totalorder %s230, %s231
      %p243 = scmp.eq.s32.totalorder %s53, 1
      %p244 = por %p242, %p243
      %p246 = scmp.ne.s32.totalorder %s231, %s245
      %p247 = scmp.eq.s32.totalorder %s53, 0
      %p248 = por %p246, %p247
      %s250 = sadd.s32 %s249, 1
      %p253 = scmp.eq.s32.totalorder %s47, 1
      %p254 = scmp.ne.s32.totalorder %s249, %s251
      %p255 = scmp.eq.s32.totalorder %s47, 0
      %p256 = por %p254, %p255
      %p257 = scmp.ne.s32.totalorder %s249, %s251
      %p258 = scmp.eq.s32.totalorder %s52, 1
      %p259 = por %p257, %p258
      %p260 = scmp.ne.s32.totalorder %s251, %s252
      %p261 = scmp.eq.s32.totalorder %s52, 0
      %p262 = por %p260, %p261
      %p263 = scmp.ne.s32.totalorder %s251, %s252
      %p264 = scmp.eq.s32.totalorder %s53, 1
      %p265 = por %p263, %p264
      %p267 = scmp.ne.s32.totalorder %s252, %s266
      %p268 = scmp.eq.s32.totalorder %s53, 0
      %p269 = por %p267, %p268
      %s271 = sadd.s32 %s270, 1
      %p274 = scmp.eq.s32.totalorder %s47, 1
      %p275 = scmp.ne.s32.totalorder %s270, %s272
      %p276 = scmp.eq.s32.totalorder %s47, 0
      %p277 = por %p275, %p276
      %p278 = scmp.ne.s32.totalorder %s270, %s272
      %p279 = scmp.eq.s32.totalorder %s52, 1
      %p280 = por %p278, %p279
      %p281 = scmp.ne.s32.totalorder %s272, %s273
      %p282 = scmp.eq.s32.totalorder %s52, 0
      %p283 = por %p281, %p282
      %p284 = scmp.ne.s32.totalorder %s272, %s273
      %p285 = scmp.eq.s32.totalorder %s53, 1
      %p286 = por %p284, %p285
      %p288 = scmp.ne.s32.totalorder %s273, %s287
      %p289 = scmp.eq.s32.totalorder %s53, 0
      %p290 = por %p288, %p289
      %s292 = sadd.s32 %s291, 1
      %p295 = scmp.eq.s32.totalorder %s47, 1
      %p296 = scmp.ne.s32.totalorder %s291, %s293
      %p297 = scmp.eq.s32.totalorder %s47, 0
      %p298 = por %p296, %p297
      %p299 = scmp.ne.s32.totalorder %s291, %s293
      %p300 = scmp.eq.s32.totalorder %s52, 1
      %p301 = por %p299, %p300
      %p302 = scmp.ne.s32.totalorder %s293, %s294
      %p303 = scmp.eq.s32.totalorder %s52, 0
      %p304 = por %p302, %p303
      %p305 = scmp.ne.s32.totalorder %s293, %s294
      %p306 = scmp.eq.s32.totalorder %s53, 1
      %p307 = por %p305, %p306
      %p309 = scmp.ne.s32.totalorder %s294, %s308
      %p310 = scmp.eq.s32.totalorder %s53, 0
      %p311 = por %p309, %p310
      %s313 = sadd.s32 %s312, 1
      %p316 = scmp.eq.s32.totalorder %s47, 1
      %p317 = scmp.ne.s32.totalorder %s312, %s314
      %p318 = scmp.eq.s32.totalorder %s47, 0
      %p319 = por %p317, %p318
      %p320 = scmp.ne.s32.totalorder %s312, %s314
      %p321 = scmp.eq.s32.totalorder %s52, 1
      %p322 = por %p320, %p321
      %p323 = scmp.ne.s32.totalorder %s314, %s315
      %p324 = scmp.eq.s32.totalorder %s52, 0
      %p325 = por %p323, %p324
      %p326 = scmp.ne.s32.totalorder %s314, %s315
      %p327 = scmp.eq.s32.totalorder %s53, 1
      %p328 = por %p326, %p327
      %p330 = scmp.ne.s32.totalorder %s315, %s329
      %p331 = scmp.eq.s32.totalorder %s53, 0
      %p332 = por %p330, %p331
      %s334 = sadd.s32 %s333, 1
      %p337 = scmp.eq.s32.totalorder %s47, 1
      %p338 = scmp.ne.s32.totalorder %s333, %s335
      %p339 = scmp.eq.s32.totalorder %s47, 0
      %p340 = por %p338, %p339
      %p341 = scmp.ne.s32.totalorder %s333, %s335
      %p342 = scmp.eq.s32.totalorder %s52, 1
      %p343 = por %p341, %p342
      %p344 = scmp.ne.s32.totalorder %s335, %s336
      %p345 = scmp.eq.s32.totalorder %s52, 0
      %p346 = por %p344, %p345
      %p347 = scmp.ne.s32.totalorder %s335, %s336
      %p348 = scmp.eq.s32.totalorder %s53, 1
      %p349 = por %p347, %p348
      %p351 = scmp.ne.s32.totalorder %s336, %s350
      %p352 = scmp.eq.s32.totalorder %s53, 0
      %p353 = por %p351, %p352
      %s355 = sadd.s32 %s354, 1
      %p358 = scmp.eq.s32.totalorder %s47, 1
      %p359 = scmp.ne.s32.totalorder %s354, %s356
      %p360 = scmp.eq.s32.totalorder %s47, 0
      %p361 = por %p359, %p360
      %p362 = scmp.ne.s32.totalorder %s354, %s356
      %p363 = scmp.eq.s32.totalorder %s52, 1
      %p364 = por %p362, %p363
      %p365 = scmp.ne.s32.totalorder %s356, %s357
      %p366 = scmp.eq.s32.totalorder %s52, 0
      %p367 = por %p365, %p366
      %p368 = scmp.ne.s32.totalorder %s356, %s357
      %p369 = scmp.eq.s32.totalorder %s53, 1
      %p370 = por %p368, %p369
      %p372 = scmp.ne.s32.totalorder %s357, %s371
      %p373 = scmp.eq.s32.totalorder %s53, 0
      %p374 = por %p372, %p373
      %s376 = sadd.s32 %s375, 1
      %p379 = scmp.eq.s32.totalorder %s47, 1
      %p380 = scmp.ne.s32.totalorder %s375, %s377
      %p381 = scmp.eq.s32.totalorder %s47, 0
      %p382 = por %p380, %p381
      %p383 = scmp.ne.s32.totalorder %s375, %s377
      %p384 = scmp.eq.s32.totalorder %s52, 1
      %p385 = por %p383, %p384
      %p386 = scmp.ne.s32.totalorder %s377, %s378
      %p387 = scmp.eq.s32.totalorder %s52, 0
      %p388 = por %p386, %p387
      %p389 = scmp.ne.s32.totalorder %s377, %s378
      %p390 = scmp.eq.s32.totalorder %s53, 1
      %p391 = por %p389, %p390
      %p393 = scmp.ne.s32.totalorder %s378, %s392
      %p394 = scmp.eq.s32.totalorder %s53, 0
      %p395 = por %p393, %p394
      %s397 = sadd.s32 %s396, 1
      %p400 = scmp.eq.s32.totalorder %s47, 1
      %p401 = scmp.ne.s32.totalorder %s396, %s398
      %p402 = scmp.eq.s32.totalorder %s47, 0
      %p403 = por %p401, %p402
      %p404 = scmp.ne.s32.totalorder %s396, %s398
      %p405 = scmp.eq.s32.totalorder %s52, 1
      %p406 = por %p404, %p405
      %p407 = scmp.ne.s32.totalorder %s398, %s399
      %p408 = scmp.eq.s32.totalorder %s52, 0
      %p409 = por %p407, %p408
      %p410 = scmp.ne.s32.totalorder %s398, %s399
      %p411 = scmp.eq.s32.totalorder %s53, 1
      %p412 = por %p410, %p411
      %p414 = scmp.ne.s32.totalorder %s399, %s413
      %p415 = scmp.eq.s32.totalorder %s53, 0
      %p416 = por %p414, %p415
      %s418 = sadd.s32 %s417, 1
      %p421 = scmp.eq.s32.totalorder %s47, 1
      %p422 = scmp.ne.s32.totalorder %s417, %s419
      %p423 = scmp.eq.s32.totalorder %s47, 0
      %p424 = por %p422, %p423
      %p425 = scmp.ne.s32.totalorder %s417, %s419
      %p426 = scmp.eq.s32.totalorder %s52, 1
      %p427 = por %p425, %p426
      %p428 = scmp.ne.s32.totalorder %s419, %s420
      %p429 = scmp.eq.s32.totalorder %s52, 0
      %p430 = por %p428, %p429
      %p431 = scmp.ne.s32.totalorder %s419, %s420
      %p432 = scmp.eq.s32.totalorder %s53, 1
      %p433 = por %p431, %p432
      %p435 = scmp.ne.s32.totalorder %s420, %s434
      %p436 = scmp.eq.s32.totalorder %s53, 0
      %p437 = por %p435, %p436
      %s439 = sadd.s32 %s438, 1
      %p442 = scmp.eq.s32.totalorder %s47, 1
      %p443 = scmp.ne.s32.totalorder %s438, %s440
      %p444 = scmp.eq.s32.totalorder %s47, 0
      %p445 = por %p443, %p444
      %p446 = scmp.ne.s32.totalorder %s438, %s440
      %p447 = scmp.eq.s32.totalorder %s52, 1
      %p448 = por %p446, %p447
      %p449 = scmp.ne.s32.totalorder %s440, %s441
      %p450 = scmp.eq.s32.totalorder %s52, 0
      %p451 = por %p449, %p450
      %p452 = scmp.ne.s32.totalorder %s440, %s441
      %p453 = scmp.eq.s32.totalorder %s53, 1
      %p454 = por %p452, %p453
      %p456 = scmp.ne.s32.totalorder %s441, %s455
      %p457 = scmp.eq.s32.totalorder %s53, 0
      %p458 = por %p456, %p457
      %s460 = sadd.s32 %s459, 1
      %p463 = scmp.eq.s32.totalorder %s47, 1
      %p464 = scmp.ne.s32.totalorder %s459, %s461
      %p465 = scmp.eq.s32.totalorder %s47, 0
      %p466 = por %p464, %p465
      %p467 = scmp.ne.s32.totalorder %s459, %s461
      %p468 = scmp.eq.s32.totalorder %s52, 1
      %p469 = por %p467, %p468
      %p470 = scmp.ne.s32.totalorder %s461, %s462
      %p471 = scmp.eq.s32.totalorder %s52, 0
      %p472 = por %p470, %p471
      %p473 = scmp.ne.s32.totalorder %s461, %s462
      %p474 = scmp.eq.s32.totalorder %s53, 1
      %p475 = por %p473, %p474
      %p477 = scmp.ne.s32.totalorder %s462, %s476
      %p478 = scmp.eq.s32.totalorder %s53, 0
      %p479 = por %p477, %p478
      %s481 = sadd.s32 %s480, 1
      %p484 = scmp.eq.s32.totalorder %s47, 1
      %p485 = scmp.ne.s32.totalorder %s480, %s482
      %p486 = scmp.eq.s32.totalorder %s47, 0
      %p487 = por %p485, %p486
      %p488 = scmp.ne.s32.totalorder %s480, %s482
      %p489 = scmp.eq.s32.totalorder %s52, 1
      %p490 = por %p488, %p489
      %p491 = scmp.ne.s32.totalorder %s482, %s483
      %p492 = scmp.eq.s32.totalorder %s52, 0
      %p493 = por %p491, %p492
      %p494 = scmp.ne.s32.totalorder %s482, %s483
      %p495 = scmp.eq.s32.totalorder %s53, 1
      %p496 = por %p494, %p495
      %p498 = scmp.ne.s32.totalorder %s483, %s497
      %p499 = scmp.eq.s32.totalorder %s53, 0
      %p500 = por %p498, %p499
      %s502 = sadd.s32 %s501, 1
      %p505 = scmp.eq.s32.totalorder %s47, 1
      %p506 = scmp.ne.s32.totalorder %s501, %s503
      %p507 = scmp.eq.s32.totalorder %s47, 0
      %p508 = por %p506, %p507
      %p509 = scmp.ne.s32.totalorder %s501, %s503
      %p510 = scmp.eq.s32.totalorder %s52, 1
      %p511 = por %p509, %p510
      %p512 = scmp.ne.s32.totalorder %s503, %s504
      %p513 = scmp.eq.s32.totalorder %s52, 0
      %p514 = por %p512, %p513
      %p515 = scmp.ne.s32.totalorder %s503, %s504
      %p516 = scmp.eq.s32.totalorder %s53, 1
      %p517 = por %p515, %p516
      %p519 = scmp.ne.s32.totalorder %s504, %s518
      %p520 = scmp.eq.s32.totalorder %s53, 0
      %p521 = por %p519, %p520
      %s523 = sadd.s32 %s522, 1
      %p526 = scmp.eq.s32.totalorder %s47, 1
      %p527 = scmp.ne.s32.totalorder %s522, %s524
      %p528 = scmp.eq.s32.totalorder %s47, 0
      %p529 = por %p527, %p528
      %p530 = scmp.ne.s32.totalorder %s522, %s524
      %p531 = scmp.eq.s32.totalorder %s52, 1
      %p532 = por %p530, %p531
      %p533 = scmp.ne.s32.totalorder %s524, %s525
      %p534 = scmp.eq.s32.totalorder %s52, 0
      %p535 = por %p533, %p534
      %p536 = scmp.ne.s32.totalorder %s524, %s525
      %p537 = scmp.eq.s32.totalorder %s53, 1
      %p538 = por %p536, %p537
      %p540 = scmp.ne.s32.totalorder %s525, %s539
      %p541 = scmp.eq.s32.totalorder %s53, 0
      %p542 = por %p540, %p541
      %s544 = sadd.s32 %s543, 1
      %p547 = scmp.eq.s32.totalorder %s47, 1
      %p548 = scmp.ne.s32.totalorder %s543, %s545
      %p549 = scmp.eq.s32.totalorder %s47, 0
      %p550 = por %p548, %p549
      %p551 = scmp.ne.s32.totalorder %s543, %s545
      %p552 = scmp.eq.s32.totalorder %s52, 1
      %p553 = por %p551, %p552
      %p554 = scmp.ne.s32.totalorder %s545, %s546
      %p555 = scmp.eq.s32.totalorder %s52, 0
      %p556 = por %p554, %p555
      %p557 = scmp.ne.s32.totalorder %s545, %s546
      %p558 = scmp.eq.s32.totalorder %s53, 1
      %p559 = por %p557, %p558
      %p561 = scmp.ne.s32.totalorder %s546, %s560
      %p562 = scmp.eq.s32.totalorder %s53, 0
      %p563 = por %p561, %p562
      %s565 = sadd.s32 %s564, 1
      %p568 = scmp.eq.s32.totalorder %s47, 1
      %p569 = scmp.ne.s32.totalorder %s564, %s566
      %p570 = scmp.eq.s32.totalorder %s47, 0
      %p571 = por %p569, %p570
      %p572 = scmp.ne.s32.totalorder %s564, %s566
      %p573 = scmp.eq.s32.totalorder %s52, 1
      %p574 = por %p572, %p573
      %p575 = scmp.ne.s32.totalorder %s566, %s567
      %p576 = scmp.eq.s32.totalorder %s52, 0
      %p577 = por %p575, %p576
      %p578 = scmp.ne.s32.totalorder %s566, %s567
      %p579 = scmp.eq.s32.totalorder %s53, 1
      %p580 = por %p578, %p579
      %p582 = scmp.ne.s32.totalorder %s567, %s581
      %p583 = scmp.eq.s32.totalorder %s53, 0
      %p584 = por %p582, %p583
      %s586 = sadd.s32 %s585, 1
      %p589 = scmp.eq.s32.totalorder %s47, 1
      %p590 = scmp.ne.s32.totalorder %s585, %s587
      %p591 = scmp.eq.s32.totalorder %s47, 0
      %p592 = por %p590, %p591
      %p593 = scmp.ne.s32.totalorder %s585, %s587
      %p594 = scmp.eq.s32.totalorder %s52, 1
      %p595 = por %p593, %p594
      %p596 = scmp.ne.s32.totalorder %s587, %s588
      %p597 = scmp.eq.s32.totalorder %s52, 0
      %p598 = por %p596, %p597
      %p599 = scmp.ne.s32.totalorder %s587, %s588
      %p600 = scmp.eq.s32.totalorder %s53, 1
      %p601 = por %p599, %p600
      %p603 = scmp.ne.s32.totalorder %s588, %s602
      %p604 = scmp.eq.s32.totalorder %s53, 0
      %p605 = por %p603, %p604
      %s607 = sadd.s32 %s606, 1
      %p610 = scmp.eq.s32.totalorder %s47, 1
      %p611 = scmp.ne.s32.totalorder %s606, %s608
      %p612 = scmp.eq.s32.totalorder %s47, 0
      %p613 = por %p611, %p612
      %p614 = scmp.ne.s32.totalorder %s606, %s608
      %p615 = scmp.eq.s32.totalorder %s52, 1
      %p616 = por %p614, %p615
      %p617 = scmp.ne.s32.totalorder %s608, %s609
      %p618 = scmp.eq.s32.totalorder %s52, 0
      %p619 = por %p617, %p618
      %p620 = scmp.ne.s32.totalorder %s608, %s609
      %p621 = scmp.eq.s32.totalorder %s53, 1
      %p622 = por %p620, %p621
      %p624 = scmp.ne.s32.totalorder %s609, %s623
      %p625 = scmp.eq.s32.totalorder %s53, 0
      %p626 = por %p624, %p625
      %s628 = sadd.s32 %s627, 1
      %p631 = scmp.eq.s32.totalorder %s47, 1
      %p632 = scmp.ne.s32.totalorder %s627, %s629
      %p633 = scmp.eq.s32.totalorder %s47, 0
      %p634 = por %p632, %p633
      %p635 = scmp.ne.s32.totalorder %s627, %s629
      %p636 = scmp.eq.s32.totalorder %s52, 1
      %p637 = por %p635, %p636
      %p638 = scmp.ne.s32.totalorder %s629, %s630
      %p639 = scmp.eq.s32.totalorder %s52, 0
      %p640 = por %p638, %p639
      %p641 = scmp.ne.s32.totalorder %s629, %s630
      %p642 = scmp.eq.s32.totalorder %s53, 1
      %p643 = por %p641, %p642
      %p645 = scmp.ne.s32.totalorder %s630, %s644
      %p646 = scmp.eq.s32.totalorder %s53, 0
      %p647 = por %p645, %p646
      %s648 = ssub.s32 %s47, %s54
      %p649 = scmp.eq.s32.totalorder %s648, 0
      %s651 = sadd.s32 %s650, 1
      %s652 = scalar_select %p649, %s650, %s651
      %p655 = pneg %p649
      %p656 = scmp.eq.s32.totalorder %s47, 1
      %p657 = por %p655, %p656
      %p658 = scmp.ne.s32.totalorder %s650, %s653
      %p659 = scmp.eq.s32.totalorder %s47, 0
      %p660 = por %p658, %p659
      %p661 = scmp.ne.s32.totalorder %s650, %s653
      %p662 = scmp.eq.s32.totalorder %s52, 1
      %p663 = por %p661, %p662
      %p664 = scmp.ne.s32.totalorder %s653, %s654
      %p665 = scmp.eq.s32.totalorder %s52, 0
      %p666 = por %p664, %p665
      %p667 = scmp.ne.s32.totalorder %s653, %s654
      %p668 = scmp.eq.s32.totalorder %s53, 1
      %p669 = por %p667, %p668
      %p671 = scmp.ne.s32.totalorder %s654, %s670
      %p672 = scmp.eq.s32.totalorder %s53, 0
      %p673 = por %p671, %p672
      %p674 = scmp.le.s32.totalorder 1, %s47
      %p675 = scmp.lt.s32.totalorder %s47, 3
      %p676 = pnand %p674, %p675
      %p677 = pneg %p676
      // Predicated region
      $region9: #{_lambda_.1} parent=5 // pred_check
        _
      $region10: #{_lambda_.1} parent=5 // pred_check_branch
        %679 = sbr.rel (%p676) target = $region12
      $region11: #{_lambda_.1} parent=5 // pred_region
        %s680 = ssub.s32 %s47, 1
        // Predicated region
        $region13: #{_lambda_.1} parent=11 // pred_check
          %p681 = pneg %p94
        $region14: #{_lambda_.1} parent=11 // pred_check_branch
          %683 = sbr.rel (%p681) target = $region16
        $region15: #{_lambda_.1} parent=11 // pred_region
          _
        $region16: #{_lambda_.1} parent=11 // pred_fallthru
          _
        // Predicated region
        $region17: #{_lambda_.1} parent=11 // pred_check
          %p684 = pneg %p115
        $region18: #{_lambda_.1} parent=11 // pred_check_branch
          %686 = sbr.rel (%p684) target = $region20
        $region19: #{_lambda_.1} parent=11 // pred_region
          %s688 = ssub.s32 16, 16
          %689 = vsyncadd [#allocation4], %s688
          %s691 = sshll.u32 [#allocation3], 4
          %s692 = int_to_ptr.vmem [resolvable:$true] %s691
          %694 = dma.hbm_to_vmem [thread:$0]  %s2, 16, %s692, [#allocation4]
        $region20: #{_lambda_.1} parent=11 // pred_fallthru
          _
        // Predicated region
        $region21: #{_lambda_.1} parent=11 // pred_check
          %p695 = pneg %p136
        $region22: #{_lambda_.1} parent=11 // pred_check_branch
          %697 = sbr.rel (%p695) target = $region24
        $region23: #{_lambda_.1} parent=11 // pred_region
          %s699 = ssub.s32 16, 16
          %700 = vsyncadd [#allocation7], %s699
          %s702 = sshll.u32 [#allocation6], 4
          %s703 = int_to_ptr.vmem [resolvable:$true] %s702
          %705 = dma.hbm_to_vmem [thread:$0]  %s3, 16, %s703, [#allocation7]
        $region24: #{_lambda_.1} parent=11 // pred_fallthru
          _
        // Predicated region
        $region25: #{_lambda_.1} parent=11 // pred_check
          %p706 = pneg %p157
        $region26: #{_lambda_.1} parent=11 // pred_check_branch
          %708 = sbr.rel (%p706) target = $region28
        $region27: #{_lambda_.1} parent=11 // pred_region
          _
        $region28: #{_lambda_.1} parent=11 // pred_fallthru
          _
        // Predicated region
        $region29: #{_lambda_.1} parent=11 // pred_check
          %p709 = pneg %p178
        $region30: #{_lambda_.1} parent=11 // pred_check_branch
          %711 = sbr.rel (%p709) target = $region32
        $region31: #{_lambda_.1} parent=11 // pred_region
          _
        $region32: #{_lambda_.1} parent=11 // pred_fallthru
          _
        // Predicated region
        $region33: #{_lambda_.1} parent=11 // pred_check
          %p712 = pneg %p199
        $region34: #{_lambda_.1} parent=11 // pred_check_branch
          %714 = sbr.rel (%p712) target = $region36
        $region35: #{_lambda_.1} parent=11 // pred_region
          _
        $region36: #{_lambda_.1} parent=11 // pred_fallthru
          _
        // Predicated region
        $region37: #{_lambda_.1} parent=11 // pred_check
          %p715 = pneg %p220
        $region38: #{_lambda_.1} parent=11 // pred_check_branch
          %717 = sbr.rel (%p715) target = $region40
        $region39: #{_lambda_.1} parent=11 // pred_region
          _
        $region40: #{_lambda_.1} parent=11 // pred_fallthru
          _
        // Predicated region
        $region41: #{_lambda_.1} parent=11 // pred_check
          %p718 = pneg %p241
        $region42: #{_lambda_.1} parent=11 // pred_check_branch
          %720 = sbr.rel (%p718) target = $region44
        $region43: #{_lambda_.1} parent=11 // pred_region
          %s722 = ssub.s32 96, 96
          %723 = vsyncadd [#allocation7], %s722
          %s724 = sshll.u32 [#allocation8], 4
          %s725 = int_to_ptr.vmem [resolvable:$true] %s724
          %730 = dma.hbm_to_vmem [thread:$0]  %s8, 96, %s725, [#allocation7], 48, 48, 3
        $region44: #{_lambda_.1} parent=11 // pred_fallthru
          _
        // Predicated region
        $region45: #{_lambda_.1} parent=11 // pred_check
          %p731 = pneg %p262
        $region46: #{_lambda_.1} parent=11 // pred_check_branch
          %733 = sbr.rel (%p731) target = $region48
        $region47: #{_lambda_.1} parent=11 // pred_region
          %s735 = ssub.s32 2048, 2048
          %736 = vsyncadd [#allocation10], %s735
          %s737 = sshll.u32 [#allocation9], 4
          %s738 = int_to_ptr.vmem [resolvable:$true] %s737
          %743 = dma.hbm_to_vmem [thread:$0]  %s9, 2048, %s738, [#allocation10], 64, 64, 4
        $region48: #{_lambda_.1} parent=11 // pred_fallthru
          _
        // Predicated region
        $region49: #{_lambda_.1} parent=11 // pred_check
          %p744 = pneg %p283
        $region50: #{_lambda_.1} parent=11 // pred_check_branch
          %746 = sbr.rel (%p744) target = $region52
        $region51: #{_lambda_.1} parent=11 // pred_region
          %s748 = ssub.s32 32, 32
          %749 = vsyncadd [#allocation10], %s748
          %s750 = sshll.u32 [#allocation11], 4
          %s751 = int_to_ptr.vmem [resolvable:$true] %s750
          %756 = dma.hbm_to_vmem [thread:$0]  %s10, 32, %s751, [#allocation10], 16, 16, 1
        $region52: #{_lambda_.1} parent=11 // pred_fallthru
          _
        // Predicated region
        $region53: #{_lambda_.1} parent=11 // pred_check
          %p757 = pneg %p304
        $region54: #{_lambda_.1} parent=11 // pred_check_branch
          %759 = sbr.rel (%p757) target = $region56
        $region55: #{_lambda_.1} parent=11 // pred_region
          %s761 = ssub.s32 32, 32
          %762 = vsyncadd [#allocation13], %s761
          %s763 = sshll.u32 [#allocation12], 4
          %s764 = int_to_ptr.vmem [resolvable:$true] %s763
          %769 = dma.hbm_to_vmem [thread:$0]  %s11, 32, %s764, [#allocation13], 16, 16, 1
        $region56: #{_lambda_.1} parent=11 // pred_fallthru
          _
        // Predicated region
        $region57: #{_lambda_.1} parent=11 // pred_check
          %p770 = pneg %p325
        $region58: #{_lambda_.1} parent=11 // pred_check_branch
          %772 = sbr.rel (%p770) target = $region60
        $region59: #{_lambda_.1} parent=11 // pred_region
          %s774 = ssub.s32 32, 32
          %775 = vsyncadd [#allocation13], %s774
          %s776 = sshll.u32 [#allocation14], 4
          %s777 = int_to_ptr.vmem [resolvable:$true] %s776
          %782 = dma.hbm_to_vmem [thread:$0]  %s12, 32, %s777, [#allocation13], 16, 16, 1
        $region60: #{_lambda_.1} parent=11 // pred_fallthru
          _
        // Predicated region
        $region61: #{_lambda_.1} parent=11 // pred_check
          %p783 = pneg %p346
        $region62: #{_lambda_.1} parent=11 // pred_check_branch
          %785 = sbr.rel (%p783) target = $region64
        $region63: #{_lambda_.1} parent=11 // pred_region
          %s787 = ssub.s32 32, 32
          %788 = vsyncadd [#allocation16], %s787
          %s789 = sshll.u32 [#allocation15], 4
          %s790 = int_to_ptr.vmem [resolvable:$true] %s789
          %795 = dma.hbm_to_vmem [thread:$0]  %s13, 32, %s790, [#allocation16], 16, 16, 1
        $region64: #{_lambda_.1} parent=11 // pred_fallthru
          _
        // Predicated region
        $region65: #{_lambda_.1} parent=11 // pred_check
          %p796 = pneg %p367
        $region66: #{_lambda_.1} parent=11 // pred_check_branch
          %798 = sbr.rel (%p796) target = $region68
        $region67: #{_lambda_.1} parent=11 // pred_region
          _
        $region68: #{_lambda_.1} parent=11 // pred_fallthru
          _
        // Predicated region
        $region69: #{_lambda_.1} parent=11 // pred_check
          %p799 = pneg %p388
        $region70: #{_lambda_.1} parent=11 // pred_check_branch
          %801 = sbr.rel (%p799) target = $region72
        $region71: #{_lambda_.1} parent=11 // pred_region
          %s803 = ssub.s32 128, 128
          %804 = vsyncadd [#allocation16], %s803
          %s805 = sshll.u32 [#allocation17], 4
          %s806 = int_to_ptr.vmem [resolvable:$true] %s805
          %811 = dma.hbm_to_vmem [thread:$0]  %s15, 128, %s806, [#allocation16], 64, 64, 4
        $region72: #{_lambda_.1} parent=11 // pred_fallthru
          _
        // Predicated region
        $region73: #{_lambda_.1} parent=11 // pred_check
          %p812 = pneg %p409
        $region74: #{_lambda_.1} parent=11 // pred_check_branch
          %814 = sbr.rel (%p812) target = $region76
        $region75: #{_lambda_.1} parent=11 // pred_region
          _
        $region76: #{_lambda_.1} parent=11 // pred_fallthru
          _
        // Predicated region
        $region77: #{_lambda_.1} parent=11 // pred_check
          %p815 = pneg %p430
        $region78: #{_lambda_.1} parent=11 // pred_check_branch
          %817 = sbr.rel (%p815) target = $region80
        $region79: #{_lambda_.1} parent=11 // pred_region
          %s819 = ssub.s32 32, 32
          %820 = vsyncadd [#allocation19], %s819
          %s821 = sshll.u32 [#allocation18], 4
          %s822 = int_to_ptr.vmem [resolvable:$true] %s821
          %827 = dma.hbm_to_vmem [thread:$0]  %s17, 32, %s822, [#allocation19], 16, 16, 1
        $region80: #{_lambda_.1} parent=11 // pred_fallthru
          _
        // Predicated region
        $region81: #{_lambda_.1} parent=11 // pred_check
          %p828 = pneg %p451
        $region82: #{_lambda_.1} parent=11 // pred_check_branch
          %830 = sbr.rel (%p828) target = $region84
        $region83: #{_lambda_.1} parent=11 // pred_region
          %s832 = ssub.s32 32, 32
          %833 = vsyncadd [#allocation19], %s832
          %s834 = sshll.u32 [#allocation20], 4
          %s835 = int_to_ptr.vmem [resolvable:$true] %s834
          %840 = dma.hbm_to_vmem [thread:$0]  %s18, 32, %s835, [#allocation19], 16, 16, 1
        $region84: #{_lambda_.1} parent=11 // pred_fallthru
          _
        // Predicated region
        $region85: #{_lambda_.1} parent=11 // pred_check
          %p841 = pneg %p472
        $region86: #{_lambda_.1} parent=11 // pred_check_branch
          %843 = sbr.rel (%p841) target = $region88
        $region87: #{_lambda_.1} parent=11 // pred_region
          %s845 = ssub.s32 16, 16
          %846 = vsyncadd [#allocation22], %s845
          %s848 = sshll.u32 [#allocation21], 4
          %s849 = int_to_ptr.vmem [resolvable:$true] %s848
          %851 = dma.hbm_to_vmem [thread:$0]  %s19, 16, %s849, [#allocation22]
        $region88: #{_lambda_.1} parent=11 // pred_fallthru
          _
        // Predicated region
        $region89: #{_lambda_.1} parent=11 // pred_check
          %p852 = pneg %p493
        $region90: #{_lambda_.1} parent=11 // pred_check_branch
          %854 = sbr.rel (%p852) target = $region92
        $region91: #{_lambda_.1} parent=11 // pred_region
          %s856 = ssub.s32 16, 16
          %857 = vsyncadd [#allocation22], %s856
          %s859 = sshll.u32 [#allocation23], 4
          %s860 = int_to_ptr.vmem [resolvable:$true] %s859
          %862 = dma.hbm_to_vmem [thread:$0]  %s20, 16, %s860, [#allocation22]
        $region92: #{_lambda_.1} parent=11 // pred_fallthru
          _
        // Predicated region
        $region93: #{_lambda_.1} parent=11 // pred_check
          %p863 = pneg %p514
        $region94: #{_lambda_.1} parent=11 // pred_check_branch
          %865 = sbr.rel (%p863) target = $region96
        $region95: #{_lambda_.1} parent=11 // pred_region
          %s867 = ssub.s32 2048, 2048
          %868 = vsyncadd [#allocation25], %s867
          %s869 = sshll.u32 [#allocation24], 4
          %s870 = int_to_ptr.vmem [resolvable:$true] %s869
          %875 = dma.hbm_to_vmem [thread:$0]  %s21, 2048, %s870, [#allocation25], 128, 128, 8
        $region96: #{_lambda_.1} parent=11 // pred_fallthru
          _
        // Predicated region
        $region97: #{_lambda_.1} parent=11 // pred_check
          %p876 = pneg %p535
        $region98: #{_lambda_.1} parent=11 // pred_check_branch
          %878 = sbr.rel (%p876) target = $region100
        $region99: #{_lambda_.1} parent=11 // pred_region
          %s880 = ssub.s32 32, 32
          %881 = vsyncadd [#allocation25], %s880
          %s883 = sshll.u32 [#allocation26], 4
          %s884 = int_to_ptr.vmem [resolvable:$true] %s883
          %886 = dma.hbm_to_vmem [thread:$0]  %s22, 32, %s884, [#allocation25]
        $region100: #{_lambda_.1} parent=11 // pred_fallthru
          _
        // Predicated region
        $region101: #{_lambda_.1} parent=11 // pred_check
          %p887 = pneg %p556
        $region102: #{_lambda_.1} parent=11 // pred_check_branch
          %889 = sbr.rel (%p887) target = $region104
        $region103: #{_lambda_.1} parent=11 // pred_region
          %s891 = ssub.s32 4096, 4096
          %892 = vsyncadd [#allocation28], %s891
          %s893 = sshll.u32 [#allocation27], 4
          %s894 = int_to_ptr.vmem [resolvable:$true] %s893
          %899 = dma.hbm_to_vmem [thread:$0]  %s23, 4096, %s894, [#allocation28], 128, 128, 8
        $region104: #{_lambda_.1} parent=11 // pred_fallthru
          _
        // Predicated region
        $region105: #{_lambda_.1} parent=11 // pred_check
          %p900 = pneg %p577
        $region106: #{_lambda_.1} parent=11 // pred_check_branch
          %902 = sbr.rel (%p900) target = $region108
        $region107: #{_lambda_.1} parent=11 // pred_region
          %s904 = ssub.s32 32, 32
          %905 = vsyncadd [#allocation28], %s904
          %s907 = sshll.u32 [#allocation29], 4
          %s908 = int_to_ptr.vmem [resolvable:$true] %s907
          %910 = dma.hbm_to_vmem [thread:$0]  %s24, 32, %s908, [#allocation28]
        $region108: #{_lambda_.1} parent=11 // pred_fallthru
          _
        // Predicated region
        $region109: #{_lambda_.1} parent=11 // pred_check
          %p911 = pneg %p598
        $region110: #{_lambda_.1} parent=11 // pred_check_branch
          %913 = sbr.rel (%p911) target = $region112
        $region111: #{_lambda_.1} parent=11 // pred_region
          %s915 = ssub.s32 2048, 2048
          %916 = vsyncadd [#allocation31], %s915
          %s917 = sshll.u32 [#allocation30], 4
          %s918 = int_to_ptr.vmem [resolvable:$true] %s917
          %923 = dma.hbm_to_vmem [thread:$0]  %s25, 2048, %s918, [#allocation31], 64, 64, 4
        $region112: #{_lambda_.1} parent=11 // pred_fallthru
          _
        // Predicated region
        $region113: #{_lambda_.1} parent=11 // pred_check
          %p924 = pneg %p619
        $region114: #{_lambda_.1} parent=11 // pred_check_branch
          %926 = sbr.rel (%p924) target = $region116
        $region115: #{_lambda_.1} parent=11 // pred_region
          %s928 = ssub.s32 16, 16
          %929 = vsyncadd [#allocation31], %s928
          %s931 = sshll.u32 [#allocation32], 4
          %s932 = int_to_ptr.vmem [resolvable:$true] %s931
          %934 = dma.hbm_to_vmem [thread:$0]  %s26, 16, %s932, [#allocation31]
        $region116: #{_lambda_.1} parent=11 // pred_fallthru
          _
        // Predicated region
        $region117: #{_lambda_.1} parent=11 // pred_check
          %p935 = pneg %p640
        $region118: #{_lambda_.1} parent=11 // pred_check_branch
          %937 = sbr.rel (%p935) target = $region120
        $region119: #{_lambda_.1} parent=11 // pred_region
          _
        $region120: #{_lambda_.1} parent=11 // pred_fallthru
          _
      $region12: #{_lambda_.1} parent=5 // pred_fallthru
        _
      %p938 = scmp.lt.s32.totalorder %s47, 2
      // Predicated region
      $region121: #{_lambda_.1} parent=5 // pred_check
        %p939 = pneg %p938
      $region122: #{_lambda_.1} parent=5 // pred_check_branch
        %941 = sbr.rel (%p939) target = $region124
      $region123: #{_lambda_.1} parent=5 // pred_region
        // Predicated region
        $region125: #{_lambda_.1} parent=123 // pred_check
          %p942 = pneg %p67
        $region126: #{_lambda_.1} parent=123 // pred_check_branch
          %944 = sbr.rel (%p942) target = $region128
        $region127: #{_lambda_.1} parent=123 // pred_region
          %p945 = scmp.lt.s32.totalorder %s47, 1
          %s946 = scalar_select %p945, %s47, 1
          %s947 = smul.addr %s946, 5
          %s948 = smul.addr %s947, 4
          %s949 = scalar_lea.vmem %s0, %s948
        $region128: #{_lambda_.1} parent=123 // pred_fallthru
          _
      $region124: #{_lambda_.1} parent=5 // pred_fallthru
        _
      %p950 = scmp.le.s32.totalorder 1, %s47
      %p951 = scmp.lt.s32.totalorder %s47, 3
      %p952 = pnand %p950, %p951
      %p953 = pneg %p952
      // Predicated region
      $region129: #{_lambda_.1} parent=5 // pred_check
        _
      $region130: #{_lambda_.1} parent=5 // pred_check_branch
        %955 = sbr.rel (%p952) target = $region132
      $region131: #{_lambda_.1} parent=5 // pred_region
        %s956 = ssub.s32 %s47, 1
        // Predicated region
        $region133: #{_lambda_.1} parent=131 // pred_check
          %p957 = pneg %p115
        $region134: #{_lambda_.1} parent=131 // pred_check_branch
          %959 = sbr.rel (%p957) target = $region136
        $region135: #{_lambda_.1} parent=131 // pred_region
          %960 = dma.done [#allocation4], 16
        $region136: #{_lambda_.1} parent=131 // pred_fallthru
          _
        // Predicated region
        $region137: #{_lambda_.1} parent=131 // pred_check
          %p961 = pneg %p136
        $region138: #{_lambda_.1} parent=131 // pred_check_branch
          %963 = sbr.rel (%p961) target = $region140
        $region139: #{_lambda_.1} parent=131 // pred_region
          %964 = dma.done [#allocation7], 16
        $region140: #{_lambda_.1} parent=131 // pred_fallthru
          _
        // Predicated region
        $region141: #{_lambda_.1} parent=131 // pred_check
          %p965 = pneg %p241
        $region142: #{_lambda_.1} parent=131 // pred_check_branch
          %967 = sbr.rel (%p965) target = $region144
        $region143: #{_lambda_.1} parent=131 // pred_region
          %968 = dma.done [#allocation7], 96
        $region144: #{_lambda_.1} parent=131 // pred_fallthru
          _
        // Predicated region
        $region145: #{_lambda_.1} parent=131 // pred_check
          %p969 = pneg %p262
        $region146: #{_lambda_.1} parent=131 // pred_check_branch
          %971 = sbr.rel (%p969) target = $region148
        $region147: #{_lambda_.1} parent=131 // pred_region
          %972 = dma.done [#allocation10], 2048
        $region148: #{_lambda_.1} parent=131 // pred_fallthru
          _
        // Predicated region
        $region149: #{_lambda_.1} parent=131 // pred_check
          %p973 = pneg %p283
        $region150: #{_lambda_.1} parent=131 // pred_check_branch
          %975 = sbr.rel (%p973) target = $region152
        $region151: #{_lambda_.1} parent=131 // pred_region
          %976 = dma.done [#allocation10], 32
        $region152: #{_lambda_.1} parent=131 // pred_fallthru
          _
        // Predicated region
        $region153: #{_lambda_.1} parent=131 // pred_check
          %p977 = pneg %p304
        $region154: #{_lambda_.1} parent=131 // pred_check_branch
          %979 = sbr.rel (%p977) target = $region156
        $region155: #{_lambda_.1} parent=131 // pred_region
          %980 = dma.done [#allocation13], 32
        $region156: #{_lambda_.1} parent=131 // pred_fallthru
          _
        // Predicated region
        $region157: #{_lambda_.1} parent=131 // pred_check
          %p981 = pneg %p325
        $region158: #{_lambda_.1} parent=131 // pred_check_branch
          %983 = sbr.rel (%p981) target = $region160
        $region159: #{_lambda_.1} parent=131 // pred_region
          %984 = dma.done [#allocation13], 32
        $region160: #{_lambda_.1} parent=131 // pred_fallthru
          _
        // Predicated region
        $region161: #{_lambda_.1} parent=131 // pred_check
          %p985 = pneg %p346
        $region162: #{_lambda_.1} parent=131 // pred_check_branch
          %987 = sbr.rel (%p985) target = $region164
        $region163: #{_lambda_.1} parent=131 // pred_region
          %988 = dma.done [#allocation16], 32
        $region164: #{_lambda_.1} parent=131 // pred_fallthru
          _
        // Predicated region
        $region165: #{_lambda_.1} parent=131 // pred_check
          %p989 = pneg %p388
        $region166: #{_lambda_.1} parent=131 // pred_check_branch
          %991 = sbr.rel (%p989) target = $region168
        $region167: #{_lambda_.1} parent=131 // pred_region
          %992 = dma.done [#allocation16], 128
        $region168: #{_lambda_.1} parent=131 // pred_fallthru
          _
        // Predicated region
        $region169: #{_lambda_.1} parent=131 // pred_check
          %p993 = pneg %p430
        $region170: #{_lambda_.1} parent=131 // pred_check_branch
          %995 = sbr.rel (%p993) target = $region172
        $region171: #{_lambda_.1} parent=131 // pred_region
          %996 = dma.done [#allocation19], 32
        $region172: #{_lambda_.1} parent=131 // pred_fallthru
          _
        // Predicated region
        $region173: #{_lambda_.1} parent=131 // pred_check
          %p997 = pneg %p451
        $region174: #{_lambda_.1} parent=131 // pred_check_branch
          %999 = sbr.rel (%p997) target = $region176
        $region175: #{_lambda_.1} parent=131 // pred_region
          %1000 = dma.done [#allocation19], 32
        $region176: #{_lambda_.1} parent=131 // pred_fallthru
          _
        // Predicated region
        $region177: #{_lambda_.1} parent=131 // pred_check
          %p1001 = pneg %p472
        $region178: #{_lambda_.1} parent=131 // pred_check_branch
          %1003 = sbr.rel (%p1001) target = $region180
        $region179: #{_lambda_.1} parent=131 // pred_region
          %1004 = dma.done [#allocation22], 16
        $region180: #{_lambda_.1} parent=131 // pred_fallthru
          _
        // Predicated region
        $region181: #{_lambda_.1} parent=131 // pred_check
          %p1005 = pneg %p493
        $region182: #{_lambda_.1} parent=131 // pred_check_branch
          %1007 = sbr.rel (%p1005) target = $region184
        $region183: #{_lambda_.1} parent=131 // pred_region
          %1008 = dma.done [#allocation22], 16
        $region184: #{_lambda_.1} parent=131 // pred_fallthru
          _
        // Predicated region
        $region185: #{_lambda_.1} parent=131 // pred_check
          %p1009 = pneg %p514
        $region186: #{_lambda_.1} parent=131 // pred_check_branch
          %1011 = sbr.rel (%p1009) target = $region188
        $region187: #{_lambda_.1} parent=131 // pred_region
          %1012 = dma.done [#allocation25], 2048
        $region188: #{_lambda_.1} parent=131 // pred_fallthru
          _
        // Predicated region
        $region189: #{_lambda_.1} parent=131 // pred_check
          %p1013 = pneg %p535
        $region190: #{_lambda_.1} parent=131 // pred_check_branch
          %1015 = sbr.rel (%p1013) target = $region192
        $region191: #{_lambda_.1} parent=131 // pred_region
          %1016 = dma.done [#allocation25], 32
        $region192: #{_lambda_.1} parent=131 // pred_fallthru
          _
        // Predicated region
        $region193: #{_lambda_.1} parent=131 // pred_check
          %p1017 = pneg %p556
        $region194: #{_lambda_.1} parent=131 // pred_check_branch
          %1019 = sbr.rel (%p1017) target = $region196
        $region195: #{_lambda_.1} parent=131 // pred_region
          %1020 = dma.done [#allocation28], 4096
        $region196: #{_lambda_.1} parent=131 // pred_fallthru
          _
        // Predicated region
        $region197: #{_lambda_.1} parent=131 // pred_check
          %p1021 = pneg %p577
        $region198: #{_lambda_.1} parent=131 // pred_check_branch
          %1023 = sbr.rel (%p1021) target = $region200
        $region199: #{_lambda_.1} parent=131 // pred_region
          %1024 = dma.done [#allocation28], 32
        $region200: #{_lambda_.1} parent=131 // pred_fallthru
          _
        // Predicated region
        $region201: #{_lambda_.1} parent=131 // pred_check
          %p1025 = pneg %p598
        $region202: #{_lambda_.1} parent=131 // pred_check_branch
          %1027 = sbr.rel (%p1025) target = $region204
        $region203: #{_lambda_.1} parent=131 // pred_region
          %1028 = dma.done [#allocation31], 2048
        $region204: #{_lambda_.1} parent=131 // pred_fallthru
          _
        // Predicated region
        $region205: #{_lambda_.1} parent=131 // pred_check
          %p1029 = pneg %p619
        $region206: #{_lambda_.1} parent=131 // pred_check_branch
          %1031 = sbr.rel (%p1029) target = $region208
        $region207: #{_lambda_.1} parent=131 // pred_region
          %1032 = dma.done [#allocation31], 16
        $region208: #{_lambda_.1} parent=131 // pred_fallthru
          _
        %p1033 = scmp.lt.s32.totalorder %s52, 1
        %s1034 = scalar_select %p1033, %s52, 1
        %s1035 = smul.addr %s1034, 5
        %s1036 = smul.addr %s1035, 4
        %s1037 = scalar_lea.vmem %s0, %s1036
        %p1038 = pneg %p73
        %p1039 = pneg %p70
        %p1040 = pneg %p94
        %p1041 = pneg %p91
        %p1042 = pneg %p115
        %p1043 = pneg %p112
        %p1044 = pneg %p136
        %p1045 = pneg %p133
        %p1046 = pneg %p157
        %p1047 = pneg %p154
        %p1048 = pneg %p178
        %p1049 = pneg %p175
        %p1050 = pneg %p199
        %p1051 = pneg %p196
        %p1052 = pneg %p220
        %p1053 = pneg %p217
        %p1054 = pneg %p241
        %p1055 = pneg %p238
        %p1056 = pneg %p262
        %p1057 = pneg %p259
        %p1058 = pneg %p283
        %p1059 = pneg %p280
        %p1060 = pneg %p304
        %p1061 = pneg %p301
        %p1062 = pneg %p325
        %p1063 = pneg %p322
        %p1064 = pneg %p346
        %p1065 = pneg %p343
        %p1066 = pneg %p367
        %p1067 = pneg %p364
        %p1068 = pneg %p388
        %p1069 = pneg %p385
        %p1070 = pneg %p409
        %p1071 = pneg %p406
        %p1072 = pneg %p430
        %p1073 = pneg %p427
        %p1074 = pneg %p451
        %p1075 = pneg %p448
        %p1076 = pneg %p472
        %p1077 = pneg %p469
        %p1078 = pneg %p493
        %p1079 = pneg %p490
        %p1080 = pneg %p514
        %p1081 = pneg %p511
        %p1082 = pneg %p535
        %p1083 = pneg %p532
        %p1084 = pneg %p556
        %p1085 = pneg %p553
        %p1086 = pneg %p577
        %p1087 = pneg %p574
        %p1088 = pneg %p598
        %p1089 = pneg %p595
        %p1090 = pneg %p619
        %p1091 = pneg %p616
        %p1092 = pneg %p640
        %p1093 = pneg %p637
        %p1094 = pneg %p666
        %p1095 = pneg %p663
        %s1096 = sand.u32 %s653, 1
        %s1097 = scalar_lea.sflag [#allocation5], %s1096
        %s1098 = sand.u32 %s653, 1
        %s1099 = scalar_lea.vmem [#allocation33], %s1098
        %p1100 = scmp.lt.s32.totalorder %s52, 1
        %s1101 = scalar_select %p1100, %s52, 1
        %s1102 = smul.addr %s1101, 5
        %s1103 = smul.addr %s1102, 4
        %s1104 = scalar_lea.vmem %s0, %s1103
        %v1106 = vld [vmem:[%s1104] sm:$0xff]
        %v1107 = vld [vmem:[%s1104 + $0x8] sm:$0xff]
        %v1108 = vld [vmem:[%s1104 + $0x10] sm:$0xf]
        %v1109 = vld [vmem:[%s1] sm:$0xf]
        %v1110 = vld [vmem:[%s1 + $0x4] sm:$0xf]
        %v1111 = vld [vmem:[%s1 + $0x8] sm:$0xf]
        %v1112 = vld [vmem:[%s1 + $0xc] sm:$0xf]
        %v1113 = vld [vmem:[%s1 + $0x10] sm:$0xf]
        %v1114 = vld [vmem:[%s1 + $0x14] sm:$0xf]
        %v1115 = vld [vmem:[%s1 + $0x18] sm:$0xf]
        %v1116 = vld [vmem:[%s1 + $0x1c] sm:$0xf]
        %v1117 = vld [vmem:[%s1 + $0x20] sm:$0xf]
        %v1118 = vld [vmem:[%s1 + $0x24] sm:$0xf]
        %v1119 = vld [vmem:[%s1 + $0x28] sm:$0xf]
        %v1120 = vld [vmem:[%s1 + $0x2c] sm:$0xf]
        %v1121 = vld [vmem:[%s1 + $0x30] sm:$0xf]
        %v1122 = vld [vmem:[%s1 + $0x34] sm:$0xf]
        %v1123 = vld [vmem:[%s1 + $0x38] sm:$0xf]
        %v1124 = vld [vmem:[%s1 + $0x3c] sm:$0xf]
        %v1125 = vld [vmem:[%s1 + $0x40] sm:$0xf]
        %v1126 = vld [vmem:[%s1 + $0x44] sm:$0xf]
        %v1127 = vld [vmem:[%s1 + $0x48] sm:$0xf]
        %v1128 = vld [vmem:[%s1 + $0x4c] sm:$0xf]
        %v1129 = vld [vmem:[%s1 + $0x50] sm:$0xf]
        %v1130 = vld [vmem:[%s1 + $0x54] sm:$0xf]
        %v1131 = vld [vmem:[%s1 + $0x58] sm:$0xf]
        %v1132 = vld [vmem:[%s1 + $0x5c] sm:$0xf]
        %v1133 = vld [vmem:[%s1 + $0x60] sm:$0xf]
        %v1134 = vld [vmem:[%s1 + $0x64] sm:$0xf]
        %v1135 = vld [vmem:[%s1 + $0x68] sm:$0xf]
        %v1136 = vld [vmem:[%s1 + $0x6c] sm:$0xf]
        %v1137 = vld [vmem:[%s1 + $0x70] sm:$0xf]
        %v1138 = vld [vmem:[%s1 + $0x74] sm:$0xf]
        %v1139 = vld [vmem:[%s1 + $0x78] sm:$0xf]
        %v1140 = vld [vmem:[%s1 + $0x7c] sm:$0xf]
        %v1141 = vld [vmem:[%s1 + $0x80] sm:$0xf]
        %v1142 = vld [vmem:[%s1 + $0x84] sm:$0xf]
        %v1143 = vld [vmem:[%s1 + $0x88] sm:$0xf]
        %v1144 = vld [vmem:[%s1 + $0x8c] sm:$0xf]
        %v1145 = vld [vmem:[%s1 + $0x90] sm:$0xf]
        %v1146 = vld [vmem:[%s1 + $0x94] sm:$0xf]
        %v1147 = vld [vmem:[%s1 + $0x98] sm:$0xf]
        %v1148 = vld [vmem:[%s1 + $0x9c] sm:$0xf]
        %v1149 = vld [vmem:[%s1 + $0xa0] sm:$0xf]
        %v1150 = vld [vmem:[%s1 + $0xa4] sm:$0xf]
        %v1151 = vld [vmem:[%s1 + $0xa8] sm:$0xf]
        %v1152 = vld [vmem:[%s1 + $0xac] sm:$0xf]
        %v1153 = vld [vmem:[%s1 + $0xb0] sm:$0xf]
        %v1154 = vld [vmem:[%s1 + $0xb4] sm:$0xf]
        %v1155 = vld [vmem:[%s1 + $0xb8] sm:$0xf]
        %v1156 = vld [vmem:[%s1 + $0xbc] sm:$0xf]
        %v1157 = vld [vmem:[%s1 + $0xc0] sm:$0xf]
        %v1158 = vld [vmem:[%s1 + $0xc4] sm:$0xf]
        %v1159 = vld [vmem:[%s1 + $0xc8] sm:$0xf]
        %v1160 = vld [vmem:[%s1 + $0xcc] sm:$0xf]
        %v1161 = vld [vmem:[%s1 + $0xd0] sm:$0xf]
        %v1162 = vld [vmem:[%s1 + $0xd4] sm:$0xf]
        %v1163 = vld [vmem:[%s1 + $0xd8] sm:$0xf]
        %v1164 = vld [vmem:[%s1 + $0xdc] sm:$0xf]
        %v1165 = vld [vmem:[%s1 + $0xe0] sm:$0xf]
        %v1166 = vld [vmem:[%s1 + $0xe4] sm:$0xf]
        %v1167 = vld [vmem:[%s1 + $0xe8] sm:$0xf]
        %v1168 = vld [vmem:[%s1 + $0xec] sm:$0xf]
        %v1169 = vld [vmem:[%s1 + $0xf0] sm:$0xf]
        %v1170 = vld [vmem:[%s1 + $0xf4] sm:$0xf]
        %v1171 = vld [vmem:[%s1 + $0xf8] sm:$0xf]
        %v1172 = vld [vmem:[%s1 + $0xfc] sm:$0xf]
        %v1173 = vld [vmem:[%s1 + $0x100] sm:$0xf]
        %v1174 = vld [vmem:[%s1 + $0x104] sm:$0xf]
        %v1175 = vld [vmem:[%s1 + $0x108] sm:$0xf]
        %v1176 = vld [vmem:[%s1 + $0x10c] sm:$0xf]
        %v1177 = vld [vmem:[%s1 + $0x110] sm:$0xf]
        %v1178 = vld [vmem:[%s1 + $0x114] sm:$0xf]
        %v1179 = vld [vmem:[%s1 + $0x118] sm:$0xf]
        %v1180 = vld [vmem:[%s1 + $0x11c] sm:$0xf]
        %v1181 = vld [vmem:[%s1 + $0x120] sm:$0xf]
        %v1182 = vld [vmem:[%s1 + $0x124] sm:$0xf]
        %v1183 = vld [vmem:[%s1 + $0x128] sm:$0xf]
        %v1184 = vld [vmem:[%s1 + $0x12c] sm:$0xf]
        %v1185 = vld [vmem:[%s1 + $0x130] sm:$0xf]
        %v1186 = vld [vmem:[%s1 + $0x134] sm:$0xf]
        %v1187 = vld [vmem:[%s1 + $0x138] sm:$0xf]
        %v1188 = vld [vmem:[%s1 + $0x13c] sm:$0xf]
        %v1189 = vld [vmem:[#allocation3] sm:$0x1]
        %v1192 = vcombine.high %v1106, %v1106
        %v1193 = vcombine.high %v1107, %v1107
        %v1196 = vpack.c.bf16 %v1106, %v1106
        %v1197 = vpack.c.bf16 %v1192, %v1192
        %v1198 = vpack.c.bf16 %v1107, %v1107
        %v1199 = vpack.c.bf16 %v1193, %v1193
        %v1200 = vpack.c.bf16 %v1108, %v1108
        %v1202 = vlaneseq
        %v1203 = vshrl.u32 %v1202, 7
        %v1204 = vsub.s32 0, %v1203
        %v1205 = vrot.slane %v1189, %v1204
        %v1287 = vunpack.c.l.b16 %v1109
        %v1288 = vunpack.c.l.b16 %v1110
        %v1289 = vunpack.c.l.b16 %v1111
        %v1290 = vunpack.c.l.b16 %v1112
        %v1291 = vunpack.c.l.b16 %v1113
        %v1292 = vunpack.c.l.b16 %v1114
        %v1293 = vunpack.c.l.b16 %v1115
        %v1294 = vunpack.c.l.b16 %v1116
        %v1295 = vunpack.c.l.b16 %v1117
        %v1296 = vunpack.c.l.b16 %v1118
        %v1297 = vunpack.c.l.b16 %v1119
        %v1298 = vunpack.c.l.b16 %v1120
        %v1299 = vunpack.c.l.b16 %v1121
        %v1300 = vunpack.c.l.b16 %v1122
        %v1301 = vunpack.c.l.b16 %v1123
        %v1302 = vunpack.c.l.b16 %v1124
        %v1303 = vunpack.c.l.b16 %v1125
        %v1304 = vunpack.c.l.b16 %v1126
        %v1305 = vunpack.c.l.b16 %v1127
        %v1306 = vunpack.c.l.b16 %v1128
        %v1307 = vunpack.c.l.b16 %v1129
        %v1308 = vunpack.c.l.b16 %v1130
        %v1309 = vunpack.c.l.b16 %v1131
        %v1310 = vunpack.c.l.b16 %v1132
        %v1311 = vunpack.c.l.b16 %v1133
        %v1312 = vunpack.c.l.b16 %v1134
        %v1313 = vunpack.c.l.b16 %v1135
        %v1314 = vunpack.c.l.b16 %v1136
        %v1315 = vunpack.c.l.b16 %v1137
        %v1316 = vunpack.c.l.b16 %v1138
        %v1317 = vunpack.c.l.b16 %v1139
        %v1318 = vunpack.c.l.b16 %v1140
        %v1319 = vunpack.c.l.b16 %v1141
        %v1320 = vunpack.c.l.b16 %v1142
        %v1321 = vunpack.c.l.b16 %v1143
        %v1322 = vunpack.c.l.b16 %v1144
        %v1323 = vunpack.c.l.b16 %v1145
        %v1324 = vunpack.c.l.b16 %v1146
        %v1325 = vunpack.c.l.b16 %v1147
        %v1326 = vunpack.c.l.b16 %v1148
        %v1327 = vunpack.c.l.b16 %v1149
        %v1328 = vunpack.c.l.b16 %v1150
        %v1329 = vunpack.c.l.b16 %v1151
        %v1330 = vunpack.c.l.b16 %v1152
        %v1331 = vunpack.c.l.b16 %v1153
        %v1332 = vunpack.c.l.b16 %v1154
        %v1333 = vunpack.c.l.b16 %v1155
        %v1334 = vunpack.c.l.b16 %v1156
        %v1335 = vunpack.c.l.b16 %v1157
        %v1336 = vunpack.c.l.b16 %v1158
        %v1337 = vunpack.c.l.b16 %v1159
        %v1338 = vunpack.c.l.b16 %v1160
        %v1339 = vunpack.c.l.b16 %v1161
        %v1340 = vunpack.c.l.b16 %v1162
        %v1341 = vunpack.c.l.b16 %v1163
        %v1342 = vunpack.c.l.b16 %v1164
        %v1343 = vunpack.c.l.b16 %v1165
        %v1344 = vunpack.c.l.b16 %v1166
        %v1345 = vunpack.c.l.b16 %v1167
        %v1346 = vunpack.c.l.b16 %v1168
        %v1347 = vunpack.c.l.b16 %v1169
        %v1348 = vunpack.c.l.b16 %v1170
        %v1349 = vunpack.c.l.b16 %v1171
        %v1350 = vunpack.c.l.b16 %v1172
        %v1351 = vunpack.c.l.b16 %v1173
        %v1352 = vunpack.c.l.b16 %v1174
        %v1353 = vunpack.c.l.b16 %v1175
        %v1354 = vunpack.c.l.b16 %v1176
        %v1355 = vunpack.c.l.b16 %v1177
        %v1356 = vunpack.c.l.b16 %v1178
        %v1357 = vunpack.c.l.b16 %v1179
        %v1358 = vunpack.c.l.b16 %v1180
        %v1359 = vunpack.c.l.b16 %v1181
        %v1360 = vunpack.c.l.b16 %v1182
        %v1361 = vunpack.c.l.b16 %v1183
        %v1362 = vunpack.c.l.b16 %v1184
        %v1363 = vunpack.c.l.b16 %v1185
        %v1364 = vunpack.c.l.b16 %v1186
        %v1365 = vunpack.c.l.b16 %v1187
        %v1366 = vunpack.c.l.b16 %v1188
        %v1367 = vpack.c.b16 %v1288, %v1287
        %v1368 = vpack.c.b16 %v1290, %v1289
        %v1369 = vpack.c.b16 %v1292, %v1291
        %v1370 = vpack.c.b16 %v1294, %v1293
        %v1371 = vpack.c.b16 %v1296, %v1295
        %v1372 = vpack.c.b16 %v1298, %v1297
        %v1373 = vpack.c.b16 %v1300, %v1299
        %v1374 = vpack.c.b16 %v1302, %v1301
        %v1375 = vpack.c.b16 %v1304, %v1303
        %v1376 = vpack.c.b16 %v1306, %v1305
        %v1377 = vpack.c.b16 %v1308, %v1307
        %v1378 = vpack.c.b16 %v1310, %v1309
        %v1379 = vpack.c.b16 %v1312, %v1311
        %v1380 = vpack.c.b16 %v1314, %v1313
        %v1381 = vpack.c.b16 %v1316, %v1315
        %v1382 = vpack.c.b16 %v1318, %v1317
        %v1383 = vpack.c.b16 %v1320, %v1319
        %v1384 = vpack.c.b16 %v1322, %v1321
        %v1385 = vpack.c.b16 %v1324, %v1323
        %v1386 = vpack.c.b16 %v1326, %v1325
        %v1387 = vpack.c.b16 %v1328, %v1327
        %v1388 = vpack.c.b16 %v1330, %v1329
        %v1389 = vpack.c.b16 %v1332, %v1331
        %v1390 = vpack.c.b16 %v1334, %v1333
        %v1391 = vpack.c.b16 %v1336, %v1335
        %v1392 = vpack.c.b16 %v1338, %v1337
        %v1393 = vpack.c.b16 %v1340, %v1339
        %v1394 = vpack.c.b16 %v1342, %v1341
        %v1395 = vpack.c.b16 %v1344, %v1343
        %v1396 = vpack.c.b16 %v1346, %v1345
        %v1397 = vpack.c.b16 %v1348, %v1347
        %v1398 = vpack.c.b16 %v1350, %v1349
        %v1399 = vpack.c.b16 %v1352, %v1351
        %v1400 = vpack.c.b16 %v1354, %v1353
        %v1401 = vpack.c.b16 %v1356, %v1355
        %v1402 = vpack.c.b16 %v1358, %v1357
        %v1403 = vpack.c.b16 %v1360, %v1359
        %v1404 = vpack.c.b16 %v1362, %v1361
        %v1405 = vpack.c.b16 %v1364, %v1363
        %v1406 = vpack.c.b16 %v1366, %v1365
        %1447 = vmatprep.subr.bf16.mxu0 0
        %1448 = vmatpush1.bf16.msra.mxu0 %v1367
        %1449 = vmatprep.subr.bf16.mxu0 0
        %1450 = vmatpush1.bf16.msra.mxu0 %v1368
        %1451 = vmatprep.subr.bf16.mxu0 0
        %1452 = vmatpush1.bf16.msra.mxu0 %v1369
        %1453 = vmatprep.subr.bf16.mxu0 0
        %1454 = vmatpush1.bf16.msra.mxu0 %v1370
        %1455 = vmatprep.subr.bf16.mxu0 0
        %1456 = vmatpush1.bf16.msra.mxu0 %v1371
        %1457 = vmatprep.subr.bf16.mxu0 0
        %1458 = vmatpush1.bf16.msra.mxu0 %v1372
        %1459 = vmatprep.subr.bf16.mxu0 0
        %1460 = vmatpush1.bf16.msra.mxu0 %v1373
        %1461 = vmatprep.subr.bf16.mxu0 0
        %1462 = vmatpush1.bf16.msra.mxu0 %v1374
        %1463 = vmatprep.subr.bf16.mxu0 0
        %1464 = vmatpush1.bf16.msra.mxu0 %v1375
        %1465 = vmatprep.subr.bf16.mxu0 0
        %1466 = vmatpush1.bf16.msra.mxu0 %v1376
        %1467 = vmatprep.subr.bf16.mxu0 0
        %1468 = vmatpush1.bf16.msra.mxu0 %v1377
        %1469 = vmatprep.subr.bf16.mxu0 0
        %1470 = vmatpush1.bf16.msra.mxu0 %v1378
        %1471 = vmatprep.subr.bf16.mxu0 0
        %1472 = vmatpush1.bf16.msra.mxu0 %v1379
        %1473 = vmatprep.subr.bf16.mxu0 0
        %1474 = vmatpush1.bf16.msra.mxu0 %v1380
        %1475 = vmatprep.subr.bf16.mxu0 0
        %1476 = vmatpush1.bf16.msra.mxu0 %v1381
        %1477 = vmatprep.subr.bf16.mxu0 0
        %1478 = vmatpush1.bf16.msra.mxu0 %v1382
        %1479 = vmatprep.mubr.bf16.mxu0 %v1197
        %1480 = vmatmul.mubr.bf16.gmra.mrb[0].mxu0 %v1196
        %v1481 = vpop.f32.mrb[0].mxu0
        %v1482 = vadd.f32 %v1205, %v1481
        %v1483 = vpop.f32.mrb[0].mxu0
        %v1484 = vpop.f32.mrb[0].mxu0
        %v1485 = vpop.f32.mrb[0].mxu0
        %1486 = vdwg.mxu0
        %1487 = vmatprep.subr.bf16.mxu0 0
        %1488 = vmatpush1.bf16.msra.mxu0 %v1383
        %1489 = vmatprep.subr.bf16.mxu0 0
        %1490 = vmatpush1.bf16.msra.mxu0 %v1384
        %1491 = vmatprep.subr.bf16.mxu0 0
        %1492 = vmatpush1.bf16.msra.mxu0 %v1385
        %1493 = vmatprep.subr.bf16.mxu0 0
        %1494 = vmatpush1.bf16.msra.mxu0 %v1386
        %1495 = vmatprep.subr.bf16.mxu0 0
        %1496 = vmatpush1.bf16.msra.mxu0 %v1387
        %1497 = vmatprep.subr.bf16.mxu0 0
        %1498 = vmatpush1.bf16.msra.mxu0 %v1388
        %1499 = vmatprep.subr.bf16.mxu0 0
        %1500 = vmatpush1.bf16.msra.mxu0 %v1389
        %1501 = vmatprep.subr.bf16.mxu0 0
        %1502 = vmatpush1.bf16.msra.mxu0 %v1390
        %1503 = vmatprep.subr.bf16.mxu0 0
        %1504 = vmatpush1.bf16.msra.mxu0 %v1391
        %1505 = vmatprep.subr.bf16.mxu0 0
        %1506 = vmatpush1.bf16.msra.mxu0 %v1392
        %1507 = vmatprep.subr.bf16.mxu0 0
        %1508 = vmatpush1.bf16.msra.mxu0 %v1393
        %1509 = vmatprep.subr.bf16.mxu0 0
        %1510 = vmatpush1.bf16.msra.mxu0 %v1394
        %1511 = vmatprep.subr.bf16.mxu0 0
        %1512 = vmatpush1.bf16.msra.mxu0 %v1395
        %1513 = vmatprep.subr.bf16.mxu0 0
        %1514 = vmatpush1.bf16.msra.mxu0 %v1396
        %1515 = vmatprep.subr.bf16.mxu0 0
        %1516 = vmatpush1.bf16.msra.mxu0 %v1397
        %1517 = vmatprep.subr.bf16.mxu0 0
        %1518 = vmatpush1.bf16.msra.mxu0 %v1398
        %1519 = vmatprep.mubr.bf16.mxu0 %v1199
        %1520 = vmatmul.mubr.bf16.gmra.mrb[0].mxu0 %v1198
        %v1521 = vpop.f32.mrb[0].mxu0
        %v1522 = vadd.f32 %v1482, %v1521
        %v1523 = vpop.f32.mrb[0].mxu0
        %v1524 = vpop.f32.mrb[0].mxu0
        %v1525 = vpop.f32.mrb[0].mxu0
        %1526 = vdwg.mxu0
        %1527 = vmatprep.subr.bf16.mxu0 0
        %1528 = vmatpush1.bf16.msra.mxu0 %v1399
        %1529 = vmatprep.subr.bf16.mxu0 0
        %1530 = vmatpush1.bf16.msra.mxu0 %v1400
        %1531 = vmatprep.subr.bf16.mxu0 0
        %1532 = vmatpush1.bf16.msra.mxu0 %v1401
        %1533 = vmatprep.subr.bf16.mxu0 0
        %1534 = vmatpush1.bf16.msra.mxu0 %v1402
        %1535 = vmatprep.subr.bf16.mxu0 0
        %1536 = vmatpush1.bf16.msra.mxu0 %v1403
        %1537 = vmatprep.subr.bf16.mxu0 0
        %1538 = vmatpush1.bf16.msra.mxu0 %v1404
        %1539 = vmatprep.subr.bf16.mxu0 0
        %1540 = vmatpush1.bf16.msra.mxu0 %v1405
        %1541 = vmatprep.subr.bf16.mxu0 0
        %1542 = vmatpush1.bf16.msra.mxu0 %v1406
        %1543 = vmatprep.subr.bf16.mxu0 0
        %1544 = vmatpush1.bf16.msra.mxu0 0
        %1545 = vmatprep.subr.bf16.mxu0 0
        %1546 = vmatpush1.bf16.msra.mxu0 0
        %1547 = vmatprep.subr.bf16.mxu0 0
        %1548 = vmatpush1.bf16.msra.mxu0 0
        %1549 = vmatprep.subr.bf16.mxu0 0
        %1550 = vmatpush1.bf16.msra.mxu0 0
        %1551 = vmatprep.subr.bf16.mxu0 0
        %1552 = vmatpush1.bf16.msra.mxu0 0
        %1553 = vmatprep.subr.bf16.mxu0 0
        %1554 = vmatpush1.bf16.msra.mxu0 0
        %1555 = vmatprep.subr.bf16.mxu0 0
        %1556 = vmatpush1.bf16.msra.mxu0 0
        %1557 = vmatprep.subr.bf16.mxu0 0
        %1558 = vmatpush1.bf16.msra.mxu0 0
        %1559 = vmatprep.mubr.bf16.mxu0 0
        %1560 = vmatmul.mubr.bf16.gmra.mrb[0].mxu0 %v1200
        %v1561 = vpop.f32.mrb[0].mxu0
        %v1562 = vadd.f32 %v1522, %v1561
        %v1563 = vpop.f32.mrb[0].mxu0
        %v1564 = vpop.f32.mrb[0].mxu0
        %v1565 = vpop.f32.mrb[0].mxu0
        %1566 = vdwg.mxu0
        %v1567 = vld [vmem:[%s4] sm:$0x1f]
        %v1568 = vld [vmem:[#allocation6] sm:$0x1]
        %v1569 = vadd.f32 %v1568, %v1567
        %1570 = vst [vmem:[#allocation2] sm:$0x1] %v1569
        %v1572 = vrot.slane %v1567, 1
        %v1574 = vadd.f32 %v1562, %v1572
        %1575 = vst [vmem:[#allocation2 + $0x1] sm:$0xf] %v1574
        %v1576 = vld [vmem:[#allocation2] sm:$0x1f]
        %v1577 = vld [vmem:[%s5] sm:$0x1]
        %v1578 = vld [vmem:[%s6] sm:$0x1]
        %vm1579 = vcmask 1044480
        %v1580 = vsel %vm1579, %v1576, 0.0
        %1581 = vadd.xlane.f32.xlu0 %v1580
        %v1582 = vpop.xlane.xlu0 %1581
        %v1583 = vrcp.pop 128.0
        %v1584 = vmul.f32 %v1582, %v1583
        %v1585 = vsub.f32 %v1576, %v1584
        %v1586 = vmul.f32 %v1585, %v1585
        %v1587 = vsel %vm1579, %v1586, 0.0
        %1588 = vadd.xlane.f32.xlu0 %v1587
        %v1589 = vpop.xlane.xlu0 %1588
        %v1590 = vmul.f32 %v1589, %v1583
        %v1591 = vadd.f32 %v1590, 1e-06
        %v1592 = vrsqrt.pop %v1591
        %v1593 = vmul.f32 %v1585, %v1592
        %v1595 = vlaneseq
        %v1596 = vshrl.u32 %v1595, 7
        %v1597 = vsub.s32 0, %v1596
        %v1598 = vrot.slane %v1577, %v1597
        %v1600 = vmul.f32 %v1593, %v1598
        %v1602 = vlaneseq
        %v1603 = vshrl.u32 %v1602, 7
        %v1604 = vsub.s32 0, %v1603
        %v1605 = vrot.slane %v1578, %v1604
        %v1607 = vadd.f32 %v1600, %v1605
        %v1608 = vld [vmem:[%s7] sm:$0xff]
        %v1609 = vld [vmem:[%s7 + $0x8] sm:$0xf]
        %v1610 = vld [vmem:[%s7 + $0xc] sm:$0xff]
        %v1611 = vld [vmem:[%s7 + $0x14] sm:$0xf]
        %v1612 = vld [vmem:[%s7 + $0x18] sm:$0xff]
        %v1613 = vld [vmem:[%s7 + $0x20] sm:$0xf]
        %v1614 = vld [vmem:[%s7 + $0x24] sm:$0xff]
        %v1615 = vld [vmem:[%s7 + $0x2c] sm:$0xf]
        %v1616 = vld [vmem:[%s7 + $0x30] sm:$0xff]
        %v1617 = vld [vmem:[%s7 + $0x38] sm:$0xf]
        %v1618 = vld [vmem:[%s7 + $0x3c] sm:$0xff]
        %v1619 = vld [vmem:[%s7 + $0x44] sm:$0xf]
        %v1620 = vld [vmem:[%s7 + $0x48] sm:$0xff]
        %v1621 = vld [vmem:[%s7 + $0x50] sm:$0xf]
        %v1622 = vld [vmem:[%s7 + $0x54] sm:$0xff]
        %v1623 = vld [vmem:[%s7 + $0x5c] sm:$0xf]
        %v1624 = vld [vmem:[%s7 + $0x60] sm:$0xff]
        %v1625 = vld [vmem:[%s7 + $0x68] sm:$0xf]
        %v1626 = vld [vmem:[%s7 + $0x6c] sm:$0xff]
        %v1627 = vld [vmem:[%s7 + $0x74] sm:$0xf]
        %v1628 = vld [vmem:[%s7 + $0x78] sm:$0xff]
        %v1629 = vld [vmem:[%s7 + $0x80] sm:$0xf]
        %v1630 = vld [vmem:[%s7 + $0x84] sm:$0xff]
        %v1631 = vld [vmem:[%s7 + $0x8c] sm:$0xf]
        %v1632 = vld [vmem:[%s7 + $0x90] sm:$0xff]
        %v1633 = vld [vmem:[%s7 + $0x98] sm:$0xf]
        %v1634 = vld [vmem:[%s7 + $0x9c] sm:$0xff]
        %v1635 = vld [vmem:[%s7 + $0xa4] sm:$0xf]
        %v1636 = vld [vmem:[%s7 + $0xa8] sm:$0xff]
        %v1637 = vld [vmem:[%s7 + $0xb0] sm:$0xf]
        %v1638 = vld [vmem:[%s7 + $0xb4] sm:$0xff]
        %v1639 = vld [vmem:[%s7 + $0xbc] sm:$0xf]
        %v1640 = vld [vmem:[#allocation8] sm:$0x7]
        %v1641 = vpack.c.bf16 %v1607, %v1607
        %v1643 = vlaneseq
        %v1644 = vshrl.u32 %v1643, 7
        %v1645 = vsub.s32 0, %v1644
        %v1646 = vrot.slane %v1640, %v1645
        %v1647 = vlaneseq
        %v1648 = vshrl.u32 %v1647, 7
        %v1649 = vsub.s32 1, %v1648
        %v1650 = vrot.slane %v1640, %v1649
        %v1651 = vlaneseq
        %v1652 = vshrl.u32 %v1651, 7
        %v1653 = vsub.s32 2, %v1652
        %v1654 = vrot.slane %v1640, %v1653
        %v1690 = vunpack.c.l.b16 %v1608
        %v1691 = vunpack.c.h.b16 %v1608
        %v1692 = vunpack.c.l.b16 %v1609
        %v1693 = vunpack.c.l.b16 %v1610
        %v1694 = vunpack.c.h.b16 %v1610
        %v1695 = vunpack.c.l.b16 %v1611
        %v1696 = vunpack.c.l.b16 %v1612
        %v1697 = vunpack.c.h.b16 %v1612
        %v1698 = vunpack.c.l.b16 %v1613
        %v1699 = vunpack.c.l.b16 %v1614
        %v1700 = vunpack.c.h.b16 %v1614
        %v1701 = vunpack.c.l.b16 %v1615
        %v1702 = vunpack.c.l.b16 %v1616
        %v1703 = vunpack.c.h.b16 %v1616
        %v1704 = vunpack.c.l.b16 %v1617
        %v1705 = vunpack.c.l.b16 %v1618
        %v1706 = vunpack.c.h.b16 %v1618
        %v1707 = vunpack.c.l.b16 %v1619
        %v1708 = vunpack.c.l.b16 %v1620
        %v1709 = vunpack.c.h.b16 %v1620
        %v1710 = vunpack.c.l.b16 %v1621
        %v1711 = vunpack.c.l.b16 %v1622
        %v1712 = vunpack.c.h.b16 %v1622
        %v1713 = vunpack.c.l.b16 %v1623
        %v1714 = vunpack.c.l.b16 %v1624
        %v1715 = vunpack.c.h.b16 %v1624
        %v1716 = vunpack.c.l.b16 %v1625
        %v1717 = vunpack.c.l.b16 %v1626
        %v1718 = vunpack.c.h.b16 %v1626
        %v1719 = vunpack.c.l.b16 %v1627
        %v1720 = vunpack.c.l.b16 %v1628
        %v1721 = vunpack.c.h.b16 %v1628
        %v1722 = vunpack.c.l.b16 %v1629
        %v1723 = vunpack.c.l.b16 %v1630
        %v1724 = vunpack.c.h.b16 %v1630
        %v1725 = vunpack.c.l.b16 %v1631
        %v1726 = vunpack.c.l.b16 %v1632
        %v1727 = vunpack.c.h.b16 %v1632
        %v1728 = vunpack.c.l.b16 %v1633
        %v1729 = vunpack.c.l.b16 %v1634
        %v1730 = vunpack.c.h.b16 %v1634
        %v1731 = vunpack.c.l.b16 %v1635
        %v1732 = vunpack.c.l.b16 %v1636
        %v1733 = vunpack.c.h.b16 %v1636
        %v1734 = vunpack.c.l.b16 %v1637
        %v1735 = vunpack.c.l.b16 %v1638
        %v1736 = vunpack.c.h.b16 %v1638
        %v1737 = vunpack.c.l.b16 %v1639
        %v1738 = vpack.c.b16 %v1693, %v1690
        %v1739 = vpack.c.b16 %v1694, %v1691
        %v1740 = vpack.c.b16 %v1695, %v1692
        %v1741 = vpack.c.b16 %v1699, %v1696
        %v1742 = vpack.c.b16 %v1700, %v1697
        %v1743 = vpack.c.b16 %v1701, %v1698
        %v1744 = vpack.c.b16 %v1705, %v1702
        %v1745 = vpack.c.b16 %v1706, %v1703
        %v1746 = vpack.c.b16 %v1707, %v1704
        %v1747 = vpack.c.b16 %v1711, %v1708
        %v1748 = vpack.c.b16 %v1712, %v1709
        %v1749 = vpack.c.b16 %v1713, %v1710
        %v1750 = vpack.c.b16 %v1717, %v1714
        %v1751 = vpack.c.b16 %v1718, %v1715
        %v1752 = vpack.c.b16 %v1719, %v1716
        %v1753 = vpack.c.b16 %v1723, %v1720
        %v1754 = vpack.c.b16 %v1724, %v1721
        %v1755 = vpack.c.b16 %v1725, %v1722
        %v1756 = vpack.c.b16 %v1729, %v1726
        %v1757 = vpack.c.b16 %v1730, %v1727
        %v1758 = vpack.c.b16 %v1731, %v1728
        %v1759 = vpack.c.b16 %v1735, %v1732
        %v1760 = vpack.c.b16 %v1736, %v1733
        %v1761 = vpack.c.b16 %v1737, %v1734
        %1786 = vmatprep.subr.bf16.mxu0 %v1739
        %1787 = vmatpush1.bf16.msra.mxu0 %v1738
        %1788 = vmatprep.subr.bf16.mxu0 %v1742
        %1789 = vmatpush1.bf16.msra.mxu0 %v1741
        %1790 = vmatprep.subr.bf16.mxu0 %v1745
        %1791 = vmatpush1.bf16.msra.mxu0 %v1744
        %1792 = vmatprep.subr.bf16.mxu0 %v1748
        %1793 = vmatpush1.bf16.msra.mxu0 %v1747
        %1794 = vmatprep.subr.bf16.mxu0 %v1751
        %1795 = vmatpush1.bf16.msra.mxu0 %v1750
        %1796 = vmatprep.subr.bf16.mxu0 %v1754
        %1797 = vmatpush1.bf16.msra.mxu0 %v1753
        %1798 = vmatprep.subr.bf16.mxu0 %v1757
        %1799 = vmatpush1.bf16.msra.mxu0 %v1756
        %1800 = vmatprep.subr.bf16.mxu0 %v1760
        %1801 = vmatpush1.bf16.msra.mxu0 %v1759
        %1802 = vmatprep.subr.bf16.mxu0 0
        %1803 = vmatpush1.bf16.msra.mxu0 0
        %1804 = vmatprep.subr.bf16.mxu0 0
        %1805 = vmatpush1.bf16.msra.mxu0 0
        %1806 = vmatprep.subr.bf16.mxu0 0
        %1807 = vmatpush1.bf16.msra.mxu0 0
        %1808 = vmatprep.subr.bf16.mxu0 0
        %1809 = vmatpush1.bf16.msra.mxu0 0
        %1810 = vmatprep.subr.bf16.mxu0 0
        %1811 = vmatpush1.bf16.msra.mxu0 0
        %1812 = vmatprep.subr.bf16.mxu0 0
        %1813 = vmatpush1.bf16.msra.mxu0 0
        %1814 = vmatprep.subr.bf16.mxu0 0
        %1815 = vmatpush1.bf16.msra.mxu0 0
        %1816 = vmatprep.subr.bf16.mxu0 0
        %1817 = vmatpush1.bf16.msra.mxu0 0
        %1818 = vmatprep.mubr.bf16.mxu0 0
        %1819 = vmatmul.mubr.bf16.gmra.mrb[0].mxu0 %v1641
        %v1820 = vpop.f32.mrb[0].mxu0
        %v1821 = vadd.f32 %v1646, %v1820
        %v1822 = vpop.f32.mrb[0].mxu0
        %v1823 = vadd.f32 %v1650, %v1822
        %v1824 = vpop.f32.mrb[0].mxu0
        %v1825 = vpop.f32.mrb[0].mxu0
        %1826 = vdwg.mxu0
        %1827 = vmatprep.subr.bf16.mxu0 0
        %1828 = vmatpush1.bf16.msra.mxu0 %v1740
        %1829 = vmatprep.subr.bf16.mxu0 0
        %1830 = vmatpush1.bf16.msra.mxu0 %v1743
        %1831 = vmatprep.subr.bf16.mxu0 0
        %1832 = vmatpush1.bf16.msra.mxu0 %v1746
        %1833 = vmatprep.subr.bf16.mxu0 0
        %1834 = vmatpush1.bf16.msra.mxu0 %v1749
        %1835 = vmatprep.subr.bf16.mxu0 0
        %1836 = vmatpush1.bf16.msra.mxu0 %v1752
        %1837 = vmatprep.subr.bf16.mxu0 0
        %1838 = vmatpush1.bf16.msra.mxu0 %v1755
        %1839 = vmatprep.subr.bf16.mxu0 0
        %1840 = vmatpush1.bf16.msra.mxu0 %v1758
        %1841 = vmatprep.subr.bf16.mxu0 0
        %1842 = vmatpush1.bf16.msra.mxu0 %v1761
        %1843 = vmatprep.subr.bf16.mxu0 0
        %1844 = vmatpush1.bf16.msra.mxu0 0
        %1845 = vmatprep.subr.bf16.mxu0 0
        %1846 = vmatpush1.bf16.msra.mxu0 0
        %1847 = vmatprep.subr.bf16.mxu0 0
        %1848 = vmatpush1.bf16.msra.mxu0 0
        %1849 = vmatprep.subr.bf16.mxu0 0
        %1850 = vmatpush1.bf16.msra.mxu0 0
        %1851 = vmatprep.subr.bf16.mxu0 0
        %1852 = vmatpush1.bf16.msra.mxu0 0
        %1853 = vmatprep.subr.bf16.mxu0 0
        %1854 = vmatpush1.bf16.msra.mxu0 0
        %1855 = vmatprep.subr.bf16.mxu0 0
        %1856 = vmatpush1.bf16.msra.mxu0 0
        %1857 = vmatprep.subr.bf16.mxu0 0
        %1858 = vmatpush1.bf16.msra.mxu0 0
        %1859 = vmatprep.mubr.bf16.mxu0 0
        %1860 = vmatmul.mubr.bf16.gmra.mrb[0].mxu0 %v1641
        %v1861 = vpop.f32.mrb[0].mxu0
        %v1862 = vadd.f32 %v1654, %v1861
        %v1863 = vpop.f32.mrb[0].mxu0
        %v1864 = vpop.f32.mrb[0].mxu0
        %v1865 = vpop.f32.mrb[0].mxu0
        %1866 = vdwg.mxu0
        %v1867 = vmul.f32 %v1821, 0.17677669
        %v1868 = vpack.c.bf16 %v1867, %v1867
        %v1869 = vpack.c.bf16 %v1823, %v1823
        %v1870 = vpack.c.bf16 %v1862, %v1862
        %vm1871 = vcmask 261120
        %v1873 = vsel %vm1871, %v1868, 0
        %v1876 = vsel %vm1871, %v1869, 0
        %1878 = vmatprep.subr.bf16.mxu0 0
        %1879 = vmatpush1.bf16.xpose.msra.mxu0 %v1876
        %1880 = vmatprep.subr.bf16.mxu0 0
        %1881 = vmatpush1.bf16.xpose.msra.mxu0 0
        %1882 = vmatprep.subr.bf16.mxu0 0
        %1883 = vmatpush1.bf16.xpose.msra.mxu0 0
        %1884 = vmatprep.subr.bf16.mxu0 0
        %1885 = vmatpush1.bf16.xpose.msra.mxu0 0
        %1886 = vmatprep.subr.bf16.mxu0 0
        %1887 = vmatpush1.bf16.xpose.msra.mxu0 0
        %1888 = vmatprep.subr.bf16.mxu0 0
        %1889 = vmatpush1.bf16.xpose.msra.mxu0 0
        %1890 = vmatprep.subr.bf16.mxu0 0
        %1891 = vmatpush1.bf16.xpose.msra.mxu0 0
        %1892 = vmatprep.subr.bf16.mxu0 0
        %1893 = vmatpush1.bf16.xpose.msra.mxu0 0
        %1894 = vmatprep.subr.bf16.mxu0 0
        %1895 = vmatpush1.bf16.xpose.msra.mxu0 0
        %1896 = vmatprep.subr.bf16.mxu0 0
        %1897 = vmatpush1.bf16.xpose.msra.mxu0 0
        %1898 = vmatprep.subr.bf16.mxu0 0
        %1899 = vmatpush1.bf16.xpose.msra.mxu0 0
        %1900 = vmatprep.subr.bf16.mxu0 0
        %1901 = vmatpush1.bf16.xpose.msra.mxu0 0
        %1902 = vmatprep.subr.bf16.mxu0 0
        %1903 = vmatpush1.bf16.xpose.msra.mxu0 0
        %1904 = vmatprep.subr.bf16.mxu0 0
        %1905 = vmatpush1.bf16.xpose.msra.mxu0 0
        %1906 = vmatprep.subr.bf16.mxu0 0
        %1907 = vmatpush1.bf16.xpose.msra.mxu0 0
        %1908 = vmatprep.subr.bf16.mxu0 0
        %1909 = vmatpush1.bf16.xpose.msra.mxu0 0
        %1910 = vmatprep.mubr.bf16.mxu0 0
        %1911 = vmatmul.mubr.bf16.gmra.mrb[0].mxu0 %v1873
        %v1912 = vpop.f32.mrb[0].mxu0
        %v1913 = vadd.f32 0.0, %v1912
        %v1914 = vpop.f32.mrb[0].mxu0
        %v1915 = vpop.f32.mrb[0].mxu0
        %v1916 = vpop.f32.mrb[0].mxu0
        %1917 = vdwg.mxu0
        %vm1918 = vcmask 36864
        %v1919 = vsel %vm1918, %v1913, -inf
        %1920 = vmax.xlane.f32.xlu0 %v1919
        %v1921 = vpop.xlane.xlu0 %1920
        %v1922 = vsub.f32 %v1913, %v1921
        %v1923 = vmul.f32 %v1922, 1.442695
        %v1924 = vpow.pop %v1923
        %v1925 = vsel %vm1918, %v1924, 0.0
        %1926 = vadd.xlane.f32.xlu0 %v1925
        %v1927 = vpop.xlane.xlu0 %1926
        %v1928 = vrcp.pop %v1927
        %v1929 = vmul.f32 %v1924, %v1928
        %v1930 = vpack.c.bf16 %v1929, %v1929
        %vm1931 = vcmask 39936
        %v1933 = vsel %vm1931, %v1930, 0
        %vm1935 = vcmask 1041408
        %vm1936 = vcmask 1042432
        %v1937 = vsel %vm1935, 4294967295, 65535
        %v1938 = vsel %vm1936, %v1937, 0
        %v1940 = vand.u32 %v1870, %v1938
        %1942 = vmatprep.subr.bf16.mxu0 0
        %1943 = vmatpush1.bf16.msra.mxu0 %v1940
        %1944 = vmatprep.subr.bf16.mxu0 0
        %1945 = vmatpush1.bf16.msra.mxu0 0
        %1946 = vmatprep.subr.bf16.mxu0 0
        %1947 = vmatpush1.bf16.msra.mxu0 0
        %1948 = vmatprep.subr.bf16.mxu0 0
        %1949 = vmatpush1.bf16.msra.mxu0 0
        %1950 = vmatprep.subr.bf16.mxu0 0
        %1951 = vmatpush1.bf16.msra.mxu0 0
        %1952 = vmatprep.subr.bf16.mxu0 0
        %1953 = vmatpush1.bf16.msra.mxu0 0
        %1954 = vmatprep.subr.bf16.mxu0 0
        %1955 = vmatpush1.bf16.msra.mxu0 0
        %1956 = vmatprep.subr.bf16.mxu0 0
        %1957 = vmatpush1.bf16.msra.mxu0 0
        %1958 = vmatprep.subr.bf16.mxu0 0
        %1959 = vmatpush1.bf16.msra.mxu0 0
        %1960 = vmatprep.subr.bf16.mxu0 0
        %1961 = vmatpush1.bf16.msra.mxu0 0
        %1962 = vmatprep.subr.bf16.mxu0 0
        %1963 = vmatpush1.bf16.msra.mxu0 0
        %1964 = vmatprep.subr.bf16.mxu0 0
        %1965 = vmatpush1.bf16.msra.mxu0 0
        %1966 = vmatprep.subr.bf16.mxu0 0
        %1967 = vmatpush1.bf16.msra.mxu0 0
        %1968 = vmatprep.subr.bf16.mxu0 0
        %1969 = vmatpush1.bf16.msra.mxu0 0
        %1970 = vmatprep.subr.bf16.mxu0 0
        %1971 = vmatpush1.bf16.msra.mxu0 0
        %1972 = vmatprep.subr.bf16.mxu0 0
        %1973 = vmatpush1.bf16.msra.mxu0 0
        %1974 = vmatprep.mubr.bf16.mxu0 0
        %1975 = vmatmul.mubr.bf16.gmra.mrb[0].mxu0 %v1933
        %v1976 = vpop.f32.mrb[0].mxu0
        %v1977 = vadd.f32 0.0, %v1976
        %v1978 = vpop.f32.mrb[0].mxu0
        %v1979 = vpop.f32.mrb[0].mxu0
        %v1980 = vpop.f32.mrb[0].mxu0
        %1981 = vdwg.mxu0
        %v1982 = vpack.c.bf16 %v1977, %v1977
        %v1983 = vld [vmem:[#allocation9] sm:$0xf]
        %v1984 = vld [vmem:[#allocation9 + $0x4] sm:$0xf]
        %v1985 = vld [vmem:[#allocation9 + $0x8] sm:$0xf]
        %v1986 = vld [vmem:[#allocation9 + $0xc] sm:$0xf]
        %1988 = vrot.lane.b32.xlu0 %v1868, 96
        %v1989 = vpop.permute.xlu0 %1988
        %1991 = vrot.lane.b32.xlu0 %v1869, 96
        %v1992 = vpop.permute.xlu0 %1991
        %v1994 = vsel %vm1871, %v1989, 0
        %v1997 = vsel %vm1871, %v1992, 0
        %1999 = vmatprep.subr.bf16.mxu0 0
        %2000 = vmatpush1.bf16.xpose.msra.mxu0 %v1997
        %2001 = vmatprep.subr.bf16.mxu0 0
        %2002 = vmatpush1.bf16.xpose.msra.mxu0 0
        %2003 = vmatprep.subr.bf16.mxu0 0
        %2004 = vmatpush1.bf16.xpose.msra.mxu0 0
        %2005 = vmatprep.subr.bf16.mxu0 0
        %2006 = vmatpush1.bf16.xpose.msra.mxu0 0
        %2007 = vmatprep.subr.bf16.mxu0 0
        %2008 = vmatpush1.bf16.xpose.msra.mxu0 0
        %2009 = vmatprep.subr.bf16.mxu0 0
        %2010 = vmatpush1.bf16.xpose.msra.mxu0 0
        %2011 = vmatprep.subr.bf16.mxu0 0
        %2012 = vmatpush1.bf16.xpose.msra.mxu0 0
        %2013 = vmatprep.subr.bf16.mxu0 0
        %2014 = vmatpush1.bf16.xpose.msra.mxu0 0
        %2015 = vmatprep.subr.bf16.mxu0 0
        %2016 = vmatpush1.bf16.xpose.msra.mxu0 0
        %2017 = vmatprep.subr.bf16.mxu0 0
        %2018 = vmatpush1.bf16.xpose.msra.mxu0 0
        %2019 = vmatprep.subr.bf16.mxu0 0
        %2020 = vmatpush1.bf16.xpose.msra.mxu0 0
        %2021 = vmatprep.subr.bf16.mxu0 0
        %2022 = vmatpush1.bf16.xpose.msra.mxu0 0
        %2023 = vmatprep.subr.bf16.mxu0 0
        %2024 = vmatpush1.bf16.xpose.msra.mxu0 0
        %2025 = vmatprep.subr.bf16.mxu0 0
        %2026 = vmatpush1.bf16.xpose.msra.mxu0 0
        %2027 = vmatprep.subr.bf16.mxu0 0
        %2028 = vmatpush1.bf16.xpose.msra.mxu0 0
        %2029 = vmatprep.subr.bf16.mxu0 0
        %2030 = vmatpush1.bf16.xpose.msra.mxu0 0
        %2031 = vmatprep.mubr.bf16.mxu0 0
        %2032 = vmatmul.mubr.bf16.gmra.mrb[0].mxu0 %v1994
        %v2033 = vpop.f32.mrb[0].mxu0
        %v2034 = vadd.f32 0.0, %v2033
        %v2035 = vpop.f32.mrb[0].mxu0
        %v2036 = vpop.f32.mrb[0].mxu0
        %v2037 = vpop.f32.mrb[0].mxu0
        %2038 = vdwg.mxu0
        %v2039 = vsel %vm1918, %v2034, -inf
        %2040 = vmax.xlane.f32.xlu0 %v2039
        %v2041 = vpop.xlane.xlu0 %2040
        %v2042 = vsub.f32 %v2034, %v2041
        %v2043 = vmul.f32 %v2042, 1.442695
        %v2044 = vpow.pop %v2043
        %v2045 = vsel %vm1918, %v2044, 0.0
        %2046 = vadd.xlane.f32.xlu0 %v2045
        %v2047 = vpop.xlane.xlu0 %2046
        %v2048 = vrcp.pop %v2047
        %v2049 = vmul.f32 %v2044, %v2048
        %v2050 = vpack.c.bf16 %v2049, %v2049
        %2052 = vrot.lane.b32.xlu0 %v1870, 96
        %v2053 = vpop.permute.xlu0 %2052
        %v2055 = vsel %vm1931, %v2050, 0
        %v2058 = vand.u32 %v2053, %v1938
        %2060 = vmatprep.subr.bf16.mxu0 0
        %2061 = vmatpush1.bf16.msra.mxu0 %v2058
        %2062 = vmatprep.subr.bf16.mxu0 0
        %2063 = vmatpush1.bf16.msra.mxu0 0
        %2064 = vmatprep.subr.bf16.mxu0 0
        %2065 = vmatpush1.bf16.msra.mxu0 0
        %2066 = vmatprep.subr.bf16.mxu0 0
        %2067 = vmatpush1.bf16.msra.mxu0 0
        %2068 = vmatprep.subr.bf16.mxu0 0
        %2069 = vmatpush1.bf16.msra.mxu0 0
        %2070 = vmatprep.subr.bf16.mxu0 0
        %2071 = vmatpush1.bf16.msra.mxu0 0
        %2072 = vmatprep.subr.bf16.mxu0 0
        %2073 = vmatpush1.bf16.msra.mxu0 0
        %2074 = vmatprep.subr.bf16.mxu0 0
        %2075 = vmatpush1.bf16.msra.mxu0 0
        %2076 = vmatprep.subr.bf16.mxu0 0
        %2077 = vmatpush1.bf16.msra.mxu0 0
        %2078 = vmatprep.subr.bf16.mxu0 0
        %2079 = vmatpush1.bf16.msra.mxu0 0
        %2080 = vmatprep.subr.bf16.mxu0 0
        %2081 = vmatpush1.bf16.msra.mxu0 0
        %2082 = vmatprep.subr.bf16.mxu0 0
        %2083 = vmatpush1.bf16.msra.mxu0 0
        %2084 = vmatprep.subr.bf16.mxu0 0
        %2085 = vmatpush1.bf16.msra.mxu0 0
        %2086 = vmatprep.subr.bf16.mxu0 0
        %2087 = vmatpush1.bf16.msra.mxu0 0
        %2088 = vmatprep.subr.bf16.mxu0 0
        %2089 = vmatpush1.bf16.msra.mxu0 0
        %2090 = vmatprep.subr.bf16.mxu0 0
        %2091 = vmatpush1.bf16.msra.mxu0 0
        %2092 = vmatprep.mubr.bf16.mxu0 0
        %2093 = vmatmul.mubr.bf16.gmra.mrb[0].mxu0 %v2055
        %v2094 = vpop.f32.mrb[0].mxu0
        %v2095 = vadd.f32 0.0, %v2094
        %v2096 = vpop.f32.mrb[0].mxu0
        %v2097 = vpop.f32.mrb[0].mxu0
        %v2098 = vpop.f32.mrb[0].mxu0
        %2099 = vdwg.mxu0
        %v2100 = vpack.c.bf16 %v2095, %v2095
        %v2101 = vld [vmem:[#allocation9 + $0x10] sm:$0xf]
        %v2102 = vld [vmem:[#allocation9 + $0x14] sm:$0xf]
        %v2103 = vld [vmem:[#allocation9 + $0x18] sm:$0xf]
        %v2104 = vld [vmem:[#allocation9 + $0x1c] sm:$0xf]
        %v2109 = vunpack.c.l.b16 %v2101
        %v2110 = vunpack.c.l.b16 %v2102
        %v2111 = vunpack.c.l.b16 %v2103
        %v2112 = vunpack.c.l.b16 %v2104
        %v2113 = vpack.c.b16 %v2110, %v2109
        %v2114 = vpack.c.b16 %v2112, %v2111
        %v2118 = vsel %vm1871, %v2100, 0
        %2120 = vmatprep.subr.bf16.mxu0 0
        %2121 = vmatpush1.bf16.msra.mxu0 %v2113
        %2122 = vmatprep.subr.bf16.mxu0 0
        %2123 = vmatpush1.bf16.msra.mxu0 %v2114
        %2124 = vmatprep.subr.bf16.mxu0 0
        %2125 = vmatpush1.bf16.msra.mxu0 0
        %2126 = vmatprep.subr.bf16.mxu0 0
        %2127 = vmatpush1.bf16.msra.mxu0 0
        %2128 = vmatprep.subr.bf16.mxu0 0
        %2129 = vmatpush1.bf16.msra.mxu0 0
        %2130 = vmatprep.subr.bf16.mxu0 0
        %2131 = vmatpush1.bf16.msra.mxu0 0
        %2132 = vmatprep.subr.bf16.mxu0 0
        %2133 = vmatpush1.bf16.msra.mxu0 0
        %2134 = vmatprep.subr.bf16.mxu0 0
        %2135 = vmatpush1.bf16.msra.mxu0 0
        %2136 = vmatprep.subr.bf16.mxu0 0
        %2137 = vmatpush1.bf16.msra.mxu0 0
        %2138 = vmatprep.subr.bf16.mxu0 0
        %2139 = vmatpush1.bf16.msra.mxu0 0
        %2140 = vmatprep.subr.bf16.mxu0 0
        %2141 = vmatpush1.bf16.msra.mxu0 0
        %2142 = vmatprep.subr.bf16.mxu0 0
        %2143 = vmatpush1.bf16.msra.mxu0 0
        %2144 = vmatprep.subr.bf16.mxu0 0
        %2145 = vmatpush1.bf16.msra.mxu0 0
        %2146 = vmatprep.subr.bf16.mxu0 0
        %2147 = vmatpush1.bf16.msra.mxu0 0
        %2148 = vmatprep.subr.bf16.mxu0 0
        %2149 = vmatpush1.bf16.msra.mxu0 0
        %2150 = vmatprep.subr.bf16.mxu0 0
        %2151 = vmatpush1.bf16.msra.mxu0 0
        %2152 = vmatprep.mubr.bf16.mxu0 0
        %2153 = vmatmul.mubr.bf16.gmra.mrb[0].mxu0 %v2118
        %v2154 = vpop.f32.mrb[0].mxu0
        %v2155 = vadd.f32 0.0, %v2154
        %v2156 = vpop.f32.mrb[0].mxu0
        %v2157 = vpop.f32.mrb[0].mxu0
        %v2158 = vpop.f32.mrb[0].mxu0
        %2159 = vdwg.mxu0
        %v2164 = vunpack.c.l.b16 %v1983
        %v2165 = vunpack.c.l.b16 %v1984
        %v2166 = vunpack.c.l.b16 %v1985
        %v2167 = vunpack.c.l.b16 %v1986
        %v2168 = vpack.c.b16 %v2165, %v2164
        %v2169 = vpack.c.b16 %v2167, %v2166
        %v2173 = vsel %vm1871, %v1982, 0
        %2175 = vmatprep.subr.bf16.mxu0 0
        %2176 = vmatpush1.bf16.msra.mxu0 %v2168
        %2177 = vmatprep.subr.bf16.mxu0 0
        %2178 = vmatpush1.bf16.msra.mxu0 %v2169
        %2179 = vmatprep.subr.bf16.mxu0 0
        %2180 = vmatpush1.bf16.msra.mxu0 0
        %2181 = vmatprep.subr.bf16.mxu0 0
        %2182 = vmatpush1.bf16.msra.mxu0 0
        %2183 = vmatprep.subr.bf16.mxu0 0
        %2184 = vmatpush1.bf16.msra.mxu0 0
        %2185 = vmatprep.subr.bf16.mxu0 0
        %2186 = vmatpush1.bf16.msra.mxu0 0
        %2187 = vmatprep.subr.bf16.mxu0 0
        %2188 = vmatpush1.bf16.msra.mxu0 0
        %2189 = vmatprep.subr.bf16.mxu0 0
        %2190 = vmatpush1.bf16.msra.mxu0 0
        %2191 = vmatprep.subr.bf16.mxu0 0
        %2192 = vmatpush1.bf16.msra.mxu0 0
        %2193 = vmatprep.subr.bf16.mxu0 0
        %2194 = vmatpush1.bf16.msra.mxu0 0
        %2195 = vmatprep.subr.bf16.mxu0 0
        %2196 = vmatpush1.bf16.msra.mxu0 0
        %2197 = vmatprep.subr.bf16.mxu0 0
        %2198 = vmatpush1.bf16.msra.mxu0 0
        %2199 = vmatprep.subr.bf16.mxu0 0
        %2200 = vmatpush1.bf16.msra.mxu0 0
        %2201 = vmatprep.subr.bf16.mxu0 0
        %2202 = vmatpush1.bf16.msra.mxu0 0
        %2203 = vmatprep.subr.bf16.mxu0 0
        %2204 = vmatpush1.bf16.msra.mxu0 0
        %2205 = vmatprep.subr.bf16.mxu0 0
        %2206 = vmatpush1.bf16.msra.mxu0 0
        %2207 = vmatprep.mubr.bf16.mxu0 0
        %2208 = vmatmul.mubr.bf16.gmra.mrb[0].mxu0 %v2173
        %v2209 = vpop.f32.mrb[0].mxu0
        %v2210 = vadd.f32 %v2155, %v2209
        %v2211 = vpop.f32.mrb[0].mxu0
        %v2212 = vpop.f32.mrb[0].mxu0
        %v2213 = vpop.f32.mrb[0].mxu0
        %2214 = vdwg.mxu0
        %2215 = vrot.lane.b32.xlu0 %v1868, 64
        %v2216 = vpop.permute.xlu0 %2215
        %2217 = vrot.lane.b32.xlu0 %v1869, 64
        %v2218 = vpop.permute.xlu0 %2217
        %v2220 = vsel %vm1871, %v2216, 0
        %v2223 = vsel %vm1871, %v2218, 0
        %2225 = vmatprep.subr.bf16.mxu0 0
        %2226 = vmatpush1.bf16.xpose.msra.mxu0 %v2223
        %2227 = vmatprep.subr.bf16.mxu0 0
        %2228 = vmatpush1.bf16.xpose.msra.mxu0 0
        %2229 = vmatprep.subr.bf16.mxu0 0
        %2230 = vmatpush1.bf16.xpose.msra.mxu0 0
        %2231 = vmatprep.subr.bf16.mxu0 0
        %2232 = vmatpush1.bf16.xpose.msra.mxu0 0
        %2233 = vmatprep.subr.bf16.mxu0 0
        %2234 = vmatpush1.bf16.xpose.msra.mxu0 0
        %2235 = vmatprep.subr.bf16.mxu0 0
        %2236 = vmatpush1.bf16.xpose.msra.mxu0 0
        %2237 = vmatprep.subr.bf16.mxu0 0
        %2238 = vmatpush1.bf16.xpose.msra.mxu0 0
        %2239 = vmatprep.subr.bf16.mxu0 0
        %2240 = vmatpush1.bf16.xpose.msra.mxu0 0
        %2241 = vmatprep.subr.bf16.mxu0 0
        %2242 = vmatpush1.bf16.xpose.msra.mxu0 0
        %2243 = vmatprep.subr.bf16.mxu0 0
        %2244 = vmatpush1.bf16.xpose.msra.mxu0 0
        %2245 = vmatprep.subr.bf16.mxu0 0
        %2246 = vmatpush1.bf16.xpose.msra.mxu0 0
        %2247 = vmatprep.subr.bf16.mxu0 0
        %2248 = vmatpush1.bf16.xpose.msra.mxu0 0
        %2249 = vmatprep.subr.bf16.mxu0 0
        %2250 = vmatpush1.bf16.xpose.msra.mxu0 0
        %2251 = vmatprep.subr.bf16.mxu0 0
        %2252 = vmatpush1.bf16.xpose.msra.mxu0 0
        %2253 = vmatprep.subr.bf16.mxu0 0
        %2254 = vmatpush1.bf16.xpose.msra.mxu0 0
        %2255 = vmatprep.subr.bf16.mxu0 0
        %2256 = vmatpush1.bf16.xpose.msra.mxu0 0
        %2257 = vmatprep.mubr.bf16.mxu0 0
        %2258 = vmatmul.mubr.bf16.gmra.mrb[0].mxu0 %v2220
        %v2259 = vpop.f32.mrb[0].mxu0
        %v2260 = vadd.f32 0.0, %v2259
        %v2261 = vpop.f32.mrb[0].mxu0
        %v2262 = vpop.f32.mrb[0].mxu0
        %v2263 = vpop.f32.mrb[0].mxu0
        %2264 = vdwg.mxu0
        %v2265 = vsel %vm1918, %v2260, -inf
        %2266 = vmax.xlane.f32.xlu0 %v2265
        %v2267 = vpop.xlane.xlu0 %2266
        %v2268 = vsub.f32 %v2260, %v2267
        %v2269 = vmul.f32 %v2268, 1.442695
        %v2270 = vpow.pop %v2269
        %v2271 = vsel %vm1918, %v2270, 0.0
        %2272 = vadd.xlane.f32.xlu0 %v2271
        %v2273 = vpop.xlane.xlu0 %2272
        %v2274 = vrcp.pop %v2273
        %v2275 = vmul.f32 %v2270, %v2274
        %v2276 = vpack.c.bf16 %v2275, %v2275
        %2277 = vrot.lane.b32.xlu0 %v1870, 64
        %v2278 = vpop.permute.xlu0 %2277
        %v2280 = vsel %vm1931, %v2276, 0
        %v2283 = vand.u32 %v2278, %v1938
        %2285 = vmatprep.subr.bf16.mxu0 0
        %2286 = vmatpush1.bf16.msra.mxu0 %v2283
        %2287 = vmatprep.subr.bf16.mxu0 0
        %2288 = vmatpush1.bf16.msra.mxu0 0
        %2289 = vmatprep.subr.bf16.mxu0 0
        %2290 = vmatpush1.bf16.msra.mxu0 0
        %2291 = vmatprep.subr.bf16.mxu0 0
        %2292 = vmatpush1.bf16.msra.mxu0 0
        %2293 = vmatprep.subr.bf16.mxu0 0
        %2294 = vmatpush1.bf16.msra.mxu0 0
        %2295 = vmatprep.subr.bf16.mxu0 0
        %2296 = vmatpush1.bf16.msra.mxu0 0
        %2297 = vmatprep.subr.bf16.mxu0 0
        %2298 = vmatpush1.bf16.msra.mxu0 0
        %2299 = vmatprep.subr.bf16.mxu0 0
        %2300 = vmatpush1.bf16.msra.mxu0 0
        %2301 = vmatprep.subr.bf16.mxu0 0
        %2302 = vmatpush1.bf16.msra.mxu0 0
        %2303 = vmatprep.subr.bf16.mxu0 0
        %2304 = vmatpush1.bf16.msra.mxu0 0
        %2305 = vmatprep.subr.bf16.mxu0 0
        %2306 = vmatpush1.bf16.msra.mxu0 0
        %2307 = vmatprep.subr.bf16.mxu0 0
        %2308 = vmatpush1.bf16.msra.mxu0 0
        %2309 = vmatprep.subr.bf16.mxu0 0
        %2310 = vmatpush1.bf16.msra.mxu0 0
        %2311 = vmatprep.subr.bf16.mxu0 0
        %2312 = vmatpush1.bf16.msra.mxu0 0
        %2313 = vmatprep.subr.bf16.mxu0 0
        %2314 = vmatpush1.bf16.msra.mxu0 0
        %2315 = vmatprep.subr.bf16.mxu0 0
        %2316 = vmatpush1.bf16.msra.mxu0 0
        %2317 = vmatprep.mubr.bf16.mxu0 0
        %2318 = vmatmul.mubr.bf16.gmra.mrb[0].mxu0 %v2280
        %v2319 = vpop.f32.mrb[0].mxu0
        %v2320 = vadd.f32 0.0, %v2319
        %v2321 = vpop.f32.mrb[0].mxu0
        %v2322 = vpop.f32.mrb[0].mxu0
        %v2323 = vpop.f32.mrb[0].mxu0
        %2324 = vdwg.mxu0
        %v2325 = vpack.c.bf16 %v2320, %v2320
        %v2326 = vld [vmem:[#allocation9 + $0x20] sm:$0xf]
        %v2327 = vld [vmem:[#allocation9 + $0x24] sm:$0xf]
        %v2328 = vld [vmem:[#allocation9 + $0x28] sm:$0xf]
        %v2329 = vld [vmem:[#allocation9 + $0x2c] sm:$0xf]
        %v2334 = vunpack.c.l.b16 %v2326
        %v2335 = vunpack.c.l.b16 %v2327
        %v2336 = vunpack.c.l.b16 %v2328
        %v2337 = vunpack.c.l.b16 %v2329
        %v2338 = vpack.c.b16 %v2335, %v2334
        %v2339 = vpack.c.b16 %v2337, %v2336
        %v2343 = vsel %vm1871, %v2325, 0
        %2345 = vmatprep.subr.bf16.mxu0 0
        %2346 = vmatpush1.bf16.msra.mxu0 %v2338
        %2347 = vmatprep.subr.bf16.mxu0 0
        %2348 = vmatpush1.bf16.msra.mxu0 %v2339
        %2349 = vmatprep.subr.bf16.mxu0 0
        %2350 = vmatpush1.bf16.msra.mxu0 0
        %2351 = vmatprep.subr.bf16.mxu0 0
        %2352 = vmatpush1.bf16.msra.mxu0 0
        %2353 = vmatprep.subr.bf16.mxu0 0
        %2354 = vmatpush1.bf16.msra.mxu0 0
        %2355 = vmatprep.subr.bf16.mxu0 0
        %2356 = vmatpush1.bf16.msra.mxu0 0
        %2357 = vmatprep.subr.bf16.mxu0 0
        %2358 = vmatpush1.bf16.msra.mxu0 0
        %2359 = vmatprep.subr.bf16.mxu0 0
        %2360 = vmatpush1.bf16.msra.mxu0 0
        %2361 = vmatprep.subr.bf16.mxu0 0
        %2362 = vmatpush1.bf16.msra.mxu0 0
        %2363 = vmatprep.subr.bf16.mxu0 0
        %2364 = vmatpush1.bf16.msra.mxu0 0
        %2365 = vmatprep.subr.bf16.mxu0 0
        %2366 = vmatpush1.bf16.msra.mxu0 0
        %2367 = vmatprep.subr.bf16.mxu0 0
        %2368 = vmatpush1.bf16.msra.mxu0 0
        %2369 = vmatprep.subr.bf16.mxu0 0
        %2370 = vmatpush1.bf16.msra.mxu0 0
        %2371 = vmatprep.subr.bf16.mxu0 0
        %2372 = vmatpush1.bf16.msra.mxu0 0
        %2373 = vmatprep.subr.bf16.mxu0 0
        %2374 = vmatpush1.bf16.msra.mxu0 0
        %2375 = vmatprep.subr.bf16.mxu0 0
        %2376 = vmatpush1.bf16.msra.mxu0 0
        %2377 = vmatprep.mubr.bf16.mxu0 0
        %2378 = vmatmul.mubr.bf16.gmra.mrb[0].mxu0 %v2343
        %v2379 = vpop.f32.mrb[0].mxu0
        %v2380 = vadd.f32 0.0, %v2379
        %v2381 = vpop.f32.mrb[0].mxu0
        %v2382 = vpop.f32.mrb[0].mxu0
        %v2383 = vpop.f32.mrb[0].mxu0
        %2384 = vdwg.mxu0
        %v2385 = vadd.f32 %v2210, %v2380
        %2386 = vrot.lane.b32.xlu0 %v1868, 32
        %v2387 = vpop.permute.xlu0 %2386
        %2388 = vrot.lane.b32.xlu0 %v1869, 32
        %v2389 = vpop.permute.xlu0 %2388
        %v2391 = vsel %vm1871, %v2387, 0
        %v2394 = vsel %vm1871, %v2389, 0
        %2396 = vmatprep.subr.bf16.mxu0 0
        %2397 = vmatpush1.bf16.xpose.msra.mxu0 %v2394
        %2398 = vmatprep.subr.bf16.mxu0 0
        %2399 = vmatpush1.bf16.xpose.msra.mxu0 0
        %2400 = vmatprep.subr.bf16.mxu0 0
        %2401 = vmatpush1.bf16.xpose.msra.mxu0 0
        %2402 = vmatprep.subr.bf16.mxu0 0
        %2403 = vmatpush1.bf16.xpose.msra.mxu0 0
        %2404 = vmatprep.subr.bf16.mxu0 0
        %2405 = vmatpush1.bf16.xpose.msra.mxu0 0
        %2406 = vmatprep.subr.bf16.mxu0 0
        %2407 = vmatpush1.bf16.xpose.msra.mxu0 0
        %2408 = vmatprep.subr.bf16.mxu0 0
        %2409 = vmatpush1.bf16.xpose.msra.mxu0 0
        %2410 = vmatprep.subr.bf16.mxu0 0
        %2411 = vmatpush1.bf16.xpose.msra.mxu0 0
        %2412 = vmatprep.subr.bf16.mxu0 0
        %2413 = vmatpush1.bf16.xpose.msra.mxu0 0
        %2414 = vmatprep.subr.bf16.mxu0 0
        %2415 = vmatpush1.bf16.xpose.msra.mxu0 0
        %2416 = vmatprep.subr.bf16.mxu0 0
        %2417 = vmatpush1.bf16.xpose.msra.mxu0 0
        %2418 = vmatprep.subr.bf16.mxu0 0
        %2419 = vmatpush1.bf16.xpose.msra.mxu0 0
        %2420 = vmatprep.subr.bf16.mxu0 0
        %2421 = vmatpush1.bf16.xpose.msra.mxu0 0
        %2422 = vmatprep.subr.bf16.mxu0 0
        %2423 = vmatpush1.bf16.xpose.msra.mxu0 0
        %2424 = vmatprep.subr.bf16.mxu0 0
        %2425 = vmatpush1.bf16.xpose.msra.mxu0 0
        %2426 = vmatprep.subr.bf16.mxu0 0
        %2427 = vmatpush1.bf16.xpose.msra.mxu0 0
        %2428 = vmatprep.mubr.bf16.mxu0 0
        %2429 = vmatmul.mubr.bf16.gmra.mrb[0].mxu0 %v2391
        %v2430 = vpop.f32.mrb[0].mxu0
        %v2431 = vadd.f32 0.0, %v2430
        %v2432 = vpop.f32.mrb[0].mxu0
        %v2433 = vpop.f32.mrb[0].mxu0
        %v2434 = vpop.f32.mrb[0].mxu0
        %2435 = vdwg.mxu0
        %v2436 = vsel %vm1918, %v2431, -inf
        %2437 = vmax.xlane.f32.xlu0 %v2436
        %v2438 = vpop.xlane.xlu0 %2437
        %v2439 = vsub.f32 %v2431, %v2438
        %v2440 = vmul.f32 %v2439, 1.442695
        %v2441 = vpow.pop %v2440
        %v2442 = vsel %vm1918, %v2441, 0.0
        %2443 = vadd.xlane.f32.xlu0 %v2442
        %v2444 = vpop.xlane.xlu0 %2443
        %v2445 = vrcp.pop %v2444
        %v2446 = vmul.f32 %v2441, %v2445
        %v2447 = vpack.c.bf16 %v2446, %v2446
        %2448 = vrot.lane.b32.xlu0 %v1870, 32
        %v2449 = vpop.permute.xlu0 %2448
        %v2451 = vsel %vm1931, %v2447, 0
        %v2454 = vand.u32 %v2449, %v1938
        %2456 = vmatprep.subr.bf16.mxu0 0
        %2457 = vmatpush1.bf16.msra.mxu0 %v2454
        %2458 = vmatprep.subr.bf16.mxu0 0
        %2459 = vmatpush1.bf16.msra.mxu0 0
        %2460 = vmatprep.subr.bf16.mxu0 0
        %2461 = vmatpush1.bf16.msra.mxu0 0
        %2462 = vmatprep.subr.bf16.mxu0 0
        %2463 = vmatpush1.bf16.msra.mxu0 0
        %2464 = vmatprep.subr.bf16.mxu0 0
        %2465 = vmatpush1.bf16.msra.mxu0 0
        %2466 = vmatprep.subr.bf16.mxu0 0
        %2467 = vmatpush1.bf16.msra.mxu0 0
        %2468 = vmatprep.subr.bf16.mxu0 0
        %2469 = vmatpush1.bf16.msra.mxu0 0
        %2470 = vmatprep.subr.bf16.mxu0 0
        %2471 = vmatpush1.bf16.msra.mxu0 0
        %2472 = vmatprep.subr.bf16.mxu0 0
        %2473 = vmatpush1.bf16.msra.mxu0 0
        %2474 = vmatprep.subr.bf16.mxu0 0
        %2475 = vmatpush1.bf16.msra.mxu0 0
        %2476 = vmatprep.subr.bf16.mxu0 0
        %2477 = vmatpush1.bf16.msra.mxu0 0
        %2478 = vmatprep.subr.bf16.mxu0 0
        %2479 = vmatpush1.bf16.msra.mxu0 0
        %2480 = vmatprep.subr.bf16.mxu0 0
        %2481 = vmatpush1.bf16.msra.mxu0 0
        %2482 = vmatprep.subr.bf16.mxu0 0
        %2483 = vmatpush1.bf16.msra.mxu0 0
        %2484 = vmatprep.subr.bf16.mxu0 0
        %2485 = vmatpush1.bf16.msra.mxu0 0
        %2486 = vmatprep.subr.bf16.mxu0 0
        %2487 = vmatpush1.bf16.msra.mxu0 0
        %2488 = vmatprep.mubr.bf16.mxu0 0
        %2489 = vmatmul.mubr.bf16.gmra.mrb[0].mxu0 %v2451
        %v2490 = vpop.f32.mrb[0].mxu0
        %v2491 = vadd.f32 0.0, %v2490
        %v2492 = vpop.f32.mrb[0].mxu0
        %v2493 = vpop.f32.mrb[0].mxu0
        %v2494 = vpop.f32.mrb[0].mxu0
        %2495 = vdwg.mxu0
        %v2496 = vpack.c.bf16 %v2491, %v2491
        %v2497 = vld [vmem:[#allocation9 + $0x30] sm:$0xf]
        %v2498 = vld [vmem:[#allocation9 + $0x34] sm:$0xf]
        %v2499 = vld [vmem:[#allocation9 + $0x38] sm:$0xf]
        %v2500 = vld [vmem:[#allocation9 + $0x3c] sm:$0xf]
        %v2505 = vunpack.c.l.b16 %v2497
        %v2506 = vunpack.c.l.b16 %v2498
        %v2507 = vunpack.c.l.b16 %v2499
        %v2508 = vunpack.c.l.b16 %v2500
        %v2509 = vpack.c.b16 %v2506, %v2505
        %v2510 = vpack.c.b16 %v2508, %v2507
        %v2514 = vsel %vm1871, %v2496, 0
        %2516 = vmatprep.subr.bf16.mxu0 0
        %2517 = vmatpush1.bf16.msra.mxu0 %v2509
        %2518 = vmatprep.subr.bf16.mxu0 0
        %2519 = vmatpush1.bf16.msra.mxu0 %v2510
        %2520 = vmatprep.subr.bf16.mxu0 0
        %2521 = vmatpush1.bf16.msra.mxu0 0
        %2522 = vmatprep.subr.bf16.mxu0 0
        %2523 = vmatpush1.bf16.msra.mxu0 0
        %2524 = vmatprep.subr.bf16.mxu0 0
        %2525 = vmatpush1.bf16.msra.mxu0 0
        %2526 = vmatprep.subr.bf16.mxu0 0
        %2527 = vmatpush1.bf16.msra.mxu0 0
        %2528 = vmatprep.subr.bf16.mxu0 0
        %2529 = vmatpush1.bf16.msra.mxu0 0
        %2530 = vmatprep.subr.bf16.mxu0 0
        %2531 = vmatpush1.bf16.msra.mxu0 0
        %2532 = vmatprep.subr.bf16.mxu0 0
        %2533 = vmatpush1.bf16.msra.mxu0 0
        %2534 = vmatprep.subr.bf16.mxu0 0
        %2535 = vmatpush1.bf16.msra.mxu0 0
        %2536 = vmatprep.subr.bf16.mxu0 0
        %2537 = vmatpush1.bf16.msra.mxu0 0
        %2538 = vmatprep.subr.bf16.mxu0 0
        %2539 = vmatpush1.bf16.msra.mxu0 0
        %2540 = vmatprep.subr.bf16.mxu0 0
        %2541 = vmatpush1.bf16.msra.mxu0 0
        %2542 = vmatprep.subr.bf16.mxu0 0
        %2543 = vmatpush1.bf16.msra.mxu0 0
        %2544 = vmatprep.subr.bf16.mxu0 0
        %2545 = vmatpush1.bf16.msra.mxu0 0
        %2546 = vmatprep.subr.bf16.mxu0 0
        %2547 = vmatpush1.bf16.msra.mxu0 0
        %2548 = vmatprep.mubr.bf16.mxu0 0
        %2549 = vmatmul.mubr.bf16.gmra.mrb[0].mxu0 %v2514
        %v2550 = vpop.f32.mrb[0].mxu0
        %v2551 = vadd.f32 0.0, %v2550
        %v2552 = vpop.f32.mrb[0].mxu0
        %v2553 = vpop.f32.mrb[0].mxu0
        %v2554 = vpop.f32.mrb[0].mxu0
        %2555 = vdwg.mxu0
        %v2556 = vadd.f32 %v2385, %v2551
        %v2557 = vld [vmem:[#allocation12] sm:$0x1]
        %v2558 = vld [vmem:[#allocation11] sm:$0x1]
        %v2560 = vlaneseq
        %v2561 = vshrl.u32 %v2560, 7
        %v2562 = vsub.s32 0, %v2561
        %v2563 = vrot.slane %v2558, %v2562
        %v2565 = vadd.f32 %v2556, %v2563
        %v2567 = vlaneseq
        %v2568 = vshrl.u32 %v2567, 7
        %v2569 = vsub.s32 0, %v2568
        %v2570 = vrot.slane %v2557, %v2569
        %v2572 = vmul.f32 %v2570, %v2565
        %v2573 = vadd.f32 %v1576, %v2572
        %v2574 = vld [vmem:[#allocation14] sm:$0x1]
        %v2575 = vld [vmem:[#allocation15] sm:$0x1]
        %v2576 = vsel %vm1579, %v2573, 0.0
        %2577 = vadd.xlane.f32.xlu0 %v2576
        %v2578 = vpop.xlane.xlu0 %2577
        %v2579 = vmul.f32 %v2578, %v1583
        %v2580 = vsub.f32 %v2573, %v2579
        %v2581 = vmul.f32 %v2580, %v2580
        %v2582 = vsel %vm1579, %v2581, 0.0
        %2583 = vadd.xlane.f32.xlu0 %v2582
        %v2584 = vpop.xlane.xlu0 %2583
        %v2585 = vmul.f32 %v2584, %v1583
        %v2586 = vadd.f32 %v2585, 1e-06
        %v2587 = vrsqrt.pop %v2586
        %v2588 = vmul.f32 %v2580, %v2587
        %v2590 = vlaneseq
        %v2591 = vshrl.u32 %v2590, 7
        %v2592 = vsub.s32 0, %v2591
        %v2593 = vrot.slane %v2574, %v2592
        %v2595 = vmul.f32 %v2588, %v2593
        %v2597 = vlaneseq
        %v2598 = vshrl.u32 %v2597, 7
        %v2599 = vsub.s32 0, %v2598
        %v2600 = vrot.slane %v2575, %v2599
        %v2602 = vadd.f32 %v2595, %v2600
        %v2603 = vld [vmem:[%s14] sm:$0xff]
        %v2604 = vld [vmem:[%s14 + $0x8] sm:$0xff]
        %v2605 = vld [vmem:[%s14 + $0x10] sm:$0xff]
        %v2606 = vld [vmem:[%s14 + $0x18] sm:$0xff]
        %v2607 = vld [vmem:[%s14 + $0x20] sm:$0xff]
        %v2608 = vld [vmem:[%s14 + $0x28] sm:$0xff]
        %v2609 = vld [vmem:[%s14 + $0x30] sm:$0xff]
        %v2610 = vld [vmem:[%s14 + $0x38] sm:$0xff]
        %v2611 = vld [vmem:[%s14 + $0x40] sm:$0xff]
        %v2612 = vld [vmem:[%s14 + $0x48] sm:$0xff]
        %v2613 = vld [vmem:[%s14 + $0x50] sm:$0xff]
        %v2614 = vld [vmem:[%s14 + $0x58] sm:$0xff]
        %v2615 = vld [vmem:[%s14 + $0x60] sm:$0xff]
        %v2616 = vld [vmem:[%s14 + $0x68] sm:$0xff]
        %v2617 = vld [vmem:[%s14 + $0x70] sm:$0xff]
        %v2618 = vld [vmem:[%s14 + $0x78] sm:$0xff]
        %v2619 = vld [vmem:[%s14 + $0x80] sm:$0xff]
        %v2620 = vld [vmem:[%s14 + $0x88] sm:$0xff]
        %v2621 = vld [vmem:[%s14 + $0x90] sm:$0xff]
        %v2622 = vld [vmem:[%s14 + $0x98] sm:$0xff]
        %v2623 = vld [vmem:[%s14 + $0xa0] sm:$0xff]
        %v2624 = vld [vmem:[%s14 + $0xa8] sm:$0xff]
        %v2625 = vld [vmem:[%s14 + $0xb0] sm:$0xff]
        %v2626 = vld [vmem:[%s14 + $0xb8] sm:$0xff]
        %v2627 = vld [vmem:[%s14 + $0xc0] sm:$0xff]
        %v2628 = vld [vmem:[%s14 + $0xc8] sm:$0xff]
        %v2629 = vld [vmem:[%s14 + $0xd0] sm:$0xff]
        %v2630 = vld [vmem:[%s14 + $0xd8] sm:$0xff]
        %v2631 = vld [vmem:[%s14 + $0xe0] sm:$0xff]
        %v2632 = vld [vmem:[%s14 + $0xe8] sm:$0xff]
        %v2633 = vld [vmem:[%s14 + $0xf0] sm:$0xff]
        %v2634 = vld [vmem:[%s14 + $0xf8] sm:$0xff]
        %v2635 = vld [vmem:[#allocation17] sm:$0xf]
        %v2636 = vpack.c.bf16 %v2602, %v2602
        %v2638 = vlaneseq
        %v2639 = vshrl.u32 %v2638, 7
        %v2640 = vsub.s32 0, %v2639
        %v2641 = vrot.slane %v2635, %v2640
        %v2642 = vlaneseq
        %v2643 = vshrl.u32 %v2642, 7
        %v2644 = vsub.s32 1, %v2643
        %v2645 = vrot.slane %v2635, %v2644
        %v2646 = vlaneseq
        %v2647 = vshrl.u32 %v2646, 7
        %v2648 = vsub.s32 2, %v2647
        %v2649 = vrot.slane %v2635, %v2648
        %v2650 = vlaneseq
        %v2651 = vshrl.u32 %v2650, 7
        %v2652 = vsub.s32 3, %v2651
        %v2653 = vrot.slane %v2635, %v2652
        %v2690 = vunpack.c.l.b16 %v2603
        %v2691 = vunpack.c.h.b16 %v2603
        %v2692 = vunpack.c.l.b16 %v2604
        %v2693 = vunpack.c.h.b16 %v2604
        %v2694 = vunpack.c.l.b16 %v2605
        %v2695 = vunpack.c.h.b16 %v2605
        %v2696 = vunpack.c.l.b16 %v2606
        %v2697 = vunpack.c.h.b16 %v2606
        %v2698 = vunpack.c.l.b16 %v2607
        %v2699 = vunpack.c.h.b16 %v2607
        %v2700 = vunpack.c.l.b16 %v2608
        %v2701 = vunpack.c.h.b16 %v2608
        %v2702 = vunpack.c.l.b16 %v2609
        %v2703 = vunpack.c.h.b16 %v2609
        %v2704 = vunpack.c.l.b16 %v2610
        %v2705 = vunpack.c.h.b16 %v2610
        %v2706 = vunpack.c.l.b16 %v2611
        %v2707 = vunpack.c.h.b16 %v2611
        %v2708 = vunpack.c.l.b16 %v2612
        %v2709 = vunpack.c.h.b16 %v2612
        %v2710 = vunpack.c.l.b16 %v2613
        %v2711 = vunpack.c.h.b16 %v2613
        %v2712 = vunpack.c.l.b16 %v2614
        %v2713 = vunpack.c.h.b16 %v2614
        %v2714 = vunpack.c.l.b16 %v2615
        %v2715 = vunpack.c.h.b16 %v2615
        %v2716 = vunpack.c.l.b16 %v2616
        %v2717 = vunpack.c.h.b16 %v2616
        %v2718 = vunpack.c.l.b16 %v2617
        %v2719 = vunpack.c.h.b16 %v2617
        %v2720 = vunpack.c.l.b16 %v2618
        %v2721 = vunpack.c.h.b16 %v2618
        %v2722 = vunpack.c.l.b16 %v2619
        %v2723 = vunpack.c.h.b16 %v2619
        %v2724 = vunpack.c.l.b16 %v2620
        %v2725 = vunpack.c.h.b16 %v2620
        %v2726 = vunpack.c.l.b16 %v2621
        %v2727 = vunpack.c.h.b16 %v2621
        %v2728 = vunpack.c.l.b16 %v2622
        %v2729 = vunpack.c.h.b16 %v2622
        %v2730 = vunpack.c.l.b16 %v2623
        %v2731 = vunpack.c.h.b16 %v2623
        %v2732 = vunpack.c.l.b16 %v2624
        %v2733 = vunpack.c.h.b16 %v2624
        %v2734 = vunpack.c.l.b16 %v2625
        %v2735 = vunpack.c.h.b16 %v2625
        %v2736 = vunpack.c.l.b16 %v2626
        %v2737 = vunpack.c.h.b16 %v2626
        %v2738 = vunpack.c.l.b16 %v2627
        %v2739 = vunpack.c.h.b16 %v2627
        %v2740 = vunpack.c.l.b16 %v2628
        %v2741 = vunpack.c.h.b16 %v2628
        %v2742 = vunpack.c.l.b16 %v2629
        %v2743 = vunpack.c.h.b16 %v2629
        %v2744 = vunpack.c.l.b16 %v2630
        %v2745 = vunpack.c.h.b16 %v2630
        %v2746 = vunpack.c.l.b16 %v2631
        %v2747 = vunpack.c.h.b16 %v2631
        %v2748 = vunpack.c.l.b16 %v2632
        %v2749 = vunpack.c.h.b16 %v2632
        %v2750 = vunpack.c.l.b16 %v2633
        %v2751 = vunpack.c.h.b16 %v2633
        %v2752 = vunpack.c.l.b16 %v2634
        %v2753 = vunpack.c.h.b16 %v2634
        %v2754 = vpack.c.b16 %v2694, %v2690
        %v2755 = vpack.c.b16 %v2695, %v2691
        %v2756 = vpack.c.b16 %v2696, %v2692
        %v2757 = vpack.c.b16 %v2697, %v2693
        %v2758 = vpack.c.b16 %v2702, %v2698
        %v2759 = vpack.c.b16 %v2703, %v2699
        %v2760 = vpack.c.b16 %v2704, %v2700
        %v2761 = vpack.c.b16 %v2705, %v2701
        %v2762 = vpack.c.b16 %v2710, %v2706
        %v2763 = vpack.c.b16 %v2711, %v2707
        %v2764 = vpack.c.b16 %v2712, %v2708
        %v2765 = vpack.c.b16 %v2713, %v2709
        %v2766 = vpack.c.b16 %v2718, %v2714
        %v2767 = vpack.c.b16 %v2719, %v2715
        %v2768 = vpack.c.b16 %v2720, %v2716
        %v2769 = vpack.c.b16 %v2721, %v2717
        %v2770 = vpack.c.b16 %v2726, %v2722
        %v2771 = vpack.c.b16 %v2727, %v2723
        %v2772 = vpack.c.b16 %v2728, %v2724
        %v2773 = vpack.c.b16 %v2729, %v2725
        %v2774 = vpack.c.b16 %v2734, %v2730
        %v2775 = vpack.c.b16 %v2735, %v2731
        %v2776 = vpack.c.b16 %v2736, %v2732
        %v2777 = vpack.c.b16 %v2737, %v2733
        %v2778 = vpack.c.b16 %v2742, %v2738
        %v2779 = vpack.c.b16 %v2743, %v2739
        %v2780 = vpack.c.b16 %v2744, %v2740
        %v2781 = vpack.c.b16 %v2745, %v2741
        %v2782 = vpack.c.b16 %v2750, %v2746
        %v2783 = vpack.c.b16 %v2751, %v2747
        %v2784 = vpack.c.b16 %v2752, %v2748
        %v2785 = vpack.c.b16 %v2753, %v2749
        %2818 = vmatprep.subr.bf16.mxu0 %v2755
        %2819 = vmatpush1.bf16.msra.mxu0 %v2754
        %2820 = vmatprep.subr.bf16.mxu0 %v2759
        %2821 = vmatpush1.bf16.msra.mxu0 %v2758
        %2822 = vmatprep.subr.bf16.mxu0 %v2763
        %2823 = vmatpush1.bf16.msra.mxu0 %v2762
        %2824 = vmatprep.subr.bf16.mxu0 %v2767
        %2825 = vmatpush1.bf16.msra.mxu0 %v2766
        %2826 = vmatprep.subr.bf16.mxu0 %v2771
        %2827 = vmatpush1.bf16.msra.mxu0 %v2770
        %2828 = vmatprep.subr.bf16.mxu0 %v2775
        %2829 = vmatpush1.bf16.msra.mxu0 %v2774
        %2830 = vmatprep.subr.bf16.mxu0 %v2779
        %2831 = vmatpush1.bf16.msra.mxu0 %v2778
        %2832 = vmatprep.subr.bf16.mxu0 %v2783
        %2833 = vmatpush1.bf16.msra.mxu0 %v2782
        %2834 = vmatprep.subr.bf16.mxu0 0
        %2835 = vmatpush1.bf16.msra.mxu0 0
        %2836 = vmatprep.subr.bf16.mxu0 0
        %2837 = vmatpush1.bf16.msra.mxu0 0
        %2838 = vmatprep.subr.bf16.mxu0 0
        %2839 = vmatpush1.bf16.msra.mxu0 0
        %2840 = vmatprep.subr.bf16.mxu0 0
        %2841 = vmatpush1.bf16.msra.mxu0 0
        %2842 = vmatprep.subr.bf16.mxu0 0
        %2843 = vmatpush1.bf16.msra.mxu0 0
        %2844 = vmatprep.subr.bf16.mxu0 0
        %2845 = vmatpush1.bf16.msra.mxu0 0
        %2846 = vmatprep.subr.bf16.mxu0 0
        %2847 = vmatpush1.bf16.msra.mxu0 0
        %2848 = vmatprep.subr.bf16.mxu0 0
        %2849 = vmatpush1.bf16.msra.mxu0 0
        %2850 = vmatprep.mubr.bf16.mxu0 0
        %2851 = vmatmul.mubr.bf16.gmra.mrb[0].mxu0 %v2636
        %v2852 = vpop.f32.mrb[0].mxu0
        %v2853 = vadd.f32 %v2641, %v2852
        %v2854 = vpop.f32.mrb[0].mxu0
        %v2855 = vadd.f32 %v2645, %v2854
        %v2856 = vpop.f32.mrb[0].mxu0
        %v2857 = vpop.f32.mrb[0].mxu0
        %2858 = vdwg.mxu0
        %2859 = vmatprep.subr.bf16.mxu0 %v2757
        %2860 = vmatpush1.bf16.msra.mxu0 %v2756
        %2861 = vmatprep.subr.bf16.mxu0 %v2761
        %2862 = vmatpush1.bf16.msra.mxu0 %v2760
        %2863 = vmatprep.subr.bf16.mxu0 %v2765
        %2864 = vmatpush1.bf16.msra.mxu0 %v2764
        %2865 = vmatprep.subr.bf16.mxu0 %v2769
        %2866 = vmatpush1.bf16.msra.mxu0 %v2768
        %2867 = vmatprep.subr.bf16.mxu0 %v2773
        %2868 = vmatpush1.bf16.msra.mxu0 %v2772
        %2869 = vmatprep.subr.bf16.mxu0 %v2777
        %2870 = vmatpush1.bf16.msra.mxu0 %v2776
        %2871 = vmatprep.subr.bf16.mxu0 %v2781
        %2872 = vmatpush1.bf16.msra.mxu0 %v2780
        %2873 = vmatprep.subr.bf16.mxu0 %v2785
        %2874 = vmatpush1.bf16.msra.mxu0 %v2784
        %2875 = vmatprep.subr.bf16.mxu0 0
        %2876 = vmatpush1.bf16.msra.mxu0 0
        %2877 = vmatprep.subr.bf16.mxu0 0
        %2878 = vmatpush1.bf16.msra.mxu0 0
        %2879 = vmatprep.subr.bf16.mxu0 0
        %2880 = vmatpush1.bf16.msra.mxu0 0
        %2881 = vmatprep.subr.bf16.mxu0 0
        %2882 = vmatpush1.bf16.msra.mxu0 0
        %2883 = vmatprep.subr.bf16.mxu0 0
        %2884 = vmatpush1.bf16.msra.mxu0 0
        %2885 = vmatprep.subr.bf16.mxu0 0
        %2886 = vmatpush1.bf16.msra.mxu0 0
        %2887 = vmatprep.subr.bf16.mxu0 0
        %2888 = vmatpush1.bf16.msra.mxu0 0
        %2889 = vmatprep.subr.bf16.mxu0 0
        %2890 = vmatpush1.bf16.msra.mxu0 0
        %2891 = vmatprep.mubr.bf16.mxu0 0
        %2892 = vmatmul.mubr.bf16.gmra.mrb[0].mxu0 %v2636
        %v2893 = vpop.f32.mrb[0].mxu0
        %v2894 = vadd.f32 %v2649, %v2893
        %v2895 = vpop.f32.mrb[0].mxu0
        %v2896 = vadd.f32 %v2653, %v2895
        %v2897 = vpop.f32.mrb[0].mxu0
        %v2898 = vpop.f32.mrb[0].mxu0
        %2899 = vdwg.mxu0
        %v2900 = vmul.f32 %v2853, 0.5
        %v2901 = vmul.f32 %v2855, 0.5
        %v2902 = vmul.f32 %v2894, 0.5
        %v2903 = vmul.f32 %v2896, 0.5
        %v2904 = vrcp.pop 1.4142135
        %v2905 = vmul.f32 %v2853, %v2904
        %v2906 = vmul.f32 %v2855, %v2904
        %v2907 = vmul.f32 %v2894, %v2904
        %v2908 = vmul.f32 %v2896, %v2904
        %v2909 = verf.f32.pop %v2905
        %v2910 = verf.f32.pop %v2906
        %v2911 = verf.f32.pop %v2907
        %v2912 = verf.f32.pop %v2908
        %v2913 = vadd.f32 %v2909, 1.0
        %v2914 = vadd.f32 %v2910, 1.0
        %v2915 = vadd.f32 %v2911, 1.0
        %v2916 = vadd.f32 %v2912, 1.0
        %v2917 = vmul.f32 %v2900, %v2913
        %v2918 = vmul.f32 %v2901, %v2914
        %v2919 = vmul.f32 %v2902, %v2915
        %v2920 = vmul.f32 %v2903, %v2916
        %v2921 = vld [vmem:[#allocation20] sm:$0x1]
        %v2922 = vld [vmem:[%s16] sm:$0xf]
        %v2923 = vld [vmem:[%s16 + $0x4] sm:$0xf]
        %v2924 = vld [vmem:[%s16 + $0x8] sm:$0xf]
        %v2925 = vld [vmem:[%s16 + $0xc] sm:$0xf]
        %v2926 = vld [vmem:[%s16 + $0x10] sm:$0xf]
        %v2927 = vld [vmem:[%s16 + $0x14] sm:$0xf]
        %v2928 = vld [vmem:[%s16 + $0x18] sm:$0xf]
        %v2929 = vld [vmem:[%s16 + $0x1c] sm:$0xf]
        %v2930 = vld [vmem:[%s16 + $0x20] sm:$0xf]
        %v2931 = vld [vmem:[%s16 + $0x24] sm:$0xf]
        %v2932 = vld [vmem:[%s16 + $0x28] sm:$0xf]
        %v2933 = vld [vmem:[%s16 + $0x2c] sm:$0xf]
        %v2934 = vld [vmem:[%s16 + $0x30] sm:$0xf]
        %v2935 = vld [vmem:[%s16 + $0x34] sm:$0xf]
        %v2936 = vld [vmem:[%s16 + $0x38] sm:$0xf]
        %v2937 = vld [vmem:[%s16 + $0x3c] sm:$0xf]
        %v2938 = vld [vmem:[%s16 + $0x40] sm:$0xf]
        %v2939 = vld [vmem:[%s16 + $0x44] sm:$0xf]
        %v2940 = vld [vmem:[%s16 + $0x48] sm:$0xf]
        %v2941 = vld [vmem:[%s16 + $0x4c] sm:$0xf]
        %v2942 = vld [vmem:[%s16 + $0x50] sm:$0xf]
        %v2943 = vld [vmem:[%s16 + $0x54] sm:$0xf]
        %v2944 = vld [vmem:[%s16 + $0x58] sm:$0xf]
        %v2945 = vld [vmem:[%s16 + $0x5c] sm:$0xf]
        %v2946 = vld [vmem:[%s16 + $0x60] sm:$0xf]
        %v2947 = vld [vmem:[%s16 + $0x64] sm:$0xf]
        %v2948 = vld [vmem:[%s16 + $0x68] sm:$0xf]
        %v2949 = vld [vmem:[%s16 + $0x6c] sm:$0xf]
        %v2950 = vld [vmem:[%s16 + $0x70] sm:$0xf]
        %v2951 = vld [vmem:[%s16 + $0x74] sm:$0xf]
        %v2952 = vld [vmem:[%s16 + $0x78] sm:$0xf]
        %v2953 = vld [vmem:[%s16 + $0x7c] sm:$0xf]
        %v2954 = vld [vmem:[%s16 + $0x80] sm:$0xf]
        %v2955 = vld [vmem:[%s16 + $0x84] sm:$0xf]
        %v2956 = vld [vmem:[%s16 + $0x88] sm:$0xf]
        %v2957 = vld [vmem:[%s16 + $0x8c] sm:$0xf]
        %v2958 = vld [vmem:[%s16 + $0x90] sm:$0xf]
        %v2959 = vld [vmem:[%s16 + $0x94] sm:$0xf]
        %v2960 = vld [vmem:[%s16 + $0x98] sm:$0xf]
        %v2961 = vld [vmem:[%s16 + $0x9c] sm:$0xf]
        %v2962 = vld [vmem:[%s16 + $0xa0] sm:$0xf]
        %v2963 = vld [vmem:[%s16 + $0xa4] sm:$0xf]
        %v2964 = vld [vmem:[%s16 + $0xa8] sm:$0xf]
        %v2965 = vld [vmem:[%s16 + $0xac] sm:$0xf]
        %v2966 = vld [vmem:[%s16 + $0xb0] sm:$0xf]
        %v2967 = vld [vmem:[%s16 + $0xb4] sm:$0xf]
        %v2968 = vld [vmem:[%s16 + $0xb8] sm:$0xf]
        %v2969 = vld [vmem:[%s16 + $0xbc] sm:$0xf]
        %v2970 = vld [vmem:[%s16 + $0xc0] sm:$0xf]
        %v2971 = vld [vmem:[%s16 + $0xc4] sm:$0xf]
        %v2972 = vld [vmem:[%s16 + $0xc8] sm:$0xf]
        %v2973 = vld [vmem:[%s16 + $0xcc] sm:$0xf]
        %v2974 = vld [vmem:[%s16 + $0xd0] sm:$0xf]
        %v2975 = vld [vmem:[%s16 + $0xd4] sm:$0xf]
        %v2976 = vld [vmem:[%s16 + $0xd8] sm:$0xf]
        %v2977 = vld [vmem:[%s16 + $0xdc] sm:$0xf]
        %v2978 = vld [vmem:[%s16 + $0xe0] sm:$0xf]
        %v2979 = vld [vmem:[%s16 + $0xe4] sm:$0xf]
        %v2980 = vld [vmem:[%s16 + $0xe8] sm:$0xf]
        %v2981 = vld [vmem:[%s16 + $0xec] sm:$0xf]
        %v2982 = vld [vmem:[%s16 + $0xf0] sm:$0xf]
        %v2983 = vld [vmem:[%s16 + $0xf4] sm:$0xf]
        %v2984 = vld [vmem:[%s16 + $0xf8] sm:$0xf]
        %v2985 = vld [vmem:[%s16 + $0xfc] sm:$0xf]
        %v2986 = vld [vmem:[#allocation18] sm:$0x1]
        %v2987 = vpack.c.bf16 %v2917, %v2917
        %v2988 = vpack.c.bf16 %v2918, %v2918
        %v2989 = vpack.c.bf16 %v2919, %v2919
        %v2990 = vpack.c.bf16 %v2920, %v2920
        %v2992 = vlaneseq
        %v2993 = vshrl.u32 %v2992, 7
        %v2994 = vsub.s32 0, %v2993
        %v2995 = vrot.slane %v2986, %v2994
        %v3061 = vunpack.c.l.b16 %v2922
        %v3062 = vunpack.c.l.b16 %v2923
        %v3063 = vunpack.c.l.b16 %v2924
        %v3064 = vunpack.c.l.b16 %v2925
        %v3065 = vunpack.c.l.b16 %v2926
        %v3066 = vunpack.c.l.b16 %v2927
        %v3067 = vunpack.c.l.b16 %v2928
        %v3068 = vunpack.c.l.b16 %v2929
        %v3069 = vunpack.c.l.b16 %v2930
        %v3070 = vunpack.c.l.b16 %v2931
        %v3071 = vunpack.c.l.b16 %v2932
        %v3072 = vunpack.c.l.b16 %v2933
        %v3073 = vunpack.c.l.b16 %v2934
        %v3074 = vunpack.c.l.b16 %v2935
        %v3075 = vunpack.c.l.b16 %v2936
        %v3076 = vunpack.c.l.b16 %v2937
        %v3077 = vunpack.c.l.b16 %v2938
        %v3078 = vunpack.c.l.b16 %v2939
        %v3079 = vunpack.c.l.b16 %v2940
        %v3080 = vunpack.c.l.b16 %v2941
        %v3081 = vunpack.c.l.b16 %v2942
        %v3082 = vunpack.c.l.b16 %v2943
        %v3083 = vunpack.c.l.b16 %v2944
        %v3084 = vunpack.c.l.b16 %v2945
        %v3085 = vunpack.c.l.b16 %v2946
        %v3086 = vunpack.c.l.b16 %v2947
        %v3087 = vunpack.c.l.b16 %v2948
        %v3088 = vunpack.c.l.b16 %v2949
        %v3089 = vunpack.c.l.b16 %v2950
        %v3090 = vunpack.c.l.b16 %v2951
        %v3091 = vunpack.c.l.b16 %v2952
        %v3092 = vunpack.c.l.b16 %v2953
        %v3093 = vunpack.c.l.b16 %v2954
        %v3094 = vunpack.c.l.b16 %v2955
        %v3095 = vunpack.c.l.b16 %v2956
        %v3096 = vunpack.c.l.b16 %v2957
        %v3097 = vunpack.c.l.b16 %v2958
        %v3098 = vunpack.c.l.b16 %v2959
        %v3099 = vunpack.c.l.b16 %v2960
        %v3100 = vunpack.c.l.b16 %v2961
        %v3101 = vunpack.c.l.b16 %v2962
        %v3102 = vunpack.c.l.b16 %v2963
        %v3103 = vunpack.c.l.b16 %v2964
        %v3104 = vunpack.c.l.b16 %v2965
        %v3105 = vunpack.c.l.b16 %v2966
        %v3106 = vunpack.c.l.b16 %v2967
        %v3107 = vunpack.c.l.b16 %v2968
        %v3108 = vunpack.c.l.b16 %v2969
        %v3109 = vunpack.c.l.b16 %v2970
        %v3110 = vunpack.c.l.b16 %v2971
        %v3111 = vunpack.c.l.b16 %v2972
        %v3112 = vunpack.c.l.b16 %v2973
        %v3113 = vunpack.c.l.b16 %v2974
        %v3114 = vunpack.c.l.b16 %v2975
        %v3115 = vunpack.c.l.b16 %v2976
        %v3116 = vunpack.c.l.b16 %v2977
        %v3117 = vunpack.c.l.b16 %v2978
        %v3118 = vunpack.c.l.b16 %v2979
        %v3119 = vunpack.c.l.b16 %v2980
        %v3120 = vunpack.c.l.b16 %v2981
        %v3121 = vunpack.c.l.b16 %v2982
        %v3122 = vunpack.c.l.b16 %v2983
        %v3123 = vunpack.c.l.b16 %v2984
        %v3124 = vunpack.c.l.b16 %v2985
        %v3125 = vpack.c.b16 %v3062, %v3061
        %v3126 = vpack.c.b16 %v3064, %v3063
        %v3127 = vpack.c.b16 %v3066, %v3065
        %v3128 = vpack.c.b16 %v3068, %v3067
        %v3129 = vpack.c.b16 %v3070, %v3069
        %v3130 = vpack.c.b16 %v3072, %v3071
        %v3131 = vpack.c.b16 %v3074, %v3073
        %v3132 = vpack.c.b16 %v3076, %v3075
        %v3133 = vpack.c.b16 %v3078, %v3077
        %v3134 = vpack.c.b16 %v3080, %v3079
        %v3135 = vpack.c.b16 %v3082, %v3081
        %v3136 = vpack.c.b16 %v3084, %v3083
        %v3137 = vpack.c.b16 %v3086, %v3085
        %v3138 = vpack.c.b16 %v3088, %v3087
        %v3139 = vpack.c.b16 %v3090, %v3089
        %v3140 = vpack.c.b16 %v3092, %v3091
        %v3141 = vpack.c.b16 %v3094, %v3093
        %v3142 = vpack.c.b16 %v3096, %v3095
        %v3143 = vpack.c.b16 %v3098, %v3097
        %v3144 = vpack.c.b16 %v3100, %v3099
        %v3145 = vpack.c.b16 %v3102, %v3101
        %v3146 = vpack.c.b16 %v3104, %v3103
        %v3147 = vpack.c.b16 %v3106, %v3105
        %v3148 = vpack.c.b16 %v3108, %v3107
        %v3149 = vpack.c.b16 %v3110, %v3109
        %v3150 = vpack.c.b16 %v3112, %v3111
        %v3151 = vpack.c.b16 %v3114, %v3113
        %v3152 = vpack.c.b16 %v3116, %v3115
        %v3153 = vpack.c.b16 %v3118, %v3117
        %v3154 = vpack.c.b16 %v3120, %v3119
        %v3155 = vpack.c.b16 %v3122, %v3121
        %v3156 = vpack.c.b16 %v3124, %v3123
        %3189 = vmatprep.subr.bf16.mxu0 0
        %3190 = vmatpush1.bf16.msra.mxu0 %v3125
        %3191 = vmatprep.subr.bf16.mxu0 0
        %3192 = vmatpush1.bf16.msra.mxu0 %v3126
        %3193 = vmatprep.subr.bf16.mxu0 0
        %3194 = vmatpush1.bf16.msra.mxu0 %v3127
        %3195 = vmatprep.subr.bf16.mxu0 0
        %3196 = vmatpush1.bf16.msra.mxu0 %v3128
        %3197 = vmatprep.subr.bf16.mxu0 0
        %3198 = vmatpush1.bf16.msra.mxu0 %v3129
        %3199 = vmatprep.subr.bf16.mxu0 0
        %3200 = vmatpush1.bf16.msra.mxu0 %v3130
        %3201 = vmatprep.subr.bf16.mxu0 0
        %3202 = vmatpush1.bf16.msra.mxu0 %v3131
        %3203 = vmatprep.subr.bf16.mxu0 0
        %3204 = vmatpush1.bf16.msra.mxu0 %v3132
        %3205 = vmatprep.subr.bf16.mxu0 0
        %3206 = vmatpush1.bf16.msra.mxu0 %v3133
        %3207 = vmatprep.subr.bf16.mxu0 0
        %3208 = vmatpush1.bf16.msra.mxu0 %v3134
        %3209 = vmatprep.subr.bf16.mxu0 0
        %3210 = vmatpush1.bf16.msra.mxu0 %v3135
        %3211 = vmatprep.subr.bf16.mxu0 0
        %3212 = vmatpush1.bf16.msra.mxu0 %v3136
        %3213 = vmatprep.subr.bf16.mxu0 0
        %3214 = vmatpush1.bf16.msra.mxu0 %v3137
        %3215 = vmatprep.subr.bf16.mxu0 0
        %3216 = vmatpush1.bf16.msra.mxu0 %v3138
        %3217 = vmatprep.subr.bf16.mxu0 0
        %3218 = vmatpush1.bf16.msra.mxu0 %v3139
        %3219 = vmatprep.subr.bf16.mxu0 0
        %3220 = vmatpush1.bf16.msra.mxu0 %v3140
        %3221 = vmatprep.mubr.bf16.mxu0 %v2988
        %3222 = vmatmul.mubr.bf16.gmra.mrb[0].mxu0 %v2987
        %v3223 = vpop.f32.mrb[0].mxu0
        %v3224 = vadd.f32 %v2995, %v3223
        %v3225 = vpop.f32.mrb[0].mxu0
        %v3226 = vpop.f32.mrb[0].mxu0
        %v3227 = vpop.f32.mrb[0].mxu0
        %3228 = vdwg.mxu0
        %3229 = vmatprep.subr.bf16.mxu0 0
        %3230 = vmatpush1.bf16.msra.mxu0 %v3141
        %3231 = vmatprep.subr.bf16.mxu0 0
        %3232 = vmatpush1.bf16.msra.mxu0 %v3142
        %3233 = vmatprep.subr.bf16.mxu0 0
        %3234 = vmatpush1.bf16.msra.mxu0 %v3143
        %3235 = vmatprep.subr.bf16.mxu0 0
        %3236 = vmatpush1.bf16.msra.mxu0 %v3144
        %3237 = vmatprep.subr.bf16.mxu0 0
        %3238 = vmatpush1.bf16.msra.mxu0 %v3145
        %3239 = vmatprep.subr.bf16.mxu0 0
        %3240 = vmatpush1.bf16.msra.mxu0 %v3146
        %3241 = vmatprep.subr.bf16.mxu0 0
        %3242 = vmatpush1.bf16.msra.mxu0 %v3147
        %3243 = vmatprep.subr.bf16.mxu0 0
        %3244 = vmatpush1.bf16.msra.mxu0 %v3148
        %3245 = vmatprep.subr.bf16.mxu0 0
        %3246 = vmatpush1.bf16.msra.mxu0 %v3149
        %3247 = vmatprep.subr.bf16.mxu0 0
        %3248 = vmatpush1.bf16.msra.mxu0 %v3150
        %3249 = vmatprep.subr.bf16.mxu0 0
        %3250 = vmatpush1.bf16.msra.mxu0 %v3151
        %3251 = vmatprep.subr.bf16.mxu0 0
        %3252 = vmatpush1.bf16.msra.mxu0 %v3152
        %3253 = vmatprep.subr.bf16.mxu0 0
        %3254 = vmatpush1.bf16.msra.mxu0 %v3153
        %3255 = vmatprep.subr.bf16.mxu0 0
        %3256 = vmatpush1.bf16.msra.mxu0 %v3154
        %3257 = vmatprep.subr.bf16.mxu0 0
        %3258 = vmatpush1.bf16.msra.mxu0 %v3155
        %3259 = vmatprep.subr.bf16.mxu0 0
        %3260 = vmatpush1.bf16.msra.mxu0 %v3156
        %3261 = vmatprep.mubr.bf16.mxu0 %v2990
        %3262 = vmatmul.mubr.bf16.gmra.mrb[0].mxu0 %v2989
        %v3263 = vpop.f32.mrb[0].mxu0
        %v3264 = vadd.f32 %v3224, %v3263
        %v3265 = vpop.f32.mrb[0].mxu0
        %v3266 = vpop.f32.mrb[0].mxu0
        %v3267 = vpop.f32.mrb[0].mxu0
        %3268 = vdwg.mxu0
        %v3270 = vlaneseq
        %v3271 = vshrl.u32 %v3270, 7
        %v3272 = vsub.s32 0, %v3271
        %v3273 = vrot.slane %v2921, %v3272
        %v3275 = vmul.f32 %v3273, %v3264
        %v3276 = vadd.f32 %v2573, %v3275
        %s3277 = scalar_lea.vmem %s5, 1
        %v3278 = vld [vmem:[%s3277] sm:$0x1]
        %s3279 = scalar_lea.vmem %s6, 1
        %v3280 = vld [vmem:[%s3279] sm:$0x1]
        %v3281 = vsel %vm1579, %v3276, 0.0
        %3282 = vadd.xlane.f32.xlu0 %v3281
        %v3283 = vpop.xlane.xlu0 %3282
        %v3284 = vmul.f32 %v3283, %v1583
        %v3285 = vsub.f32 %v3276, %v3284
        %v3286 = vmul.f32 %v3285, %v3285
        %v3287 = vsel %vm1579, %v3286, 0.0
        %3288 = vadd.xlane.f32.xlu0 %v3287
        %v3289 = vpop.xlane.xlu0 %3288
        %v3290 = vmul.f32 %v3289, %v1583
        %v3291 = vadd.f32 %v3290, 1e-06
        %v3292 = vrsqrt.pop %v3291
        %v3293 = vmul.f32 %v3285, %v3292
        %v3295 = vlaneseq
        %v3296 = vshrl.u32 %v3295, 7
        %v3297 = vsub.s32 0, %v3296
        %v3298 = vrot.slane %v3278, %v3297
        %v3300 = vmul.f32 %v3293, %v3298
        %v3302 = vlaneseq
        %v3303 = vshrl.u32 %v3302, 7
        %v3304 = vsub.s32 0, %v3303
        %v3305 = vrot.slane %v3280, %v3304
        %v3307 = vadd.f32 %v3300, %v3305
        %s3308 = scalar_lea.vmem %s7, 192
        %v3309 = vld [vmem:[%s3308] sm:$0xff]
        %v3310 = vld [vmem:[%s3308 + $0x8] sm:$0xf]
        %v3311 = vld [vmem:[%s3308 + $0xc] sm:$0xff]
        %v3312 = vld [vmem:[%s3308 + $0x14] sm:$0xf]
        %v3313 = vld [vmem:[%s3308 + $0x18] sm:$0xff]
        %v3314 = vld [vmem:[%s3308 + $0x20] sm:$0xf]
        %v3315 = vld [vmem:[%s3308 + $0x24] sm:$0xff]
        %v3316 = vld [vmem:[%s3308 + $0x2c] sm:$0xf]
        %v3317 = vld [vmem:[%s3308 + $0x30] sm:$0xff]
        %v3318 = vld [vmem:[%s3308 + $0x38] sm:$0xf]
        %v3319 = vld [vmem:[%s3308 + $0x3c] sm:$0xff]
        %v3320 = vld [vmem:[%s3308 + $0x44] sm:$0xf]
        %v3321 = vld [vmem:[%s3308 + $0x48] sm:$0xff]
        %v3322 = vld [vmem:[%s3308 + $0x50] sm:$0xf]
        %v3323 = vld [vmem:[%s3308 + $0x54] sm:$0xff]
        %v3324 = vld [vmem:[%s3308 + $0x5c] sm:$0xf]
        %v3325 = vld [vmem:[%s3308 + $0x60] sm:$0xff]
        %v3326 = vld [vmem:[%s3308 + $0x68] sm:$0xf]
        %v3327 = vld [vmem:[%s3308 + $0x6c] sm:$0xff]
        %v3328 = vld [vmem:[%s3308 + $0x74] sm:$0xf]
        %v3329 = vld [vmem:[%s3308 + $0x78] sm:$0xff]
        %v3330 = vld [vmem:[%s3308 + $0x80] sm:$0xf]
        %v3331 = vld [vmem:[%s3308 + $0x84] sm:$0xff]
        %v3332 = vld [vmem:[%s3308 + $0x8c] sm:$0xf]
        %v3333 = vld [vmem:[%s3308 + $0x90] sm:$0xff]
        %v3334 = vld [vmem:[%s3308 + $0x98] sm:$0xf]
        %v3335 = vld [vmem:[%s3308 + $0x9c] sm:$0xff]
        %v3336 = vld [vmem:[%s3308 + $0xa4] sm:$0xf]
        %v3337 = vld [vmem:[%s3308 + $0xa8] sm:$0xff]
        %v3338 = vld [vmem:[%s3308 + $0xb0] sm:$0xf]
        %v3339 = vld [vmem:[%s3308 + $0xb4] sm:$0xff]
        %v3340 = vld [vmem:[%s3308 + $0xbc] sm:$0xf]
        %s3341 = scalar_lea.vmem [#allocation8], 3
        %v3342 = vld [vmem:[%s3341] sm:$0x7]
        %v3343 = vpack.c.bf16 %v3307, %v3307
        %v3345 = vlaneseq
        %v3346 = vshrl.u32 %v3345, 7
        %v3347 = vsub.s32 0, %v3346
        %v3348 = vrot.slane %v3342, %v3347
        %v3349 = vlaneseq
        %v3350 = vshrl.u32 %v3349, 7
        %v3351 = vsub.s32 1, %v3350
        %v3352 = vrot.slane %v3342, %v3351
        %v3353 = vlaneseq
        %v3354 = vshrl.u32 %v3353, 7
        %v3355 = vsub.s32 2, %v3354
        %v3356 = vrot.slane %v3342, %v3355
        %v3392 = vunpack.c.l.b16 %v3309
        %v3393 = vunpack.c.h.b16 %v3309
        %v3394 = vunpack.c.l.b16 %v3310
        %v3395 = vunpack.c.l.b16 %v3311
        %v3396 = vunpack.c.h.b16 %v3311
        %v3397 = vunpack.c.l.b16 %v3312
        %v3398 = vunpack.c.l.b16 %v3313
        %v3399 = vunpack.c.h.b16 %v3313
        %v3400 = vunpack.c.l.b16 %v3314
        %v3401 = vunpack.c.l.b16 %v3315
        %v3402 = vunpack.c.h.b16 %v3315
        %v3403 = vunpack.c.l.b16 %v3316
        %v3404 = vunpack.c.l.b16 %v3317
        %v3405 = vunpack.c.h.b16 %v3317
        %v3406 = vunpack.c.l.b16 %v3318
        %v3407 = vunpack.c.l.b16 %v3319
        %v3408 = vunpack.c.h.b16 %v3319
        %v3409 = vunpack.c.l.b16 %v3320
        %v3410 = vunpack.c.l.b16 %v3321
        %v3411 = vunpack.c.h.b16 %v3321
        %v3412 = vunpack.c.l.b16 %v3322
        %v3413 = vunpack.c.l.b16 %v3323
        %v3414 = vunpack.c.h.b16 %v3323
        %v3415 = vunpack.c.l.b16 %v3324
        %v3416 = vunpack.c.l.b16 %v3325
        %v3417 = vunpack.c.h.b16 %v3325
        %v3418 = vunpack.c.l.b16 %v3326
        %v3419 = vunpack.c.l.b16 %v3327
        %v3420 = vunpack.c.h.b16 %v3327
        %v3421 = vunpack.c.l.b16 %v3328
        %v3422 = vunpack.c.l.b16 %v3329
        %v3423 = vunpack.c.h.b16 %v3329
        %v3424 = vunpack.c.l.b16 %v3330
        %v3425 = vunpack.c.l.b16 %v3331
        %v3426 = vunpack.c.h.b16 %v3331
        %v3427 = vunpack.c.l.b16 %v3332
        %v3428 = vunpack.c.l.b16 %v3333
        %v3429 = vunpack.c.h.b16 %v3333
        %v3430 = vunpack.c.l.b16 %v3334
        %v3431 = vunpack.c.l.b16 %v3335
        %v3432 = vunpack.c.h.b16 %v3335
        %v3433 = vunpack.c.l.b16 %v3336
        %v3434 = vunpack.c.l.b16 %v3337
        %v3435 = vunpack.c.h.b16 %v3337
        %v3436 = vunpack.c.l.b16 %v3338
        %v3437 = vunpack.c.l.b16 %v3339
        %v3438 = vunpack.c.h.b16 %v3339
        %v3439 = vunpack.c.l.b16 %v3340
        %v3440 = vpack.c.b16 %v3395, %v3392
        %v3441 = vpack.c.b16 %v3396, %v3393
        %v3442 = vpack.c.b16 %v3397, %v3394
        %v3443 = vpack.c.b16 %v3401, %v3398
        %v3444 = vpack.c.b16 %v3402, %v3399
        %v3445 = vpack.c.b16 %v3403, %v3400
        %v3446 = vpack.c.b16 %v3407, %v3404
        %v3447 = vpack.c.b16 %v3408, %v3405
        %v3448 = vpack.c.b16 %v3409, %v3406
        %v3449 = vpack.c.b16 %v3413, %v3410
        %v3450 = vpack.c.b16 %v3414, %v3411
        %v3451 = vpack.c.b16 %v3415, %v3412
        %v3452 = vpack.c.b16 %v3419, %v3416
        %v3453 = vpack.c.b16 %v3420, %v3417
        %v3454 = vpack.c.b16 %v3421, %v3418
        %v3455 = vpack.c.b16 %v3425, %v3422
        %v3456 = vpack.c.b16 %v3426, %v3423
        %v3457 = vpack.c.b16 %v3427, %v3424
        %v3458 = vpack.c.b16 %v3431, %v3428
        %v3459 = vpack.c.b16 %v3432, %v3429
        %v3460 = vpack.c.b16 %v3433, %v3430
        %v3461 = vpack.c.b16 %v3437, %v3434
        %v3462 = vpack.c.b16 %v3438, %v3435
        %v3463 = vpack.c.b16 %v3439, %v3436
        %3488 = vmatprep.subr.bf16.mxu0 %v3441
        %3489 = vmatpush1.bf16.msra.mxu0 %v3440
        %3490 = vmatprep.subr.bf16.mxu0 %v3444
        %3491 = vmatpush1.bf16.msra.mxu0 %v3443
        %3492 = vmatprep.subr.bf16.mxu0 %v3447
        %3493 = vmatpush1.bf16.msra.mxu0 %v3446
        %3494 = vmatprep.subr.bf16.mxu0 %v3450
        %3495 = vmatpush1.bf16.msra.mxu0 %v3449
        %3496 = vmatprep.subr.bf16.mxu0 %v3453
        %3497 = vmatpush1.bf16.msra.mxu0 %v3452
        %3498 = vmatprep.subr.bf16.mxu0 %v3456
        %3499 = vmatpush1.bf16.msra.mxu0 %v3455
        %3500 = vmatprep.subr.bf16.mxu0 %v3459
        %3501 = vmatpush1.bf16.msra.mxu0 %v3458
        %3502 = vmatprep.subr.bf16.mxu0 %v3462
        %3503 = vmatpush1.bf16.msra.mxu0 %v3461
        %3504 = vmatprep.subr.bf16.mxu0 0
        %3505 = vmatpush1.bf16.msra.mxu0 0
        %3506 = vmatprep.subr.bf16.mxu0 0
        %3507 = vmatpush1.bf16.msra.mxu0 0
        %3508 = vmatprep.subr.bf16.mxu0 0
        %3509 = vmatpush1.bf16.msra.mxu0 0
        %3510 = vmatprep.subr.bf16.mxu0 0
        %3511 = vmatpush1.bf16.msra.mxu0 0
        %3512 = vmatprep.subr.bf16.mxu0 0
        %3513 = vmatpush1.bf16.msra.mxu0 0
        %3514 = vmatprep.subr.bf16.mxu0 0
        %3515 = vmatpush1.bf16.msra.mxu0 0
        %3516 = vmatprep.subr.bf16.mxu0 0
        %3517 = vmatpush1.bf16.msra.mxu0 0
        %3518 = vmatprep.subr.bf16.mxu0 0
        %3519 = vmatpush1.bf16.msra.mxu0 0
        %3520 = vmatprep.mubr.bf16.mxu0 0
        %3521 = vmatmul.mubr.bf16.gmra.mrb[0].mxu0 %v3343
        %v3522 = vpop.f32.mrb[0].mxu0
        %v3523 = vadd.f32 %v3348, %v3522
        %v3524 = vpop.f32.mrb[0].mxu0
        %v3525 = vadd.f32 %v3352, %v3524
        %v3526 = vpop.f32.mrb[0].mxu0
        %v3527 = vpop.f32.mrb[0].mxu0
        %3528 = vdwg.mxu0
        %3529 = vmatprep.subr.bf16.mxu0 0
        %3530 = vmatpush1.bf16.msra.mxu0 %v3442
        %3531 = vmatprep.subr.bf16.mxu0 0
        %3532 = vmatpush1.bf16.msra.mxu0 %v3445
        %3533 = vmatprep.subr.bf16.mxu0 0
        %3534 = vmatpush1.bf16.msra.mxu0 %v3448
        %3535 = vmatprep.subr.bf16.mxu0 0
        %3536 = vmatpush1.bf16.msra.mxu0 %v3451
        %3537 = vmatprep.subr.bf16.mxu0 0
        %3538 = vmatpush1.bf16.msra.mxu0 %v3454
        %3539 = vmatprep.subr.bf16.mxu0 0
        %3540 = vmatpush1.bf16.msra.mxu0 %v3457
        %3541 = vmatprep.subr.bf16.mxu0 0
        %3542 = vmatpush1.bf16.msra.mxu0 %v3460
        %3543 = vmatprep.subr.bf16.mxu0 0
        %3544 = vmatpush1.bf16.msra.mxu0 %v3463
        %3545 = vmatprep.subr.bf16.mxu0 0
        %3546 = vmatpush1.bf16.msra.mxu0 0
        %3547 = vmatprep.subr.bf16.mxu0 0
        %3548 = vmatpush1.bf16.msra.mxu0 0
        %3549 = vmatprep.subr.bf16.mxu0 0
        %3550 = vmatpush1.bf16.msra.mxu0 0
        %3551 = vmatprep.subr.bf16.mxu0 0
        %3552 = vmatpush1.bf16.msra.mxu0 0
        %3553 = vmatprep.subr.bf16.mxu0 0
        %3554 = vmatpush1.bf16.msra.mxu0 0
        %3555 = vmatprep.subr.bf16.mxu0 0
        %3556 = vmatpush1.bf16.msra.mxu0 0
        %3557 = vmatprep.subr.bf16.mxu0 0
        %3558 = vmatpush1.bf16.msra.mxu0 0
        %3559 = vmatprep.subr.bf16.mxu0 0
        %3560 = vmatpush1.bf16.msra.mxu0 0
        %3561 = vmatprep.mubr.bf16.mxu0 0
        %3562 = vmatmul.mubr.bf16.gmra.mrb[0].mxu0 %v3343
        %v3563 = vpop.f32.mrb[0].mxu0
        %v3564 = vadd.f32 %v3356, %v3563
        %v3565 = vpop.f32.mrb[0].mxu0
        %v3566 = vpop.f32.mrb[0].mxu0
        %v3567 = vpop.f32.mrb[0].mxu0
        %3568 = vdwg.mxu0
        %v3569 = vmul.f32 %v3523, 0.17677669
        %v3570 = vpack.c.bf16 %v3569, %v3569
        %v3571 = vpack.c.bf16 %v3525, %v3525
        %v3572 = vpack.c.bf16 %v3564, %v3564
        %v3574 = vsel %vm1871, %v3570, 0
        %v3577 = vsel %vm1871, %v3571, 0
        %3579 = vmatprep.subr.bf16.mxu0 0
        %3580 = vmatpush1.bf16.xpose.msra.mxu0 %v3577
        %3581 = vmatprep.subr.bf16.mxu0 0
        %3582 = vmatpush1.bf16.xpose.msra.mxu0 0
        %3583 = vmatprep.subr.bf16.mxu0 0
        %3584 = vmatpush1.bf16.xpose.msra.mxu0 0
        %3585 = vmatprep.subr.bf16.mxu0 0
        %3586 = vmatpush1.bf16.xpose.msra.mxu0 0
        %3587 = vmatprep.subr.bf16.mxu0 0
        %3588 = vmatpush1.bf16.xpose.msra.mxu0 0
        %3589 = vmatprep.subr.bf16.mxu0 0
        %3590 = vmatpush1.bf16.xpose.msra.mxu0 0
        %3591 = vmatprep.subr.bf16.mxu0 0
        %3592 = vmatpush1.bf16.xpose.msra.mxu0 0
        %3593 = vmatprep.subr.bf16.mxu0 0
        %3594 = vmatpush1.bf16.xpose.msra.mxu0 0
        %3595 = vmatprep.subr.bf16.mxu0 0
        %3596 = vmatpush1.bf16.xpose.msra.mxu0 0
        %3597 = vmatprep.subr.bf16.mxu0 0
        %3598 = vmatpush1.bf16.xpose.msra.mxu0 0
        %3599 = vmatprep.subr.bf16.mxu0 0
        %3600 = vmatpush1.bf16.xpose.msra.mxu0 0
        %3601 = vmatprep.subr.bf16.mxu0 0
        %3602 = vmatpush1.bf16.xpose.msra.mxu0 0
        %3603 = vmatprep.subr.bf16.mxu0 0
        %3604 = vmatpush1.bf16.xpose.msra.mxu0 0
        %3605 = vmatprep.subr.bf16.mxu0 0
        %3606 = vmatpush1.bf16.xpose.msra.mxu0 0
        %3607 = vmatprep.subr.bf16.mxu0 0
        %3608 = vmatpush1.bf16.xpose.msra.mxu0 0
        %3609 = vmatprep.subr.bf16.mxu0 0
        %3610 = vmatpush1.bf16.xpose.msra.mxu0 0
        %3611 = vmatprep.mubr.bf16.mxu0 0
        %3612 = vmatmul.mubr.bf16.gmra.mrb[0].mxu0 %v3574
        %v3613 = vpop.f32.mrb[0].mxu0
        %v3614 = vadd.f32 0.0, %v3613
        %v3615 = vpop.f32.mrb[0].mxu0
        %v3616 = vpop.f32.mrb[0].mxu0
        %v3617 = vpop.f32.mrb[0].mxu0
        %3618 = vdwg.mxu0
        %v3619 = vsel %vm1918, %v3614, -inf
        %3620 = vmax.xlane.f32.xlu0 %v3619
        %v3621 = vpop.xlane.xlu0 %3620
        %v3622 = vsub.f32 %v3614, %v3621
        %v3623 = vmul.f32 %v3622, 1.442695
        %v3624 = vpow.pop %v3623
        %v3625 = vsel %vm1918, %v3624, 0.0
        %3626 = vadd.xlane.f32.xlu0 %v3625
        %v3627 = vpop.xlane.xlu0 %3626
        %v3628 = vrcp.pop %v3627
        %v3629 = vmul.f32 %v3624, %v3628
        %v3630 = vpack.c.bf16 %v3629, %v3629
        %v3632 = vsel %vm1931, %v3630, 0
        %v3635 = vand.u32 %v3572, %v1938
        %3637 = vmatprep.subr.bf16.mxu0 0
        %3638 = vmatpush1.bf16.msra.mxu0 %v3635
        %3639 = vmatprep.subr.bf16.mxu0 0
        %3640 = vmatpush1.bf16.msra.mxu0 0
        %3641 = vmatprep.subr.bf16.mxu0 0
        %3642 = vmatpush1.bf16.msra.mxu0 0
        %3643 = vmatprep.subr.bf16.mxu0 0
        %3644 = vmatpush1.bf16.msra.mxu0 0
        %3645 = vmatprep.subr.bf16.mxu0 0
        %3646 = vmatpush1.bf16.msra.mxu0 0
        %3647 = vmatprep.subr.bf16.mxu0 0
        %3648 = vmatpush1.bf16.msra.mxu0 0
        %3649 = vmatprep.subr.bf16.mxu0 0
        %3650 = vmatpush1.bf16.msra.mxu0 0
        %3651 = vmatprep.subr.bf16.mxu0 0
        %3652 = vmatpush1.bf16.msra.mxu0 0
        %3653 = vmatprep.subr.bf16.mxu0 0
        %3654 = vmatpush1.bf16.msra.mxu0 0
        %3655 = vmatprep.subr.bf16.mxu0 0
        %3656 = vmatpush1.bf16.msra.mxu0 0
        %3657 = vmatprep.subr.bf16.mxu0 0
        %3658 = vmatpush1.bf16.msra.mxu0 0
        %3659 = vmatprep.subr.bf16.mxu0 0
        %3660 = vmatpush1.bf16.msra.mxu0 0
        %3661 = vmatprep.subr.bf16.mxu0 0
        %3662 = vmatpush1.bf16.msra.mxu0 0
        %3663 = vmatprep.subr.bf16.mxu0 0
        %3664 = vmatpush1.bf16.msra.mxu0 0
        %3665 = vmatprep.subr.bf16.mxu0 0
        %3666 = vmatpush1.bf16.msra.mxu0 0
        %3667 = vmatprep.subr.bf16.mxu0 0
        %3668 = vmatpush1.bf16.msra.mxu0 0
        %3669 = vmatprep.mubr.bf16.mxu0 0
        %3670 = vmatmul.mubr.bf16.gmra.mrb[0].mxu0 %v3632
        %v3671 = vpop.f32.mrb[0].mxu0
        %v3672 = vadd.f32 0.0, %v3671
        %v3673 = vpop.f32.mrb[0].mxu0
        %v3674 = vpop.f32.mrb[0].mxu0
        %v3675 = vpop.f32.mrb[0].mxu0
        %3676 = vdwg.mxu0
        %v3677 = vpack.c.bf16 %v3672, %v3672
        %s3678 = scalar_lea.vmem [#allocation9], 64
        %v3679 = vld [vmem:[%s3678] sm:$0xf]
        %v3680 = vld [vmem:[%s3678 + $0x4] sm:$0xf]
        %v3681 = vld [vmem:[%s3678 + $0x8] sm:$0xf]
        %v3682 = vld [vmem:[%s3678 + $0xc] sm:$0xf]
        %3684 = vrot.lane.b32.xlu0 %v3570, 96
        %v3685 = vpop.permute.xlu0 %3684
        %3687 = vrot.lane.b32.xlu0 %v3571, 96
        %v3688 = vpop.permute.xlu0 %3687
        %v3690 = vsel %vm1871, %v3685, 0
        %v3693 = vsel %vm1871, %v3688, 0
        %3695 = vmatprep.subr.bf16.mxu0 0
        %3696 = vmatpush1.bf16.xpose.msra.mxu0 %v3693
        %3697 = vmatprep.subr.bf16.mxu0 0
        %3698 = vmatpush1.bf16.xpose.msra.mxu0 0
        %3699 = vmatprep.subr.bf16.mxu0 0
        %3700 = vmatpush1.bf16.xpose.msra.mxu0 0
        %3701 = vmatprep.subr.bf16.mxu0 0
        %3702 = vmatpush1.bf16.xpose.msra.mxu0 0
        %3703 = vmatprep.subr.bf16.mxu0 0
        %3704 = vmatpush1.bf16.xpose.msra.mxu0 0
        %3705 = vmatprep.subr.bf16.mxu0 0
        %3706 = vmatpush1.bf16.xpose.msra.mxu0 0
        %3707 = vmatprep.subr.bf16.mxu0 0
        %3708 = vmatpush1.bf16.xpose.msra.mxu0 0
        %3709 = vmatprep.subr.bf16.mxu0 0
        %3710 = vmatpush1.bf16.xpose.msra.mxu0 0
        %3711 = vmatprep.subr.bf16.mxu0 0
        %3712 = vmatpush1.bf16.xpose.msra.mxu0 0
        %3713 = vmatprep.subr.bf16.mxu0 0
        %3714 = vmatpush1.bf16.xpose.msra.mxu0 0
        %3715 = vmatprep.subr.bf16.mxu0 0
        %3716 = vmatpush1.bf16.xpose.msra.mxu0 0
        %3717 = vmatprep.subr.bf16.mxu0 0
        %3718 = vmatpush1.bf16.xpose.msra.mxu0 0
        %3719 = vmatprep.subr.bf16.mxu0 0
        %3720 = vmatpush1.bf16.xpose.msra.mxu0 0
        %3721 = vmatprep.subr.bf16.mxu0 0
        %3722 = vmatpush1.bf16.xpose.msra.mxu0 0
        %3723 = vmatprep.subr.bf16.mxu0 0
        %3724 = vmatpush1.bf16.xpose.msra.mxu0 0
        %3725 = vmatprep.subr.bf16.mxu0 0
        %3726 = vmatpush1.bf16.xpose.msra.mxu0 0
        %3727 = vmatprep.mubr.bf16.mxu0 0
        %3728 = vmatmul.mubr.bf16.gmra.mrb[0].mxu0 %v3690
        %v3729 = vpop.f32.mrb[0].mxu0
        %v3730 = vadd.f32 0.0, %v3729
        %v3731 = vpop.f32.mrb[0].mxu0
        %v3732 = vpop.f32.mrb[0].mxu0
        %v3733 = vpop.f32.mrb[0].mxu0
        %3734 = vdwg.mxu0
        %v3735 = vsel %vm1918, %v3730, -inf
        %3736 = vmax.xlane.f32.xlu0 %v3735
        %v3737 = vpop.xlane.xlu0 %3736
        %v3738 = vsub.f32 %v3730, %v3737
        %v3739 = vmul.f32 %v3738, 1.442695
        %v3740 = vpow.pop %v3739
        %v3741 = vsel %vm1918, %v3740, 0.0
        %3742 = vadd.xlane.f32.xlu0 %v3741
        %v3743 = vpop.xlane.xlu0 %3742
        %v3744 = vrcp.pop %v3743
        %v3745 = vmul.f32 %v3740, %v3744
        %v3746 = vpack.c.bf16 %v3745, %v3745
        %3748 = vrot.lane.b32.xlu0 %v3572, 96
        %v3749 = vpop.permute.xlu0 %3748
        %v3751 = vsel %vm1931, %v3746, 0
        %v3754 = vand.u32 %v3749, %v1938
        %3756 = vmatprep.subr.bf16.mxu0 0
        %3757 = vmatpush1.bf16.msra.mxu0 %v3754
        %3758 = vmatprep.subr.bf16.mxu0 0
        %3759 = vmatpush1.bf16.msra.mxu0 0
        %3760 = vmatprep.subr.bf16.mxu0 0
        %3761 = vmatpush1.bf16.msra.mxu0 0
        %3762 = vmatprep.subr.bf16.mxu0 0
        %3763 = vmatpush1.bf16.msra.mxu0 0
        %3764 = vmatprep.subr.bf16.mxu0 0
        %3765 = vmatpush1.bf16.msra.mxu0 0
        %3766 = vmatprep.subr.bf16.mxu0 0
        %3767 = vmatpush1.bf16.msra.mxu0 0
        %3768 = vmatprep.subr.bf16.mxu0 0
        %3769 = vmatpush1.bf16.msra.mxu0 0
        %3770 = vmatprep.subr.bf16.mxu0 0
        %3771 = vmatpush1.bf16.msra.mxu0 0
        %3772 = vmatprep.subr.bf16.mxu0 0
        %3773 = vmatpush1.bf16.msra.mxu0 0
        %3774 = vmatprep.subr.bf16.mxu0 0
        %3775 = vmatpush1.bf16.msra.mxu0 0
        %3776 = vmatprep.subr.bf16.mxu0 0
        %3777 = vmatpush1.bf16.msra.mxu0 0
        %3778 = vmatprep.subr.bf16.mxu0 0
        %3779 = vmatpush1.bf16.msra.mxu0 0
        %3780 = vmatprep.subr.bf16.mxu0 0
        %3781 = vmatpush1.bf16.msra.mxu0 0
        %3782 = vmatprep.subr.bf16.mxu0 0
        %3783 = vmatpush1.bf16.msra.mxu0 0
        %3784 = vmatprep.subr.bf16.mxu0 0
        %3785 = vmatpush1.bf16.msra.mxu0 0
        %3786 = vmatprep.subr.bf16.mxu0 0
        %3787 = vmatpush1.bf16.msra.mxu0 0
        %3788 = vmatprep.mubr.bf16.mxu0 0
        %3789 = vmatmul.mubr.bf16.gmra.mrb[0].mxu0 %v3751
        %v3790 = vpop.f32.mrb[0].mxu0
        %v3791 = vadd.f32 0.0, %v3790
        %v3792 = vpop.f32.mrb[0].mxu0
        %v3793 = vpop.f32.mrb[0].mxu0
        %v3794 = vpop.f32.mrb[0].mxu0
        %3795 = vdwg.mxu0
        %v3796 = vpack.c.bf16 %v3791, %v3791
        %v3797 = vld [vmem:[%s3678 + $0x10] sm:$0xf]
        %v3798 = vld [vmem:[%s3678 + $0x14] sm:$0xf]
        %v3799 = vld [vmem:[%s3678 + $0x18] sm:$0xf]
        %v3800 = vld [vmem:[%s3678 + $0x1c] sm:$0xf]
        %v3805 = vunpack.c.l.b16 %v3797
        %v3806 = vunpack.c.l.b16 %v3798
        %v3807 = vunpack.c.l.b16 %v3799
        %v3808 = vunpack.c.l.b16 %v3800
        %v3809 = vpack.c.b16 %v3806, %v3805
        %v3810 = vpack.c.b16 %v3808, %v3807
        %v3814 = vsel %vm1871, %v3796, 0
        %3816 = vmatprep.subr.bf16.mxu0 0
        %3817 = vmatpush1.bf16.msra.mxu0 %v3809
        %3818 = vmatprep.subr.bf16.mxu0 0
        %3819 = vmatpush1.bf16.msra.mxu0 %v3810
        %3820 = vmatprep.subr.bf16.mxu0 0
        %3821 = vmatpush1.bf16.msra.mxu0 0
        %3822 = vmatprep.subr.bf16.mxu0 0
        %3823 = vmatpush1.bf16.msra.mxu0 0
        %3824 = vmatprep.subr.bf16.mxu0 0
        %3825 = vmatpush1.bf16.msra.mxu0 0
        %3826 = vmatprep.subr.bf16.mxu0 0
        %3827 = vmatpush1.bf16.msra.mxu0 0
        %3828 = vmatprep.subr.bf16.mxu0 0
        %3829 = vmatpush1.bf16.msra.mxu0 0
        %3830 = vmatprep.subr.bf16.mxu0 0
        %3831 = vmatpush1.bf16.msra.mxu0 0
        %3832 = vmatprep.subr.bf16.mxu0 0
        %3833 = vmatpush1.bf16.msra.mxu0 0
        %3834 = vmatprep.subr.bf16.mxu0 0
        %3835 = vmatpush1.bf16.msra.mxu0 0
        %3836 = vmatprep.subr.bf16.mxu0 0
        %3837 = vmatpush1.bf16.msra.mxu0 0
        %3838 = vmatprep.subr.bf16.mxu0 0
        %3839 = vmatpush1.bf16.msra.mxu0 0
        %3840 = vmatprep.subr.bf16.mxu0 0
        %3841 = vmatpush1.bf16.msra.mxu0 0
        %3842 = vmatprep.subr.bf16.mxu0 0
        %3843 = vmatpush1.bf16.msra.mxu0 0
        %3844 = vmatprep.subr.bf16.mxu0 0
        %3845 = vmatpush1.bf16.msra.mxu0 0
        %3846 = vmatprep.subr.bf16.mxu0 0
        %3847 = vmatpush1.bf16.msra.mxu0 0
        %3848 = vmatprep.mubr.bf16.mxu0 0
        %3849 = vmatmul.mubr.bf16.gmra.mrb[0].mxu0 %v3814
        %v3850 = vpop.f32.mrb[0].mxu0
        %v3851 = vadd.f32 0.0, %v3850
        %v3852 = vpop.f32.mrb[0].mxu0
        %v3853 = vpop.f32.mrb[0].mxu0
        %v3854 = vpop.f32.mrb[0].mxu0
        %3855 = vdwg.mxu0
        %v3860 = vunpack.c.l.b16 %v3679
        %v3861 = vunpack.c.l.b16 %v3680
        %v3862 = vunpack.c.l.b16 %v3681
        %v3863 = vunpack.c.l.b16 %v3682
        %v3864 = vpack.c.b16 %v3861, %v3860
        %v3865 = vpack.c.b16 %v3863, %v3862
        %v3869 = vsel %vm1871, %v3677, 0
        %3871 = vmatprep.subr.bf16.mxu0 0
        %3872 = vmatpush1.bf16.msra.mxu0 %v3864
        %3873 = vmatprep.subr.bf16.mxu0 0
        %3874 = vmatpush1.bf16.msra.mxu0 %v3865
        %3875 = vmatprep.subr.bf16.mxu0 0
        %3876 = vmatpush1.bf16.msra.mxu0 0
        %3877 = vmatprep.subr.bf16.mxu0 0
        %3878 = vmatpush1.bf16.msra.mxu0 0
        %3879 = vmatprep.subr.bf16.mxu0 0
        %3880 = vmatpush1.bf16.msra.mxu0 0
        %3881 = vmatprep.subr.bf16.mxu0 0
        %3882 = vmatpush1.bf16.msra.mxu0 0
        %3883 = vmatprep.subr.bf16.mxu0 0
        %3884 = vmatpush1.bf16.msra.mxu0 0
        %3885 = vmatprep.subr.bf16.mxu0 0
        %3886 = vmatpush1.bf16.msra.mxu0 0
        %3887 = vmatprep.subr.bf16.mxu0 0
        %3888 = vmatpush1.bf16.msra.mxu0 0
        %3889 = vmatprep.subr.bf16.mxu0 0
        %3890 = vmatpush1.bf16.msra.mxu0 0
        %3891 = vmatprep.subr.bf16.mxu0 0
        %3892 = vmatpush1.bf16.msra.mxu0 0
        %3893 = vmatprep.subr.bf16.mxu0 0
        %3894 = vmatpush1.bf16.msra.mxu0 0
        %3895 = vmatprep.subr.bf16.mxu0 0
        %3896 = vmatpush1.bf16.msra.mxu0 0
        %3897 = vmatprep.subr.bf16.mxu0 0
        %3898 = vmatpush1.bf16.msra.mxu0 0
        %3899 = vmatprep.subr.bf16.mxu0 0
        %3900 = vmatpush1.bf16.msra.mxu0 0
        %3901 = vmatprep.subr.bf16.mxu0 0
        %3902 = vmatpush1.bf16.msra.mxu0 0
        %3903 = vmatprep.mubr.bf16.mxu0 0
        %3904 = vmatmul.mubr.bf16.gmra.mrb[0].mxu0 %v3869
        %v3905 = vpop.f32.mrb[0].mxu0
        %v3906 = vadd.f32 %v3851, %v3905
        %v3907 = vpop.f32.mrb[0].mxu0
        %v3908 = vpop.f32.mrb[0].mxu0
        %v3909 = vpop.f32.mrb[0].mxu0
        %3910 = vdwg.mxu0
        %3911 = vrot.lane.b32.xlu0 %v3570, 64
        %v3912 = vpop.permute.xlu0 %3911
        %3913 = vrot.lane.b32.xlu0 %v3571, 64
        %v3914 = vpop.permute.xlu0 %3913
        %v3916 = vsel %vm1871, %v3912, 0
        %v3919 = vsel %vm1871, %v3914, 0
        %3921 = vmatprep.subr.bf16.mxu0 0
        %3922 = vmatpush1.bf16.xpose.msra.mxu0 %v3919
        %3923 = vmatprep.subr.bf16.mxu0 0
        %3924 = vmatpush1.bf16.xpose.msra.mxu0 0
        %3925 = vmatprep.subr.bf16.mxu0 0
        %3926 = vmatpush1.bf16.xpose.msra.mxu0 0
        %3927 = vmatprep.subr.bf16.mxu0 0
        %3928 = vmatpush1.bf16.xpose.msra.mxu0 0
        %3929 = vmatprep.subr.bf16.mxu0 0
        %3930 = vmatpush1.bf16.xpose.msra.mxu0 0
        %3931 = vmatprep.subr.bf16.mxu0 0
        %3932 = vmatpush1.bf16.xpose.msra.mxu0 0
        %3933 = vmatprep.subr.bf16.mxu0 0
        %3934 = vmatpush1.bf16.xpose.msra.mxu0 0
        %3935 = vmatprep.subr.bf16.mxu0 0
        %3936 = vmatpush1.bf16.xpose.msra.mxu0 0
        %3937 = vmatprep.subr.bf16.mxu0 0
        %3938 = vmatpush1.bf16.xpose.msra.mxu0 0
        %3939 = vmatprep.subr.bf16.mxu0 0
        %3940 = vmatpush1.bf16.xpose.msra.mxu0 0
        %3941 = vmatprep.subr.bf16.mxu0 0
        %3942 = vmatpush1.bf16.xpose.msra.mxu0 0
        %3943 = vmatprep.subr.bf16.mxu0 0
        %3944 = vmatpush1.bf16.xpose.msra.mxu0 0
        %3945 = vmatprep.subr.bf16.mxu0 0
        %3946 = vmatpush1.bf16.xpose.msra.mxu0 0
        %3947 = vmatprep.subr.bf16.mxu0 0
        %3948 = vmatpush1.bf16.xpose.msra.mxu0 0
        %3949 = vmatprep.subr.bf16.mxu0 0
        %3950 = vmatpush1.bf16.xpose.msra.mxu0 0
        %3951 = vmatprep.subr.bf16.mxu0 0
        %3952 = vmatpush1.bf16.xpose.msra.mxu0 0
        %3953 = vmatprep.mubr.bf16.mxu0 0
        %3954 = vmatmul.mubr.bf16.gmra.mrb[0].mxu0 %v3916
        %v3955 = vpop.f32.mrb[0].mxu0
        %v3956 = vadd.f32 0.0, %v3955
        %v3957 = vpop.f32.mrb[0].mxu0
        %v3958 = vpop.f32.mrb[0].mxu0
        %v3959 = vpop.f32.mrb[0].mxu0
        %3960 = vdwg.mxu0
        %v3961 = vsel %vm1918, %v3956, -inf
        %3962 = vmax.xlane.f32.xlu0 %v3961
        %v3963 = vpop.xlane.xlu0 %3962
        %v3964 = vsub.f32 %v3956, %v3963
        %v3965 = vmul.f32 %v3964, 1.442695
        %v3966 = vpow.pop %v3965
        %v3967 = vsel %vm1918, %v3966, 0.0
        %3968 = vadd.xlane.f32.xlu0 %v3967
        %v3969 = vpop.xlane.xlu0 %3968
        %v3970 = vrcp.pop %v3969
        %v3971 = vmul.f32 %v3966, %v3970
        %v3972 = vpack.c.bf16 %v3971, %v3971
        %3973 = vrot.lane.b32.xlu0 %v3572, 64
        %v3974 = vpop.permute.xlu0 %3973
        %v3976 = vsel %vm1931, %v3972, 0
        %v3979 = vand.u32 %v3974, %v1938
        %3981 = vmatprep.subr.bf16.mxu0 0
        %3982 = vmatpush1.bf16.msra.mxu0 %v3979
        %3983 = vmatprep.subr.bf16.mxu0 0
        %3984 = vmatpush1.bf16.msra.mxu0 0
        %3985 = vmatprep.subr.bf16.mxu0 0
        %3986 = vmatpush1.bf16.msra.mxu0 0
        %3987 = vmatprep.subr.bf16.mxu0 0
        %3988 = vmatpush1.bf16.msra.mxu0 0
        %3989 = vmatprep.subr.bf16.mxu0 0
        %3990 = vmatpush1.bf16.msra.mxu0 0
        %3991 = vmatprep.subr.bf16.mxu0 0
        %3992 = vmatpush1.bf16.msra.mxu0 0
        %3993 = vmatprep.subr.bf16.mxu0 0
        %3994 = vmatpush1.bf16.msra.mxu0 0
        %3995 = vmatprep.subr.bf16.mxu0 0
        %3996 = vmatpush1.bf16.msra.mxu0 0
        %3997 = vmatprep.subr.bf16.mxu0 0
        %3998 = vmatpush1.bf16.msra.mxu0 0
        %3999 = vmatprep.subr.bf16.mxu0 0
        %4000 = vmatpush1.bf16.msra.mxu0 0
        %4001 = vmatprep.subr.bf16.mxu0 0
        %4002 = vmatpush1.bf16.msra.mxu0 0
        %4003 = vmatprep.subr.bf16.mxu0 0
        %4004 = vmatpush1.bf16.msra.mxu0 0
        %4005 = vmatprep.subr.bf16.mxu0 0
        %4006 = vmatpush1.bf16.msra.mxu0 0
        %4007 = vmatprep.subr.bf16.mxu0 0
        %4008 = vmatpush1.bf16.msra.mxu0 0
        %4009 = vmatprep.subr.bf16.mxu0 0
        %4010 = vmatpush1.bf16.msra.mxu0 0
        %4011 = vmatprep.subr.bf16.mxu0 0
        %4012 = vmatpush1.bf16.msra.mxu0 0
        %4013 = vmatprep.mubr.bf16.mxu0 0
        %4014 = vmatmul.mubr.bf16.gmra.mrb[0].mxu0 %v3976
        %v4015 = vpop.f32.mrb[0].mxu0
        %v4016 = vadd.f32 0.0, %v4015
        %v4017 = vpop.f32.mrb[0].mxu0
        %v4018 = vpop.f32.mrb[0].mxu0
        %v4019 = vpop.f32.mrb[0].mxu0
        %4020 = vdwg.mxu0
        %v4021 = vpack.c.bf16 %v4016, %v4016
        %v4022 = vld [vmem:[%s3678 + $0x20] sm:$0xf]
        %v4023 = vld [vmem:[%s3678 + $0x24] sm:$0xf]
        %v4024 = vld [vmem:[%s3678 + $0x28] sm:$0xf]
        %v4025 = vld [vmem:[%s3678 + $0x2c] sm:$0xf]
        %v4030 = vunpack.c.l.b16 %v4022
        %v4031 = vunpack.c.l.b16 %v4023
        %v4032 = vunpack.c.l.b16 %v4024
        %v4033 = vunpack.c.l.b16 %v4025
        %v4034 = vpack.c.b16 %v4031, %v4030
        %v4035 = vpack.c.b16 %v4033, %v4032
        %v4039 = vsel %vm1871, %v4021, 0
        %4041 = vmatprep.subr.bf16.mxu0 0
        %4042 = vmatpush1.bf16.msra.mxu0 %v4034
        %4043 = vmatprep.subr.bf16.mxu0 0
        %4044 = vmatpush1.bf16.msra.mxu0 %v4035
        %4045 = vmatprep.subr.bf16.mxu0 0
        %4046 = vmatpush1.bf16.msra.mxu0 0
        %4047 = vmatprep.subr.bf16.mxu0 0
        %4048 = vmatpush1.bf16.msra.mxu0 0
        %4049 = vmatprep.subr.bf16.mxu0 0
        %4050 = vmatpush1.bf16.msra.mxu0 0
        %4051 = vmatprep.subr.bf16.mxu0 0
        %4052 = vmatpush1.bf16.msra.mxu0 0
        %4053 = vmatprep.subr.bf16.mxu0 0
        %4054 = vmatpush1.bf16.msra.mxu0 0
        %4055 = vmatprep.subr.bf16.mxu0 0
        %4056 = vmatpush1.bf16.msra.mxu0 0
        %4057 = vmatprep.subr.bf16.mxu0 0
        %4058 = vmatpush1.bf16.msra.mxu0 0
        %4059 = vmatprep.subr.bf16.mxu0 0
        %4060 = vmatpush1.bf16.msra.mxu0 0
        %4061 = vmatprep.subr.bf16.mxu0 0
        %4062 = vmatpush1.bf16.msra.mxu0 0
        %4063 = vmatprep.subr.bf16.mxu0 0
        %4064 = vmatpush1.bf16.msra.mxu0 0
        %4065 = vmatprep.subr.bf16.mxu0 0
        %4066 = vmatpush1.bf16.msra.mxu0 0
        %4067 = vmatprep.subr.bf16.mxu0 0
        %4068 = vmatpush1.bf16.msra.mxu0 0
        %4069 = vmatprep.subr.bf16.mxu0 0
        %4070 = vmatpush1.bf16.msra.mxu0 0
        %4071 = vmatprep.subr.bf16.mxu0 0
        %4072 = vmatpush1.bf16.msra.mxu0 0
        %4073 = vmatprep.mubr.bf16.mxu0 0
        %4074 = vmatmul.mubr.bf16.gmra.mrb[0].mxu0 %v4039
        %v4075 = vpop.f32.mrb[0].mxu0
        %v4076 = vadd.f32 0.0, %v4075
        %v4077 = vpop.f32.mrb[0].mxu0
        %v4078 = vpop.f32.mrb[0].mxu0
        %v4079 = vpop.f32.mrb[0].mxu0
        %4080 = vdwg.mxu0
        %v4081 = vadd.f32 %v3906, %v4076
        %4082 = vrot.lane.b32.xlu0 %v3570, 32
        %v4083 = vpop.permute.xlu0 %4082
        %4084 = vrot.lane.b32.xlu0 %v3571, 32
        %v4085 = vpop.permute.xlu0 %4084
        %v4087 = vsel %vm1871, %v4083, 0
        %v4090 = vsel %vm1871, %v4085, 0
        %4092 = vmatprep.subr.bf16.mxu0 0
        %4093 = vmatpush1.bf16.xpose.msra.mxu0 %v4090
        %4094 = vmatprep.subr.bf16.mxu0 0
        %4095 = vmatpush1.bf16.xpose.msra.mxu0 0
        %4096 = vmatprep.subr.bf16.mxu0 0
        %4097 = vmatpush1.bf16.xpose.msra.mxu0 0
        %4098 = vmatprep.subr.bf16.mxu0 0
        %4099 = vmatpush1.bf16.xpose.msra.mxu0 0
        %4100 = vmatprep.subr.bf16.mxu0 0
        %4101 = vmatpush1.bf16.xpose.msra.mxu0 0
        %4102 = vmatprep.subr.bf16.mxu0 0
        %4103 = vmatpush1.bf16.xpose.msra.mxu0 0
        %4104 = vmatprep.subr.bf16.mxu0 0
        %4105 = vmatpush1.bf16.xpose.msra.mxu0 0
        %4106 = vmatprep.subr.bf16.mxu0 0
        %4107 = vmatpush1.bf16.xpose.msra.mxu0 0
        %4108 = vmatprep.subr.bf16.mxu0 0
        %4109 = vmatpush1.bf16.xpose.msra.mxu0 0
        %4110 = vmatprep.subr.bf16.mxu0 0
        %4111 = vmatpush1.bf16.xpose.msra.mxu0 0
        %4112 = vmatprep.subr.bf16.mxu0 0
        %4113 = vmatpush1.bf16.xpose.msra.mxu0 0
        %4114 = vmatprep.subr.bf16.mxu0 0
        %4115 = vmatpush1.bf16.xpose.msra.mxu0 0
        %4116 = vmatprep.subr.bf16.mxu0 0
        %4117 = vmatpush1.bf16.xpose.msra.mxu0 0
        %4118 = vmatprep.subr.bf16.mxu0 0
        %4119 = vmatpush1.bf16.xpose.msra.mxu0 0
        %4120 = vmatprep.subr.bf16.mxu0 0
        %4121 = vmatpush1.bf16.xpose.msra.mxu0 0
        %4122 = vmatprep.subr.bf16.mxu0 0
        %4123 = vmatpush1.bf16.xpose.msra.mxu0 0
        %4124 = vmatprep.mubr.bf16.mxu0 0
        %4125 = vmatmul.mubr.bf16.gmra.mrb[0].mxu0 %v4087
        %v4126 = vpop.f32.mrb[0].mxu0
        %v4127 = vadd.f32 0.0, %v4126
        %v4128 = vpop.f32.mrb[0].mxu0
        %v4129 = vpop.f32.mrb[0].mxu0
        %v4130 = vpop.f32.mrb[0].mxu0
        %4131 = vdwg.mxu0
        %v4132 = vsel %vm1918, %v4127, -inf
        %4133 = vmax.xlane.f32.xlu0 %v4132
        %v4134 = vpop.xlane.xlu0 %4133
        %v4135 = vsub.f32 %v4127, %v4134
        %v4136 = vmul.f32 %v4135, 1.442695
        %v4137 = vpow.pop %v4136
        %v4138 = vsel %vm1918, %v4137, 0.0
        %4139 = vadd.xlane.f32.xlu0 %v4138
        %v4140 = vpop.xlane.xlu0 %4139
        %v4141 = vrcp.pop %v4140
        %v4142 = vmul.f32 %v4137, %v4141
        %v4143 = vpack.c.bf16 %v4142, %v4142
        %4144 = vrot.lane.b32.xlu0 %v3572, 32
        %v4145 = vpop.permute.xlu0 %4144
        %v4147 = vsel %vm1931, %v4143, 0
        %v4150 = vand.u32 %v4145, %v1938
        %4152 = vmatprep.subr.bf16.mxu0 0
        %4153 = vmatpush1.bf16.msra.mxu0 %v4150
        %4154 = vmatprep.subr.bf16.mxu0 0
        %4155 = vmatpush1.bf16.msra.mxu0 0
        %4156 = vmatprep.subr.bf16.mxu0 0
        %4157 = vmatpush1.bf16.msra.mxu0 0
        %4158 = vmatprep.subr.bf16.mxu0 0
        %4159 = vmatpush1.bf16.msra.mxu0 0
        %4160 = vmatprep.subr.bf16.mxu0 0
        %4161 = vmatpush1.bf16.msra.mxu0 0
        %4162 = vmatprep.subr.bf16.mxu0 0
        %4163 = vmatpush1.bf16.msra.mxu0 0
        %4164 = vmatprep.subr.bf16.mxu0 0
        %4165 = vmatpush1.bf16.msra.mxu0 0
        %4166 = vmatprep.subr.bf16.mxu0 0
        %4167 = vmatpush1.bf16.msra.mxu0 0
        %4168 = vmatprep.subr.bf16.mxu0 0
        %4169 = vmatpush1.bf16.msra.mxu0 0
        %4170 = vmatprep.subr.bf16.mxu0 0
        %4171 = vmatpush1.bf16.msra.mxu0 0
        %4172 = vmatprep.subr.bf16.mxu0 0
        %4173 = vmatpush1.bf16.msra.mxu0 0
        %4174 = vmatprep.subr.bf16.mxu0 0
        %4175 = vmatpush1.bf16.msra.mxu0 0
        %4176 = vmatprep.subr.bf16.mxu0 0
        %4177 = vmatpush1.bf16.msra.mxu0 0
        %4178 = vmatprep.subr.bf16.mxu0 0
        %4179 = vmatpush1.bf16.msra.mxu0 0
        %4180 = vmatprep.subr.bf16.mxu0 0
        %4181 = vmatpush1.bf16.msra.mxu0 0
        %4182 = vmatprep.subr.bf16.mxu0 0
        %4183 = vmatpush1.bf16.msra.mxu0 0
        %4184 = vmatprep.mubr.bf16.mxu0 0
        %4185 = vmatmul.mubr.bf16.gmra.mrb[0].mxu0 %v4147
        %v4186 = vpop.f32.mrb[0].mxu0
        %v4187 = vadd.f32 0.0, %v4186
        %v4188 = vpop.f32.mrb[0].mxu0
        %v4189 = vpop.f32.mrb[0].mxu0
        %v4190 = vpop.f32.mrb[0].mxu0
        %4191 = vdwg.mxu0
        %v4192 = vpack.c.bf16 %v4187, %v4187
        %v4193 = vld [vmem:[%s3678 + $0x30] sm:$0xf]
        %v4194 = vld [vmem:[%s3678 + $0x34] sm:$0xf]
        %v4195 = vld [vmem:[%s3678 + $0x38] sm:$0xf]
        %v4196 = vld [vmem:[%s3678 + $0x3c] sm:$0xf]
        %v4201 = vunpack.c.l.b16 %v4193
        %v4202 = vunpack.c.l.b16 %v4194
        %v4203 = vunpack.c.l.b16 %v4195
        %v4204 = vunpack.c.l.b16 %v4196
        %v4205 = vpack.c.b16 %v4202, %v4201
        %v4206 = vpack.c.b16 %v4204, %v4203
        %v4210 = vsel %vm1871, %v4192, 0
        %4212 = vmatprep.subr.bf16.mxu0 0
        %4213 = vmatpush1.bf16.msra.mxu0 %v4205
        %4214 = vmatprep.subr.bf16.mxu0 0
        %4215 = vmatpush1.bf16.msra.mxu0 %v4206
        %4216 = vmatprep.subr.bf16.mxu0 0
        %4217 = vmatpush1.bf16.msra.mxu0 0
        %4218 = vmatprep.subr.bf16.mxu0 0
        %4219 = vmatpush1.bf16.msra.mxu0 0
        %4220 = vmatprep.subr.bf16.mxu0 0
        %4221 = vmatpush1.bf16.msra.mxu0 0
        %4222 = vmatprep.subr.bf16.mxu0 0
        %4223 = vmatpush1.bf16.msra.mxu0 0
        %4224 = vmatprep.subr.bf16.mxu0 0
        %4225 = vmatpush1.bf16.msra.mxu0 0
        %4226 = vmatprep.subr.bf16.mxu0 0
        %4227 = vmatpush1.bf16.msra.mxu0 0
        %4228 = vmatprep.subr.bf16.mxu0 0
        %4229 = vmatpush1.bf16.msra.mxu0 0
        %4230 = vmatprep.subr.bf16.mxu0 0
        %4231 = vmatpush1.bf16.msra.mxu0 0
        %4232 = vmatprep.subr.bf16.mxu0 0
        %4233 = vmatpush1.bf16.msra.mxu0 0
        %4234 = vmatprep.subr.bf16.mxu0 0
        %4235 = vmatpush1.bf16.msra.mxu0 0
        %4236 = vmatprep.subr.bf16.mxu0 0
        %4237 = vmatpush1.bf16.msra.mxu0 0
        %4238 = vmatprep.subr.bf16.mxu0 0
        %4239 = vmatpush1.bf16.msra.mxu0 0
        %4240 = vmatprep.subr.bf16.mxu0 0
        %4241 = vmatpush1.bf16.msra.mxu0 0
        %4242 = vmatprep.subr.bf16.mxu0 0
        %4243 = vmatpush1.bf16.msra.mxu0 0
        %4244 = vmatprep.mubr.bf16.mxu0 0
        %4245 = vmatmul.mubr.bf16.gmra.mrb[0].mxu0 %v4210
        %v4246 = vpop.f32.mrb[0].mxu0
        %v4247 = vadd.f32 0.0, %v4246
        %v4248 = vpop.f32.mrb[0].mxu0
        %v4249 = vpop.f32.mrb[0].mxu0
        %v4250 = vpop.f32.mrb[0].mxu0
        %4251 = vdwg.mxu0
        %v4252 = vadd.f32 %v4081, %v4247
        %s4253 = scalar_lea.vmem [#allocation12], 1
        %v4254 = vld [vmem:[%s4253] sm:$0x1]
        %s4255 = scalar_lea.vmem [#allocation11], 1
        %v4256 = vld [vmem:[%s4255] sm:$0x1]
        %v4258 = vlaneseq
        %v4259 = vshrl.u32 %v4258, 7
        %v4260 = vsub.s32 0, %v4259
        %v4261 = vrot.slane %v4256, %v4260
        %v4263 = vadd.f32 %v4252, %v4261
        %v4265 = vlaneseq
        %v4266 = vshrl.u32 %v4265, 7
        %v4267 = vsub.s32 0, %v4266
        %v4268 = vrot.slane %v4254, %v4267
        %v4270 = vmul.f32 %v4268, %v4263
        %v4271 = vadd.f32 %v3276, %v4270
        %s4272 = scalar_lea.vmem [#allocation14], 1
        %v4273 = vld [vmem:[%s4272] sm:$0x1]
        %s4274 = scalar_lea.vmem [#allocation15], 1
        %v4275 = vld [vmem:[%s4274] sm:$0x1]
        %v4276 = vsel %vm1579, %v4271, 0.0
        %4277 = vadd.xlane.f32.xlu0 %v4276
        %v4278 = vpop.xlane.xlu0 %4277
        %v4279 = vmul.f32 %v4278, %v1583
        %v4280 = vsub.f32 %v4271, %v4279
        %v4281 = vmul.f32 %v4280, %v4280
        %v4282 = vsel %vm1579, %v4281, 0.0
        %4283 = vadd.xlane.f32.xlu0 %v4282
        %v4284 = vpop.xlane.xlu0 %4283
        %v4285 = vmul.f32 %v4284, %v1583
        %v4286 = vadd.f32 %v4285, 1e-06
        %v4287 = vrsqrt.pop %v4286
        %v4288 = vmul.f32 %v4280, %v4287
        %v4290 = vlaneseq
        %v4291 = vshrl.u32 %v4290, 7
        %v4292 = vsub.s32 0, %v4291
        %v4293 = vrot.slane %v4273, %v4292
        %v4295 = vmul.f32 %v4288, %v4293
        %v4297 = vlaneseq
        %v4298 = vshrl.u32 %v4297, 7
        %v4299 = vsub.s32 0, %v4298
        %v4300 = vrot.slane %v4275, %v4299
        %v4302 = vadd.f32 %v4295, %v4300
        %s4303 = scalar_lea.vmem %s14, 256
        %v4304 = vld [vmem:[%s4303] sm:$0xff]
        %v4305 = vld [vmem:[%s4303 + $0x8] sm:$0xff]
        %v4306 = vld [vmem:[%s4303 + $0x10] sm:$0xff]
        %v4307 = vld [vmem:[%s4303 + $0x18] sm:$0xff]
        %v4308 = vld [vmem:[%s4303 + $0x20] sm:$0xff]
        %v4309 = vld [vmem:[%s4303 + $0x28] sm:$0xff]
        %v4310 = vld [vmem:[%s4303 + $0x30] sm:$0xff]
        %v4311 = vld [vmem:[%s4303 + $0x38] sm:$0xff]
        %v4312 = vld [vmem:[%s4303 + $0x40] sm:$0xff]
        %v4313 = vld [vmem:[%s4303 + $0x48] sm:$0xff]
        %v4314 = vld [vmem:[%s4303 + $0x50] sm:$0xff]
        %v4315 = vld [vmem:[%s4303 + $0x58] sm:$0xff]
        %v4316 = vld [vmem:[%s4303 + $0x60] sm:$0xff]
        %v4317 = vld [vmem:[%s4303 + $0x68] sm:$0xff]
        %v4318 = vld [vmem:[%s4303 + $0x70] sm:$0xff]
        %v4319 = vld [vmem:[%s4303 + $0x78] sm:$0xff]
        %v4320 = vld [vmem:[%s4303 + $0x80] sm:$0xff]
        %v4321 = vld [vmem:[%s4303 + $0x88] sm:$0xff]
        %v4322 = vld [vmem:[%s4303 + $0x90] sm:$0xff]
        %v4323 = vld [vmem:[%s4303 + $0x98] sm:$0xff]
        %v4324 = vld [vmem:[%s4303 + $0xa0] sm:$0xff]
        %v4325 = vld [vmem:[%s4303 + $0xa8] sm:$0xff]
        %v4326 = vld [vmem:[%s4303 + $0xb0] sm:$0xff]
        %v4327 = vld [vmem:[%s4303 + $0xb8] sm:$0xff]
        %v4328 = vld [vmem:[%s4303 + $0xc0] sm:$0xff]
        %v4329 = vld [vmem:[%s4303 + $0xc8] sm:$0xff]
        %v4330 = vld [vmem:[%s4303 + $0xd0] sm:$0xff]
        %v4331 = vld [vmem:[%s4303 + $0xd8] sm:$0xff]
        %v4332 = vld [vmem:[%s4303 + $0xe0] sm:$0xff]
        %v4333 = vld [vmem:[%s4303 + $0xe8] sm:$0xff]
        %v4334 = vld [vmem:[%s4303 + $0xf0] sm:$0xff]
        %v4335 = vld [vmem:[%s4303 + $0xf8] sm:$0xff]
        %s4336 = scalar_lea.vmem [#allocation17], 4
        %v4337 = vld [vmem:[%s4336] sm:$0xf]
        %v4338 = vpack.c.bf16 %v4302, %v4302
        %v4340 = vlaneseq
        %v4341 = vshrl.u32 %v4340, 7
        %v4342 = vsub.s32 0, %v4341
        %v4343 = vrot.slane %v4337, %v4342
        %v4344 = vlaneseq
        %v4345 = vshrl.u32 %v4344, 7
        %v4346 = vsub.s32 1, %v4345
        %v4347 = vrot.slane %v4337, %v4346
        %v4348 = vlaneseq
        %v4349 = vshrl.u32 %v4348, 7
        %v4350 = vsub.s32 2, %v4349
        %v4351 = vrot.slane %v4337, %v4350
        %v4352 = vlaneseq
        %v4353 = vshrl.u32 %v4352, 7
        %v4354 = vsub.s32 3, %v4353
        %v4355 = vrot.slane %v4337, %v4354
        %v4392 = vunpack.c.l.b16 %v4304
        %v4393 = vunpack.c.h.b16 %v4304
        %v4394 = vunpack.c.l.b16 %v4305
        %v4395 = vunpack.c.h.b16 %v4305
        %v4396 = vunpack.c.l.b16 %v4306
        %v4397 = vunpack.c.h.b16 %v4306
        %v4398 = vunpack.c.l.b16 %v4307
        %v4399 = vunpack.c.h.b16 %v4307
        %v4400 = vunpack.c.l.b16 %v4308
        %v4401 = vunpack.c.h.b16 %v4308
        %v4402 = vunpack.c.l.b16 %v4309
        %v4403 = vunpack.c.h.b16 %v4309
        %v4404 = vunpack.c.l.b16 %v4310
        %v4405 = vunpack.c.h.b16 %v4310
        %v4406 = vunpack.c.l.b16 %v4311
        %v4407 = vunpack.c.h.b16 %v4311
        %v4408 = vunpack.c.l.b16 %v4312
        %v4409 = vunpack.c.h.b16 %v4312
        %v4410 = vunpack.c.l.b16 %v4313
        %v4411 = vunpack.c.h.b16 %v4313
        %v4412 = vunpack.c.l.b16 %v4314
        %v4413 = vunpack.c.h.b16 %v4314
        %v4414 = vunpack.c.l.b16 %v4315
        %v4415 = vunpack.c.h.b16 %v4315
        %v4416 = vunpack.c.l.b16 %v4316
        %v4417 = vunpack.c.h.b16 %v4316
        %v4418 = vunpack.c.l.b16 %v4317
        %v4419 = vunpack.c.h.b16 %v4317
        %v4420 = vunpack.c.l.b16 %v4318
        %v4421 = vunpack.c.h.b16 %v4318
        %v4422 = vunpack.c.l.b16 %v4319
        %v4423 = vunpack.c.h.b16 %v4319
        %v4424 = vunpack.c.l.b16 %v4320
        %v4425 = vunpack.c.h.b16 %v4320
        %v4426 = vunpack.c.l.b16 %v4321
        %v4427 = vunpack.c.h.b16 %v4321
        %v4428 = vunpack.c.l.b16 %v4322
        %v4429 = vunpack.c.h.b16 %v4322
        %v4430 = vunpack.c.l.b16 %v4323
        %v4431 = vunpack.c.h.b16 %v4323
        %v4432 = vunpack.c.l.b16 %v4324
        %v4433 = vunpack.c.h.b16 %v4324
        %v4434 = vunpack.c.l.b16 %v4325
        %v4435 = vunpack.c.h.b16 %v4325
        %v4436 = vunpack.c.l.b16 %v4326
        %v4437 = vunpack.c.h.b16 %v4326
        %v4438 = vunpack.c.l.b16 %v4327
        %v4439 = vunpack.c.h.b16 %v4327
        %v4440 = vunpack.c.l.b16 %v4328
        %v4441 = vunpack.c.h.b16 %v4328
        %v4442 = vunpack.c.l.b16 %v4329
        %v4443 = vunpack.c.h.b16 %v4329
        %v4444 = vunpack.c.l.b16 %v4330
        %v4445 = vunpack.c.h.b16 %v4330
        %v4446 = vunpack.c.l.b16 %v4331
        %v4447 = vunpack.c.h.b16 %v4331
        %v4448 = vunpack.c.l.b16 %v4332
        %v4449 = vunpack.c.h.b16 %v4332
        %v4450 = vunpack.c.l.b16 %v4333
        %v4451 = vunpack.c.h.b16 %v4333
        %v4452 = vunpack.c.l.b16 %v4334
        %v4453 = vunpack.c.h.b16 %v4334
        %v4454 = vunpack.c.l.b16 %v4335
        %v4455 = vunpack.c.h.b16 %v4335
        %v4456 = vpack.c.b16 %v4396, %v4392
        %v4457 = vpack.c.b16 %v4397, %v4393
        %v4458 = vpack.c.b16 %v4398, %v4394
        %v4459 = vpack.c.b16 %v4399, %v4395
        %v4460 = vpack.c.b16 %v4404, %v4400
        %v4461 = vpack.c.b16 %v4405, %v4401
        %v4462 = vpack.c.b16 %v4406, %v4402
        %v4463 = vpack.c.b16 %v4407, %v4403
        %v4464 = vpack.c.b16 %v4412, %v4408
        %v4465 = vpack.c.b16 %v4413, %v4409
        %v4466 = vpack.c.b16 %v4414, %v4410
        %v4467 = vpack.c.b16 %v4415, %v4411
        %v4468 = vpack.c.b16 %v4420, %v4416
        %v4469 = vpack.c.b16 %v4421, %v4417
        %v4470 = vpack.c.b16 %v4422, %v4418
        %v4471 = vpack.c.b16 %v4423, %v4419
        %v4472 = vpack.c.b16 %v4428, %v4424
        %v4473 = vpack.c.b16 %v4429, %v4425
        %v4474 = vpack.c.b16 %v4430, %v4426
        %v4475 = vpack.c.b16 %v4431, %v4427
        %v4476 = vpack.c.b16 %v4436, %v4432
        %v4477 = vpack.c.b16 %v4437, %v4433
        %v4478 = vpack.c.b16 %v4438, %v4434
        %v4479 = vpack.c.b16 %v4439, %v4435
        %v4480 = vpack.c.b16 %v4444, %v4440
        %v4481 = vpack.c.b16 %v4445, %v4441
        %v4482 = vpack.c.b16 %v4446, %v4442
        %v4483 = vpack.c.b16 %v4447, %v4443
        %v4484 = vpack.c.b16 %v4452, %v4448
        %v4485 = vpack.c.b16 %v4453, %v4449
        %v4486 = vpack.c.b16 %v4454, %v4450
        %v4487 = vpack.c.b16 %v4455, %v4451
        %4520 = vmatprep.subr.bf16.mxu0 %v4457
        %4521 = vmatpush1.bf16.msra.mxu0 %v4456
        %4522 = vmatprep.subr.bf16.mxu0 %v4461
        %4523 = vmatpush1.bf16.msra.mxu0 %v4460
        %4524 = vmatprep.subr.bf16.mxu0 %v4465
        %4525 = vmatpush1.bf16.msra.mxu0 %v4464
        %4526 = vmatprep.subr.bf16.mxu0 %v4469
        %4527 = vmatpush1.bf16.msra.mxu0 %v4468
        %4528 = vmatprep.subr.bf16.mxu0 %v4473
        %4529 = vmatpush1.bf16.msra.mxu0 %v4472
        %4530 = vmatprep.subr.bf16.mxu0 %v4477
        %4531 = vmatpush1.bf16.msra.mxu0 %v4476
        %4532 = vmatprep.subr.bf16.mxu0 %v4481
        %4533 = vmatpush1.bf16.msra.mxu0 %v4480
        %4534 = vmatprep.subr.bf16.mxu0 %v4485
        %4535 = vmatpush1.bf16.msra.mxu0 %v4484
        %4536 = vmatprep.subr.bf16.mxu0 0
        %4537 = vmatpush1.bf16.msra.mxu0 0
        %4538 = vmatprep.subr.bf16.mxu0 0
        %4539 = vmatpush1.bf16.msra.mxu0 0
        %4540 = vmatprep.subr.bf16.mxu0 0
        %4541 = vmatpush1.bf16.msra.mxu0 0
        %4542 = vmatprep.subr.bf16.mxu0 0
        %4543 = vmatpush1.bf16.msra.mxu0 0
        %4544 = vmatprep.subr.bf16.mxu0 0
        %4545 = vmatpush1.bf16.msra.mxu0 0
        %4546 = vmatprep.subr.bf16.mxu0 0
        %4547 = vmatpush1.bf16.msra.mxu0 0
        %4548 = vmatprep.subr.bf16.mxu0 0
        %4549 = vmatpush1.bf16.msra.mxu0 0
        %4550 = vmatprep.subr.bf16.mxu0 0
        %4551 = vmatpush1.bf16.msra.mxu0 0
        %4552 = vmatprep.mubr.bf16.mxu0 0
        %4553 = vmatmul.mubr.bf16.gmra.mrb[0].mxu0 %v4338
        %v4554 = vpop.f32.mrb[0].mxu0
        %v4555 = vadd.f32 %v4343, %v4554
        %v4556 = vpop.f32.mrb[0].mxu0
        %v4557 = vadd.f32 %v4347, %v4556
        %v4558 = vpop.f32.mrb[0].mxu0
        %v4559 = vpop.f32.mrb[0].mxu0
        %4560 = vdwg.mxu0
        %4561 = vmatprep.subr.bf16.mxu0 %v4459
        %4562 = vmatpush1.bf16.msra.mxu0 %v4458
        %4563 = vmatprep.subr.bf16.mxu0 %v4463
        %4564 = vmatpush1.bf16.msra.mxu0 %v4462
        %4565 = vmatprep.subr.bf16.mxu0 %v4467
        %4566 = vmatpush1.bf16.msra.mxu0 %v4466
        %4567 = vmatprep.subr.bf16.mxu0 %v4471
        %4568 = vmatpush1.bf16.msra.mxu0 %v4470
        %4569 = vmatprep.subr.bf16.mxu0 %v4475
        %4570 = vmatpush1.bf16.msra.mxu0 %v4474
        %4571 = vmatprep.subr.bf16.mxu0 %v4479
        %4572 = vmatpush1.bf16.msra.mxu0 %v4478
        %4573 = vmatprep.subr.bf16.mxu0 %v4483
        %4574 = vmatpush1.bf16.msra.mxu0 %v4482
        %4575 = vmatprep.subr.bf16.mxu0 %v4487
        %4576 = vmatpush1.bf16.msra.mxu0 %v4486
        %4577 = vmatprep.subr.bf16.mxu0 0
        %4578 = vmatpush1.bf16.msra.mxu0 0
        %4579 = vmatprep.subr.bf16.mxu0 0
        %4580 = vmatpush1.bf16.msra.mxu0 0
        %4581 = vmatprep.subr.bf16.mxu0 0
        %4582 = vmatpush1.bf16.msra.mxu0 0
        %4583 = vmatprep.subr.bf16.mxu0 0
        %4584 = vmatpush1.bf16.msra.mxu0 0
        %4585 = vmatprep.subr.bf16.mxu0 0
        %4586 = vmatpush1.bf16.msra.mxu0 0
        %4587 = vmatprep.subr.bf16.mxu0 0
        %4588 = vmatpush1.bf16.msra.mxu0 0
        %4589 = vmatprep.subr.bf16.mxu0 0
        %4590 = vmatpush1.bf16.msra.mxu0 0
        %4591 = vmatprep.subr.bf16.mxu0 0
        %4592 = vmatpush1.bf16.msra.mxu0 0
        %4593 = vmatprep.mubr.bf16.mxu0 0
        %4594 = vmatmul.mubr.bf16.gmra.mrb[0].mxu0 %v4338
        %v4595 = vpop.f32.mrb[0].mxu0
        %v4596 = vadd.f32 %v4351, %v4595
        %v4597 = vpop.f32.mrb[0].mxu0
        %v4598 = vadd.f32 %v4355, %v4597
        %v4599 = vpop.f32.mrb[0].mxu0
        %v4600 = vpop.f32.mrb[0].mxu0
        %4601 = vdwg.mxu0
        %v4602 = vmul.f32 %v4555, 0.5
        %v4603 = vmul.f32 %v4557, 0.5
        %v4604 = vmul.f32 %v4596, 0.5
        %v4605 = vmul.f32 %v4598, 0.5
        %v4606 = vmul.f32 %v4555, %v2904
        %v4607 = vmul.f32 %v4557, %v2904
        %v4608 = vmul.f32 %v4596, %v2904
        %v4609 = vmul.f32 %v4598, %v2904
        %v4610 = verf.f32.pop %v4606
        %v4611 = verf.f32.pop %v4607
        %v4612 = verf.f32.pop %v4608
        %v4613 = verf.f32.pop %v4609
        %v4614 = vadd.f32 %v4610, 1.0
        %v4615 = vadd.f32 %v4611, 1.0
        %v4616 = vadd.f32 %v4612, 1.0
        %v4617 = vadd.f32 %v4613, 1.0
        %v4618 = vmul.f32 %v4602, %v4614
        %v4619 = vmul.f32 %v4603, %v4615
        %v4620 = vmul.f32 %v4604, %v4616
        %v4621 = vmul.f32 %v4605, %v4617
        %s4622 = scalar_lea.vmem [#allocation20], 1
        %v4623 = vld [vmem:[%s4622] sm:$0x1]
        %s4624 = scalar_lea.vmem %s16, 256
        %v4625 = vld [vmem:[%s4624] sm:$0xf]
        %v4626 = vld [vmem:[%s4624 + $0x4] sm:$0xf]
        %v4627 = vld [vmem:[%s4624 + $0x8] sm:$0xf]
        %v4628 = vld [vmem:[%s4624 + $0xc] sm:$0xf]
        %v4629 = vld [vmem:[%s4624 + $0x10] sm:$0xf]
        %v4630 = vld [vmem:[%s4624 + $0x14] sm:$0xf]
        %v4631 = vld [vmem:[%s4624 + $0x18] sm:$0xf]
        %v4632 = vld [vmem:[%s4624 + $0x1c] sm:$0xf]
        %v4633 = vld [vmem:[%s4624 + $0x20] sm:$0xf]
        %v4634 = vld [vmem:[%s4624 + $0x24] sm:$0xf]
        %v4635 = vld [vmem:[%s4624 + $0x28] sm:$0xf]
        %v4636 = vld [vmem:[%s4624 + $0x2c] sm:$0xf]
        %v4637 = vld [vmem:[%s4624 + $0x30] sm:$0xf]
        %v4638 = vld [vmem:[%s4624 + $0x34] sm:$0xf]
        %v4639 = vld [vmem:[%s4624 + $0x38] sm:$0xf]
        %v4640 = vld [vmem:[%s4624 + $0x3c] sm:$0xf]
        %v4641 = vld [vmem:[%s4624 + $0x40] sm:$0xf]
        %v4642 = vld [vmem:[%s4624 + $0x44] sm:$0xf]
        %v4643 = vld [vmem:[%s4624 + $0x48] sm:$0xf]
        %v4644 = vld [vmem:[%s4624 + $0x4c] sm:$0xf]
        %v4645 = vld [vmem:[%s4624 + $0x50] sm:$0xf]
        %v4646 = vld [vmem:[%s4624 + $0x54] sm:$0xf]
        %v4647 = vld [vmem:[%s4624 + $0x58] sm:$0xf]
        %v4648 = vld [vmem:[%s4624 + $0x5c] sm:$0xf]
        %v4649 = vld [vmem:[%s4624 + $0x60] sm:$0xf]
        %v4650 = vld [vmem:[%s4624 + $0x64] sm:$0xf]
        %v4651 = vld [vmem:[%s4624 + $0x68] sm:$0xf]
        %v4652 = vld [vmem:[%s4624 + $0x6c] sm:$0xf]
        %v4653 = vld [vmem:[%s4624 + $0x70] sm:$0xf]
        %v4654 = vld [vmem:[%s4624 + $0x74] sm:$0xf]
        %v4655 = vld [vmem:[%s4624 + $0x78] sm:$0xf]
        %v4656 = vld [vmem:[%s4624 + $0x7c] sm:$0xf]
        %v4657 = vld [vmem:[%s4624 + $0x80] sm:$0xf]
        %v4658 = vld [vmem:[%s4624 + $0x84] sm:$0xf]
        %v4659 = vld [vmem:[%s4624 + $0x88] sm:$0xf]
        %v4660 = vld [vmem:[%s4624 + $0x8c] sm:$0xf]
        %v4661 = vld [vmem:[%s4624 + $0x90] sm:$0xf]
        %v4662 = vld [vmem:[%s4624 + $0x94] sm:$0xf]
        %v4663 = vld [vmem:[%s4624 + $0x98] sm:$0xf]
        %v4664 = vld [vmem:[%s4624 + $0x9c] sm:$0xf]
        %v4665 = vld [vmem:[%s4624 + $0xa0] sm:$0xf]
        %v4666 = vld [vmem:[%s4624 + $0xa4] sm:$0xf]
        %v4667 = vld [vmem:[%s4624 + $0xa8] sm:$0xf]
        %v4668 = vld [vmem:[%s4624 + $0xac] sm:$0xf]
        %v4669 = vld [vmem:[%s4624 + $0xb0] sm:$0xf]
        %v4670 = vld [vmem:[%s4624 + $0xb4] sm:$0xf]
        %v4671 = vld [vmem:[%s4624 + $0xb8] sm:$0xf]
        %v4672 = vld [vmem:[%s4624 + $0xbc] sm:$0xf]
        %v4673 = vld [vmem:[%s4624 + $0xc0] sm:$0xf]
        %v4674 = vld [vmem:[%s4624 + $0xc4] sm:$0xf]
        %v4675 = vld [vmem:[%s4624 + $0xc8] sm:$0xf]
        %v4676 = vld [vmem:[%s4624 + $0xcc] sm:$0xf]
        %v4677 = vld [vmem:[%s4624 + $0xd0] sm:$0xf]
        %v4678 = vld [vmem:[%s4624 + $0xd4] sm:$0xf]
        %v4679 = vld [vmem:[%s4624 + $0xd8] sm:$0xf]
        %v4680 = vld [vmem:[%s4624 + $0xdc] sm:$0xf]
        %v4681 = vld [vmem:[%s4624 + $0xe0] sm:$0xf]
        %v4682 = vld [vmem:[%s4624 + $0xe4] sm:$0xf]
        %v4683 = vld [vmem:[%s4624 + $0xe8] sm:$0xf]
        %v4684 = vld [vmem:[%s4624 + $0xec] sm:$0xf]
        %v4685 = vld [vmem:[%s4624 + $0xf0] sm:$0xf]
        %v4686 = vld [vmem:[%s4624 + $0xf4] sm:$0xf]
        %v4687 = vld [vmem:[%s4624 + $0xf8] sm:$0xf]
        %v4688 = vld [vmem:[%s4624 + $0xfc] sm:$0xf]
        %s4689 = scalar_lea.vmem [#allocation18], 1
        %v4690 = vld [vmem:[%s4689] sm:$0x1]
        %v4691 = vpack.c.bf16 %v4618, %v4618
        %v4692 = vpack.c.bf16 %v4619, %v4619
        %v4693 = vpack.c.bf16 %v4620, %v4620
        %v4694 = vpack.c.bf16 %v4621, %v4621
        %v4696 = vlaneseq
        %v4697 = vshrl.u32 %v4696, 7
        %v4698 = vsub.s32 0, %v4697
        %v4699 = vrot.slane %v4690, %v4698
        %v4765 = vunpack.c.l.b16 %v4625
        %v4766 = vunpack.c.l.b16 %v4626
        %v4767 = vunpack.c.l.b16 %v4627
        %v4768 = vunpack.c.l.b16 %v4628
        %v4769 = vunpack.c.l.b16 %v4629
        %v4770 = vunpack.c.l.b16 %v4630
        %v4771 = vunpack.c.l.b16 %v4631
        %v4772 = vunpack.c.l.b16 %v4632
        %v4773 = vunpack.c.l.b16 %v4633
        %v4774 = vunpack.c.l.b16 %v4634
        %v4775 = vunpack.c.l.b16 %v4635
        %v4776 = vunpack.c.l.b16 %v4636
        %v4777 = vunpack.c.l.b16 %v4637
        %v4778 = vunpack.c.l.b16 %v4638
        %v4779 = vunpack.c.l.b16 %v4639
        %v4780 = vunpack.c.l.b16 %v4640
        %v4781 = vunpack.c.l.b16 %v4641
        %v4782 = vunpack.c.l.b16 %v4642
        %v4783 = vunpack.c.l.b16 %v4643
        %v4784 = vunpack.c.l.b16 %v4644
        %v4785 = vunpack.c.l.b16 %v4645
        %v4786 = vunpack.c.l.b16 %v4646
        %v4787 = vunpack.c.l.b16 %v4647
        %v4788 = vunpack.c.l.b16 %v4648
        %v4789 = vunpack.c.l.b16 %v4649
        %v4790 = vunpack.c.l.b16 %v4650
        %v4791 = vunpack.c.l.b16 %v4651
        %v4792 = vunpack.c.l.b16 %v4652
        %v4793 = vunpack.c.l.b16 %v4653
        %v4794 = vunpack.c.l.b16 %v4654
        %v4795 = vunpack.c.l.b16 %v4655
        %v4796 = vunpack.c.l.b16 %v4656
        %v4797 = vunpack.c.l.b16 %v4657
        %v4798 = vunpack.c.l.b16 %v4658
        %v4799 = vunpack.c.l.b16 %v4659
        %v4800 = vunpack.c.l.b16 %v4660
        %v4801 = vunpack.c.l.b16 %v4661
        %v4802 = vunpack.c.l.b16 %v4662
        %v4803 = vunpack.c.l.b16 %v4663
        %v4804 = vunpack.c.l.b16 %v4664
        %v4805 = vunpack.c.l.b16 %v4665
        %v4806 = vunpack.c.l.b16 %v4666
        %v4807 = vunpack.c.l.b16 %v4667
        %v4808 = vunpack.c.l.b16 %v4668
        %v4809 = vunpack.c.l.b16 %v4669
        %v4810 = vunpack.c.l.b16 %v4670
        %v4811 = vunpack.c.l.b16 %v4671
        %v4812 = vunpack.c.l.b16 %v4672
        %v4813 = vunpack.c.l.b16 %v4673
        %v4814 = vunpack.c.l.b16 %v4674
        %v4815 = vunpack.c.l.b16 %v4675
        %v4816 = vunpack.c.l.b16 %v4676
        %v4817 = vunpack.c.l.b16 %v4677
        %v4818 = vunpack.c.l.b16 %v4678
        %v4819 = vunpack.c.l.b16 %v4679
        %v4820 = vunpack.c.l.b16 %v4680
        %v4821 = vunpack.c.l.b16 %v4681
        %v4822 = vunpack.c.l.b16 %v4682
        %v4823 = vunpack.c.l.b16 %v4683
        %v4824 = vunpack.c.l.b16 %v4684
        %v4825 = vunpack.c.l.b16 %v4685
        %v4826 = vunpack.c.l.b16 %v4686
        %v4827 = vunpack.c.l.b16 %v4687
        %v4828 = vunpack.c.l.b16 %v4688
        %v4829 = vpack.c.b16 %v4766, %v4765
        %v4830 = vpack.c.b16 %v4768, %v4767
        %v4831 = vpack.c.b16 %v4770, %v4769
        %v4832 = vpack.c.b16 %v4772, %v4771
        %v4833 = vpack.c.b16 %v4774, %v4773
        %v4834 = vpack.c.b16 %v4776, %v4775
        %v4835 = vpack.c.b16 %v4778, %v4777
        %v4836 = vpack.c.b16 %v4780, %v4779
        %v4837 = vpack.c.b16 %v4782, %v4781
        %v4838 = vpack.c.b16 %v4784, %v4783
        %v4839 = vpack.c.b16 %v4786, %v4785
        %v4840 = vpack.c.b16 %v4788, %v4787
        %v4841 = vpack.c.b16 %v4790, %v4789
        %v4842 = vpack.c.b16 %v4792, %v4791
        %v4843 = vpack.c.b16 %v4794, %v4793
        %v4844 = vpack.c.b16 %v4796, %v4795
        %v4845 = vpack.c.b16 %v4798, %v4797
        %v4846 = vpack.c.b16 %v4800, %v4799
        %v4847 = vpack.c.b16 %v4802, %v4801
        %v4848 = vpack.c.b16 %v4804, %v4803
        %v4849 = vpack.c.b16 %v4806, %v4805
        %v4850 = vpack.c.b16 %v4808, %v4807
        %v4851 = vpack.c.b16 %v4810, %v4809
        %v4852 = vpack.c.b16 %v4812, %v4811
        %v4853 = vpack.c.b16 %v4814, %v4813
        %v4854 = vpack.c.b16 %v4816, %v4815
        %v4855 = vpack.c.b16 %v4818, %v4817
        %v4856 = vpack.c.b16 %v4820, %v4819
        %v4857 = vpack.c.b16 %v4822, %v4821
        %v4858 = vpack.c.b16 %v4824, %v4823
        %v4859 = vpack.c.b16 %v4826, %v4825
        %v4860 = vpack.c.b16 %v4828, %v4827
        %4893 = vmatprep.subr.bf16.mxu0 0
        %4894 = vmatpush1.bf16.msra.mxu0 %v4829
        %4895 = vmatprep.subr.bf16.mxu0 0
        %4896 = vmatpush1.bf16.msra.mxu0 %v4830
        %4897 = vmatprep.subr.bf16.mxu0 0
        %4898 = vmatpush1.bf16.msra.mxu0 %v4831
        %4899 = vmatprep.subr.bf16.mxu0 0
        %4900 = vmatpush1.bf16.msra.mxu0 %v4832
        %4901 = vmatprep.subr.bf16.mxu0 0
        %4902 = vmatpush1.bf16.msra.mxu0 %v4833
        %4903 = vmatprep.subr.bf16.mxu0 0
        %4904 = vmatpush1.bf16.msra.mxu0 %v4834
        %4905 = vmatprep.subr.bf16.mxu0 0
        %4906 = vmatpush1.bf16.msra.mxu0 %v4835
        %4907 = vmatprep.subr.bf16.mxu0 0
        %4908 = vmatpush1.bf16.msra.mxu0 %v4836
        %4909 = vmatprep.subr.bf16.mxu0 0
        %4910 = vmatpush1.bf16.msra.mxu0 %v4837
        %4911 = vmatprep.subr.bf16.mxu0 0
        %4912 = vmatpush1.bf16.msra.mxu0 %v4838
        %4913 = vmatprep.subr.bf16.mxu0 0
        %4914 = vmatpush1.bf16.msra.mxu0 %v4839
        %4915 = vmatprep.subr.bf16.mxu0 0
        %4916 = vmatpush1.bf16.msra.mxu0 %v4840
        %4917 = vmatprep.subr.bf16.mxu0 0
        %4918 = vmatpush1.bf16.msra.mxu0 %v4841
        %4919 = vmatprep.subr.bf16.mxu0 0
        %4920 = vmatpush1.bf16.msra.mxu0 %v4842
        %4921 = vmatprep.subr.bf16.mxu0 0
        %4922 = vmatpush1.bf16.msra.mxu0 %v4843
        %4923 = vmatprep.subr.bf16.mxu0 0
        %4924 = vmatpush1.bf16.msra.mxu0 %v4844
        %4925 = vmatprep.mubr.bf16.mxu0 %v4692
        %4926 = vmatmul.mubr.bf16.gmra.mrb[0].mxu0 %v4691
        %v4927 = vpop.f32.mrb[0].mxu0
        %v4928 = vadd.f32 %v4699, %v4927
        %v4929 = vpop.f32.mrb[0].mxu0
        %v4930 = vpop.f32.mrb[0].mxu0
        %v4931 = vpop.f32.mrb[0].mxu0
        %4932 = vdwg.mxu0
        %4933 = vmatprep.subr.bf16.mxu0 0
        %4934 = vmatpush1.bf16.msra.mxu0 %v4845
        %4935 = vmatprep.subr.bf16.mxu0 0
        %4936 = vmatpush1.bf16.msra.mxu0 %v4846
        %4937 = vmatprep.subr.bf16.mxu0 0
        %4938 = vmatpush1.bf16.msra.mxu0 %v4847
        %4939 = vmatprep.subr.bf16.mxu0 0
        %4940 = vmatpush1.bf16.msra.mxu0 %v4848
        %4941 = vmatprep.subr.bf16.mxu0 0
        %4942 = vmatpush1.bf16.msra.mxu0 %v4849
        %4943 = vmatprep.subr.bf16.mxu0 0
        %4944 = vmatpush1.bf16.msra.mxu0 %v4850
        %4945 = vmatprep.subr.bf16.mxu0 0
        %4946 = vmatpush1.bf16.msra.mxu0 %v4851
        %4947 = vmatprep.subr.bf16.mxu0 0
        %4948 = vmatpush1.bf16.msra.mxu0 %v4852
        %4949 = vmatprep.subr.bf16.mxu0 0
        %4950 = vmatpush1.bf16.msra.mxu0 %v4853
        %4951 = vmatprep.subr.bf16.mxu0 0
        %4952 = vmatpush1.bf16.msra.mxu0 %v4854
        %4953 = vmatprep.subr.bf16.mxu0 0
        %4954 = vmatpush1.bf16.msra.mxu0 %v4855
        %4955 = vmatprep.subr.bf16.mxu0 0
        %4956 = vmatpush1.bf16.msra.mxu0 %v4856
        %4957 = vmatprep.subr.bf16.mxu0 0
        %4958 = vmatpush1.bf16.msra.mxu0 %v4857
        %4959 = vmatprep.subr.bf16.mxu0 0
        %4960 = vmatpush1.bf16.msra.mxu0 %v4858
        %4961 = vmatprep.subr.bf16.mxu0 0
        %4962 = vmatpush1.bf16.msra.mxu0 %v4859
        %4963 = vmatprep.subr.bf16.mxu0 0
        %4964 = vmatpush1.bf16.msra.mxu0 %v4860
        %4965 = vmatprep.mubr.bf16.mxu0 %v4694
        %4966 = vmatmul.mubr.bf16.gmra.mrb[0].mxu0 %v4693
        %v4967 = vpop.f32.mrb[0].mxu0
        %v4968 = vadd.f32 %v4928, %v4967
        %v4969 = vpop.f32.mrb[0].mxu0
        %v4970 = vpop.f32.mrb[0].mxu0
        %v4971 = vpop.f32.mrb[0].mxu0
        %4972 = vdwg.mxu0
        %v4974 = vlaneseq
        %v4975 = vshrl.u32 %v4974, 7
        %v4976 = vsub.s32 0, %v4975
        %v4977 = vrot.slane %v4623, %v4976
        %v4979 = vmul.f32 %v4977, %v4968
        %v4980 = vadd.f32 %v4271, %v4979
        %v4981 = vld [vmem:[#allocation21] sm:$0x1]
        %v4982 = vld [vmem:[#allocation23] sm:$0x1]
        %v4983 = vsel %vm1579, %v4980, 0.0
        %4984 = vadd.xlane.f32.xlu0 %v4983
        %v4985 = vpop.xlane.xlu0 %4984
        %v4986 = vmul.f32 %v4985, %v1583
        %v4987 = vsub.f32 %v4980, %v4986
        %v4988 = vmul.f32 %v4987, %v4987
        %v4989 = vsel %vm1579, %v4988, 0.0
        %4990 = vadd.xlane.f32.xlu0 %v4989
        %v4991 = vpop.xlane.xlu0 %4990
        %v4992 = vmul.f32 %v4991, %v1583
        %v4993 = vadd.f32 %v4992, 1e-06
        %v4994 = vrsqrt.pop %v4993
        %v4995 = vmul.f32 %v4987, %v4994
        %v4997 = vlaneseq
        %v4998 = vshrl.u32 %v4997, 7
        %v4999 = vsub.s32 0, %v4998
        %v5000 = vrot.slane %v4981, %v4999
        %v5002 = vmul.f32 %v4995, %v5000
        %v5004 = vlaneseq
        %v5005 = vshrl.u32 %v5004, 7
        %v5006 = vsub.s32 0, %v5005
        %v5007 = vrot.slane %v4982, %v5006
        %v5009 = vadd.f32 %v5002, %v5007
        %v5010 = vsel %vm1579, %v5009, 0.0
        %v5011 = vrot.slane %v5010, 4
        %v5012 = vadd.f32 %v5010, %v5011
        %v5013 = vrot.slane %v5012, 2
        %v5014 = vadd.f32 %v5012, %v5013
        %v5015 = vrot.slane %v5014, 1
        %v5016 = vadd.f32 %v5014, %v5015
        %v5017 = vrcp.pop 5.0
        %v5018 = vmul.f32 %v5016, %v5017
        %v5019 = vld [vmem:[#allocation24] sm:$0xff]
        %v5020 = vld [vmem:[#allocation24 + $0x8] sm:$0xff]
        %v5021 = vld [vmem:[#allocation24 + $0x10] sm:$0xff]
        %v5022 = vld [vmem:[#allocation24 + $0x18] sm:$0xff]
        %v5023 = vld [vmem:[#allocation24 + $0x20] sm:$0xff]
        %v5024 = vld [vmem:[#allocation24 + $0x28] sm:$0xff]
        %v5025 = vld [vmem:[#allocation24 + $0x30] sm:$0xff]
        %v5026 = vld [vmem:[#allocation24 + $0x38] sm:$0xff]
        %v5027 = vld [vmem:[#allocation24 + $0x40] sm:$0xff]
        %v5028 = vld [vmem:[#allocation24 + $0x48] sm:$0xff]
        %v5029 = vld [vmem:[#allocation24 + $0x50] sm:$0xff]
        %v5030 = vld [vmem:[#allocation24 + $0x58] sm:$0xff]
        %v5031 = vld [vmem:[#allocation24 + $0x60] sm:$0xff]
        %v5032 = vld [vmem:[#allocation24 + $0x68] sm:$0xff]
        %v5033 = vld [vmem:[#allocation24 + $0x70] sm:$0xff]
        %v5034 = vld [vmem:[#allocation24 + $0x78] sm:$0xff]
        %v5035 = vld [vmem:[#allocation26] sm:$0x3]
        %v5036 = vpack.c.bf16 %v5018, %v5018
        %v5053 = vunpack.c.l.b16 %v5019
        %v5054 = vunpack.c.h.b16 %v5019
        %v5055 = vunpack.c.l.b16 %v5020
        %v5056 = vunpack.c.h.b16 %v5020
        %v5057 = vunpack.c.l.b16 %v5021
        %v5058 = vunpack.c.h.b16 %v5021
        %v5059 = vunpack.c.l.b16 %v5022
        %v5060 = vunpack.c.h.b16 %v5022
        %v5061 = vunpack.c.l.b16 %v5023
        %v5062 = vunpack.c.h.b16 %v5023
        %v5063 = vunpack.c.l.b16 %v5024
        %v5064 = vunpack.c.h.b16 %v5024
        %v5065 = vunpack.c.l.b16 %v5025
        %v5066 = vunpack.c.h.b16 %v5025
        %v5067 = vunpack.c.l.b16 %v5026
        %v5068 = vunpack.c.h.b16 %v5026
        %v5069 = vunpack.c.l.b16 %v5027
        %v5070 = vunpack.c.h.b16 %v5027
        %v5071 = vunpack.c.l.b16 %v5028
        %v5072 = vunpack.c.h.b16 %v5028
        %v5073 = vunpack.c.l.b16 %v5029
        %v5074 = vunpack.c.h.b16 %v5029
        %v5075 = vunpack.c.l.b16 %v5030
        %v5076 = vunpack.c.h.b16 %v5030
        %v5077 = vunpack.c.l.b16 %v5031
        %v5078 = vunpack.c.h.b16 %v5031
        %v5079 = vunpack.c.l.b16 %v5032
        %v5080 = vunpack.c.h.b16 %v5032
        %v5081 = vunpack.c.l.b16 %v5033
        %v5082 = vunpack.c.h.b16 %v5033
        %v5083 = vunpack.c.l.b16 %v5034
        %v5084 = vunpack.c.h.b16 %v5034
        %v5085 = vpack.c.b16 %v5055, %v5053
        %v5086 = vpack.c.b16 %v5056, %v5054
        %v5087 = vpack.c.b16 %v5059, %v5057
        %v5088 = vpack.c.b16 %v5060, %v5058
        %v5089 = vpack.c.b16 %v5063, %v5061
        %v5090 = vpack.c.b16 %v5064, %v5062
        %v5091 = vpack.c.b16 %v5067, %v5065
        %v5092 = vpack.c.b16 %v5068, %v5066
        %v5093 = vpack.c.b16 %v5071, %v5069
        %v5094 = vpack.c.b16 %v5072, %v5070
        %v5095 = vpack.c.b16 %v5075, %v5073
        %v5096 = vpack.c.b16 %v5076, %v5074
        %v5097 = vpack.c.b16 %v5079, %v5077
        %v5098 = vpack.c.b16 %v5080, %v5078
        %v5099 = vpack.c.b16 %v5083, %v5081
        %v5100 = vpack.c.b16 %v5084, %v5082
        %v5118 = vlaneseq
        %v5119 = vshrl.u32 %v5118, 7
        %v5120 = vsub.s32 0, %v5119
        %v5121 = vrot.slane %v5035, %v5120
        %v5122 = vlaneseq
        %v5123 = vshrl.u32 %v5122, 7
        %v5124 = vsub.s32 1, %v5123
        %v5125 = vrot.slane %v5035, %v5124
        %5128 = vmatprep.subr.bf16.mxu0 %v5086
        %5129 = vmatpush1.bf16.msra.mxu0 %v5085
        %5130 = vmatprep.subr.bf16.mxu0 %v5088
        %5131 = vmatpush1.bf16.msra.mxu0 %v5087
        %5132 = vmatprep.subr.bf16.mxu0 %v5090
        %5133 = vmatpush1.bf16.msra.mxu0 %v5089
        %5134 = vmatprep.subr.bf16.mxu0 %v5092
        %5135 = vmatpush1.bf16.msra.mxu0 %v5091
        %5136 = vmatprep.subr.bf16.mxu0 %v5094
        %5137 = vmatpush1.bf16.msra.mxu0 %v5093
        %5138 = vmatprep.subr.bf16.mxu0 %v5096
        %5139 = vmatpush1.bf16.msra.mxu0 %v5095
        %5140 = vmatprep.subr.bf16.mxu0 %v5098
        %5141 = vmatpush1.bf16.msra.mxu0 %v5097
        %5142 = vmatprep.subr.bf16.mxu0 %v5100
        %5143 = vmatpush1.bf16.msra.mxu0 %v5099
        %5144 = vmatprep.subr.bf16.mxu0 0
        %5145 = vmatpush1.bf16.msra.mxu0 0
        %5146 = vmatprep.subr.bf16.mxu0 0
        %5147 = vmatpush1.bf16.msra.mxu0 0
        %5148 = vmatprep.subr.bf16.mxu0 0
        %5149 = vmatpush1.bf16.msra.mxu0 0
        %5150 = vmatprep.subr.bf16.mxu0 0
        %5151 = vmatpush1.bf16.msra.mxu0 0
        %5152 = vmatprep.subr.bf16.mxu0 0
        %5153 = vmatpush1.bf16.msra.mxu0 0
        %5154 = vmatprep.subr.bf16.mxu0 0
        %5155 = vmatpush1.bf16.msra.mxu0 0
        %5156 = vmatprep.subr.bf16.mxu0 0
        %5157 = vmatpush1.bf16.msra.mxu0 0
        %5158 = vmatprep.subr.bf16.mxu0 0
        %5159 = vmatpush1.bf16.msra.mxu0 0
        %5160 = vmatprep.mubr.bf16.mxu0 0
        %5161 = vmatmul.mubr.bf16.gmra.mrb[0].mxu0 %v5036
        %v5162 = vpop.f32.mrb[0].mxu0
        %v5163 = vadd.f32 %v5121, %v5162
        %v5164 = vpop.f32.mrb[0].mxu0
        %v5165 = vadd.f32 %v5125, %v5164
        %v5166 = vpop.f32.mrb[0].mxu0
        %v5167 = vpop.f32.mrb[0].mxu0
        %5168 = vdwg.mxu0
        %v5169 = vmul.f32 %v5163, 0.5
        %v5170 = vmul.f32 %v5165, 0.5
        %v5171 = vmul.f32 %v5163, %v2904
        %v5172 = vmul.f32 %v5165, %v2904
        %v5173 = verf.f32.pop %v5171
        %v5174 = verf.f32.pop %v5172
        %v5175 = vadd.f32 %v5173, 1.0
        %v5176 = vadd.f32 %v5174, 1.0
        %v5177 = vmul.f32 %v5169, %v5175
        %v5178 = vmul.f32 %v5170, %v5176
        %v5179 = vld [vmem:[#allocation27] sm:$0xff]
        %v5180 = vld [vmem:[#allocation27 + $0x8] sm:$0xff]
        %v5181 = vld [vmem:[#allocation27 + $0x10] sm:$0xff]
        %v5182 = vld [vmem:[#allocation27 + $0x18] sm:$0xff]
        %v5183 = vld [vmem:[#allocation27 + $0x20] sm:$0xff]
        %v5184 = vld [vmem:[#allocation27 + $0x28] sm:$0xff]
        %v5185 = vld [vmem:[#allocation27 + $0x30] sm:$0xff]
        %v5186 = vld [vmem:[#allocation27 + $0x38] sm:$0xff]
        %v5187 = vld [vmem:[#allocation27 + $0x40] sm:$0xff]
        %v5188 = vld [vmem:[#allocation27 + $0x48] sm:$0xff]
        %v5189 = vld [vmem:[#allocation27 + $0x50] sm:$0xff]
        %v5190 = vld [vmem:[#allocation27 + $0x58] sm:$0xff]
        %v5191 = vld [vmem:[#allocation27 + $0x60] sm:$0xff]
        %v5192 = vld [vmem:[#allocation27 + $0x68] sm:$0xff]
        %v5193 = vld [vmem:[#allocation27 + $0x70] sm:$0xff]
        %v5194 = vld [vmem:[#allocation27 + $0x78] sm:$0xff]
        %v5195 = vld [vmem:[#allocation27 + $0x80] sm:$0xff]
        %v5196 = vld [vmem:[#allocation27 + $0x88] sm:$0xff]
        %v5197 = vld [vmem:[#allocation27 + $0x90] sm:$0xff]
        %v5198 = vld [vmem:[#allocation27 + $0x98] sm:$0xff]
        %v5199 = vld [vmem:[#allocation27 + $0xa0] sm:$0xff]
        %v5200 = vld [vmem:[#allocation27 + $0xa8] sm:$0xff]
        %v5201 = vld [vmem:[#allocation27 + $0xb0] sm:$0xff]
        %v5202 = vld [vmem:[#allocation27 + $0xb8] sm:$0xff]
        %v5203 = vld [vmem:[#allocation27 + $0xc0] sm:$0xff]
        %v5204 = vld [vmem:[#allocation27 + $0xc8] sm:$0xff]
        %v5205 = vld [vmem:[#allocation27 + $0xd0] sm:$0xff]
        %v5206 = vld [vmem:[#allocation27 + $0xd8] sm:$0xff]
        %v5207 = vld [vmem:[#allocation27 + $0xe0] sm:$0xff]
        %v5208 = vld [vmem:[#allocation27 + $0xe8] sm:$0xff]
        %v5209 = vld [vmem:[#allocation27 + $0xf0] sm:$0xff]
        %v5210 = vld [vmem:[#allocation27 + $0xf8] sm:$0xff]
        %v5211 = vld [vmem:[#allocation29] sm:$0x3]
        %v5212 = vpack.c.bf16 %v5177, %v5177
        %v5213 = vpack.c.bf16 %v5178, %v5178
        %v5246 = vunpack.c.l.b16 %v5179
        %v5247 = vunpack.c.h.b16 %v5179
        %v5248 = vunpack.c.l.b16 %v5180
        %v5249 = vunpack.c.h.b16 %v5180
        %v5250 = vunpack.c.l.b16 %v5181
        %v5251 = vunpack.c.h.b16 %v5181
        %v5252 = vunpack.c.l.b16 %v5182
        %v5253 = vunpack.c.h.b16 %v5182
        %v5254 = vunpack.c.l.b16 %v5183
        %v5255 = vunpack.c.h.b16 %v5183
        %v5256 = vunpack.c.l.b16 %v5184
        %v5257 = vunpack.c.h.b16 %v5184
        %v5258 = vunpack.c.l.b16 %v5185
        %v5259 = vunpack.c.h.b16 %v5185
        %v5260 = vunpack.c.l.b16 %v5186
        %v5261 = vunpack.c.h.b16 %v5186
        %v5262 = vunpack.c.l.b16 %v5187
        %v5263 = vunpack.c.h.b16 %v5187
        %v5264 = vunpack.c.l.b16 %v5188
        %v5265 = vunpack.c.h.b16 %v5188
        %v5266 = vunpack.c.l.b16 %v5189
        %v5267 = vunpack.c.h.b16 %v5189
        %v5268 = vunpack.c.l.b16 %v5190
        %v5269 = vunpack.c.h.b16 %v5190
        %v5270 = vunpack.c.l.b16 %v5191
        %v5271 = vunpack.c.h.b16 %v5191
        %v5272 = vunpack.c.l.b16 %v5192
        %v5273 = vunpack.c.h.b16 %v5192
        %v5274 = vunpack.c.l.b16 %v5193
        %v5275 = vunpack.c.h.b16 %v5193
        %v5276 = vunpack.c.l.b16 %v5194
        %v5277 = vunpack.c.h.b16 %v5194
        %v5278 = vunpack.c.l.b16 %v5195
        %v5279 = vunpack.c.h.b16 %v5195
        %v5280 = vunpack.c.l.b16 %v5196
        %v5281 = vunpack.c.h.b16 %v5196
        %v5282 = vunpack.c.l.b16 %v5197
        %v5283 = vunpack.c.h.b16 %v5197
        %v5284 = vunpack.c.l.b16 %v5198
        %v5285 = vunpack.c.h.b16 %v5198
        %v5286 = vunpack.c.l.b16 %v5199
        %v5287 = vunpack.c.h.b16 %v5199
        %v5288 = vunpack.c.l.b16 %v5200
        %v5289 = vunpack.c.h.b16 %v5200
        %v5290 = vunpack.c.l.b16 %v5201
        %v5291 = vunpack.c.h.b16 %v5201
        %v5292 = vunpack.c.l.b16 %v5202
        %v5293 = vunpack.c.h.b16 %v5202
        %v5294 = vunpack.c.l.b16 %v5203
        %v5295 = vunpack.c.h.b16 %v5203
        %v5296 = vunpack.c.l.b16 %v5204
        %v5297 = vunpack.c.h.b16 %v5204
        %v5298 = vunpack.c.l.b16 %v5205
        %v5299 = vunpack.c.h.b16 %v5205
        %v5300 = vunpack.c.l.b16 %v5206
        %v5301 = vunpack.c.h.b16 %v5206
        %v5302 = vunpack.c.l.b16 %v5207
        %v5303 = vunpack.c.h.b16 %v5207
        %v5304 = vunpack.c.l.b16 %v5208
        %v5305 = vunpack.c.h.b16 %v5208
        %v5306 = vunpack.c.l.b16 %v5209
        %v5307 = vunpack.c.h.b16 %v5209
        %v5308 = vunpack.c.l.b16 %v5210
        %v5309 = vunpack.c.h.b16 %v5210
        %v5310 = vpack.c.b16 %v5248, %v5246
        %v5311 = vpack.c.b16 %v5249, %v5247
        %v5312 = vpack.c.b16 %v5252, %v5250
        %v5313 = vpack.c.b16 %v5253, %v5251
        %v5314 = vpack.c.b16 %v5256, %v5254
        %v5315 = vpack.c.b16 %v5257, %v5255
        %v5316 = vpack.c.b16 %v5260, %v5258
        %v5317 = vpack.c.b16 %v5261, %v5259
        %v5318 = vpack.c.b16 %v5264, %v5262
        %v5319 = vpack.c.b16 %v5265, %v5263
        %v5320 = vpack.c.b16 %v5268, %v5266
        %v5321 = vpack.c.b16 %v5269, %v5267
        %v5322 = vpack.c.b16 %v5272, %v5270
        %v5323 = vpack.c.b16 %v5273, %v5271
        %v5324 = vpack.c.b16 %v5276, %v5274
        %v5325 = vpack.c.b16 %v5277, %v5275
        %v5326 = vpack.c.b16 %v5280, %v5278
        %v5327 = vpack.c.b16 %v5281, %v5279
        %v5328 = vpack.c.b16 %v5284, %v5282
        %v5329 = vpack.c.b16 %v5285, %v5283
        %v5330 = vpack.c.b16 %v5288, %v5286
        %v5331 = vpack.c.b16 %v5289, %v5287
        %v5332 = vpack.c.b16 %v5292, %v5290
        %v5333 = vpack.c.b16 %v5293, %v5291
        %v5334 = vpack.c.b16 %v5296, %v5294
        %v5335 = vpack.c.b16 %v5297, %v5295
        %v5336 = vpack.c.b16 %v5300, %v5298
        %v5337 = vpack.c.b16 %v5301, %v5299
        %v5338 = vpack.c.b16 %v5304, %v5302
        %v5339 = vpack.c.b16 %v5305, %v5303
        %v5340 = vpack.c.b16 %v5308, %v5306
        %v5341 = vpack.c.b16 %v5309, %v5307
        %v5375 = vlaneseq
        %v5376 = vshrl.u32 %v5375, 7
        %v5377 = vsub.s32 0, %v5376
        %v5378 = vrot.slane %v5211, %v5377
        %v5379 = vlaneseq
        %v5380 = vshrl.u32 %v5379, 7
        %v5381 = vsub.s32 1, %v5380
        %v5382 = vrot.slane %v5211, %v5381
        %5385 = vmatprep.subr.bf16.mxu0 %v5311
        %5386 = vmatpush1.bf16.msra.mxu0 %v5310
        %5387 = vmatprep.subr.bf16.mxu0 %v5313
        %5388 = vmatpush1.bf16.msra.mxu0 %v5312
        %5389 = vmatprep.subr.bf16.mxu0 %v5315
        %5390 = vmatpush1.bf16.msra.mxu0 %v5314
        %5391 = vmatprep.subr.bf16.mxu0 %v5317
        %5392 = vmatpush1.bf16.msra.mxu0 %v5316
        %5393 = vmatprep.subr.bf16.mxu0 %v5319
        %5394 = vmatpush1.bf16.msra.mxu0 %v5318
        %5395 = vmatprep.subr.bf16.mxu0 %v5321
        %5396 = vmatpush1.bf16.msra.mxu0 %v5320
        %5397 = vmatprep.subr.bf16.mxu0 %v5323
        %5398 = vmatpush1.bf16.msra.mxu0 %v5322
        %5399 = vmatprep.subr.bf16.mxu0 %v5325
        %5400 = vmatpush1.bf16.msra.mxu0 %v5324
        %5401 = vmatprep.subr.bf16.mxu0 %v5327
        %5402 = vmatpush1.bf16.msra.mxu0 %v5326
        %5403 = vmatprep.subr.bf16.mxu0 %v5329
        %5404 = vmatpush1.bf16.msra.mxu0 %v5328
        %5405 = vmatprep.subr.bf16.mxu0 %v5331
        %5406 = vmatpush1.bf16.msra.mxu0 %v5330
        %5407 = vmatprep.subr.bf16.mxu0 %v5333
        %5408 = vmatpush1.bf16.msra.mxu0 %v5332
        %5409 = vmatprep.subr.bf16.mxu0 %v5335
        %5410 = vmatpush1.bf16.msra.mxu0 %v5334
        %5411 = vmatprep.subr.bf16.mxu0 %v5337
        %5412 = vmatpush1.bf16.msra.mxu0 %v5336
        %5413 = vmatprep.subr.bf16.mxu0 %v5339
        %5414 = vmatpush1.bf16.msra.mxu0 %v5338
        %5415 = vmatprep.subr.bf16.mxu0 %v5341
        %5416 = vmatpush1.bf16.msra.mxu0 %v5340
        %5417 = vmatprep.mubr.bf16.mxu0 %v5213
        %5418 = vmatmul.mubr.bf16.gmra.mrb[0].mxu0 %v5212
        %v5419 = vpop.f32.mrb[0].mxu0
        %v5420 = vadd.f32 %v5378, %v5419
        %v5421 = vpop.f32.mrb[0].mxu0
        %v5422 = vadd.f32 %v5382, %v5421
        %v5423 = vpop.f32.mrb[0].mxu0
        %v5424 = vpop.f32.mrb[0].mxu0
        %5425 = vdwg.mxu0
        %v5426 = vmul.f32 %v5420, 0.5
        %v5427 = vmul.f32 %v5422, 0.5
        %v5428 = vmul.f32 %v5420, %v2904
        %v5429 = vmul.f32 %v5422, %v2904
        %v5430 = verf.f32.pop %v5428
        %v5431 = verf.f32.pop %v5429
        %v5432 = vadd.f32 %v5430, 1.0
        %v5433 = vadd.f32 %v5431, 1.0
        %v5434 = vmul.f32 %v5426, %v5432
        %v5435 = vmul.f32 %v5427, %v5433
        %v5436 = vld [vmem:[#allocation30] sm:$0xf]
        %v5437 = vld [vmem:[#allocation30 + $0x4] sm:$0xf]
        %v5438 = vld [vmem:[#allocation30 + $0x8] sm:$0xf]
        %v5439 = vld [vmem:[#allocation30 + $0xc] sm:$0xf]
        %v5440 = vld [vmem:[#allocation30 + $0x10] sm:$0xf]
        %v5441 = vld [vmem:[#allocation30 + $0x14] sm:$0xf]
        %v5442 = vld [vmem:[#allocation30 + $0x18] sm:$0xf]
        %v5443 = vld [vmem:[#allocation30 + $0x1c] sm:$0xf]
        %v5444 = vld [vmem:[#allocation30 + $0x20] sm:$0xf]
        %v5445 = vld [vmem:[#allocation30 + $0x24] sm:$0xf]
        %v5446 = vld [vmem:[#allocation30 + $0x28] sm:$0xf]
        %v5447 = vld [vmem:[#allocation30 + $0x2c] sm:$0xf]
        %v5448 = vld [vmem:[#allocation30 + $0x30] sm:$0xf]
        %v5449 = vld [vmem:[#allocation30 + $0x34] sm:$0xf]
        %v5450 = vld [vmem:[#allocation30 + $0x38] sm:$0xf]
        %v5451 = vld [vmem:[#allocation30 + $0x3c] sm:$0xf]
        %v5452 = vld [vmem:[#allocation30 + $0x40] sm:$0xf]
        %v5453 = vld [vmem:[#allocation30 + $0x44] sm:$0xf]
        %v5454 = vld [vmem:[#allocation30 + $0x48] sm:$0xf]
        %v5455 = vld [vmem:[#allocation30 + $0x4c] sm:$0xf]
        %v5456 = vld [vmem:[#allocation30 + $0x50] sm:$0xf]
        %v5457 = vld [vmem:[#allocation30 + $0x54] sm:$0xf]
        %v5458 = vld [vmem:[#allocation30 + $0x58] sm:$0xf]
        %v5459 = vld [vmem:[#allocation30 + $0x5c] sm:$0xf]
        %v5460 = vld [vmem:[#allocation30 + $0x60] sm:$0xf]
        %v5461 = vld [vmem:[#allocation30 + $0x64] sm:$0xf]
        %v5462 = vld [vmem:[#allocation30 + $0x68] sm:$0xf]
        %v5463 = vld [vmem:[#allocation30 + $0x6c] sm:$0xf]
        %v5464 = vld [vmem:[#allocation30 + $0x70] sm:$0xf]
        %v5465 = vld [vmem:[#allocation30 + $0x74] sm:$0xf]
        %v5466 = vld [vmem:[#allocation30 + $0x78] sm:$0xf]
        %v5467 = vld [vmem:[#allocation30 + $0x7c] sm:$0xf]
        %v5468 = vld [vmem:[#allocation32] sm:$0x1]
        %v5469 = vpack.c.bf16 %v5434, %v5434
        %v5470 = vpack.c.bf16 %v5435, %v5435
        %v5503 = vunpack.c.l.b16 %v5436
        %v5504 = vunpack.c.l.b16 %v5437
        %v5505 = vunpack.c.l.b16 %v5438
        %v5506 = vunpack.c.l.b16 %v5439
        %v5507 = vunpack.c.l.b16 %v5440
        %v5508 = vunpack.c.l.b16 %v5441
        %v5509 = vunpack.c.l.b16 %v5442
        %v5510 = vunpack.c.l.b16 %v5443
        %v5511 = vunpack.c.l.b16 %v5444
        %v5512 = vunpack.c.l.b16 %v5445
        %v5513 = vunpack.c.l.b16 %v5446
        %v5514 = vunpack.c.l.b16 %v5447
        %v5515 = vunpack.c.l.b16 %v5448
        %v5516 = vunpack.c.l.b16 %v5449
        %v5517 = vunpack.c.l.b16 %v5450
        %v5518 = vunpack.c.l.b16 %v5451
        %v5519 = vunpack.c.l.b16 %v5452
        %v5520 = vunpack.c.l.b16 %v5453
        %v5521 = vunpack.c.l.b16 %v5454
        %v5522 = vunpack.c.l.b16 %v5455
        %v5523 = vunpack.c.l.b16 %v5456
        %v5524 = vunpack.c.l.b16 %v5457
        %v5525 = vunpack.c.l.b16 %v5458
        %v5526 = vunpack.c.l.b16 %v5459
        %v5527 = vunpack.c.l.b16 %v5460
        %v5528 = vunpack.c.l.b16 %v5461
        %v5529 = vunpack.c.l.b16 %v5462
        %v5530 = vunpack.c.l.b16 %v5463
        %v5531 = vunpack.c.l.b16 %v5464
        %v5532 = vunpack.c.l.b16 %v5465
        %v5533 = vunpack.c.l.b16 %v5466
        %v5534 = vunpack.c.l.b16 %v5467
        %v5535 = vpack.c.b16 %v5504, %v5503
        %v5536 = vpack.c.b16 %v5506, %v5505
        %v5537 = vpack.c.b16 %v5508, %v5507
        %v5538 = vpack.c.b16 %v5510, %v5509
        %v5539 = vpack.c.b16 %v5512, %v5511
        %v5540 = vpack.c.b16 %v5514, %v5513
        %v5541 = vpack.c.b16 %v5516, %v5515
        %v5542 = vpack.c.b16 %v5518, %v5517
        %v5543 = vpack.c.b16 %v5520, %v5519
        %v5544 = vpack.c.b16 %v5522, %v5521
        %v5545 = vpack.c.b16 %v5524, %v5523
        %v5546 = vpack.c.b16 %v5526, %v5525
        %v5547 = vpack.c.b16 %v5528, %v5527
        %v5548 = vpack.c.b16 %v5530, %v5529
        %v5549 = vpack.c.b16 %v5532, %v5531
        %v5550 = vpack.c.b16 %v5534, %v5533
        %5567 = vmatprep.subr.bf16.mxu0 0
        %5568 = vmatpush1.bf16.msra.mxu0 %v5535
        %5569 = vmatprep.subr.bf16.mxu0 0
        %5570 = vmatpush1.bf16.msra.mxu0 %v5536
        %5571 = vmatprep.subr.bf16.mxu0 0
        %5572 = vmatpush1.bf16.msra.mxu0 %v5537
        %5573 = vmatprep.subr.bf16.mxu0 0
        %5574 = vmatpush1.bf16.msra.mxu0 %v5538
        %5575 = vmatprep.subr.bf16.mxu0 0
        %5576 = vmatpush1.bf16.msra.mxu0 %v5539
        %5577 = vmatprep.subr.bf16.mxu0 0
        %5578 = vmatpush1.bf16.msra.mxu0 %v5540
        %5579 = vmatprep.subr.bf16.mxu0 0
        %5580 = vmatpush1.bf16.msra.mxu0 %v5541
        %5581 = vmatprep.subr.bf16.mxu0 0
        %5582 = vmatpush1.bf16.msra.mxu0 %v5542
        %5583 = vmatprep.subr.bf16.mxu0 0
        %5584 = vmatpush1.bf16.msra.mxu0 %v5543
        %5585 = vmatprep.subr.bf16.mxu0 0
        %5586 = vmatpush1.bf16.msra.mxu0 %v5544
        %5587 = vmatprep.subr.bf16.mxu0 0
        %5588 = vmatpush1.bf16.msra.mxu0 %v5545
        %5589 = vmatprep.subr.bf16.mxu0 0
        %5590 = vmatpush1.bf16.msra.mxu0 %v5546
        %5591 = vmatprep.subr.bf16.mxu0 0
        %5592 = vmatpush1.bf16.msra.mxu0 %v5547
        %5593 = vmatprep.subr.bf16.mxu0 0
        %5594 = vmatpush1.bf16.msra.mxu0 %v5548
        %5595 = vmatprep.subr.bf16.mxu0 0
        %5596 = vmatpush1.bf16.msra.mxu0 %v5549
        %5597 = vmatprep.subr.bf16.mxu0 0
        %5598 = vmatpush1.bf16.msra.mxu0 %v5550
        %5599 = vmatprep.mubr.bf16.mxu0 %v5470
        %5600 = vmatmul.mubr.bf16.gmra.mrb[0].mxu0 %v5469
        %v5601 = vpop.f32.mrb[0].mxu0
        %v5602 = vadd.f32 %v5468, %v5601
        %v5603 = vpop.f32.mrb[0].mxu0
        %v5604 = vpop.f32.mrb[0].mxu0
        %v5605 = vpop.f32.mrb[0].mxu0
        %5606 = vdwg.mxu0
        %v5607 = vmul.f32 %v5602, %v5602
        %vm5608 = vcmask 1040384
        %v5609 = vsel %vm5608, %v5607, 0.0
        %5610 = vadd.xlane.f32.xlu0 %v5609
        %v5611 = vpop.xlane.xlu0 %5610
        %v5612 = vrsqrt.pop %v5611
        %v5613 = vmul.f32 %v5611, %v5612
        %vm5614 = vcmp.eq.f32.partialorder %v5611, inf
        %v5615 = vsel %vm5614, %v5611, %v5613
        %vm5616 = vcmp.eq.f32.partialorder %v5611, 0.0
        %v5617 = vand.u32 %v5611, 2147483648
        %v5618 = vsel %vm5616, %v5617, %v5615
        %v5619 = vmax.f32 %v5618, 1e-12
        %v5620 = vrcp.pop %v5619
        %v5621 = vmul.f32 %v5602, %v5620
        %v5622 = vld [vmem:[%s27] sm:$0xf]
        %v5623 = vld [vmem:[%s27 + $0x4] sm:$0xf]
        %v5624 = vld [vmem:[%s27 + $0x8] sm:$0xf]
        %v5625 = vld [vmem:[%s27 + $0xc] sm:$0xf]
        %v5626 = vld [vmem:[%s27 + $0x10] sm:$0xf]
        %v5627 = vld [vmem:[%s27 + $0x14] sm:$0xf]
        %v5628 = vld [vmem:[%s27 + $0x18] sm:$0xf]
        %v5629 = vld [vmem:[%s27 + $0x1c] sm:$0xf]
        %v5630 = vld [vmem:[%s27 + $0x20] sm:$0xf]
        %v5631 = vld [vmem:[%s27 + $0x24] sm:$0xf]
        %v5632 = vld [vmem:[%s27 + $0x28] sm:$0xf]
        %v5633 = vld [vmem:[%s27 + $0x2c] sm:$0xf]
        %v5634 = vld [vmem:[%s27 + $0x30] sm:$0xf]
        %v5635 = vld [vmem:[%s27 + $0x34] sm:$0xf]
        %v5636 = vld [vmem:[%s27 + $0x38] sm:$0xf]
        %v5637 = vld [vmem:[%s27 + $0x3c] sm:$0xf]
        %v5638 = vpack.c.bf16 %v5621, %v5621
        %v5655 = vunpack.c.l.b16 %v5622
        %v5656 = vunpack.c.l.b16 %v5623
        %v5657 = vunpack.c.l.b16 %v5624
        %v5658 = vunpack.c.l.b16 %v5625
        %v5659 = vunpack.c.l.b16 %v5626
        %v5660 = vunpack.c.l.b16 %v5627
        %v5661 = vunpack.c.l.b16 %v5628
        %v5662 = vunpack.c.l.b16 %v5629
        %v5663 = vunpack.c.l.b16 %v5630
        %v5664 = vunpack.c.l.b16 %v5631
        %v5665 = vunpack.c.l.b16 %v5632
        %v5666 = vunpack.c.l.b16 %v5633
        %v5667 = vunpack.c.l.b16 %v5634
        %v5668 = vunpack.c.l.b16 %v5635
        %v5669 = vunpack.c.l.b16 %v5636
        %v5670 = vunpack.c.l.b16 %v5637
        %v5671 = vpack.c.b16 %v5656, %v5655
        %v5672 = vpack.c.b16 %v5658, %v5657
        %v5673 = vpack.c.b16 %v5660, %v5659
        %v5674 = vpack.c.b16 %v5662, %v5661
        %v5675 = vpack.c.b16 %v5664, %v5663
        %v5676 = vpack.c.b16 %v5666, %v5665
        %v5677 = vpack.c.b16 %v5668, %v5667
        %v5678 = vpack.c.b16 %v5670, %v5669
        %5687 = vmatprep.subr.bf16.mxu0 0
        %5688 = vmatpush1.bf16.msra.mxu0 %v5671
        %5689 = vmatprep.subr.bf16.mxu0 0
        %5690 = vmatpush1.bf16.msra.mxu0 %v5672
        %5691 = vmatprep.subr.bf16.mxu0 0
        %5692 = vmatpush1.bf16.msra.mxu0 %v5673
        %5693 = vmatprep.subr.bf16.mxu0 0
        %5694 = vmatpush1.bf16.msra.mxu0 %v5674
        %5695 = vmatprep.subr.bf16.mxu0 0
        %5696 = vmatpush1.bf16.msra.mxu0 %v5675
        %5697 = vmatprep.subr.bf16.mxu0 0
        %5698 = vmatpush1.bf16.msra.mxu0 %v5676
        %5699 = vmatprep.subr.bf16.mxu0 0
        %5700 = vmatpush1.bf16.msra.mxu0 %v5677
        %5701 = vmatprep.subr.bf16.mxu0 0
        %5702 = vmatpush1.bf16.msra.mxu0 %v5678
        %5703 = vmatprep.subr.bf16.mxu0 0
        %5704 = vmatpush1.bf16.msra.mxu0 0
        %5705 = vmatprep.subr.bf16.mxu0 0
        %5706 = vmatpush1.bf16.msra.mxu0 0
        %5707 = vmatprep.subr.bf16.mxu0 0
        %5708 = vmatpush1.bf16.msra.mxu0 0
        %5709 = vmatprep.subr.bf16.mxu0 0
        %5710 = vmatpush1.bf16.msra.mxu0 0
        %5711 = vmatprep.subr.bf16.mxu0 0
        %5712 = vmatpush1.bf16.msra.mxu0 0
        %5713 = vmatprep.subr.bf16.mxu0 0
        %5714 = vmatpush1.bf16.msra.mxu0 0
        %5715 = vmatprep.subr.bf16.mxu0 0
        %5716 = vmatpush1.bf16.msra.mxu0 0
        %5717 = vmatprep.subr.bf16.mxu0 0
        %5718 = vmatpush1.bf16.msra.mxu0 0
        %5719 = vmatprep.mubr.bf16.mxu0 0
        %5720 = vmatmul.mubr.bf16.gmra.mrb[0].mxu0 %v5638
        %v5721 = vpop.f32.mrb[0].mxu0
        %v5722 = vadd.f32 0.0, %v5721
        %v5723 = vpop.f32.mrb[0].mxu0
        %v5724 = vpop.f32.mrb[0].mxu0
        %v5725 = vpop.f32.mrb[0].mxu0
        %5726 = vdwg.mxu0
        %5727 = vst [vmem:[%s1099] sm:$0x1] %v5722
        %s5728 = sand.u32 %s653, 1
        %s5729 = scalar_lea.sflag [#allocation5], %s5728
        %s5730 = sand.u32 %s653, 1
        %s5731 = scalar_lea.vmem [#allocation33], %s5730
        // Predicated region
        $region209: #{_lambda_.1} parent=131 // pred_check
          %p5732 = pneg %p663
        $region210: #{_lambda_.1} parent=131 // pred_check_branch
          %5734 = sbr.rel (%p5732) target = $region212
        $region211: #{_lambda_.1} parent=131 // pred_region
          %s5736 = ssub.s32 16, 16
          %5737 = vsyncadd %s5729, %s5736
          %s5738 = smul.addr %s52, 16
          %s5739 = scalar_lea.hbm %s28, %s5738
          %s5741 = sshll.u32 %s5731, 4
          %s5742 = int_to_ptr.vmem [resolvable:$true] %s5741
          %5744 = dma.vmem_to_hbm [thread:$0]  %s5742, 16, %s5739, %s5729
        $region212: #{_lambda_.1} parent=131 // pred_fallthru
          _
      $region132: #{_lambda_.1} parent=5 // pred_fallthru
        _
      %p5745 = scmp.le.s32.totalorder 2, %s47
      // Predicated region
      $region213: #{_lambda_.1} parent=5 // pred_check
        %p5746 = pneg %p5745
      $region214: #{_lambda_.1} parent=5 // pred_check_branch
        %5748 = sbr.rel (%p5746) target = $region216
      $region215: #{_lambda_.1} parent=5 // pred_region
        %s5749 = ssub.s32 %s47, 2
        // Predicated region
        $region217: #{_lambda_.1} parent=215 // pred_check
          %p5750 = pneg %p669
        $region218: #{_lambda_.1} parent=215 // pred_check_branch
          %5752 = sbr.rel (%p5750) target = $region220
        $region219: #{_lambda_.1} parent=215 // pred_region
          %s5753 = sand.u32 %s654, 1
          %s5754 = scalar_lea.sflag [#allocation5], %s5753
          %s5755 = sand.u32 %s654, 1
          %s5756 = scalar_lea.vmem [#allocation33], %s5755
          %5757 = dma.done %s5754, 16
        $region220: #{_lambda_.1} parent=215 // pred_fallthru
          _
      $region216: #{_lambda_.1} parent=5 // pred_fallthru
        _
    $region6: #{_lambda_.1} parent=1 // loop_footer
      %s51 = sadd.s32 1, %s47
    $region7: #{_lambda_.1} parent=1 // loop_footer_branch
      %46 = sbr.rel target = $region3
    $region8: #{_lambda_.1} parent=1 // loop_exit
      _
    %5758 = vsyncpa [#allocation4], 1
    %s5759 = scalar_lea.sflag [#allocation4], 1
    %5760 = vsyncpa %s5759, 1
    %5761 = vsyncpa [#allocation7], 1
    %5762 = vsyncpa [#allocation10], 1
    %5763 = vsyncpa [#allocation13], 1
    %5764 = vsyncpa [#allocation16], 1
    %5765 = vsyncpa [#allocation19], 1
    %5766 = vsyncpa [#allocation22], 1
    %5767 = vsyncpa [#allocation25], 1
    %5768 = vsyncpa [#allocation28], 1
    %5769 = vsyncpa [#allocation31], 1
    %5770 = vsyncpa [#allocation5], 1
    %s5771 = scalar_lea.sflag [#allocation5], 1
    %5772 = vsyncpa %s5771, 1

</llo_original>
